<compile_context>
chip_gen: v7x
topology: tpu7x:2x2x1
jax: 0.10.0
libtpu: 0.0.40
codegen_flags: <defaults>
</compile_context>

<pallas_src>
import functools

import jax
import jax.numpy as jnp
from jax.experimental import pallas as pl
from jax.experimental.pallas import tpu as pltpu

D_IN = 784       # MNIST pixels; kept unpadded (block last dim == full dim)
D_H = 400
D_Z = 20

D_H_PAD = 512    # 4 * 128 lane tiles for h1 / h3
D_Z_PAD = 128    # lane-dense mu / logvar / z


def vae_kernel(x_ref, eps_ref,
               w1_ref, b1_ref, wh_ref, bh_ref, w3_ref, b3_ref, w4_ref, b4_ref,
               recon_ref, mu_ref, logvar_ref):
    # encoder: fc1 -> relu   (x already bf16; bf16 x bf16 -> f32 on the MXU)
    h1 = jnp.dot(x_ref[...], w1_ref[...],
                 preferred_element_type=jnp.float32) + b1_ref[...]
    h1 = jnp.maximum(h1, 0.0)

    # fused fc21|fc22 head: one (bm, 512) @ (512, 256) matmul
    head = jnp.dot(h1.astype(jnp.bfloat16), wh_ref[...],
                   preferred_element_type=jnp.float32) + bh_ref[...]
    mu = head[:, :D_Z_PAD]          # lane-tile-aligned split
    logvar = head[:, D_Z_PAD:]

    # reparametrize: z = eps * exp(0.5 * logvar) + mu
    # (padded eps columns are zero and padded head columns are zero, so the
    #  padded part of z stays exactly zero before fc3)
    std = jnp.exp(0.5 * logvar)
    z = eps_ref[...].astype(jnp.float32) * std + mu

    # decoder: fc3 -> relu -> fc4 -> sigmoid
    h3 = jnp.dot(z.astype(jnp.bfloat16), w3_ref[...],
                 preferred_element_type=jnp.float32) + b3_ref[...]
    h3 = jnp.maximum(h3, 0.0)
    logits = jnp.dot(h3.astype(jnp.bfloat16), w4_ref[...],
                     preferred_element_type=jnp.float32) + b4_ref[...]

    recon_ref[...] = jax.nn.sigmoid(logits).astype(recon_ref.dtype)   # bf16 store
    mu_ref[...] = mu
    logvar_ref[...] = logvar


def init_params(key):
    """Deterministic init mimicking torch.nn.Linear default (U[-1/sqrt(fan_in), +])."""
    def linear(key, d_in, d_out):
        kw, kb = jax.random.split(key)
        bound = 1.0 / jnp.sqrt(d_in)
        w = jax.random.uniform(kw, (d_in, d_out), jnp.float32, -bound, bound)
        b = jax.random.uniform(kb, (1, d_out), jnp.float32, -bound, bound)
        return w, b

    k1, k21, k22, k3, k4 = jax.random.split(key, 5)
    w1, b1 = linear(k1, D_IN, D_H)
    w21, b21 = linear(k21, D_H, D_Z)
    w22, b22 = linear(k22, D_H, D_Z)
    w3, b3 = linear(k3, D_Z, D_H)
    w4, b4 = linear(k4, D_H, D_IN)
    return (w1, b1, w21, b21, w22, b22, w3, b3, w4, b4)


def _pad_to(a, shape):
    out = jnp.zeros(shape, a.dtype)
    return out.at[:a.shape[0], :a.shape[1]].set(a)


def pack_params(params):
    """Zero-pad to lane-aligned shapes, fuse fc21|fc22, cast weights to bf16."""
    (w1, b1, w21, b21, w22, b22, w3, b3, w4, b4) = params
    w1p = _pad_to(w1, (D_IN, D_H_PAD)).astype(jnp.bfloat16)          # (784, 512)
    b1p = _pad_to(b1, (1, D_H_PAD))                                  # (1, 512) f32
    whp = jnp.concatenate([_pad_to(w21, (D_H_PAD, D_Z_PAD)),
                           _pad_to(w22, (D_H_PAD, D_Z_PAD))],
                          axis=1).astype(jnp.bfloat16)               # (512, 256)
    bhp = jnp.concatenate([_pad_to(b21, (1, D_Z_PAD)),
                           _pad_to(b22, (1, D_Z_PAD))], axis=1)      # (1, 256) f32
    w3p = _pad_to(w3, (D_Z_PAD, D_H_PAD)).astype(jnp.bfloat16)       # (128, 512)
    b3p = _pad_to(b3, (1, D_H_PAD))                                  # (1, 512) f32
    w4p = _pad_to(w4, (D_H_PAD, D_IN)).astype(jnp.bfloat16)          # (512, 784)
    b4p = b4                                                         # (1, 784) f32
    return (w1p, b1p, whp, bhp, w3p, b3p, w4p, b4p)


@functools.partial(jax.jit, static_argnames=("bm",))
def vae_forward(x, eps, packed, bm=128):
    B = x.shape[0]
    B_pad = ((B + bm - 1) // bm) * bm

    # Input DMA in bf16 (cast fused into the pad); x keeps its natural width.
    if B_pad == B:
        x_bf = x.astype(jnp.bfloat16)
    else:
        x_bf = jnp.zeros((B_pad, D_IN), jnp.bfloat16).at[:B].set(
            x.astype(jnp.bfloat16))
    # eps MUST be zero in columns >= D_Z so padded z lanes stay exactly zero.
    eps_bf = jnp.zeros((B_pad, D_Z_PAD), jnp.bfloat16).at[:B, :D_Z].set(
        eps.astype(jnp.bfloat16))

    (w1p, b1p, whp, bhp, w3p, b3p, w4p, b4p) = packed

    def full_spec(arr):
        # Whole parameter resident in VMEM, replicated across batch tiles.
        return pl.BlockSpec(arr.shape, lambda i: (0, 0))

    in_specs = [
        pl.BlockSpec((bm, D_IN), lambda i: (i, 0)),       # x (bf16, full width)
        pl.BlockSpec((bm, D_Z_PAD), lambda i: (i, 0)),    # eps (bf16)
        full_spec(w1p), full_spec(b1p),
        full_spec(whp), full_spec(bhp),
        full_spec(w3p), full_spec(b3p),
        full_spec(w4p), full_spec(b4p),
    ]
    out_specs = [
        pl.BlockSpec((bm, D_IN), lambda i: (i, 0)),       # reconstruction (bf16)
        pl.BlockSpec((bm, D_Z_PAD), lambda i: (i, 0)),    # mu (f32, padded lanes)
        pl.BlockSpec((bm, D_Z_PAD), lambda i: (i, 0)),    # logvar (f32, padded lanes)
    ]
    out_shape = [
        jax.ShapeDtypeStruct((B_pad, D_IN), jnp.bfloat16),
        jax.ShapeDtypeStruct((B_pad, D_Z_PAD), jnp.float32),
        jax.ShapeDtypeStruct((B_pad, D_Z_PAD), jnp.float32),
    ]

    # Advisory cost estimate so XLA schedules surrounding cast/pad/slice ops well.
    flops = 2 * B_pad * (D_IN * D_H_PAD + D_H_PAD * 2 * D_Z_PAD
                         + D_Z_PAD * D_H_PAD + D_H_PAD * D_IN)
    transcendentals = B_pad * (D_Z_PAD + D_IN)
    weight_bytes = sum(int(w.size) * w.dtype.itemsize for w in packed)
    bytes_accessed = (weight_bytes
                      + int(x_bf.size) * 2 + int(eps_bf.size) * 2
                      + B_pad * (D_IN * 2 + 2 * D_Z_PAD * 4))
    cost = pl.CostEstimate(flops=flops, transcendentals=transcendentals,
                           bytes_accessed=bytes_accessed)

    recon_p, mu_p, logvar_p = pl.pallas_call(
        vae_kernel,
        out_shape=out_shape,
        grid_spec=pltpu.PrefetchScalarGridSpec(
            num_scalar_prefetch=0,
            grid=(B_pad // bm,),
            in_specs=in_specs,
            out_specs=out_specs,
        ),
        compiler_params=pltpu.CompilerParams(
            dimension_semantics=("parallel",),
            vmem_limit_bytes=32 << 20,
        ),
        cost_estimate=cost,
    )(x_bf, eps_bf, *packed)

    recon = recon_p if B_pad == B else recon_p[:B]
    return recon, mu_p[:B, :D_Z], logvar_p[:B, :D_Z]


def vae_reference_bf16(x, eps, packed):
    """Pure-JAX reference mirroring the kernel's bf16-input / f32-accumulate math."""
    (w1p, b1p, whp, bhp, w3p, b3p, w4p, b4p) = packed
    B = x.shape[0]
    x_bf = x.astype(jnp.bfloat16)
    eps_p = jnp.zeros((B, D_Z_PAD), jnp.float32).at[:, :D_Z].set(
        eps.astype(jnp.bfloat16).astype(jnp.float32))

    h1 = jnp.maximum(jnp.dot(x_bf, w1p,
                             preferred_element_type=jnp.float32) + b1p, 0.0)
    head = jnp.dot(h1.astype(jnp.bfloat16), whp,
                   preferred_element_type=jnp.float32) + bhp
    mu = head[:, :D_Z_PAD]
    logvar = head[:, D_Z_PAD:]
    z = eps_p * jnp.exp(0.5 * logvar) + mu
    h3 = jnp.maximum(jnp.dot(z.astype(jnp.bfloat16), w3p,
                             preferred_element_type=jnp.float32) + b3p, 0.0)
    recon = jax.nn.sigmoid(jnp.dot(h3.astype(jnp.bfloat16), w4p,
                                   preferred_element_type=jnp.float32) + b4p)
    return recon, mu[:, :D_Z], logvar[:, :D_Z]


def vae_reference_f32(x, eps, params):
    """Full-precision reference of the original PyTorch forward."""
    (w1, b1, w21, b21, w22, b22, w3, b3, w4, b4) = params
    h1 = jnp.maximum(x @ w1 + b1, 0.0)
    mu = h1 @ w21 + b21
    logvar = h1 @ w22 + b22
    z = eps * jnp.exp(0.5 * logvar) + mu
    h3 = jnp.maximum(z @ w3 + b3, 0.0)
    recon = jax.nn.sigmoid(h3 @ w4 + b4)
    return recon, mu, logvar


if __name__ == "__main__":
    key = jax.random.PRNGKey(0)
    k_param, k_x, k_eps = jax.random.split(key, 3)

    B = 512    # 4 batch tiles of 128 -> grid=(4,): 2 pipelined steps per v7x core
    params = init_params(k_param)
    packed = pack_params(params)

    x = jax.random.uniform(k_x, (B, D_IN), jnp.float32)      # MNIST-like pixels in [0,1)
    eps = jax.random.normal(k_eps, (B, D_Z), jnp.float32)    # reparametrization noise

    recon, mu, logvar = vae_forward(x, eps, packed, bm=128)
    jax.block_until_ready((recon, mu, logvar))

    assert recon.shape == (B, D_IN) and mu.shape == (B, D_Z) and logvar.shape == (B, D_Z)

    # tight check vs. a reference using the same bf16 weights / casts
    r_bf, mu_bf, lv_bf = vae_reference_bf16(x, eps, packed)
    assert jnp.allclose(recon.astype(jnp.float32), r_bf, atol=1e-2, rtol=1e-2)
    assert jnp.allclose(mu, mu_bf, atol=1e-2, rtol=1e-2)
    assert jnp.allclose(logvar, lv_bf, atol=1e-2, rtol=1e-2)

    # loose check vs. the full-f32 original model (catches real logit errors
    # that a loose sigmoid-space comparison could hide)
    r_f32, mu_f32, lv_f32 = vae_reference_f32(x, eps, params)
    assert jnp.allclose(recon.astype(jnp.float32), r_f32, atol=5e-2)
    assert jnp.allclose(mu, mu_f32, atol=5e-2)
    assert jnp.allclose(logvar, lv_f32, atol=5e-2)

    print("KERNEL_OK")
</pallas_src>

<mosaic_0001>
module attributes {stable_mosaic.version = 11 : i64} {
  func.func @vae_kernel(%arg0: i32, %arg1: memref<128x784xbf16, #tpu.memory_space<vmem>>, %arg2: memref<128x128xbf16, #tpu.memory_space<vmem>>, %arg3: memref<784x512xbf16, #tpu.memory_space<vmem>>, %arg4: memref<1x512xf32, #tpu.memory_space<vmem>>, %arg5: memref<512x256xbf16, #tpu.memory_space<vmem>>, %arg6: memref<1x256xf32, #tpu.memory_space<vmem>>, %arg7: memref<128x512xbf16, #tpu.memory_space<vmem>>, %arg8: memref<1x512xf32, #tpu.memory_space<vmem>>, %arg9: memref<512x784xbf16, #tpu.memory_space<vmem>>, %arg10: memref<1x784xf32, #tpu.memory_space<vmem>>, %arg11: memref<128x784xbf16, #tpu.memory_space<vmem>>, %arg12: memref<128x128xf32, #tpu.memory_space<vmem>>, %arg13: memref<128x128xf32, #tpu.memory_space<vmem>>) attributes {dimension_semantics = [#tpu.dimension_semantics<parallel>], iteration_bounds = array<i64: 4>, scalar_prefetch = 0 : i64, scratch_operands = 0 : i64, tpu.core_type = #tpu.core_type<tc>, window_params = [{transform_indices = @transform_0, window_bounds = array<i64: 128, 784>}, {transform_indices = @transform_1, window_bounds = array<i64: 128, 128>}, {pipeline_mode = #tpu.pipeline_mode<synchronous>, transform_indices = @transform_2, window_bounds = array<i64: 784, 512>}, {pipeline_mode = #tpu.pipeline_mode<synchronous>, transform_indices = @transform_3, window_bounds = array<i64: 1, 512>}, {pipeline_mode = #tpu.pipeline_mode<synchronous>, transform_indices = @transform_4, window_bounds = array<i64: 512, 256>}, {pipeline_mode = #tpu.pipeline_mode<synchronous>, transform_indices = @transform_5, window_bounds = array<i64: 1, 256>}, {pipeline_mode = #tpu.pipeline_mode<synchronous>, transform_indices = @transform_6, window_bounds = array<i64: 128, 512>}, {pipeline_mode = #tpu.pipeline_mode<synchronous>, transform_indices = @transform_7, window_bounds = array<i64: 1, 512>}, {pipeline_mode = #tpu.pipeline_mode<synchronous>, transform_indices = @transform_8, window_bounds = array<i64: 512, 784>}, {pipeline_mode = #tpu.pipeline_mode<synchronous>, transform_indices = @transform_9, window_bounds = array<i64: 1, 784>}, {transform_indices = @transform_10, window_bounds = array<i64: 128, 784>}, {transform_indices = @transform_11, window_bounds = array<i64: 128, 128>}, {transform_indices = @transform_12, window_bounds = array<i64: 128, 128>}]} {
    %c0 = arith.constant 0 : index
    %c0_0 = arith.constant 0 : index
    %0 = vector.load %arg1[%c0, %c0_0] : memref<128x784xbf16, #tpu.memory_space<vmem>>, vector<128x784xbf16>
    %c0_1 = arith.constant 0 : index
    %c0_2 = arith.constant 0 : index
    %1 = vector.load %arg3[%c0_1, %c0_2] : memref<784x512xbf16, #tpu.memory_space<vmem>>, vector<784x512xbf16>
    %cst = arith.constant dense<0.000000e+00> : vector<128x512xf32>
    %2 = tpu.matmul %0, %1, %cst {dimension_numbers = #tpu.dot_dimension_numbers<[1], [0], [0], [1], [0, 0, 1, 1], [], []>} : vector<128x784xbf16>, vector<784x512xbf16>, vector<128x512xf32> -> vector<128x512xf32>
    %c0_3 = arith.constant 0 : index
    %c0_4 = arith.constant 0 : index
    %3 = vector.load %arg4[%c0_3, %c0_4] : memref<1x512xf32, #tpu.memory_space<vmem>>, vector<1x512xf32>
    %4 = vector.broadcast %3 : vector<1x512xf32> to vector<128x512xf32>
    %5 = arith.addf %2, %4 : vector<128x512xf32>
    %cst_5 = arith.constant 0.000000e+00 : f32
    %6 = vector.broadcast %cst_5 : f32 to vector<128x512xf32>
    %7 = arith.maximumf %5, %6 : vector<128x512xf32>
    %8 = arith.truncf %7 : vector<128x512xf32> to vector<128x512xbf16>
    %c0_6 = arith.constant 0 : index
    %c0_7 = arith.constant 0 : index
    %9 = vector.load %arg5[%c0_6, %c0_7] : memref<512x256xbf16, #tpu.memory_space<vmem>>, vector<512x256xbf16>
    %cst_8 = arith.constant dense<0.000000e+00> : vector<128x256xf32>
    %10 = tpu.matmul %8, %9, %cst_8 {dimension_numbers = #tpu.dot_dimension_numbers<[1], [0], [0], [1], [0, 0, 1, 1], [], []>} : vector<128x512xbf16>, vector<512x256xbf16>, vector<128x256xf32> -> vector<128x256xf32>
    %c0_9 = arith.constant 0 : index
    %c0_10 = arith.constant 0 : index
    %11 = vector.load %arg6[%c0_9, %c0_10] : memref<1x256xf32, #tpu.memory_space<vmem>>, vector<1x256xf32>
    %12 = vector.broadcast %11 : vector<1x256xf32> to vector<128x256xf32>
    %13 = arith.addf %10, %12 : vector<128x256xf32>
    %14 = vector.extract_strided_slice %13 {offsets = [0, 0], sizes = [128, 128], strides = [1, 1]} : vector<128x256xf32> to vector<128x128xf32>
    %15 = vector.extract_strided_slice %13 {offsets = [0, 128], sizes = [128, 128], strides = [1, 1]} : vector<128x256xf32> to vector<128x128xf32>
    %cst_11 = arith.constant 5.000000e-01 : f32
    %16 = vector.broadcast %cst_11 : f32 to vector<128x128xf32>
    %17 = arith.mulf %16, %15 : vector<128x128xf32>
    %18 = math.exp %17 : vector<128x128xf32>
    %c0_12 = arith.constant 0 : index
    %c0_13 = arith.constant 0 : index
    %19 = vector.load %arg2[%c0_12, %c0_13] : memref<128x128xbf16, #tpu.memory_space<vmem>>, vector<128x128xbf16>
    %20 = arith.extf %19 : vector<128x128xbf16> to vector<128x128xf32>
    %21 = arith.mulf %20, %18 : vector<128x128xf32>
    %22 = arith.addf %21, %14 : vector<128x128xf32>
    %23 = arith.truncf %22 : vector<128x128xf32> to vector<128x128xbf16>
    %c0_14 = arith.constant 0 : index
    %c0_15 = arith.constant 0 : index
    %24 = vector.load %arg7[%c0_14, %c0_15] : memref<128x512xbf16, #tpu.memory_space<vmem>>, vector<128x512xbf16>
    %cst_16 = arith.constant dense<0.000000e+00> : vector<128x512xf32>
    %25 = tpu.matmul %23, %24, %cst_16 {dimension_numbers = #tpu.dot_dimension_numbers<[1], [0], [0], [1], [0, 0, 1, 1], [], []>} : vector<128x128xbf16>, vector<128x512xbf16>, vector<128x512xf32> -> vector<128x512xf32>
    %c0_17 = arith.constant 0 : index
    %c0_18 = arith.constant 0 : index
    %26 = vector.load %arg8[%c0_17, %c0_18] : memref<1x512xf32, #tpu.memory_space<vmem>>, vector<1x512xf32>
    %27 = vector.broadcast %26 : vector<1x512xf32> to vector<128x512xf32>
    %28 = arith.addf %25, %27 : vector<128x512xf32>
    %cst_19 = arith.constant 0.000000e+00 : f32
    %29 = vector.broadcast %cst_19 : f32 to vector<128x512xf32>
    %30 = arith.maximumf %28, %29 : vector<128x512xf32>
    %31 = arith.truncf %30 : vector<128x512xf32> to vector<128x512xbf16>
    %c0_20 = arith.constant 0 : index
    %c0_21 = arith.constant 0 : index
    %32 = vector.load %arg9[%c0_20, %c0_21] : memref<512x784xbf16, #tpu.memory_space<vmem>>, vector<512x784xbf16>
    %cst_22 = arith.constant dense<0.000000e+00> : vector<128x784xf32>
    %33 = tpu.matmul %31, %32, %cst_22 {dimension_numbers = #tpu.dot_dimension_numbers<[1], [0], [0], [1], [0, 0, 1, 1], [], []>} : vector<128x512xbf16>, vector<512x784xbf16>, vector<128x784xf32> -> vector<128x784xf32>
    %c0_23 = arith.constant 0 : index
    %c0_24 = arith.constant 0 : index
    %34 = vector.load %arg10[%c0_23, %c0_24] : memref<1x784xf32, #tpu.memory_space<vmem>>, vector<1x784xf32>
    %35 = vector.broadcast %34 : vector<1x784xf32> to vector<128x784xf32>
    %36 = arith.addf %33, %35 : vector<128x784xf32>
    %37 = arith.negf %36 : vector<128x784xf32>
    %38 = math.exp %37 : vector<128x784xf32>
    %cst_25 = arith.constant 1.000000e+00 : f32
    %39 = vector.broadcast %cst_25 : f32 to vector<128x784xf32>
    %40 = arith.addf %39, %38 : vector<128x784xf32>
    %41 = arith.divf %39, %40 : vector<128x784xf32>
    %42 = arith.truncf %41 : vector<128x784xf32> to vector<128x784xbf16>
    %c0_26 = arith.constant 0 : index
    %c0_27 = arith.constant 0 : index
    %43 = vector.load %arg11[%c0_26, %c0_27] : memref<128x784xbf16, #tpu.memory_space<vmem>>, vector<128x784xbf16>
    tpu.vector_store %arg11[%c0_26, %c0_27], %42 {strides = array<i32>} : memref<128x784xbf16, #tpu.memory_space<vmem>>, vector<128x784xbf16>,
    %c0_28 = arith.constant 0 : index
    %c0_29 = arith.constant 0 : index
    %44 = vector.load %arg12[%c0_28, %c0_29] : memref<128x128xf32, #tpu.memory_space<vmem>>, vector<128x128xf32>
    tpu.vector_store %arg12[%c0_28, %c0_29], %14 {strides = array<i32>} : memref<128x128xf32, #tpu.memory_space<vmem>>, vector<128x128xf32>,
    %c0_30 = arith.constant 0 : index
    %c0_31 = arith.constant 0 : index
    %45 = vector.load %arg13[%c0_30, %c0_31] : memref<128x128xf32, #tpu.memory_space<vmem>>, vector<128x128xf32>
    tpu.vector_store %arg13[%c0_30, %c0_31], %15 {strides = array<i32>} : memref<128x128xf32, #tpu.memory_space<vmem>>, vector<128x128xf32>,
    return
  }
  func.func @transform_0(%arg0: i32) -> (i32, i32) {
    %c0_i32 = arith.constant 0 : i32
    %c0_i32_0 = arith.constant 0 : i32
    return %arg0, %c0_i32 : i32, i32
  }
  func.func @transform_1(%arg0: i32) -> (i32, i32) {
    %c0_i32 = arith.constant 0 : i32
    %c0_i32_0 = arith.constant 0 : i32
    return %arg0, %c0_i32 : i32, i32
  }
  func.func @transform_2(%arg0: i32) -> (i32, i32) {
    %c0_i32 = arith.constant 0 : i32
    %c0_i32_0 = arith.constant 0 : i32
    %c0_i32_1 = arith.constant 0 : i32
    return %c0_i32, %c0_i32_0 : i32, i32
  }
  func.func @transform_3(%arg0: i32) -> (i32, i32) {
    %c0_i32 = arith.constant 0 : i32
    %c0_i32_0 = arith.constant 0 : i32
    %c0_i32_1 = arith.constant 0 : i32
    return %c0_i32, %c0_i32_0 : i32, i32
  }
  func.func @transform_4(%arg0: i32) -> (i32, i32) {
    %c0_i32 = arith.constant 0 : i32
    %c0_i32_0 = arith.constant 0 : i32
    %c0_i32_1 = arith.constant 0 : i32
    return %c0_i32, %c0_i32_0 : i32, i32
  }
  func.func @transform_5(%arg0: i32) -> (i32, i32) {
    %c0_i32 = arith.constant 0 : i32
    %c0_i32_0 = arith.constant 0 : i32
    %c0_i32_1 = arith.constant 0 : i32
    return %c0_i32, %c0_i32_0 : i32, i32
  }
  func.func @transform_6(%arg0: i32) -> (i32, i32) {
    %c0_i32 = arith.constant 0 : i32
    %c0_i32_0 = arith.constant 0 : i32
    %c0_i32_1 = arith.constant 0 : i32
    return %c0_i32, %c0_i32_0 : i32, i32
  }
  func.func @transform_7(%arg0: i32) -> (i32, i32) {
    %c0_i32 = arith.constant 0 : i32
    %c0_i32_0 = arith.constant 0 : i32
    %c0_i32_1 = arith.constant 0 : i32
    return %c0_i32, %c0_i32_0 : i32, i32
  }
  func.func @transform_8(%arg0: i32) -> (i32, i32) {
    %c0_i32 = arith.constant 0 : i32
    %c0_i32_0 = arith.constant 0 : i32
    %c0_i32_1 = arith.constant 0 : i32
    return %c0_i32, %c0_i32_0 : i32, i32
  }
  func.func @transform_9(%arg0: i32) -> (i32, i32) {
    %c0_i32 = arith.constant 0 : i32
    %c0_i32_0 = arith.constant 0 : i32
    %c0_i32_1 = arith.constant 0 : i32
    return %c0_i32, %c0_i32_0 : i32, i32
  }
  func.func @transform_10(%arg0: i32) -> (i32, i32) {
    %c0_i32 = arith.constant 0 : i32
    %c0_i32_0 = arith.constant 0 : i32
    return %arg0, %c0_i32 : i32, i32
  }
  func.func @transform_11(%arg0: i32) -> (i32, i32) {
    %c0_i32 = arith.constant 0 : i32
    %c0_i32_0 = arith.constant 0 : i32
    return %arg0, %c0_i32 : i32, i32
  }
  func.func @transform_12(%arg0: i32) -> (i32, i32) {
    %c0_i32 = arith.constant 0 : i32
    %c0_i32_0 = arith.constant 0 : i32
    return %arg0, %c0_i32 : i32, i32
  }
}

</mosaic_0001>

<llo_original>
// kernel: vae_forward.1
$region0: #{vae_forward.1}
  #allocation0 [shape = 'u32[]', space=smem, size = 0x4, offset = 0x4, fixed_abs, tag = 'smem constant byte address 0x4 - core index']
  #allocation1 [shape = 'u32[144,128]{1,0:T(1,128)}', space=vmem, size = 0x12000, scoped, tag = 'internal scratch']
  %s0 = inlined_call_operand.vmem [shape: bf16[512,784], index: 0, kind: input, shape index: {}]
  %s1 = inlined_call_operand.vmem [shape: bf16[512,128], index: 1, kind: input, shape index: {}]
  %s2 = inlined_call_operand.vmem [shape: bf16[784,512], index: 2, kind: input, shape index: {}]
  %s3 = inlined_call_operand.vmem [shape: f32[1,512], index: 3, kind: input, shape index: {}]
  %s4 = inlined_call_operand.vmem [shape: bf16[512,256], index: 4, kind: input, shape index: {}]
  %s5 = inlined_call_operand.vmem [shape: f32[1,256], index: 5, kind: input, shape index: {}]
  %s6 = inlined_call_operand.vmem [shape: bf16[128,512], index: 6, kind: input, shape index: {}]
  %s7 = inlined_call_operand.vmem [shape: f32[1,512], index: 7, kind: input, shape index: {}]
  %s8 = inlined_call_operand.vmem [shape: bf16[512,784], index: 8, kind: input, shape index: {}]
  %s9 = inlined_call_operand.vmem [shape: f32[1,784], index: 9, kind: input, shape index: {}]
  %s10 = inlined_call_operand.vmem [shape: bf16[512,784], index: 10, kind: output, shape index: {0}]
  %s11 = inlined_call_operand.vmem [shape: f32[512,128], index: 11, kind: output, shape index: {1}]
  %s12 = inlined_call_operand.vmem [shape: f32[512,128], index: 12, kind: output, shape index: {2}]
  %13 = xla_tuple %s10, %s11, %s12
  %s14 = sld [smem:[#allocation0]]
  $region89: #{vae_forward.1} parent=0
    _
  %s16 = ssub.s32 1, %s14
  %s17 = scalar_select 0, %s16, %s14
  loop: start=0, step=1, limit=6
  $region2: #{vae_forward.1} parent=0 // loop_pre_header
    _
  $region3: #{vae_forward.1} parent=0 // loop_header
    %s19 = sphi 0, %s23
    %p20 = scmp.ge.s32.totalorder %s19, 6
    %s29 = sphi 0, %s31
    %s32 = sphi 0, %s29
    %s33 = sphi 0, %s32
    %s49 = sphi 0, %s33
    %s55 = sphi 0, %s57
    %s58 = sphi 0, %s55
    %s59 = sphi 0, %s58
    %s75 = sphi 0, %s59
    %s79 = sphi 0, %s79
    %s81 = sphi 0, %s79
    %s82 = sphi 0, %s81
    %s96 = sphi 0, %s82
    %s100 = sphi 0, %s100
    %s102 = sphi 0, %s100
    %s103 = sphi 0, %s102
    %s117 = sphi 0, %s103
    %s121 = sphi 0, %s121
    %s123 = sphi 0, %s121
    %s124 = sphi 0, %s123
    %s138 = sphi 0, %s124
    %s142 = sphi 0, %s142
    %s144 = sphi 0, %s142
    %s145 = sphi 0, %s144
    %s159 = sphi 0, %s145
    %s163 = sphi 0, %s163
    %s165 = sphi 0, %s163
    %s166 = sphi 0, %s165
    %s180 = sphi 0, %s166
    %s184 = sphi 0, %s184
    %s186 = sphi 0, %s184
    %s187 = sphi 0, %s186
    %s201 = sphi 0, %s187
    %s205 = sphi 0, %s205
    %s207 = sphi 0, %s205
    %s208 = sphi 0, %s207
    %s222 = sphi 0, %s208
    %s226 = sphi 0, %s226
    %s228 = sphi 0, %s226
    %s229 = sphi 0, %s228
    %s243 = sphi 0, %s229
    %s249 = sphi 0, %s251
    %s252 = sphi 0, %s249
    %s253 = sphi 0, %s252
    %s269 = sphi 0, %s253
    %s275 = sphi 0, %s277
    %s278 = sphi 0, %s275
    %s279 = sphi 0, %s278
    %s295 = sphi 0, %s279
    %s301 = sphi 0, %s303
    %s304 = sphi 0, %s301
    %s305 = sphi 0, %s304
    %s321 = sphi 0, %s305
  $region4: #{vae_forward.1} parent=0 // loop_header_branch
    %22 = sbr.rel (%p20) target = $region8
  $region5: #{vae_forward.1} parent=0 // loop_body
    %s24 = ssub.s32 %s19, 1
    %s25 = ssub.s32 %s19, 2
    %s26 = sadd.s32 %s19, 1
    %s27 = ssub.s32 %s19, %s26
    %p28 = scmp.eq.s32.totalorder %s27, 0
    %s30 = sadd.s32 %s29, 1
    %s31 = scalar_select %p28, %s29, %s30
    %p34 = pneg %p28
    %p35 = scmp.eq.s32.totalorder %s19, 3
    %p36 = por %p34, %p35
    %p37 = scmp.ne.s32.totalorder %s29, %s32
    %p38 = scmp.eq.s32.totalorder %s19, 0
    %p39 = por %p37, %p38
    %p40 = scmp.ne.s32.totalorder %s29, %s32
    %p41 = scmp.eq.s32.totalorder %s24, 3
    %p42 = por %p40, %p41
    %p43 = scmp.ne.s32.totalorder %s32, %s33
    %p44 = scmp.eq.s32.totalorder %s24, 0
    %p45 = por %p43, %p44
    %p46 = scmp.ne.s32.totalorder %s32, %s33
    %p47 = scmp.eq.s32.totalorder %s25, 3
    %p48 = por %p46, %p47
    %p50 = scmp.ne.s32.totalorder %s33, %s49
    %p51 = scmp.eq.s32.totalorder %s25, 0
    %p52 = por %p50, %p51
    %s53 = ssub.s32 %s19, %s26
    %p54 = scmp.eq.s32.totalorder %s53, 0
    %s56 = sadd.s32 %s55, 1
    %s57 = scalar_select %p54, %s55, %s56
    %p60 = pneg %p54
    %p61 = scmp.eq.s32.totalorder %s19, 3
    %p62 = por %p60, %p61
    %p63 = scmp.ne.s32.totalorder %s55, %s58
    %p64 = scmp.eq.s32.totalorder %s19, 0
    %p65 = por %p63, %p64
    %p66 = scmp.ne.s32.totalorder %s55, %s58
    %p67 = scmp.eq.s32.totalorder %s24, 3
    %p68 = por %p66, %p67
    %p69 = scmp.ne.s32.totalorder %s58, %s59
    %p70 = scmp.eq.s32.totalorder %s24, 0
    %p71 = por %p69, %p70
    %p72 = scmp.ne.s32.totalorder %s58, %s59
    %p73 = scmp.eq.s32.totalorder %s25, 3
    %p74 = por %p72, %p73
    %p76 = scmp.ne.s32.totalorder %s59, %s75
    %p77 = scmp.eq.s32.totalorder %s25, 0
    %p78 = por %p76, %p77
    %s80 = sadd.s32 %s79, 1
    %p83 = scmp.eq.s32.totalorder %s19, 3
    %p84 = scmp.ne.s32.totalorder %s79, %s81
    %p85 = scmp.eq.s32.totalorder %s19, 0
    %p86 = por %p84, %p85
    %p87 = scmp.ne.s32.totalorder %s79, %s81
    %p88 = scmp.eq.s32.totalorder %s24, 3
    %p89 = por %p87, %p88
    %p90 = scmp.ne.s32.totalorder %s81, %s82
    %p91 = scmp.eq.s32.totalorder %s24, 0
    %p92 = por %p90, %p91
    %p93 = scmp.ne.s32.totalorder %s81, %s82
    %p94 = scmp.eq.s32.totalorder %s25, 3
    %p95 = por %p93, %p94
    %p97 = scmp.ne.s32.totalorder %s82, %s96
    %p98 = scmp.eq.s32.totalorder %s25, 0
    %p99 = por %p97, %p98
    %s101 = sadd.s32 %s100, 1
    %p104 = scmp.eq.s32.totalorder %s19, 3
    %p105 = scmp.ne.s32.totalorder %s100, %s102
    %p106 = scmp.eq.s32.totalorder %s19, 0
    %p107 = por %p105, %p106
    %p108 = scmp.ne.s32.totalorder %s100, %s102
    %p109 = scmp.eq.s32.totalorder %s24, 3
    %p110 = por %p108, %p109
    %p111 = scmp.ne.s32.totalorder %s102, %s103
    %p112 = scmp.eq.s32.totalorder %s24, 0
    %p113 = por %p111, %p112
    %p114 = scmp.ne.s32.totalorder %s102, %s103
    %p115 = scmp.eq.s32.totalorder %s25, 3
    %p116 = por %p114, %p115
    %p118 = scmp.ne.s32.totalorder %s103, %s117
    %p119 = scmp.eq.s32.totalorder %s25, 0
    %p120 = por %p118, %p119
    %s122 = sadd.s32 %s121, 1
    %p125 = scmp.eq.s32.totalorder %s19, 3
    %p126 = scmp.ne.s32.totalorder %s121, %s123
    %p127 = scmp.eq.s32.totalorder %s19, 0
    %p128 = por %p126, %p127
    %p129 = scmp.ne.s32.totalorder %s121, %s123
    %p130 = scmp.eq.s32.totalorder %s24, 3
    %p131 = por %p129, %p130
    %p132 = scmp.ne.s32.totalorder %s123, %s124
    %p133 = scmp.eq.s32.totalorder %s24, 0
    %p134 = por %p132, %p133
    %p135 = scmp.ne.s32.totalorder %s123, %s124
    %p136 = scmp.eq.s32.totalorder %s25, 3
    %p137 = por %p135, %p136
    %p139 = scmp.ne.s32.totalorder %s124, %s138
    %p140 = scmp.eq.s32.totalorder %s25, 0
    %p141 = por %p139, %p140
    %s143 = sadd.s32 %s142, 1
    %p146 = scmp.eq.s32.totalorder %s19, 3
    %p147 = scmp.ne.s32.totalorder %s142, %s144
    %p148 = scmp.eq.s32.totalorder %s19, 0
    %p149 = por %p147, %p148
    %p150 = scmp.ne.s32.totalorder %s142, %s144
    %p151 = scmp.eq.s32.totalorder %s24, 3
    %p152 = por %p150, %p151
    %p153 = scmp.ne.s32.totalorder %s144, %s145
    %p154 = scmp.eq.s32.totalorder %s24, 0
    %p155 = por %p153, %p154
    %p156 = scmp.ne.s32.totalorder %s144, %s145
    %p157 = scmp.eq.s32.totalorder %s25, 3
    %p158 = por %p156, %p157
    %p160 = scmp.ne.s32.totalorder %s145, %s159
    %p161 = scmp.eq.s32.totalorder %s25, 0
    %p162 = por %p160, %p161
    %s164 = sadd.s32 %s163, 1
    %p167 = scmp.eq.s32.totalorder %s19, 3
    %p168 = scmp.ne.s32.totalorder %s163, %s165
    %p169 = scmp.eq.s32.totalorder %s19, 0
    %p170 = por %p168, %p169
    %p171 = scmp.ne.s32.totalorder %s163, %s165
    %p172 = scmp.eq.s32.totalorder %s24, 3
    %p173 = por %p171, %p172
    %p174 = scmp.ne.s32.totalorder %s165, %s166
    %p175 = scmp.eq.s32.totalorder %s24, 0
    %p176 = por %p174, %p175
    %p177 = scmp.ne.s32.totalorder %s165, %s166
    %p178 = scmp.eq.s32.totalorder %s25, 3
    %p179 = por %p177, %p178
    %p181 = scmp.ne.s32.totalorder %s166, %s180
    %p182 = scmp.eq.s32.totalorder %s25, 0
    %p183 = por %p181, %p182
    %s185 = sadd.s32 %s184, 1
    %p188 = scmp.eq.s32.totalorder %s19, 3
    %p189 = scmp.ne.s32.totalorder %s184, %s186
    %p190 = scmp.eq.s32.totalorder %s19, 0
    %p191 = por %p189, %p190
    %p192 = scmp.ne.s32.totalorder %s184, %s186
    %p193 = scmp.eq.s32.totalorder %s24, 3
    %p194 = por %p192, %p193
    %p195 = scmp.ne.s32.totalorder %s186, %s187
    %p196 = scmp.eq.s32.totalorder %s24, 0
    %p197 = por %p195, %p196
    %p198 = scmp.ne.s32.totalorder %s186, %s187
    %p199 = scmp.eq.s32.totalorder %s25, 3
    %p200 = por %p198, %p199
    %p202 = scmp.ne.s32.totalorder %s187, %s201
    %p203 = scmp.eq.s32.totalorder %s25, 0
    %p204 = por %p202, %p203
    %s206 = sadd.s32 %s205, 1
    %p209 = scmp.eq.s32.totalorder %s19, 3
    %p210 = scmp.ne.s32.totalorder %s205, %s207
    %p211 = scmp.eq.s32.totalorder %s19, 0
    %p212 = por %p210, %p211
    %p213 = scmp.ne.s32.totalorder %s205, %s207
    %p214 = scmp.eq.s32.totalorder %s24, 3
    %p215 = por %p213, %p214
    %p216 = scmp.ne.s32.totalorder %s207, %s208
    %p217 = scmp.eq.s32.totalorder %s24, 0
    %p218 = por %p216, %p217
    %p219 = scmp.ne.s32.totalorder %s207, %s208
    %p220 = scmp.eq.s32.totalorder %s25, 3
    %p221 = por %p219, %p220
    %p223 = scmp.ne.s32.totalorder %s208, %s222
    %p224 = scmp.eq.s32.totalorder %s25, 0
    %p225 = por %p223, %p224
    %s227 = sadd.s32 %s226, 1
    %p230 = scmp.eq.s32.totalorder %s19, 3
    %p231 = scmp.ne.s32.totalorder %s226, %s228
    %p232 = scmp.eq.s32.totalorder %s19, 0
    %p233 = por %p231, %p232
    %p234 = scmp.ne.s32.totalorder %s226, %s228
    %p235 = scmp.eq.s32.totalorder %s24, 3
    %p236 = por %p234, %p235
    %p237 = scmp.ne.s32.totalorder %s228, %s229
    %p238 = scmp.eq.s32.totalorder %s24, 0
    %p239 = por %p237, %p238
    %p240 = scmp.ne.s32.totalorder %s228, %s229
    %p241 = scmp.eq.s32.totalorder %s25, 3
    %p242 = por %p240, %p241
    %p244 = scmp.ne.s32.totalorder %s229, %s243
    %p245 = scmp.eq.s32.totalorder %s25, 0
    %p246 = por %p244, %p245
    %s247 = ssub.s32 %s19, %s26
    %p248 = scmp.eq.s32.totalorder %s247, 0
    %s250 = sadd.s32 %s249, 1
    %s251 = scalar_select %p248, %s249, %s250
    %p254 = pneg %p248
    %p255 = scmp.eq.s32.totalorder %s19, 3
    %p256 = por %p254, %p255
    %p257 = scmp.ne.s32.totalorder %s249, %s252
    %p258 = scmp.eq.s32.totalorder %s19, 0
    %p259 = por %p257, %p258
    %p260 = scmp.ne.s32.totalorder %s249, %s252
    %p261 = scmp.eq.s32.totalorder %s24, 3
    %p262 = por %p260, %p261
    %p263 = scmp.ne.s32.totalorder %s252, %s253
    %p264 = scmp.eq.s32.totalorder %s24, 0
    %p265 = por %p263, %p264
    %p266 = scmp.ne.s32.totalorder %s252, %s253
    %p267 = scmp.eq.s32.totalorder %s25, 3
    %p268 = por %p266, %p267
    %p270 = scmp.ne.s32.totalorder %s253, %s269
    %p271 = scmp.eq.s32.totalorder %s25, 0
    %p272 = por %p270, %p271
    %s273 = ssub.s32 %s19, %s26
    %p274 = scmp.eq.s32.totalorder %s273, 0
    %s276 = sadd.s32 %s275, 1
    %s277 = scalar_select %p274, %s275, %s276
    %p280 = pneg %p274
    %p281 = scmp.eq.s32.totalorder %s19, 3
    %p282 = por %p280, %p281
    %p283 = scmp.ne.s32.totalorder %s275, %s278
    %p284 = scmp.eq.s32.totalorder %s19, 0
    %p285 = por %p283, %p284
    %p286 = scmp.ne.s32.totalorder %s275, %s278
    %p287 = scmp.eq.s32.totalorder %s24, 3
    %p288 = por %p286, %p287
    %p289 = scmp.ne.s32.totalorder %s278, %s279
    %p290 = scmp.eq.s32.totalorder %s24, 0
    %p291 = por %p289, %p290
    %p292 = scmp.ne.s32.totalorder %s278, %s279
    %p293 = scmp.eq.s32.totalorder %s25, 3
    %p294 = por %p292, %p293
    %p296 = scmp.ne.s32.totalorder %s279, %s295
    %p297 = scmp.eq.s32.totalorder %s25, 0
    %p298 = por %p296, %p297
    %s299 = ssub.s32 %s19, %s26
    %p300 = scmp.eq.s32.totalorder %s299, 0
    %s302 = sadd.s32 %s301, 1
    %s303 = scalar_select %p300, %s301, %s302
    %p306 = pneg %p300
    %p307 = scmp.eq.s32.totalorder %s19, 3
    %p308 = por %p306, %p307
    %p309 = scmp.ne.s32.totalorder %s301, %s304
    %p310 = scmp.eq.s32.totalorder %s19, 0
    %p311 = por %p309, %p310
    %p312 = scmp.ne.s32.totalorder %s301, %s304
    %p313 = scmp.eq.s32.totalorder %s24, 3
    %p314 = por %p312, %p313
    %p315 = scmp.ne.s32.totalorder %s304, %s305
    %p316 = scmp.eq.s32.totalorder %s24, 0
    %p317 = por %p315, %p316
    %p318 = scmp.ne.s32.totalorder %s304, %s305
    %p319 = scmp.eq.s32.totalorder %s25, 3
    %p320 = por %p318, %p319
    %p322 = scmp.ne.s32.totalorder %s305, %s321
    %p323 = scmp.eq.s32.totalorder %s25, 0
    %p324 = por %p322, %p323
    %p325 = scmp.le.s32.totalorder 1, %s19
    %p326 = scmp.lt.s32.totalorder %s19, 5
    %p327 = pnand %p325, %p326
    %p328 = pneg %p327
    // Predicated region
    $region9: #{vae_forward.1} parent=5 // pred_check
      _
    $region10: #{vae_forward.1} parent=5 // pred_check_branch
      %330 = sbr.rel (%p327) target = $region12
    $region11: #{vae_forward.1} parent=5 // pred_region
      %s331 = ssub.s32 %s19, 1
      // Predicated region
      $region13: #{vae_forward.1} parent=11 // pred_check
        %p332 = pneg %p92
      $region14: #{vae_forward.1} parent=11 // pred_check_branch
        %334 = sbr.rel (%p332) target = $region16
      $region15: #{vae_forward.1} parent=11 // pred_region
        _
      $region16: #{vae_forward.1} parent=11 // pred_fallthru
        _
      // Predicated region
      $region17: #{vae_forward.1} parent=11 // pred_check
        %p335 = pneg %p113
      $region18: #{vae_forward.1} parent=11 // pred_check_branch
        %337 = sbr.rel (%p335) target = $region20
      $region19: #{vae_forward.1} parent=11 // pred_region
        _
      $region20: #{vae_forward.1} parent=11 // pred_fallthru
        _
      // Predicated region
      $region21: #{vae_forward.1} parent=11 // pred_check
        %p338 = pneg %p134
      $region22: #{vae_forward.1} parent=11 // pred_check_branch
        %340 = sbr.rel (%p338) target = $region24
      $region23: #{vae_forward.1} parent=11 // pred_region
        _
      $region24: #{vae_forward.1} parent=11 // pred_fallthru
        _
      // Predicated region
      $region25: #{vae_forward.1} parent=11 // pred_check
        %p341 = pneg %p155
      $region26: #{vae_forward.1} parent=11 // pred_check_branch
        %343 = sbr.rel (%p341) target = $region28
      $region27: #{vae_forward.1} parent=11 // pred_region
        _
      $region28: #{vae_forward.1} parent=11 // pred_fallthru
        _
      // Predicated region
      $region29: #{vae_forward.1} parent=11 // pred_check
        %p344 = pneg %p176
      $region30: #{vae_forward.1} parent=11 // pred_check_branch
        %346 = sbr.rel (%p344) target = $region32
      $region31: #{vae_forward.1} parent=11 // pred_region
        _
      $region32: #{vae_forward.1} parent=11 // pred_fallthru
        _
      // Predicated region
      $region33: #{vae_forward.1} parent=11 // pred_check
        %p347 = pneg %p197
      $region34: #{vae_forward.1} parent=11 // pred_check_branch
        %349 = sbr.rel (%p347) target = $region36
      $region35: #{vae_forward.1} parent=11 // pred_region
        _
      $region36: #{vae_forward.1} parent=11 // pred_fallthru
        _
      // Predicated region
      $region37: #{vae_forward.1} parent=11 // pred_check
        %p350 = pneg %p218
      $region38: #{vae_forward.1} parent=11 // pred_check_branch
        %352 = sbr.rel (%p350) target = $region40
      $region39: #{vae_forward.1} parent=11 // pred_region
        _
      $region40: #{vae_forward.1} parent=11 // pred_fallthru
        _
      // Predicated region
      $region41: #{vae_forward.1} parent=11 // pred_check
        %p353 = pneg %p239
      $region42: #{vae_forward.1} parent=11 // pred_check_branch
        %355 = sbr.rel (%p353) target = $region44
      $region43: #{vae_forward.1} parent=11 // pred_region
        _
      $region44: #{vae_forward.1} parent=11 // pred_fallthru
        _
    $region12: #{vae_forward.1} parent=5 // pred_fallthru
      _
    %p356 = scmp.lt.s32.totalorder %s19, 4
    // Predicated region
    $region45: #{vae_forward.1} parent=5 // pred_check
      %p357 = pneg %p356
    $region46: #{vae_forward.1} parent=5 // pred_check_branch
      %359 = sbr.rel (%p357) target = $region48
    $region47: #{vae_forward.1} parent=5 // pred_region
      // Predicated region
      $region49: #{vae_forward.1} parent=47 // pred_check
        %p360 = pneg %p39
      $region50: #{vae_forward.1} parent=47 // pred_check_branch
        %362 = sbr.rel (%p360) target = $region52
      $region51: #{vae_forward.1} parent=47 // pred_region
        %s363 = smul.u32 16, %s19
        %p364 = scmp.lt.s32.totalorder %s363, 63
        %s365 = scalar_select %p364, %s363, 63
        %s366 = smul.addr %s365, 7
        %s367 = smul.addr %s366, 4
        %s368 = scalar_lea.vmem %s0, %s367
        %s369 = smul.u32 16, %s19
      $region52: #{vae_forward.1} parent=47 // pred_fallthru
        _
      // Predicated region
      $region53: #{vae_forward.1} parent=47 // pred_check
        %p370 = pneg %p65
      $region54: #{vae_forward.1} parent=47 // pred_check_branch
        %372 = sbr.rel (%p370) target = $region56
      $region55: #{vae_forward.1} parent=47 // pred_region
        %s373 = smul.u32 16, %s19
        %p374 = scmp.lt.s32.totalorder %s373, 63
        %s375 = scalar_select %p374, %s373, 63
        %s376 = smul.addr %s375, 4
        %s377 = scalar_lea.vmem %s1, %s376
        %s378 = smul.u32 16, %s19
      $region56: #{vae_forward.1} parent=47 // pred_fallthru
        _
    $region48: #{vae_forward.1} parent=5 // pred_fallthru
      _
    %p379 = scmp.le.s32.totalorder 1, %s19
    %p380 = scmp.lt.s32.totalorder %s19, 5
    %p381 = pnand %p379, %p380
    %p382 = pneg %p381
    // Predicated region
    $region57: #{vae_forward.1} parent=5 // pred_check
      _
    $region58: #{vae_forward.1} parent=5 // pred_check_branch
      %384 = sbr.rel (%p381) target = $region60
    $region59: #{vae_forward.1} parent=5 // pred_region
      %s385 = ssub.s32 %s19, 1
      %s386 = smul.u32 16, %s24
      %p387 = scmp.lt.s32.totalorder %s386, 63
      %s388 = scalar_select %p387, %s386, 63
      %s389 = smul.addr %s388, 7
      %s390 = smul.addr %s389, 4
      %s391 = scalar_lea.vmem %s0, %s390
      %p392 = pneg %p45
      %p393 = pneg %p42
      %s394 = smul.u32 16, %s24
      %p395 = scmp.lt.s32.totalorder %s394, 63
      %s396 = scalar_select %p395, %s394, 63
      %s397 = smul.addr %s396, 4
      %s398 = scalar_lea.vmem %s1, %s397
      %p399 = pneg %p71
      %p400 = pneg %p68
      %p401 = pneg %p92
      %p402 = pneg %p89
      %p403 = pneg %p113
      %p404 = pneg %p110
      %p405 = pneg %p134
      %p406 = pneg %p131
      %p407 = pneg %p155
      %p408 = pneg %p152
      %p409 = pneg %p176
      %p410 = pneg %p173
      %p411 = pneg %p197
      %p412 = pneg %p194
      %p413 = pneg %p218
      %p414 = pneg %p215
      %p415 = pneg %p239
      %p416 = pneg %p236
      %p417 = pneg %p265
      %p418 = pneg %p262
      %s419 = smul.u32 16, %s24
      %p420 = scmp.lt.s32.totalorder %s419, 63
      %s421 = scalar_select %p420, %s419, 63
      %s422 = smul.addr %s421, 7
      %s423 = smul.addr %s422, 4
      %s424 = scalar_lea.vmem %s10, %s423
      %p425 = pneg %p291
      %p426 = pneg %p288
      %s427 = smul.u32 16, %s24
      %p428 = scmp.lt.s32.totalorder %s427, 63
      %s429 = scalar_select %p428, %s427, 63
      %s430 = smul.addr %s429, 8
      %s431 = scalar_lea.vmem %s11, %s430
      %p432 = pneg %p317
      %p433 = pneg %p314
      %s434 = smul.u32 16, %s24
      %p435 = scmp.lt.s32.totalorder %s434, 63
      %s436 = scalar_select %p435, %s434, 63
      %s437 = smul.addr %s436, 8
      %s438 = scalar_lea.vmem %s12, %s437
      %s439 = smul.u32 16, %s24
      %p440 = scmp.lt.s32.totalorder %s439, 63
      %s441 = scalar_select %p440, %s439, 63
      %s442 = smul.addr %s441, 7
      %s443 = smul.addr %s442, 4
      %s444 = scalar_lea.vmem %s0, %s443
      %s445 = smul.u32 16, %s24
      %s446 = smul.u32 16, %s24
      %p447 = scmp.lt.s32.totalorder %s446, 63
      %s448 = scalar_select %p447, %s446, 63
      %s449 = smul.addr %s448, 4
      %s450 = scalar_lea.vmem %s1, %s449
      %s451 = smul.u32 16, %s24
      %s452 = smul.u32 16, %s24
      %p453 = scmp.lt.s32.totalorder %s452, 63
      %s454 = scalar_select %p453, %s452, 63
      %s455 = smul.addr %s454, 7
      %s456 = smul.addr %s455, 4
      %s457 = scalar_lea.vmem %s10, %s456
      %s458 = smul.u32 16, %s24
      %s459 = smul.u32 16, %s24
      %p460 = scmp.lt.s32.totalorder %s459, 63
      %s461 = scalar_select %p460, %s459, 63
      %s462 = smul.addr %s461, 8
      %s463 = scalar_lea.vmem %s11, %s462
      %s464 = smul.u32 16, %s24
      %s465 = smul.u32 16, %s24
      %p466 = scmp.lt.s32.totalorder %s465, 63
      %s467 = scalar_select %p466, %s465, 63
      %s468 = smul.addr %s467, 8
      %s469 = scalar_lea.vmem %s12, %s468
      %s470 = smul.u32 16, %s24
      %v472 = vld [vmem:[%s444] sm:$0xff]
      %v473 = vld [vmem:[%s444 + $0x8] sm:$0xff]
      %v474 = vld [vmem:[%s444 + $0x10] sm:$0xff]
      %v475 = vld [vmem:[%s444 + $0x18] sm:$0xf]
      %v476 = vld [vmem:[%s444 + $0x1c] sm:$0xff]
      %v477 = vld [vmem:[%s444 + $0x24] sm:$0xff]
      %v478 = vld [vmem:[%s444 + $0x2c] sm:$0xff]
      %v479 = vld [vmem:[%s444 + $0x34] sm:$0xf]
      %v480 = vld [vmem:[%s444 + $0x38] sm:$0xff]
      %v481 = vld [vmem:[%s444 + $0x40] sm:$0xff]
      %v482 = vld [vmem:[%s444 + $0x48] sm:$0xff]
      %v483 = vld [vmem:[%s444 + $0x50] sm:$0xf]
      %v484 = vld [vmem:[%s444 + $0x54] sm:$0xff]
      %v485 = vld [vmem:[%s444 + $0x5c] sm:$0xff]
      %v486 = vld [vmem:[%s444 + $0x64] sm:$0xff]
      %v487 = vld [vmem:[%s444 + $0x6c] sm:$0xf]
      %v488 = vld [vmem:[%s444 + $0x70] sm:$0xff]
      %v489 = vld [vmem:[%s444 + $0x78] sm:$0xff]
      %v490 = vld [vmem:[%s444 + $0x80] sm:$0xff]
      %v491 = vld [vmem:[%s444 + $0x88] sm:$0xf]
      %v492 = vld [vmem:[%s444 + $0x8c] sm:$0xff]
      %v493 = vld [vmem:[%s444 + $0x94] sm:$0xff]
      %v494 = vld [vmem:[%s444 + $0x9c] sm:$0xff]
      %v495 = vld [vmem:[%s444 + $0xa4] sm:$0xf]
      %v496 = vld [vmem:[%s444 + $0xa8] sm:$0xff]
      %v497 = vld [vmem:[%s444 + $0xb0] sm:$0xff]
      %v498 = vld [vmem:[%s444 + $0xb8] sm:$0xff]
      %v499 = vld [vmem:[%s444 + $0xc0] sm:$0xf]
      %v500 = vld [vmem:[%s444 + $0xc4] sm:$0xff]
      %v501 = vld [vmem:[%s444 + $0xcc] sm:$0xff]
      %v502 = vld [vmem:[%s444 + $0xd4] sm:$0xff]
      %v503 = vld [vmem:[%s444 + $0xdc] sm:$0xf]
      %v504 = vld [vmem:[%s444 + $0xe0] sm:$0xff]
      %v505 = vld [vmem:[%s444 + $0xe8] sm:$0xff]
      %v506 = vld [vmem:[%s444 + $0xf0] sm:$0xff]
      %v507 = vld [vmem:[%s444 + $0xf8] sm:$0xf]
      %v508 = vld [vmem:[%s444 + $0xfc] sm:$0xff]
      %v509 = vld [vmem:[%s444 + $0x104] sm:$0xff]
      %v510 = vld [vmem:[%s444 + $0x10c] sm:$0xff]
      %v511 = vld [vmem:[%s444 + $0x114] sm:$0xf]
      %v512 = vld [vmem:[%s444 + $0x118] sm:$0xff]
      %v513 = vld [vmem:[%s444 + $0x120] sm:$0xff]
      %v514 = vld [vmem:[%s444 + $0x128] sm:$0xff]
      %v515 = vld [vmem:[%s444 + $0x130] sm:$0xf]
      %v516 = vld [vmem:[%s444 + $0x134] sm:$0xff]
      %v517 = vld [vmem:[%s444 + $0x13c] sm:$0xff]
      %v518 = vld [vmem:[%s444 + $0x144] sm:$0xff]
      %v519 = vld [vmem:[%s444 + $0x14c] sm:$0xf]
      %v520 = vld [vmem:[%s444 + $0x150] sm:$0xff]
      %v521 = vld [vmem:[%s444 + $0x158] sm:$0xff]
      %v522 = vld [vmem:[%s444 + $0x160] sm:$0xff]
      %v523 = vld [vmem:[%s444 + $0x168] sm:$0xf]
      %v524 = vld [vmem:[%s444 + $0x16c] sm:$0xff]
      %v525 = vld [vmem:[%s444 + $0x174] sm:$0xff]
      %v526 = vld [vmem:[%s444 + $0x17c] sm:$0xff]
      %v527 = vld [vmem:[%s444 + $0x184] sm:$0xf]
      %v528 = vld [vmem:[%s444 + $0x188] sm:$0xff]
      %v529 = vld [vmem:[%s444 + $0x190] sm:$0xff]
      %v530 = vld [vmem:[%s444 + $0x198] sm:$0xff]
      %v531 = vld [vmem:[%s444 + $0x1a0] sm:$0xf]
      %v532 = vld [vmem:[%s444 + $0x1a4] sm:$0xff]
      %v533 = vld [vmem:[%s444 + $0x1ac] sm:$0xff]
      %v534 = vld [vmem:[%s444 + $0x1b4] sm:$0xff]
      %v535 = vld [vmem:[%s444 + $0x1bc] sm:$0xf]
      %v536 = vld [vmem:[%s2] sm:$0xff]
      %v537 = vld [vmem:[%s2 + $0x8] sm:$0xff]
      %v538 = vld [vmem:[%s2 + $0x10] sm:$0xff]
      %v539 = vld [vmem:[%s2 + $0x18] sm:$0xff]
      %v540 = vld [vmem:[%s2 + $0x20] sm:$0xff]
      %v541 = vld [vmem:[%s2 + $0x28] sm:$0xff]
      %v542 = vld [vmem:[%s2 + $0x30] sm:$0xff]
      %v543 = vld [vmem:[%s2 + $0x38] sm:$0xff]
      %v544 = vld [vmem:[%s2 + $0x40] sm:$0xff]
      %v545 = vld [vmem:[%s2 + $0x48] sm:$0xff]
      %v546 = vld [vmem:[%s2 + $0x50] sm:$0xff]
      %v547 = vld [vmem:[%s2 + $0x58] sm:$0xff]
      %v548 = vld [vmem:[%s2 + $0x60] sm:$0xff]
      %v549 = vld [vmem:[%s2 + $0x68] sm:$0xff]
      %v550 = vld [vmem:[%s2 + $0x70] sm:$0xff]
      %v551 = vld [vmem:[%s2 + $0x78] sm:$0xff]
      %v552 = vld [vmem:[%s2 + $0x80] sm:$0xff]
      %v553 = vld [vmem:[%s2 + $0x88] sm:$0xff]
      %v554 = vld [vmem:[%s2 + $0x90] sm:$0xff]
      %v555 = vld [vmem:[%s2 + $0x98] sm:$0xff]
      %v556 = vld [vmem:[%s2 + $0xa0] sm:$0xff]
      %v557 = vld [vmem:[%s2 + $0xa8] sm:$0xff]
      %v558 = vld [vmem:[%s2 + $0xb0] sm:$0xff]
      %v559 = vld [vmem:[%s2 + $0xb8] sm:$0xff]
      %v560 = vld [vmem:[%s2 + $0xc0] sm:$0xff]
      %v561 = vld [vmem:[%s2 + $0xc8] sm:$0xff]
      %v562 = vld [vmem:[%s2 + $0xd0] sm:$0xff]
      %v563 = vld [vmem:[%s2 + $0xd8] sm:$0xff]
      %v564 = vld [vmem:[%s2 + $0xe0] sm:$0xff]
      %v565 = vld [vmem:[%s2 + $0xe8] sm:$0xff]
      %v566 = vld [vmem:[%s2 + $0xf0] sm:$0xff]
      %v567 = vld [vmem:[%s2 + $0xf8] sm:$0xff]
      %v568 = vld [vmem:[%s2 + $0x100] sm:$0xff]
      %v569 = vld [vmem:[%s2 + $0x108] sm:$0xff]
      %v570 = vld [vmem:[%s2 + $0x110] sm:$0xff]
      %v571 = vld [vmem:[%s2 + $0x118] sm:$0xff]
      %v572 = vld [vmem:[%s2 + $0x120] sm:$0xff]
      %v573 = vld [vmem:[%s2 + $0x128] sm:$0xff]
      %v574 = vld [vmem:[%s2 + $0x130] sm:$0xff]
      %v575 = vld [vmem:[%s2 + $0x138] sm:$0xff]
      %v576 = vld [vmem:[%s2 + $0x140] sm:$0xff]
      %v577 = vld [vmem:[%s2 + $0x148] sm:$0xff]
      %v578 = vld [vmem:[%s2 + $0x150] sm:$0xff]
      %v579 = vld [vmem:[%s2 + $0x158] sm:$0xff]
      %v580 = vld [vmem:[%s2 + $0x160] sm:$0xff]
      %v581 = vld [vmem:[%s2 + $0x168] sm:$0xff]
      %v582 = vld [vmem:[%s2 + $0x170] sm:$0xff]
      %v583 = vld [vmem:[%s2 + $0x178] sm:$0xff]
      %v584 = vld [vmem:[%s2 + $0x180] sm:$0xff]
      %v585 = vld [vmem:[%s2 + $0x188] sm:$0xff]
      %v586 = vld [vmem:[%s2 + $0x190] sm:$0xff]
      %v587 = vld [vmem:[%s2 + $0x198] sm:$0xff]
      %v588 = vld [vmem:[%s2 + $0x1a0] sm:$0xff]
      %v589 = vld [vmem:[%s2 + $0x1a8] sm:$0xff]
      %v590 = vld [vmem:[%s2 + $0x1b0] sm:$0xff]
      %v591 = vld [vmem:[%s2 + $0x1b8] sm:$0xff]
      %v592 = vld [vmem:[%s2 + $0x1c0] sm:$0xff]
      %v593 = vld [vmem:[%s2 + $0x1c8] sm:$0xff]
      %v594 = vld [vmem:[%s2 + $0x1d0] sm:$0xff]
      %v595 = vld [vmem:[%s2 + $0x1d8] sm:$0xff]
      %v596 = vld [vmem:[%s2 + $0x1e0] sm:$0xff]
      %v597 = vld [vmem:[%s2 + $0x1e8] sm:$0xff]
      %v598 = vld [vmem:[%s2 + $0x1f0] sm:$0xff]
      %v599 = vld [vmem:[%s2 + $0x1f8] sm:$0xff]
      %v600 = vld [vmem:[%s2 + $0x200] sm:$0xff]
      %v601 = vld [vmem:[%s2 + $0x208] sm:$0xff]
      %v602 = vld [vmem:[%s2 + $0x210] sm:$0xff]
      %v603 = vld [vmem:[%s2 + $0x218] sm:$0xff]
      %v604 = vld [vmem:[%s2 + $0x220] sm:$0xff]
      %v605 = vld [vmem:[%s2 + $0x228] sm:$0xff]
      %v606 = vld [vmem:[%s2 + $0x230] sm:$0xff]
      %v607 = vld [vmem:[%s2 + $0x238] sm:$0xff]
      %v608 = vld [vmem:[%s2 + $0x240] sm:$0xff]
      %v609 = vld [vmem:[%s2 + $0x248] sm:$0xff]
      %v610 = vld [vmem:[%s2 + $0x250] sm:$0xff]
      %v611 = vld [vmem:[%s2 + $0x258] sm:$0xff]
      %v612 = vld [vmem:[%s2 + $0x260] sm:$0xff]
      %v613 = vld [vmem:[%s2 + $0x268] sm:$0xff]
      %v614 = vld [vmem:[%s2 + $0x270] sm:$0xff]
      %v615 = vld [vmem:[%s2 + $0x278] sm:$0xff]
      %v616 = vld [vmem:[%s2 + $0x280] sm:$0xff]
      %v617 = vld [vmem:[%s2 + $0x288] sm:$0xff]
      %v618 = vld [vmem:[%s2 + $0x290] sm:$0xff]
      %v619 = vld [vmem:[%s2 + $0x298] sm:$0xff]
      %v620 = vld [vmem:[%s2 + $0x2a0] sm:$0xff]
      %v621 = vld [vmem:[%s2 + $0x2a8] sm:$0xff]
      %v622 = vld [vmem:[%s2 + $0x2b0] sm:$0xff]
      %v623 = vld [vmem:[%s2 + $0x2b8] sm:$0xff]
      %v624 = vld [vmem:[%s2 + $0x2c0] sm:$0xff]
      %v625 = vld [vmem:[%s2 + $0x2c8] sm:$0xff]
      %v626 = vld [vmem:[%s2 + $0x2d0] sm:$0xff]
      %v627 = vld [vmem:[%s2 + $0x2d8] sm:$0xff]
      %v628 = vld [vmem:[%s2 + $0x2e0] sm:$0xff]
      %v629 = vld [vmem:[%s2 + $0x2e8] sm:$0xff]
      %v630 = vld [vmem:[%s2 + $0x2f0] sm:$0xff]
      %v631 = vld [vmem:[%s2 + $0x2f8] sm:$0xff]
      %v632 = vld [vmem:[%s2 + $0x300] sm:$0xff]
      %v633 = vld [vmem:[%s2 + $0x308] sm:$0xff]
      %v634 = vld [vmem:[%s2 + $0x310] sm:$0xff]
      %v635 = vld [vmem:[%s2 + $0x318] sm:$0xff]
      %v636 = vld [vmem:[%s2 + $0x320] sm:$0xff]
      %v637 = vld [vmem:[%s2 + $0x328] sm:$0xff]
      %v638 = vld [vmem:[%s2 + $0x330] sm:$0xff]
      %v639 = vld [vmem:[%s2 + $0x338] sm:$0xff]
      %v640 = vld [vmem:[%s2 + $0x340] sm:$0xff]
      %v641 = vld [vmem:[%s2 + $0x348] sm:$0xff]
      %v642 = vld [vmem:[%s2 + $0x350] sm:$0xff]
      %v643 = vld [vmem:[%s2 + $0x358] sm:$0xff]
      %v644 = vld [vmem:[%s2 + $0x360] sm:$0xff]
      %v645 = vld [vmem:[%s2 + $0x368] sm:$0xff]
      %v646 = vld [vmem:[%s2 + $0x370] sm:$0xff]
      %v647 = vld [vmem:[%s2 + $0x378] sm:$0xff]
      %v648 = vld [vmem:[%s2 + $0x380] sm:$0xff]
      %v649 = vld [vmem:[%s2 + $0x388] sm:$0xff]
      %v650 = vld [vmem:[%s2 + $0x390] sm:$0xff]
      %v651 = vld [vmem:[%s2 + $0x398] sm:$0xff]
      %v652 = vld [vmem:[%s2 + $0x3a0] sm:$0xff]
      %v653 = vld [vmem:[%s2 + $0x3a8] sm:$0xff]
      %v654 = vld [vmem:[%s2 + $0x3b0] sm:$0xff]
      %v655 = vld [vmem:[%s2 + $0x3b8] sm:$0xff]
      %v656 = vld [vmem:[%s2 + $0x3c0] sm:$0xff]
      %v657 = vld [vmem:[%s2 + $0x3c8] sm:$0xff]
      %v658 = vld [vmem:[%s2 + $0x3d0] sm:$0xff]
      %v659 = vld [vmem:[%s2 + $0x3d8] sm:$0xff]
      %v660 = vld [vmem:[%s2 + $0x3e0] sm:$0xff]
      %v661 = vld [vmem:[%s2 + $0x3e8] sm:$0xff]
      %v662 = vld [vmem:[%s2 + $0x3f0] sm:$0xff]
      %v663 = vld [vmem:[%s2 + $0x3f8] sm:$0xff]
      %v664 = vld [vmem:[%s2 + $0x400] sm:$0xff]
      %v665 = vld [vmem:[%s2 + $0x408] sm:$0xff]
      %v666 = vld [vmem:[%s2 + $0x410] sm:$0xff]
      %v667 = vld [vmem:[%s2 + $0x418] sm:$0xff]
      %v668 = vld [vmem:[%s2 + $0x420] sm:$0xff]
      %v669 = vld [vmem:[%s2 + $0x428] sm:$0xff]
      %v670 = vld [vmem:[%s2 + $0x430] sm:$0xff]
      %v671 = vld [vmem:[%s2 + $0x438] sm:$0xff]
      %v672 = vld [vmem:[%s2 + $0x440] sm:$0xff]
      %v673 = vld [vmem:[%s2 + $0x448] sm:$0xff]
      %v674 = vld [vmem:[%s2 + $0x450] sm:$0xff]
      %v675 = vld [vmem:[%s2 + $0x458] sm:$0xff]
      %v676 = vld [vmem:[%s2 + $0x460] sm:$0xff]
      %v677 = vld [vmem:[%s2 + $0x468] sm:$0xff]
      %v678 = vld [vmem:[%s2 + $0x470] sm:$0xff]
      %v679 = vld [vmem:[%s2 + $0x478] sm:$0xff]
      %v680 = vld [vmem:[%s2 + $0x480] sm:$0xff]
      %v681 = vld [vmem:[%s2 + $0x488] sm:$0xff]
      %v682 = vld [vmem:[%s2 + $0x490] sm:$0xff]
      %v683 = vld [vmem:[%s2 + $0x498] sm:$0xff]
      %v684 = vld [vmem:[%s2 + $0x4a0] sm:$0xff]
      %v685 = vld [vmem:[%s2 + $0x4a8] sm:$0xff]
      %v686 = vld [vmem:[%s2 + $0x4b0] sm:$0xff]
      %v687 = vld [vmem:[%s2 + $0x4b8] sm:$0xff]
      %v688 = vld [vmem:[%s2 + $0x4c0] sm:$0xff]
      %v689 = vld [vmem:[%s2 + $0x4c8] sm:$0xff]
      %v690 = vld [vmem:[%s2 + $0x4d0] sm:$0xff]
      %v691 = vld [vmem:[%s2 + $0x4d8] sm:$0xff]
      %v692 = vld [vmem:[%s2 + $0x4e0] sm:$0xff]
      %v693 = vld [vmem:[%s2 + $0x4e8] sm:$0xff]
      %v694 = vld [vmem:[%s2 + $0x4f0] sm:$0xff]
      %v695 = vld [vmem:[%s2 + $0x4f8] sm:$0xff]
      %v696 = vld [vmem:[%s2 + $0x500] sm:$0xff]
      %v697 = vld [vmem:[%s2 + $0x508] sm:$0xff]
      %v698 = vld [vmem:[%s2 + $0x510] sm:$0xff]
      %v699 = vld [vmem:[%s2 + $0x518] sm:$0xff]
      %v700 = vld [vmem:[%s2 + $0x520] sm:$0xff]
      %v701 = vld [vmem:[%s2 + $0x528] sm:$0xff]
      %v702 = vld [vmem:[%s2 + $0x530] sm:$0xff]
      %v703 = vld [vmem:[%s2 + $0x538] sm:$0xff]
      %v704 = vld [vmem:[%s2 + $0x540] sm:$0xff]
      %v705 = vld [vmem:[%s2 + $0x548] sm:$0xff]
      %v706 = vld [vmem:[%s2 + $0x550] sm:$0xff]
      %v707 = vld [vmem:[%s2 + $0x558] sm:$0xff]
      %v708 = vld [vmem:[%s2 + $0x560] sm:$0xff]
      %v709 = vld [vmem:[%s2 + $0x568] sm:$0xff]
      %v710 = vld [vmem:[%s2 + $0x570] sm:$0xff]
      %v711 = vld [vmem:[%s2 + $0x578] sm:$0xff]
      %v712 = vld [vmem:[%s2 + $0x580] sm:$0xff]
      %v713 = vld [vmem:[%s2 + $0x588] sm:$0xff]
      %v714 = vld [vmem:[%s2 + $0x590] sm:$0xff]
      %v715 = vld [vmem:[%s2 + $0x598] sm:$0xff]
      %v716 = vld [vmem:[%s2 + $0x5a0] sm:$0xff]
      %v717 = vld [vmem:[%s2 + $0x5a8] sm:$0xff]
      %v718 = vld [vmem:[%s2 + $0x5b0] sm:$0xff]
      %v719 = vld [vmem:[%s2 + $0x5b8] sm:$0xff]
      %v720 = vld [vmem:[%s2 + $0x5c0] sm:$0xff]
      %v721 = vld [vmem:[%s2 + $0x5c8] sm:$0xff]
      %v722 = vld [vmem:[%s2 + $0x5d0] sm:$0xff]
      %v723 = vld [vmem:[%s2 + $0x5d8] sm:$0xff]
      %v724 = vld [vmem:[%s2 + $0x5e0] sm:$0xff]
      %v725 = vld [vmem:[%s2 + $0x5e8] sm:$0xff]
      %v726 = vld [vmem:[%s2 + $0x5f0] sm:$0xff]
      %v727 = vld [vmem:[%s2 + $0x5f8] sm:$0xff]
      %v728 = vld [vmem:[%s2 + $0x600] sm:$0xff]
      %v729 = vld [vmem:[%s2 + $0x608] sm:$0xff]
      %v730 = vld [vmem:[%s2 + $0x610] sm:$0xff]
      %v731 = vld [vmem:[%s2 + $0x618] sm:$0xff]
      %v732 = vld [vmem:[%s3] sm:$0xf]
      %v734 = vlaneseq
      %v735 = vshrl.u32 %v734, 7
      %v736 = vsub.s32 0, %v735
      %v737 = vrot.slane %v732, %v736
      %v738 = vlaneseq
      %v739 = vshrl.u32 %v738, 7
      %v740 = vsub.s32 1, %v739
      %v741 = vrot.slane %v732, %v740
      %v742 = vlaneseq
      %v743 = vshrl.u32 %v742, 7
      %v744 = vsub.s32 2, %v743
      %v745 = vrot.slane %v732, %v744
      %v746 = vlaneseq
      %v747 = vshrl.u32 %v746, 7
      %v748 = vsub.s32 3, %v747
      %v749 = vrot.slane %v732, %v748
      %v818 = vunpack.c.l.b16 %v472
      %v819 = vunpack.c.h.b16 %v472
      %v820 = vunpack.c.l.b16 %v473
      %v821 = vunpack.c.h.b16 %v473
      %v822 = vunpack.c.l.b16 %v474
      %v823 = vunpack.c.h.b16 %v474
      %v824 = vunpack.c.l.b16 %v475
      %v825 = vunpack.c.l.b16 %v476
      %v826 = vunpack.c.h.b16 %v476
      %v827 = vunpack.c.l.b16 %v477
      %v828 = vunpack.c.h.b16 %v477
      %v829 = vunpack.c.l.b16 %v478
      %v830 = vunpack.c.h.b16 %v478
      %v831 = vunpack.c.l.b16 %v479
      %v832 = vunpack.c.l.b16 %v480
      %v833 = vunpack.c.h.b16 %v480
      %v834 = vunpack.c.l.b16 %v481
      %v835 = vunpack.c.h.b16 %v481
      %v836 = vunpack.c.l.b16 %v482
      %v837 = vunpack.c.h.b16 %v482
      %v838 = vunpack.c.l.b16 %v483
      %v839 = vunpack.c.l.b16 %v484
      %v840 = vunpack.c.h.b16 %v484
      %v841 = vunpack.c.l.b16 %v485
      %v842 = vunpack.c.h.b16 %v485
      %v843 = vunpack.c.l.b16 %v486
      %v844 = vunpack.c.h.b16 %v486
      %v845 = vunpack.c.l.b16 %v487
      %v846 = vunpack.c.l.b16 %v488
      %v847 = vunpack.c.h.b16 %v488
      %v848 = vunpack.c.l.b16 %v489
      %v849 = vunpack.c.h.b16 %v489
      %v850 = vunpack.c.l.b16 %v490
      %v851 = vunpack.c.h.b16 %v490
      %v852 = vunpack.c.l.b16 %v491
      %v853 = vunpack.c.l.b16 %v492
      %v854 = vunpack.c.h.b16 %v492
      %v855 = vunpack.c.l.b16 %v493
      %v856 = vunpack.c.h.b16 %v493
      %v857 = vunpack.c.l.b16 %v494
      %v858 = vunpack.c.h.b16 %v494
      %v859 = vunpack.c.l.b16 %v495
      %v860 = vunpack.c.l.b16 %v496
      %v861 = vunpack.c.h.b16 %v496
      %v862 = vunpack.c.l.b16 %v497
      %v863 = vunpack.c.h.b16 %v497
      %v864 = vunpack.c.l.b16 %v498
      %v865 = vunpack.c.h.b16 %v498
      %v866 = vunpack.c.l.b16 %v499
      %v867 = vunpack.c.l.b16 %v500
      %v868 = vunpack.c.h.b16 %v500
      %v869 = vunpack.c.l.b16 %v501
      %v870 = vunpack.c.h.b16 %v501
      %v871 = vunpack.c.l.b16 %v502
      %v872 = vunpack.c.h.b16 %v502
      %v873 = vunpack.c.l.b16 %v503
      %v874 = vunpack.c.l.b16 %v504
      %v875 = vunpack.c.h.b16 %v504
      %v876 = vunpack.c.l.b16 %v505
      %v877 = vunpack.c.h.b16 %v505
      %v878 = vunpack.c.l.b16 %v506
      %v879 = vunpack.c.h.b16 %v506
      %v880 = vunpack.c.l.b16 %v507
      %v881 = vunpack.c.l.b16 %v508
      %v882 = vunpack.c.h.b16 %v508
      %v883 = vunpack.c.l.b16 %v509
      %v884 = vunpack.c.h.b16 %v509
      %v885 = vunpack.c.l.b16 %v510
      %v886 = vunpack.c.h.b16 %v510
      %v887 = vunpack.c.l.b16 %v511
      %v888 = vunpack.c.l.b16 %v512
      %v889 = vunpack.c.h.b16 %v512
      %v890 = vunpack.c.l.b16 %v513
      %v891 = vunpack.c.h.b16 %v513
      %v892 = vunpack.c.l.b16 %v514
      %v893 = vunpack.c.h.b16 %v514
      %v894 = vunpack.c.l.b16 %v515
      %v895 = vunpack.c.l.b16 %v516
      %v896 = vunpack.c.h.b16 %v516
      %v897 = vunpack.c.l.b16 %v517
      %v898 = vunpack.c.h.b16 %v517
      %v899 = vunpack.c.l.b16 %v518
      %v900 = vunpack.c.h.b16 %v518
      %v901 = vunpack.c.l.b16 %v519
      %v902 = vunpack.c.l.b16 %v520
      %v903 = vunpack.c.h.b16 %v520
      %v904 = vunpack.c.l.b16 %v521
      %v905 = vunpack.c.h.b16 %v521
      %v906 = vunpack.c.l.b16 %v522
      %v907 = vunpack.c.h.b16 %v522
      %v908 = vunpack.c.l.b16 %v523
      %v909 = vunpack.c.l.b16 %v524
      %v910 = vunpack.c.h.b16 %v524
      %v911 = vunpack.c.l.b16 %v525
      %v912 = vunpack.c.h.b16 %v525
      %v913 = vunpack.c.l.b16 %v526
      %v914 = vunpack.c.h.b16 %v526
      %v915 = vunpack.c.l.b16 %v527
      %v916 = vunpack.c.l.b16 %v528
      %v917 = vunpack.c.h.b16 %v528
      %v918 = vunpack.c.l.b16 %v529
      %v919 = vunpack.c.h.b16 %v529
      %v920 = vunpack.c.l.b16 %v530
      %v921 = vunpack.c.h.b16 %v530
      %v922 = vunpack.c.l.b16 %v531
      %v923 = vunpack.c.l.b16 %v532
      %v924 = vunpack.c.h.b16 %v532
      %v925 = vunpack.c.l.b16 %v533
      %v926 = vunpack.c.h.b16 %v533
      %v927 = vunpack.c.l.b16 %v534
      %v928 = vunpack.c.h.b16 %v534
      %v929 = vunpack.c.l.b16 %v535
      %v930 = vpack.c.b16 %v825, %v818
      %v931 = vpack.c.b16 %v826, %v819
      %v932 = vpack.c.b16 %v827, %v820
      %v933 = vpack.c.b16 %v828, %v821
      %v934 = vpack.c.b16 %v829, %v822
      %v935 = vpack.c.b16 %v830, %v823
      %v936 = vpack.c.b16 %v831, %v824
      %v937 = vpack.c.b16 %v839, %v832
      %v938 = vpack.c.b16 %v840, %v833
      %v939 = vpack.c.b16 %v841, %v834
      %v940 = vpack.c.b16 %v842, %v835
      %v941 = vpack.c.b16 %v843, %v836
      %v942 = vpack.c.b16 %v844, %v837
      %v943 = vpack.c.b16 %v845, %v838
      %v944 = vpack.c.b16 %v853, %v846
      %v945 = vpack.c.b16 %v854, %v847
      %v946 = vpack.c.b16 %v855, %v848
      %v947 = vpack.c.b16 %v856, %v849
      %v948 = vpack.c.b16 %v857, %v850
      %v949 = vpack.c.b16 %v858, %v851
      %v950 = vpack.c.b16 %v859, %v852
      %v951 = vpack.c.b16 %v867, %v860
      %v952 = vpack.c.b16 %v868, %v861
      %v953 = vpack.c.b16 %v869, %v862
      %v954 = vpack.c.b16 %v870, %v863
      %v955 = vpack.c.b16 %v871, %v864
      %v956 = vpack.c.b16 %v872, %v865
      %v957 = vpack.c.b16 %v873, %v866
      %v958 = vpack.c.b16 %v881, %v874
      %v959 = vpack.c.b16 %v882, %v875
      %v960 = vpack.c.b16 %v883, %v876
      %v961 = vpack.c.b16 %v884, %v877
      %v962 = vpack.c.b16 %v885, %v878
      %v963 = vpack.c.b16 %v886, %v879
      %v964 = vpack.c.b16 %v887, %v880
      %v965 = vpack.c.b16 %v895, %v888
      %v966 = vpack.c.b16 %v896, %v889
      %v967 = vpack.c.b16 %v897, %v890
      %v968 = vpack.c.b16 %v898, %v891
      %v969 = vpack.c.b16 %v899, %v892
      %v970 = vpack.c.b16 %v900, %v893
      %v971 = vpack.c.b16 %v901, %v894
      %v972 = vpack.c.b16 %v909, %v902
      %v973 = vpack.c.b16 %v910, %v903
      %v974 = vpack.c.b16 %v911, %v904
      %v975 = vpack.c.b16 %v912, %v905
      %v976 = vpack.c.b16 %v913, %v906
      %v977 = vpack.c.b16 %v914, %v907
      %v978 = vpack.c.b16 %v915, %v908
      %v979 = vpack.c.b16 %v923, %v916
      %v980 = vpack.c.b16 %v924, %v917
      %v981 = vpack.c.b16 %v925, %v918
      %v982 = vpack.c.b16 %v926, %v919
      %v983 = vpack.c.b16 %v927, %v920
      %v984 = vpack.c.b16 %v928, %v921
      %v985 = vpack.c.b16 %v929, %v922
      %v1230 = vunpack.c.l.b16 %v536
      %v1231 = vunpack.c.h.b16 %v536
      %v1232 = vunpack.c.l.b16 %v537
      %v1233 = vunpack.c.h.b16 %v537
      %v1234 = vunpack.c.l.b16 %v538
      %v1235 = vunpack.c.h.b16 %v538
      %v1236 = vunpack.c.l.b16 %v539
      %v1237 = vunpack.c.h.b16 %v539
      %v1238 = vunpack.c.l.b16 %v540
      %v1239 = vunpack.c.h.b16 %v540
      %v1240 = vunpack.c.l.b16 %v541
      %v1241 = vunpack.c.h.b16 %v541
      %v1242 = vunpack.c.l.b16 %v542
      %v1243 = vunpack.c.h.b16 %v542
      %v1244 = vunpack.c.l.b16 %v543
      %v1245 = vunpack.c.h.b16 %v543
      %v1246 = vunpack.c.l.b16 %v544
      %v1247 = vunpack.c.h.b16 %v544
      %v1248 = vunpack.c.l.b16 %v545
      %v1249 = vunpack.c.h.b16 %v545
      %v1250 = vunpack.c.l.b16 %v546
      %v1251 = vunpack.c.h.b16 %v546
      %v1252 = vunpack.c.l.b16 %v547
      %v1253 = vunpack.c.h.b16 %v547
      %v1254 = vunpack.c.l.b16 %v548
      %v1255 = vunpack.c.h.b16 %v548
      %v1256 = vunpack.c.l.b16 %v549
      %v1257 = vunpack.c.h.b16 %v549
      %v1258 = vunpack.c.l.b16 %v550
      %v1259 = vunpack.c.h.b16 %v550
      %v1260 = vunpack.c.l.b16 %v551
      %v1261 = vunpack.c.h.b16 %v551
      %v1262 = vunpack.c.l.b16 %v552
      %v1263 = vunpack.c.h.b16 %v552
      %v1264 = vunpack.c.l.b16 %v553
      %v1265 = vunpack.c.h.b16 %v553
      %v1266 = vunpack.c.l.b16 %v554
      %v1267 = vunpack.c.h.b16 %v554
      %v1268 = vunpack.c.l.b16 %v555
      %v1269 = vunpack.c.h.b16 %v555
      %v1270 = vunpack.c.l.b16 %v556
      %v1271 = vunpack.c.h.b16 %v556
      %v1272 = vunpack.c.l.b16 %v557
      %v1273 = vunpack.c.h.b16 %v557
      %v1274 = vunpack.c.l.b16 %v558
      %v1275 = vunpack.c.h.b16 %v558
      %v1276 = vunpack.c.l.b16 %v559
      %v1277 = vunpack.c.h.b16 %v559
      %v1278 = vunpack.c.l.b16 %v560
      %v1279 = vunpack.c.h.b16 %v560
      %v1280 = vunpack.c.l.b16 %v561
      %v1281 = vunpack.c.h.b16 %v561
      %v1282 = vunpack.c.l.b16 %v562
      %v1283 = vunpack.c.h.b16 %v562
      %v1284 = vunpack.c.l.b16 %v563
      %v1285 = vunpack.c.h.b16 %v563
      %v1286 = vunpack.c.l.b16 %v564
      %v1287 = vunpack.c.h.b16 %v564
      %v1288 = vunpack.c.l.b16 %v565
      %v1289 = vunpack.c.h.b16 %v565
      %v1290 = vunpack.c.l.b16 %v566
      %v1291 = vunpack.c.h.b16 %v566
      %v1292 = vunpack.c.l.b16 %v567
      %v1293 = vunpack.c.h.b16 %v567
      %v1294 = vunpack.c.l.b16 %v568
      %v1295 = vunpack.c.h.b16 %v568
      %v1296 = vunpack.c.l.b16 %v569
      %v1297 = vunpack.c.h.b16 %v569
      %v1298 = vunpack.c.l.b16 %v570
      %v1299 = vunpack.c.h.b16 %v570
      %v1300 = vunpack.c.l.b16 %v571
      %v1301 = vunpack.c.h.b16 %v571
      %v1302 = vunpack.c.l.b16 %v572
      %v1303 = vunpack.c.h.b16 %v572
      %v1304 = vunpack.c.l.b16 %v573
      %v1305 = vunpack.c.h.b16 %v573
      %v1306 = vunpack.c.l.b16 %v574
      %v1307 = vunpack.c.h.b16 %v574
      %v1308 = vunpack.c.l.b16 %v575
      %v1309 = vunpack.c.h.b16 %v575
      %v1310 = vunpack.c.l.b16 %v576
      %v1311 = vunpack.c.h.b16 %v576
      %v1312 = vunpack.c.l.b16 %v577
      %v1313 = vunpack.c.h.b16 %v577
      %v1314 = vunpack.c.l.b16 %v578
      %v1315 = vunpack.c.h.b16 %v578
      %v1316 = vunpack.c.l.b16 %v579
      %v1317 = vunpack.c.h.b16 %v579
      %v1318 = vunpack.c.l.b16 %v580
      %v1319 = vunpack.c.h.b16 %v580
      %v1320 = vunpack.c.l.b16 %v581
      %v1321 = vunpack.c.h.b16 %v581
      %v1322 = vunpack.c.l.b16 %v582
      %v1323 = vunpack.c.h.b16 %v582
      %v1324 = vunpack.c.l.b16 %v583
      %v1325 = vunpack.c.h.b16 %v583
      %v1326 = vunpack.c.l.b16 %v584
      %v1327 = vunpack.c.h.b16 %v584
      %v1328 = vunpack.c.l.b16 %v585
      %v1329 = vunpack.c.h.b16 %v585
      %v1330 = vunpack.c.l.b16 %v586
      %v1331 = vunpack.c.h.b16 %v586
      %v1332 = vunpack.c.l.b16 %v587
      %v1333 = vunpack.c.h.b16 %v587
      %v1334 = vunpack.c.l.b16 %v588
      %v1335 = vunpack.c.h.b16 %v588
      %v1336 = vunpack.c.l.b16 %v589
      %v1337 = vunpack.c.h.b16 %v589
      %v1338 = vunpack.c.l.b16 %v590
      %v1339 = vunpack.c.h.b16 %v590
      %v1340 = vunpack.c.l.b16 %v591
      %v1341 = vunpack.c.h.b16 %v591
      %v1342 = vunpack.c.l.b16 %v592
      %v1343 = vunpack.c.h.b16 %v592
      %v1344 = vunpack.c.l.b16 %v593
      %v1345 = vunpack.c.h.b16 %v593
      %v1346 = vunpack.c.l.b16 %v594
      %v1347 = vunpack.c.h.b16 %v594
      %v1348 = vunpack.c.l.b16 %v595
      %v1349 = vunpack.c.h.b16 %v595
      %v1350 = vunpack.c.l.b16 %v596
      %v1351 = vunpack.c.h.b16 %v596
      %v1352 = vunpack.c.l.b16 %v597
      %v1353 = vunpack.c.h.b16 %v597
      %v1354 = vunpack.c.l.b16 %v598
      %v1355 = vunpack.c.h.b16 %v598
      %v1356 = vunpack.c.l.b16 %v599
      %v1357 = vunpack.c.h.b16 %v599
      %v1358 = vunpack.c.l.b16 %v600
      %v1359 = vunpack.c.h.b16 %v600
      %v1360 = vunpack.c.l.b16 %v601
      %v1361 = vunpack.c.h.b16 %v601
      %v1362 = vunpack.c.l.b16 %v602
      %v1363 = vunpack.c.h.b16 %v602
      %v1364 = vunpack.c.l.b16 %v603
      %v1365 = vunpack.c.h.b16 %v603
      %v1366 = vunpack.c.l.b16 %v604
      %v1367 = vunpack.c.h.b16 %v604
      %v1368 = vunpack.c.l.b16 %v605
      %v1369 = vunpack.c.h.b16 %v605
      %v1370 = vunpack.c.l.b16 %v606
      %v1371 = vunpack.c.h.b16 %v606
      %v1372 = vunpack.c.l.b16 %v607
      %v1373 = vunpack.c.h.b16 %v607
      %v1374 = vunpack.c.l.b16 %v608
      %v1375 = vunpack.c.h.b16 %v608
      %v1376 = vunpack.c.l.b16 %v609
      %v1377 = vunpack.c.h.b16 %v609
      %v1378 = vunpack.c.l.b16 %v610
      %v1379 = vunpack.c.h.b16 %v610
      %v1380 = vunpack.c.l.b16 %v611
      %v1381 = vunpack.c.h.b16 %v611
      %v1382 = vunpack.c.l.b16 %v612
      %v1383 = vunpack.c.h.b16 %v612
      %v1384 = vunpack.c.l.b16 %v613
      %v1385 = vunpack.c.h.b16 %v613
      %v1386 = vunpack.c.l.b16 %v614
      %v1387 = vunpack.c.h.b16 %v614
      %v1388 = vunpack.c.l.b16 %v615
      %v1389 = vunpack.c.h.b16 %v615
      %v1390 = vunpack.c.l.b16 %v616
      %v1391 = vunpack.c.h.b16 %v616
      %v1392 = vunpack.c.l.b16 %v617
      %v1393 = vunpack.c.h.b16 %v617
      %v1394 = vunpack.c.l.b16 %v618
      %v1395 = vunpack.c.h.b16 %v618
      %v1396 = vunpack.c.l.b16 %v619
      %v1397 = vunpack.c.h.b16 %v619
      %v1398 = vunpack.c.l.b16 %v620
      %v1399 = vunpack.c.h.b16 %v620
      %v1400 = vunpack.c.l.b16 %v621
      %v1401 = vunpack.c.h.b16 %v621
      %v1402 = vunpack.c.l.b16 %v622
      %v1403 = vunpack.c.h.b16 %v622
      %v1404 = vunpack.c.l.b16 %v623
      %v1405 = vunpack.c.h.b16 %v623
      %v1406 = vunpack.c.l.b16 %v624
      %v1407 = vunpack.c.h.b16 %v624
      %v1408 = vunpack.c.l.b16 %v625
      %v1409 = vunpack.c.h.b16 %v625
      %v1410 = vunpack.c.l.b16 %v626
      %v1411 = vunpack.c.h.b16 %v626
      %v1412 = vunpack.c.l.b16 %v627
      %v1413 = vunpack.c.h.b16 %v627
      %v1414 = vunpack.c.l.b16 %v628
      %v1415 = vunpack.c.h.b16 %v628
      %v1416 = vunpack.c.l.b16 %v629
      %v1417 = vunpack.c.h.b16 %v629
      %v1418 = vunpack.c.l.b16 %v630
      %v1419 = vunpack.c.h.b16 %v630
      %v1420 = vunpack.c.l.b16 %v631
      %v1421 = vunpack.c.h.b16 %v631
      %v1422 = vunpack.c.l.b16 %v632
      %v1423 = vunpack.c.h.b16 %v632
      %v1424 = vunpack.c.l.b16 %v633
      %v1425 = vunpack.c.h.b16 %v633
      %v1426 = vunpack.c.l.b16 %v634
      %v1427 = vunpack.c.h.b16 %v634
      %v1428 = vunpack.c.l.b16 %v635
      %v1429 = vunpack.c.h.b16 %v635
      %v1430 = vunpack.c.l.b16 %v636
      %v1431 = vunpack.c.h.b16 %v636
      %v1432 = vunpack.c.l.b16 %v637
      %v1433 = vunpack.c.h.b16 %v637
      %v1434 = vunpack.c.l.b16 %v638
      %v1435 = vunpack.c.h.b16 %v638
      %v1436 = vunpack.c.l.b16 %v639
      %v1437 = vunpack.c.h.b16 %v639
      %v1438 = vunpack.c.l.b16 %v640
      %v1439 = vunpack.c.h.b16 %v640
      %v1440 = vunpack.c.l.b16 %v641
      %v1441 = vunpack.c.h.b16 %v641
      %v1442 = vunpack.c.l.b16 %v642
      %v1443 = vunpack.c.h.b16 %v642
      %v1444 = vunpack.c.l.b16 %v643
      %v1445 = vunpack.c.h.b16 %v643
      %v1446 = vunpack.c.l.b16 %v644
      %v1447 = vunpack.c.h.b16 %v644
      %v1448 = vunpack.c.l.b16 %v645
      %v1449 = vunpack.c.h.b16 %v645
      %v1450 = vunpack.c.l.b16 %v646
      %v1451 = vunpack.c.h.b16 %v646
      %v1452 = vunpack.c.l.b16 %v647
      %v1453 = vunpack.c.h.b16 %v647
      %v1454 = vunpack.c.l.b16 %v648
      %v1455 = vunpack.c.h.b16 %v648
      %v1456 = vunpack.c.l.b16 %v649
      %v1457 = vunpack.c.h.b16 %v649
      %v1458 = vunpack.c.l.b16 %v650
      %v1459 = vunpack.c.h.b16 %v650
      %v1460 = vunpack.c.l.b16 %v651
      %v1461 = vunpack.c.h.b16 %v651
      %v1462 = vunpack.c.l.b16 %v652
      %v1463 = vunpack.c.h.b16 %v652
      %v1464 = vunpack.c.l.b16 %v653
      %v1465 = vunpack.c.h.b16 %v653
      %v1466 = vunpack.c.l.b16 %v654
      %v1467 = vunpack.c.h.b16 %v654
      %v1468 = vunpack.c.l.b16 %v655
      %v1469 = vunpack.c.h.b16 %v655
      %v1470 = vunpack.c.l.b16 %v656
      %v1471 = vunpack.c.h.b16 %v656
      %v1472 = vunpack.c.l.b16 %v657
      %v1473 = vunpack.c.h.b16 %v657
      %v1474 = vunpack.c.l.b16 %v658
      %v1475 = vunpack.c.h.b16 %v658
      %v1476 = vunpack.c.l.b16 %v659
      %v1477 = vunpack.c.h.b16 %v659
      %v1478 = vunpack.c.l.b16 %v660
      %v1479 = vunpack.c.h.b16 %v660
      %v1480 = vunpack.c.l.b16 %v661
      %v1481 = vunpack.c.h.b16 %v661
      %v1482 = vunpack.c.l.b16 %v662
      %v1483 = vunpack.c.h.b16 %v662
      %v1484 = vunpack.c.l.b16 %v663
      %v1485 = vunpack.c.h.b16 %v663
      %v1486 = vunpack.c.l.b16 %v664
      %v1487 = vunpack.c.h.b16 %v664
      %v1488 = vunpack.c.l.b16 %v665
      %v1489 = vunpack.c.h.b16 %v665
      %v1490 = vunpack.c.l.b16 %v666
      %v1491 = vunpack.c.h.b16 %v666
      %v1492 = vunpack.c.l.b16 %v667
      %v1493 = vunpack.c.h.b16 %v667
      %v1494 = vunpack.c.l.b16 %v668
      %v1495 = vunpack.c.h.b16 %v668
      %v1496 = vunpack.c.l.b16 %v669
      %v1497 = vunpack.c.h.b16 %v669
      %v1498 = vunpack.c.l.b16 %v670
      %v1499 = vunpack.c.h.b16 %v670
      %v1500 = vunpack.c.l.b16 %v671
      %v1501 = vunpack.c.h.b16 %v671
      %v1502 = vunpack.c.l.b16 %v672
      %v1503 = vunpack.c.h.b16 %v672
      %v1504 = vunpack.c.l.b16 %v673
      %v1505 = vunpack.c.h.b16 %v673
      %v1506 = vunpack.c.l.b16 %v674
      %v1507 = vunpack.c.h.b16 %v674
      %v1508 = vunpack.c.l.b16 %v675
      %v1509 = vunpack.c.h.b16 %v675
      %v1510 = vunpack.c.l.b16 %v676
      %v1511 = vunpack.c.h.b16 %v676
      %v1512 = vunpack.c.l.b16 %v677
      %v1513 = vunpack.c.h.b16 %v677
      %v1514 = vunpack.c.l.b16 %v678
      %v1515 = vunpack.c.h.b16 %v678
      %v1516 = vunpack.c.l.b16 %v679
      %v1517 = vunpack.c.h.b16 %v679
      %v1518 = vunpack.c.l.b16 %v680
      %v1519 = vunpack.c.h.b16 %v680
      %v1520 = vunpack.c.l.b16 %v681
      %v1521 = vunpack.c.h.b16 %v681
      %v1522 = vunpack.c.l.b16 %v682
      %v1523 = vunpack.c.h.b16 %v682
      %v1524 = vunpack.c.l.b16 %v683
      %v1525 = vunpack.c.h.b16 %v683
      %v1526 = vunpack.c.l.b16 %v684
      %v1527 = vunpack.c.h.b16 %v684
      %v1528 = vunpack.c.l.b16 %v685
      %v1529 = vunpack.c.h.b16 %v685
      %v1530 = vunpack.c.l.b16 %v686
      %v1531 = vunpack.c.h.b16 %v686
      %v1532 = vunpack.c.l.b16 %v687
      %v1533 = vunpack.c.h.b16 %v687
      %v1534 = vunpack.c.l.b16 %v688
      %v1535 = vunpack.c.h.b16 %v688
      %v1536 = vunpack.c.l.b16 %v689
      %v1537 = vunpack.c.h.b16 %v689
      %v1538 = vunpack.c.l.b16 %v690
      %v1539 = vunpack.c.h.b16 %v690
      %v1540 = vunpack.c.l.b16 %v691
      %v1541 = vunpack.c.h.b16 %v691
      %v1542 = vunpack.c.l.b16 %v692
      %v1543 = vunpack.c.h.b16 %v692
      %v1544 = vunpack.c.l.b16 %v693
      %v1545 = vunpack.c.h.b16 %v693
      %v1546 = vunpack.c.l.b16 %v694
      %v1547 = vunpack.c.h.b16 %v694
      %v1548 = vunpack.c.l.b16 %v695
      %v1549 = vunpack.c.h.b16 %v695
      %v1550 = vunpack.c.l.b16 %v696
      %v1551 = vunpack.c.h.b16 %v696
      %v1552 = vunpack.c.l.b16 %v697
      %v1553 = vunpack.c.h.b16 %v697
      %v1554 = vunpack.c.l.b16 %v698
      %v1555 = vunpack.c.h.b16 %v698
      %v1556 = vunpack.c.l.b16 %v699
      %v1557 = vunpack.c.h.b16 %v699
      %v1558 = vunpack.c.l.b16 %v700
      %v1559 = vunpack.c.h.b16 %v700
      %v1560 = vunpack.c.l.b16 %v701
      %v1561 = vunpack.c.h.b16 %v701
      %v1562 = vunpack.c.l.b16 %v702
      %v1563 = vunpack.c.h.b16 %v702
      %v1564 = vunpack.c.l.b16 %v703
      %v1565 = vunpack.c.h.b16 %v703
      %v1566 = vunpack.c.l.b16 %v704
      %v1567 = vunpack.c.h.b16 %v704
      %v1568 = vunpack.c.l.b16 %v705
      %v1569 = vunpack.c.h.b16 %v705
      %v1570 = vunpack.c.l.b16 %v706
      %v1571 = vunpack.c.h.b16 %v706
      %v1572 = vunpack.c.l.b16 %v707
      %v1573 = vunpack.c.h.b16 %v707
      %v1574 = vunpack.c.l.b16 %v708
      %v1575 = vunpack.c.h.b16 %v708
      %v1576 = vunpack.c.l.b16 %v709
      %v1577 = vunpack.c.h.b16 %v709
      %v1578 = vunpack.c.l.b16 %v710
      %v1579 = vunpack.c.h.b16 %v710
      %v1580 = vunpack.c.l.b16 %v711
      %v1581 = vunpack.c.h.b16 %v711
      %v1582 = vunpack.c.l.b16 %v712
      %v1583 = vunpack.c.h.b16 %v712
      %v1584 = vunpack.c.l.b16 %v713
      %v1585 = vunpack.c.h.b16 %v713
      %v1586 = vunpack.c.l.b16 %v714
      %v1587 = vunpack.c.h.b16 %v714
      %v1588 = vunpack.c.l.b16 %v715
      %v1589 = vunpack.c.h.b16 %v715
      %v1590 = vunpack.c.l.b16 %v716
      %v1591 = vunpack.c.h.b16 %v716
      %v1592 = vunpack.c.l.b16 %v717
      %v1593 = vunpack.c.h.b16 %v717
      %v1594 = vunpack.c.l.b16 %v718
      %v1595 = vunpack.c.h.b16 %v718
      %v1596 = vunpack.c.l.b16 %v719
      %v1597 = vunpack.c.h.b16 %v719
      %v1598 = vunpack.c.l.b16 %v720
      %v1599 = vunpack.c.h.b16 %v720
      %v1600 = vunpack.c.l.b16 %v721
      %v1601 = vunpack.c.h.b16 %v721
      %v1602 = vunpack.c.l.b16 %v722
      %v1603 = vunpack.c.h.b16 %v722
      %v1604 = vunpack.c.l.b16 %v723
      %v1605 = vunpack.c.h.b16 %v723
      %v1606 = vunpack.c.l.b16 %v724
      %v1607 = vunpack.c.h.b16 %v724
      %v1608 = vunpack.c.l.b16 %v725
      %v1609 = vunpack.c.h.b16 %v725
      %v1610 = vunpack.c.l.b16 %v726
      %v1611 = vunpack.c.h.b16 %v726
      %v1612 = vunpack.c.l.b16 %v727
      %v1613 = vunpack.c.h.b16 %v727
      %v1614 = vunpack.c.l.b16 %v728
      %v1615 = vunpack.c.h.b16 %v728
      %v1616 = vunpack.c.l.b16 %v729
      %v1617 = vunpack.c.h.b16 %v729
      %v1618 = vunpack.c.l.b16 %v730
      %v1619 = vunpack.c.h.b16 %v730
      %v1620 = vunpack.c.l.b16 %v731
      %v1621 = vunpack.c.h.b16 %v731
      %v1622 = vpack.c.b16 %v1234, %v1230
      %v1623 = vpack.c.b16 %v1235, %v1231
      %v1624 = vpack.c.b16 %v1236, %v1232
      %v1625 = vpack.c.b16 %v1237, %v1233
      %v1626 = vpack.c.b16 %v1242, %v1238
      %v1627 = vpack.c.b16 %v1243, %v1239
      %v1628 = vpack.c.b16 %v1244, %v1240
      %v1629 = vpack.c.b16 %v1245, %v1241
      %v1630 = vpack.c.b16 %v1250, %v1246
      %v1631 = vpack.c.b16 %v1251, %v1247
      %v1632 = vpack.c.b16 %v1252, %v1248
      %v1633 = vpack.c.b16 %v1253, %v1249
      %v1634 = vpack.c.b16 %v1258, %v1254
      %v1635 = vpack.c.b16 %v1259, %v1255
      %v1636 = vpack.c.b16 %v1260, %v1256
      %v1637 = vpack.c.b16 %v1261, %v1257
      %v1638 = vpack.c.b16 %v1266, %v1262
      %v1639 = vpack.c.b16 %v1267, %v1263
      %v1640 = vpack.c.b16 %v1268, %v1264
      %v1641 = vpack.c.b16 %v1269, %v1265
      %v1642 = vpack.c.b16 %v1274, %v1270
      %v1643 = vpack.c.b16 %v1275, %v1271
      %v1644 = vpack.c.b16 %v1276, %v1272
      %v1645 = vpack.c.b16 %v1277, %v1273
      %v1646 = vpack.c.b16 %v1282, %v1278
      %v1647 = vpack.c.b16 %v1283, %v1279
      %v1648 = vpack.c.b16 %v1284, %v1280
      %v1649 = vpack.c.b16 %v1285, %v1281
      %v1650 = vpack.c.b16 %v1290, %v1286
      %v1651 = vpack.c.b16 %v1291, %v1287
      %v1652 = vpack.c.b16 %v1292, %v1288
      %v1653 = vpack.c.b16 %v1293, %v1289
      %v1654 = vpack.c.b16 %v1298, %v1294
      %v1655 = vpack.c.b16 %v1299, %v1295
      %v1656 = vpack.c.b16 %v1300, %v1296
      %v1657 = vpack.c.b16 %v1301, %v1297
      %v1658 = vpack.c.b16 %v1306, %v1302
      %v1659 = vpack.c.b16 %v1307, %v1303
      %v1660 = vpack.c.b16 %v1308, %v1304
      %v1661 = vpack.c.b16 %v1309, %v1305
      %v1662 = vpack.c.b16 %v1314, %v1310
      %v1663 = vpack.c.b16 %v1315, %v1311
      %v1664 = vpack.c.b16 %v1316, %v1312
      %v1665 = vpack.c.b16 %v1317, %v1313
      %v1666 = vpack.c.b16 %v1322, %v1318
      %v1667 = vpack.c.b16 %v1323, %v1319
      %v1668 = vpack.c.b16 %v1324, %v1320
      %v1669 = vpack.c.b16 %v1325, %v1321
      %v1670 = vpack.c.b16 %v1330, %v1326
      %v1671 = vpack.c.b16 %v1331, %v1327
      %v1672 = vpack.c.b16 %v1332, %v1328
      %v1673 = vpack.c.b16 %v1333, %v1329
      %v1674 = vpack.c.b16 %v1338, %v1334
      %v1675 = vpack.c.b16 %v1339, %v1335
      %v1676 = vpack.c.b16 %v1340, %v1336
      %v1677 = vpack.c.b16 %v1341, %v1337
      %v1678 = vpack.c.b16 %v1346, %v1342
      %v1679 = vpack.c.b16 %v1347, %v1343
      %v1680 = vpack.c.b16 %v1348, %v1344
      %v1681 = vpack.c.b16 %v1349, %v1345
      %v1682 = vpack.c.b16 %v1354, %v1350
      %v1683 = vpack.c.b16 %v1355, %v1351
      %v1684 = vpack.c.b16 %v1356, %v1352
      %v1685 = vpack.c.b16 %v1357, %v1353
      %v1686 = vpack.c.b16 %v1362, %v1358
      %v1687 = vpack.c.b16 %v1363, %v1359
      %v1688 = vpack.c.b16 %v1364, %v1360
      %v1689 = vpack.c.b16 %v1365, %v1361
      %v1690 = vpack.c.b16 %v1370, %v1366
      %v1691 = vpack.c.b16 %v1371, %v1367
      %v1692 = vpack.c.b16 %v1372, %v1368
      %v1693 = vpack.c.b16 %v1373, %v1369
      %v1694 = vpack.c.b16 %v1378, %v1374
      %v1695 = vpack.c.b16 %v1379, %v1375
      %v1696 = vpack.c.b16 %v1380, %v1376
      %v1697 = vpack.c.b16 %v1381, %v1377
      %v1698 = vpack.c.b16 %v1386, %v1382
      %v1699 = vpack.c.b16 %v1387, %v1383
      %v1700 = vpack.c.b16 %v1388, %v1384
      %v1701 = vpack.c.b16 %v1389, %v1385
      %v1702 = vpack.c.b16 %v1394, %v1390
      %v1703 = vpack.c.b16 %v1395, %v1391
      %v1704 = vpack.c.b16 %v1396, %v1392
      %v1705 = vpack.c.b16 %v1397, %v1393
      %v1706 = vpack.c.b16 %v1402, %v1398
      %v1707 = vpack.c.b16 %v1403, %v1399
      %v1708 = vpack.c.b16 %v1404, %v1400
      %v1709 = vpack.c.b16 %v1405, %v1401
      %v1710 = vpack.c.b16 %v1410, %v1406
      %v1711 = vpack.c.b16 %v1411, %v1407
      %v1712 = vpack.c.b16 %v1412, %v1408
      %v1713 = vpack.c.b16 %v1413, %v1409
      %v1714 = vpack.c.b16 %v1418, %v1414
      %v1715 = vpack.c.b16 %v1419, %v1415
      %v1716 = vpack.c.b16 %v1420, %v1416
      %v1717 = vpack.c.b16 %v1421, %v1417
      %v1718 = vpack.c.b16 %v1426, %v1422
      %v1719 = vpack.c.b16 %v1427, %v1423
      %v1720 = vpack.c.b16 %v1428, %v1424
      %v1721 = vpack.c.b16 %v1429, %v1425
      %v1722 = vpack.c.b16 %v1434, %v1430
      %v1723 = vpack.c.b16 %v1435, %v1431
      %v1724 = vpack.c.b16 %v1436, %v1432
      %v1725 = vpack.c.b16 %v1437, %v1433
      %v1726 = vpack.c.b16 %v1442, %v1438
      %v1727 = vpack.c.b16 %v1443, %v1439
      %v1728 = vpack.c.b16 %v1444, %v1440
      %v1729 = vpack.c.b16 %v1445, %v1441
      %v1730 = vpack.c.b16 %v1450, %v1446
      %v1731 = vpack.c.b16 %v1451, %v1447
      %v1732 = vpack.c.b16 %v1452, %v1448
      %v1733 = vpack.c.b16 %v1453, %v1449
      %v1734 = vpack.c.b16 %v1458, %v1454
      %v1735 = vpack.c.b16 %v1459, %v1455
      %v1736 = vpack.c.b16 %v1460, %v1456
      %v1737 = vpack.c.b16 %v1461, %v1457
      %v1738 = vpack.c.b16 %v1466, %v1462
      %v1739 = vpack.c.b16 %v1467, %v1463
      %v1740 = vpack.c.b16 %v1468, %v1464
      %v1741 = vpack.c.b16 %v1469, %v1465
      %v1742 = vpack.c.b16 %v1474, %v1470
      %v1743 = vpack.c.b16 %v1475, %v1471
      %v1744 = vpack.c.b16 %v1476, %v1472
      %v1745 = vpack.c.b16 %v1477, %v1473
      %v1746 = vpack.c.b16 %v1482, %v1478
      %v1747 = vpack.c.b16 %v1483, %v1479
      %v1748 = vpack.c.b16 %v1484, %v1480
      %v1749 = vpack.c.b16 %v1485, %v1481
      %v1750 = vpack.c.b16 %v1490, %v1486
      %v1751 = vpack.c.b16 %v1491, %v1487
      %v1752 = vpack.c.b16 %v1492, %v1488
      %v1753 = vpack.c.b16 %v1493, %v1489
      %v1754 = vpack.c.b16 %v1498, %v1494
      %v1755 = vpack.c.b16 %v1499, %v1495
      %v1756 = vpack.c.b16 %v1500, %v1496
      %v1757 = vpack.c.b16 %v1501, %v1497
      %v1758 = vpack.c.b16 %v1506, %v1502
      %v1759 = vpack.c.b16 %v1507, %v1503
      %v1760 = vpack.c.b16 %v1508, %v1504
      %v1761 = vpack.c.b16 %v1509, %v1505
      %v1762 = vpack.c.b16 %v1514, %v1510
      %v1763 = vpack.c.b16 %v1515, %v1511
      %v1764 = vpack.c.b16 %v1516, %v1512
      %v1765 = vpack.c.b16 %v1517, %v1513
      %v1766 = vpack.c.b16 %v1522, %v1518
      %v1767 = vpack.c.b16 %v1523, %v1519
      %v1768 = vpack.c.b16 %v1524, %v1520
      %v1769 = vpack.c.b16 %v1525, %v1521
      %v1770 = vpack.c.b16 %v1530, %v1526
      %v1771 = vpack.c.b16 %v1531, %v1527
      %v1772 = vpack.c.b16 %v1532, %v1528
      %v1773 = vpack.c.b16 %v1533, %v1529
      %v1774 = vpack.c.b16 %v1538, %v1534
      %v1775 = vpack.c.b16 %v1539, %v1535
      %v1776 = vpack.c.b16 %v1540, %v1536
      %v1777 = vpack.c.b16 %v1541, %v1537
      %v1778 = vpack.c.b16 %v1546, %v1542
      %v1779 = vpack.c.b16 %v1547, %v1543
      %v1780 = vpack.c.b16 %v1548, %v1544
      %v1781 = vpack.c.b16 %v1549, %v1545
      %v1782 = vpack.c.b16 %v1554, %v1550
      %v1783 = vpack.c.b16 %v1555, %v1551
      %v1784 = vpack.c.b16 %v1556, %v1552
      %v1785 = vpack.c.b16 %v1557, %v1553
      %v1786 = vpack.c.b16 %v1562, %v1558
      %v1787 = vpack.c.b16 %v1563, %v1559
      %v1788 = vpack.c.b16 %v1564, %v1560
      %v1789 = vpack.c.b16 %v1565, %v1561
      %v1790 = vpack.c.b16 %v1570, %v1566
      %v1791 = vpack.c.b16 %v1571, %v1567
      %v1792 = vpack.c.b16 %v1572, %v1568
      %v1793 = vpack.c.b16 %v1573, %v1569
      %v1794 = vpack.c.b16 %v1578, %v1574
      %v1795 = vpack.c.b16 %v1579, %v1575
      %v1796 = vpack.c.b16 %v1580, %v1576
      %v1797 = vpack.c.b16 %v1581, %v1577
      %v1798 = vpack.c.b16 %v1586, %v1582
      %v1799 = vpack.c.b16 %v1587, %v1583
      %v1800 = vpack.c.b16 %v1588, %v1584
      %v1801 = vpack.c.b16 %v1589, %v1585
      %v1802 = vpack.c.b16 %v1594, %v1590
      %v1803 = vpack.c.b16 %v1595, %v1591
      %v1804 = vpack.c.b16 %v1596, %v1592
      %v1805 = vpack.c.b16 %v1597, %v1593
      %v1806 = vpack.c.b16 %v1602, %v1598
      %v1807 = vpack.c.b16 %v1603, %v1599
      %v1808 = vpack.c.b16 %v1604, %v1600
      %v1809 = vpack.c.b16 %v1605, %v1601
      %v1810 = vpack.c.b16 %v1610, %v1606
      %v1811 = vpack.c.b16 %v1611, %v1607
      %v1812 = vpack.c.b16 %v1612, %v1608
      %v1813 = vpack.c.b16 %v1613, %v1609
      %v1814 = vpack.c.b16 %v1618, %v1614
      %v1815 = vpack.c.b16 %v1619, %v1615
      %v1816 = vpack.c.b16 %v1620, %v1616
      %v1817 = vpack.c.b16 %v1621, %v1617
      %vm2014 = vcmask 130048
      %v2016 = vsel %vm2014, %v936, 0
      %v2019 = vsel %vm2014, %v943, 0
      %v2022 = vsel %vm2014, %v950, 0
      %v2025 = vsel %vm2014, %v957, 0
      %v2028 = vsel %vm2014, %v964, 0
      %v2031 = vsel %vm2014, %v971, 0
      %v2034 = vsel %vm2014, %v978, 0
      %v2037 = vsel %vm2014, %v985, 0
      %2039 = vmatprep.subr.bf16.mxu0 %v1623
      %2040 = vmatpush1.bf16.msra.mxu0 %v1622
      %2041 = vmatprep.subr.bf16.mxu0 %v1627
      %2042 = vmatpush1.bf16.msra.mxu0 %v1626
      %2043 = vmatprep.subr.bf16.mxu0 %v1631
      %2044 = vmatpush1.bf16.msra.mxu0 %v1630
      %2045 = vmatprep.subr.bf16.mxu0 %v1635
      %2046 = vmatpush1.bf16.msra.mxu0 %v1634
      %2047 = vmatprep.subr.bf16.mxu0 %v1639
      %2048 = vmatpush1.bf16.msra.mxu0 %v1638
      %2049 = vmatprep.subr.bf16.mxu0 %v1643
      %2050 = vmatpush1.bf16.msra.mxu0 %v1642
      %2051 = vmatprep.subr.bf16.mxu0 %v1647
      %2052 = vmatpush1.bf16.msra.mxu0 %v1646
      %2053 = vmatprep.subr.bf16.mxu0 %v1651
      %2054 = vmatpush1.bf16.msra.mxu0 %v1650
      %2055 = vmatprep.subr.bf16.mxu0 %v1655
      %2056 = vmatpush1.bf16.msra.mxu0 %v1654
      %2057 = vmatprep.subr.bf16.mxu0 %v1659
      %2058 = vmatpush1.bf16.msra.mxu0 %v1658
      %2059 = vmatprep.subr.bf16.mxu0 %v1663
      %2060 = vmatpush1.bf16.msra.mxu0 %v1662
      %2061 = vmatprep.subr.bf16.mxu0 %v1667
      %2062 = vmatpush1.bf16.msra.mxu0 %v1666
      %2063 = vmatprep.subr.bf16.mxu0 %v1671
      %2064 = vmatpush1.bf16.msra.mxu0 %v1670
      %2065 = vmatprep.subr.bf16.mxu0 %v1675
      %2066 = vmatpush1.bf16.msra.mxu0 %v1674
      %2067 = vmatprep.subr.bf16.mxu0 %v1679
      %2068 = vmatpush1.bf16.msra.mxu0 %v1678
      %2069 = vmatprep.subr.bf16.mxu0 %v1683
      %2070 = vmatpush1.bf16.msra.mxu0 %v1682
      %2071 = vmatprep.mubr.bf16.mxu0 %v931
      %2072 = vmatmul.mubr.bf16.gmra.mrb[0].mxu0 %v930
      %v2073 = vpop.f32.mrb[0].mxu0
      %v2074 = vadd.f32 %v737, %v2073
      %v2075 = vpop.f32.mrb[0].mxu0
      %v2076 = vadd.f32 %v741, %v2075
      %v2077 = vpop.f32.mrb[0].mxu0
      %v2078 = vadd.f32 %v737, %v2077
      %v2079 = vpop.f32.mrb[0].mxu0
      %v2080 = vadd.f32 %v741, %v2079
      %2081 = vmatprep.mubr.bf16.mxu0 %v938
      %2082 = vmatmul.mubr.bf16.gmra.mrb[0].mxu0 %v937
      %v2083 = vpop.f32.mrb[0].mxu0
      %v2084 = vadd.f32 %v737, %v2083
      %v2085 = vpop.f32.mrb[0].mxu0
      %v2086 = vadd.f32 %v741, %v2085
      %v2087 = vpop.f32.mrb[0].mxu0
      %v2088 = vadd.f32 %v737, %v2087
      %v2089 = vpop.f32.mrb[0].mxu0
      %v2090 = vadd.f32 %v741, %v2089
      %2091 = vmatprep.mubr.bf16.mxu0 %v945
      %2092 = vmatmul.mubr.bf16.gmra.mrb[0].mxu0 %v944
      %v2093 = vpop.f32.mrb[0].mxu0
      %v2094 = vadd.f32 %v737, %v2093
      %v2095 = vpop.f32.mrb[0].mxu0
      %v2096 = vadd.f32 %v741, %v2095
      %v2097 = vpop.f32.mrb[0].mxu0
      %v2098 = vadd.f32 %v737, %v2097
      %v2099 = vpop.f32.mrb[0].mxu0
      %v2100 = vadd.f32 %v741, %v2099
      %2101 = vmatprep.mubr.bf16.mxu0 %v952
      %2102 = vmatmul.mubr.bf16.gmra.mrb[0].mxu0 %v951
      %v2103 = vpop.f32.mrb[0].mxu0
      %v2104 = vadd.f32 %v737, %v2103
      %v2105 = vpop.f32.mrb[0].mxu0
      %v2106 = vadd.f32 %v741, %v2105
      %v2107 = vpop.f32.mrb[0].mxu0
      %v2108 = vadd.f32 %v737, %v2107
      %v2109 = vpop.f32.mrb[0].mxu0
      %v2110 = vadd.f32 %v741, %v2109
      %2111 = vmatprep.mubr.bf16.mxu0 %v959
      %2112 = vmatmul.mubr.bf16.gmra.mrb[0].mxu0 %v958
      %v2113 = vpop.f32.mrb[0].mxu0
      %v2114 = vadd.f32 %v737, %v2113
      %v2115 = vpop.f32.mrb[0].mxu0
      %v2116 = vadd.f32 %v741, %v2115
      %v2117 = vpop.f32.mrb[0].mxu0
      %v2118 = vadd.f32 %v737, %v2117
      %v2119 = vpop.f32.mrb[0].mxu0
      %v2120 = vadd.f32 %v741, %v2119
      %2121 = vmatprep.mubr.bf16.mxu0 %v966
      %2122 = vmatmul.mubr.bf16.gmra.mrb[0].mxu0 %v965
      %v2123 = vpop.f32.mrb[0].mxu0
      %v2124 = vadd.f32 %v737, %v2123
      %v2125 = vpop.f32.mrb[0].mxu0
      %v2126 = vadd.f32 %v741, %v2125
      %v2127 = vpop.f32.mrb[0].mxu0
      %v2128 = vadd.f32 %v737, %v2127
      %v2129 = vpop.f32.mrb[0].mxu0
      %v2130 = vadd.f32 %v741, %v2129
      %2131 = vmatprep.mubr.bf16.mxu0 %v973
      %2132 = vmatmul.mubr.bf16.gmra.mrb[0].mxu0 %v972
      %v2133 = vpop.f32.mrb[0].mxu0
      %v2134 = vadd.f32 %v737, %v2133
      %v2135 = vpop.f32.mrb[0].mxu0
      %v2136 = vadd.f32 %v741, %v2135
      %v2137 = vpop.f32.mrb[0].mxu0
      %v2138 = vadd.f32 %v737, %v2137
      %v2139 = vpop.f32.mrb[0].mxu0
      %v2140 = vadd.f32 %v741, %v2139
      %2141 = vmatprep.mubr.bf16.mxu0 %v980
      %2142 = vmatmul.mubr.bf16.gmra.mrb[0].mxu0 %v979
      %v2143 = vpop.f32.mrb[0].mxu0
      %v2144 = vadd.f32 %v737, %v2143
      %v2145 = vpop.f32.mrb[0].mxu0
      %v2146 = vadd.f32 %v741, %v2145
      %v2147 = vpop.f32.mrb[0].mxu0
      %v2148 = vadd.f32 %v737, %v2147
      %v2149 = vpop.f32.mrb[0].mxu0
      %v2150 = vadd.f32 %v741, %v2149
      %2151 = vdwg.mxu0
      %2152 = vmatprep.subr.bf16.mxu0 %v1687
      %2153 = vmatpush1.bf16.msra.mxu0 %v1686
      %2154 = vmatprep.subr.bf16.mxu0 %v1691
      %2155 = vmatpush1.bf16.msra.mxu0 %v1690
      %2156 = vmatprep.subr.bf16.mxu0 %v1695
      %2157 = vmatpush1.bf16.msra.mxu0 %v1694
      %2158 = vmatprep.subr.bf16.mxu0 %v1699
      %2159 = vmatpush1.bf16.msra.mxu0 %v1698
      %2160 = vmatprep.subr.bf16.mxu0 %v1703
      %2161 = vmatpush1.bf16.msra.mxu0 %v1702
      %2162 = vmatprep.subr.bf16.mxu0 %v1707
      %2163 = vmatpush1.bf16.msra.mxu0 %v1706
      %2164 = vmatprep.subr.bf16.mxu0 %v1711
      %2165 = vmatpush1.bf16.msra.mxu0 %v1710
      %2166 = vmatprep.subr.bf16.mxu0 %v1715
      %2167 = vmatpush1.bf16.msra.mxu0 %v1714
      %2168 = vmatprep.subr.bf16.mxu0 %v1719
      %2169 = vmatpush1.bf16.msra.mxu0 %v1718
      %2170 = vmatprep.subr.bf16.mxu0 %v1723
      %2171 = vmatpush1.bf16.msra.mxu0 %v1722
      %2172 = vmatprep.subr.bf16.mxu0 %v1727
      %2173 = vmatpush1.bf16.msra.mxu0 %v1726
      %2174 = vmatprep.subr.bf16.mxu0 %v1731
      %2175 = vmatpush1.bf16.msra.mxu0 %v1730
      %2176 = vmatprep.subr.bf16.mxu0 %v1735
      %2177 = vmatpush1.bf16.msra.mxu0 %v1734
      %2178 = vmatprep.subr.bf16.mxu0 %v1739
      %2179 = vmatpush1.bf16.msra.mxu0 %v1738
      %2180 = vmatprep.subr.bf16.mxu0 %v1743
      %2181 = vmatpush1.bf16.msra.mxu0 %v1742
      %2182 = vmatprep.subr.bf16.mxu0 %v1747
      %2183 = vmatpush1.bf16.msra.mxu0 %v1746
      %2184 = vmatprep.mubr.bf16.mxu0 %v933
      %2185 = vmatmul.mubr.bf16.gmra.mrb[0].mxu0 %v932
      %v2186 = vpop.f32.mrb[0].mxu0
      %v2187 = vadd.f32 %v2074, %v2186
      %v2188 = vpop.f32.mrb[0].mxu0
      %v2189 = vadd.f32 %v2076, %v2188
      %v2190 = vpop.f32.mrb[0].mxu0
      %v2191 = vadd.f32 %v2078, %v2190
      %v2192 = vpop.f32.mrb[0].mxu0
      %v2193 = vadd.f32 %v2080, %v2192
      %2194 = vmatprep.mubr.bf16.mxu0 %v940
      %2195 = vmatmul.mubr.bf16.gmra.mrb[0].mxu0 %v939
      %v2196 = vpop.f32.mrb[0].mxu0
      %v2197 = vadd.f32 %v2084, %v2196
      %v2198 = vpop.f32.mrb[0].mxu0
      %v2199 = vadd.f32 %v2086, %v2198
      %v2200 = vpop.f32.mrb[0].mxu0
      %v2201 = vadd.f32 %v2088, %v2200
      %v2202 = vpop.f32.mrb[0].mxu0
      %v2203 = vadd.f32 %v2090, %v2202
      %2204 = vmatprep.mubr.bf16.mxu0 %v947
      %2205 = vmatmul.mubr.bf16.gmra.mrb[0].mxu0 %v946
      %v2206 = vpop.f32.mrb[0].mxu0
      %v2207 = vadd.f32 %v2094, %v2206
      %v2208 = vpop.f32.mrb[0].mxu0
      %v2209 = vadd.f32 %v2096, %v2208
      %v2210 = vpop.f32.mrb[0].mxu0
      %v2211 = vadd.f32 %v2098, %v2210
      %v2212 = vpop.f32.mrb[0].mxu0
      %v2213 = vadd.f32 %v2100, %v2212
      %2214 = vmatprep.mubr.bf16.mxu0 %v954
      %2215 = vmatmul.mubr.bf16.gmra.mrb[0].mxu0 %v953
      %v2216 = vpop.f32.mrb[0].mxu0
      %v2217 = vadd.f32 %v2104, %v2216
      %v2218 = vpop.f32.mrb[0].mxu0
      %v2219 = vadd.f32 %v2106, %v2218
      %v2220 = vpop.f32.mrb[0].mxu0
      %v2221 = vadd.f32 %v2108, %v2220
      %v2222 = vpop.f32.mrb[0].mxu0
      %v2223 = vadd.f32 %v2110, %v2222
      %2224 = vmatprep.mubr.bf16.mxu0 %v961
      %2225 = vmatmul.mubr.bf16.gmra.mrb[0].mxu0 %v960
      %v2226 = vpop.f32.mrb[0].mxu0
      %v2227 = vadd.f32 %v2114, %v2226
      %v2228 = vpop.f32.mrb[0].mxu0
      %v2229 = vadd.f32 %v2116, %v2228
      %v2230 = vpop.f32.mrb[0].mxu0
      %v2231 = vadd.f32 %v2118, %v2230
      %v2232 = vpop.f32.mrb[0].mxu0
      %v2233 = vadd.f32 %v2120, %v2232
      %2234 = vmatprep.mubr.bf16.mxu0 %v968
      %2235 = vmatmul.mubr.bf16.gmra.mrb[0].mxu0 %v967
      %v2236 = vpop.f32.mrb[0].mxu0
      %v2237 = vadd.f32 %v2124, %v2236
      %v2238 = vpop.f32.mrb[0].mxu0
      %v2239 = vadd.f32 %v2126, %v2238
      %v2240 = vpop.f32.mrb[0].mxu0
      %v2241 = vadd.f32 %v2128, %v2240
      %v2242 = vpop.f32.mrb[0].mxu0
      %v2243 = vadd.f32 %v2130, %v2242
      %2244 = vmatprep.mubr.bf16.mxu0 %v975
      %2245 = vmatmul.mubr.bf16.gmra.mrb[0].mxu0 %v974
      %v2246 = vpop.f32.mrb[0].mxu0
      %v2247 = vadd.f32 %v2134, %v2246
      %v2248 = vpop.f32.mrb[0].mxu0
      %v2249 = vadd.f32 %v2136, %v2248
      %v2250 = vpop.f32.mrb[0].mxu0
      %v2251 = vadd.f32 %v2138, %v2250
      %v2252 = vpop.f32.mrb[0].mxu0
      %v2253 = vadd.f32 %v2140, %v2252
      %2254 = vmatprep.mubr.bf16.mxu0 %v982
      %2255 = vmatmul.mubr.bf16.gmra.mrb[0].mxu0 %v981
      %v2256 = vpop.f32.mrb[0].mxu0
      %v2257 = vadd.f32 %v2144, %v2256
      %v2258 = vpop.f32.mrb[0].mxu0
      %v2259 = vadd.f32 %v2146, %v2258
      %v2260 = vpop.f32.mrb[0].mxu0
      %v2261 = vadd.f32 %v2148, %v2260
      %v2262 = vpop.f32.mrb[0].mxu0
      %v2263 = vadd.f32 %v2150, %v2262
      %2264 = vdwg.mxu0
      %2265 = vmatprep.subr.bf16.mxu0 %v1751
      %2266 = vmatpush1.bf16.msra.mxu0 %v1750
      %2267 = vmatprep.subr.bf16.mxu0 %v1755
      %2268 = vmatpush1.bf16.msra.mxu0 %v1754
      %2269 = vmatprep.subr.bf16.mxu0 %v1759
      %2270 = vmatpush1.bf16.msra.mxu0 %v1758
      %2271 = vmatprep.subr.bf16.mxu0 %v1763
      %2272 = vmatpush1.bf16.msra.mxu0 %v1762
      %2273 = vmatprep.subr.bf16.mxu0 %v1767
      %2274 = vmatpush1.bf16.msra.mxu0 %v1766
      %2275 = vmatprep.subr.bf16.mxu0 %v1771
      %2276 = vmatpush1.bf16.msra.mxu0 %v1770
      %2277 = vmatprep.subr.bf16.mxu0 %v1775
      %2278 = vmatpush1.bf16.msra.mxu0 %v1774
      %2279 = vmatprep.subr.bf16.mxu0 %v1779
      %2280 = vmatpush1.bf16.msra.mxu0 %v1778
      %2281 = vmatprep.subr.bf16.mxu0 %v1783
      %2282 = vmatpush1.bf16.msra.mxu0 %v1782
      %2283 = vmatprep.subr.bf16.mxu0 %v1787
      %2284 = vmatpush1.bf16.msra.mxu0 %v1786
      %2285 = vmatprep.subr.bf16.mxu0 %v1791
      %2286 = vmatpush1.bf16.msra.mxu0 %v1790
      %2287 = vmatprep.subr.bf16.mxu0 %v1795
      %2288 = vmatpush1.bf16.msra.mxu0 %v1794
      %2289 = vmatprep.subr.bf16.mxu0 %v1799
      %2290 = vmatpush1.bf16.msra.mxu0 %v1798
      %2291 = vmatprep.subr.bf16.mxu0 %v1803
      %2292 = vmatpush1.bf16.msra.mxu0 %v1802
      %2293 = vmatprep.subr.bf16.mxu0 %v1807
      %2294 = vmatpush1.bf16.msra.mxu0 %v1806
      %2295 = vmatprep.subr.bf16.mxu0 %v1811
      %2296 = vmatpush1.bf16.msra.mxu0 %v1810
      %2297 = vmatprep.mubr.bf16.mxu0 %v935
      %2298 = vmatmul.mubr.bf16.gmra.mrb[0].mxu0 %v934
      %v2299 = vpop.f32.mrb[0].mxu0
      %v2300 = vadd.f32 %v2187, %v2299
      %v2301 = vpop.f32.mrb[0].mxu0
      %v2302 = vadd.f32 %v2189, %v2301
      %v2303 = vpop.f32.mrb[0].mxu0
      %v2304 = vadd.f32 %v2191, %v2303
      %v2305 = vpop.f32.mrb[0].mxu0
      %v2306 = vadd.f32 %v2193, %v2305
      %2307 = vmatprep.mubr.bf16.mxu0 %v942
      %2308 = vmatmul.mubr.bf16.gmra.mrb[0].mxu0 %v941
      %v2309 = vpop.f32.mrb[0].mxu0
      %v2310 = vadd.f32 %v2197, %v2309
      %v2311 = vpop.f32.mrb[0].mxu0
      %v2312 = vadd.f32 %v2199, %v2311
      %v2313 = vpop.f32.mrb[0].mxu0
      %v2314 = vadd.f32 %v2201, %v2313
      %v2315 = vpop.f32.mrb[0].mxu0
      %v2316 = vadd.f32 %v2203, %v2315
      %2317 = vmatprep.mubr.bf16.mxu0 %v949
      %2318 = vmatmul.mubr.bf16.gmra.mrb[0].mxu0 %v948
      %v2319 = vpop.f32.mrb[0].mxu0
      %v2320 = vadd.f32 %v2207, %v2319
      %v2321 = vpop.f32.mrb[0].mxu0
      %v2322 = vadd.f32 %v2209, %v2321
      %v2323 = vpop.f32.mrb[0].mxu0
      %v2324 = vadd.f32 %v2211, %v2323
      %v2325 = vpop.f32.mrb[0].mxu0
      %v2326 = vadd.f32 %v2213, %v2325
      %2327 = vmatprep.mubr.bf16.mxu0 %v956
      %2328 = vmatmul.mubr.bf16.gmra.mrb[0].mxu0 %v955
      %v2329 = vpop.f32.mrb[0].mxu0
      %v2330 = vadd.f32 %v2217, %v2329
      %v2331 = vpop.f32.mrb[0].mxu0
      %v2332 = vadd.f32 %v2219, %v2331
      %v2333 = vpop.f32.mrb[0].mxu0
      %v2334 = vadd.f32 %v2221, %v2333
      %v2335 = vpop.f32.mrb[0].mxu0
      %v2336 = vadd.f32 %v2223, %v2335
      %2337 = vmatprep.mubr.bf16.mxu0 %v963
      %2338 = vmatmul.mubr.bf16.gmra.mrb[0].mxu0 %v962
      %v2339 = vpop.f32.mrb[0].mxu0
      %v2340 = vadd.f32 %v2227, %v2339
      %v2341 = vpop.f32.mrb[0].mxu0
      %v2342 = vadd.f32 %v2229, %v2341
      %v2343 = vpop.f32.mrb[0].mxu0
      %v2344 = vadd.f32 %v2231, %v2343
      %v2345 = vpop.f32.mrb[0].mxu0
      %v2346 = vadd.f32 %v2233, %v2345
      %2347 = vmatprep.mubr.bf16.mxu0 %v970
      %2348 = vmatmul.mubr.bf16.gmra.mrb[0].mxu0 %v969
      %v2349 = vpop.f32.mrb[0].mxu0
      %v2350 = vadd.f32 %v2237, %v2349
      %v2351 = vpop.f32.mrb[0].mxu0
      %v2352 = vadd.f32 %v2239, %v2351
      %v2353 = vpop.f32.mrb[0].mxu0
      %v2354 = vadd.f32 %v2241, %v2353
      %v2355 = vpop.f32.mrb[0].mxu0
      %v2356 = vadd.f32 %v2243, %v2355
      %2357 = vmatprep.mubr.bf16.mxu0 %v977
      %2358 = vmatmul.mubr.bf16.gmra.mrb[0].mxu0 %v976
      %v2359 = vpop.f32.mrb[0].mxu0
      %v2360 = vadd.f32 %v2247, %v2359
      %v2361 = vpop.f32.mrb[0].mxu0
      %v2362 = vadd.f32 %v2249, %v2361
      %v2363 = vpop.f32.mrb[0].mxu0
      %v2364 = vadd.f32 %v2251, %v2363
      %v2365 = vpop.f32.mrb[0].mxu0
      %v2366 = vadd.f32 %v2253, %v2365
      %2367 = vmatprep.mubr.bf16.mxu0 %v984
      %2368 = vmatmul.mubr.bf16.gmra.mrb[0].mxu0 %v983
      %v2369 = vpop.f32.mrb[0].mxu0
      %v2370 = vadd.f32 %v2257, %v2369
      %v2371 = vpop.f32.mrb[0].mxu0
      %v2372 = vadd.f32 %v2259, %v2371
      %v2373 = vpop.f32.mrb[0].mxu0
      %v2374 = vadd.f32 %v2261, %v2373
      %v2375 = vpop.f32.mrb[0].mxu0
      %v2376 = vadd.f32 %v2263, %v2375
      %2377 = vdwg.mxu0
      %2378 = vmatprep.subr.bf16.mxu0 %v1815
      %2379 = vmatpush1.bf16.msra.mxu0 %v1814
      %2380 = vmatprep.subr.bf16.mxu0 0
      %2381 = vmatpush1.bf16.msra.mxu0 0
      %2382 = vmatprep.subr.bf16.mxu0 0
      %2383 = vmatpush1.bf16.msra.mxu0 0
      %2384 = vmatprep.subr.bf16.mxu0 0
      %2385 = vmatpush1.bf16.msra.mxu0 0
      %2386 = vmatprep.subr.bf16.mxu0 0
      %2387 = vmatpush1.bf16.msra.mxu0 0
      %2388 = vmatprep.subr.bf16.mxu0 0
      %2389 = vmatpush1.bf16.msra.mxu0 0
      %2390 = vmatprep.subr.bf16.mxu0 0
      %2391 = vmatpush1.bf16.msra.mxu0 0
      %2392 = vmatprep.subr.bf16.mxu0 0
      %2393 = vmatpush1.bf16.msra.mxu0 0
      %2394 = vmatprep.subr.bf16.mxu0 0
      %2395 = vmatpush1.bf16.msra.mxu0 0
      %2396 = vmatprep.subr.bf16.mxu0 0
      %2397 = vmatpush1.bf16.msra.mxu0 0
      %2398 = vmatprep.subr.bf16.mxu0 0
      %2399 = vmatpush1.bf16.msra.mxu0 0
      %2400 = vmatprep.subr.bf16.mxu0 0
      %2401 = vmatpush1.bf16.msra.mxu0 0
      %2402 = vmatprep.subr.bf16.mxu0 0
      %2403 = vmatpush1.bf16.msra.mxu0 0
      %2404 = vmatprep.subr.bf16.mxu0 0
      %2405 = vmatpush1.bf16.msra.mxu0 0
      %2406 = vmatprep.subr.bf16.mxu0 0
      %2407 = vmatpush1.bf16.msra.mxu0 0
      %2408 = vmatprep.subr.bf16.mxu0 0
      %2409 = vmatpush1.bf16.msra.mxu0 0
      %2410 = vmatprep.mubr.bf16.mxu0 0
      %2411 = vmatmul.mubr.bf16.gmra.mrb[0].mxu0 %v2016
      %v2412 = vpop.f32.mrb[0].mxu0
      %v2413 = vadd.f32 %v2300, %v2412
      %v2414 = vpop.f32.mrb[0].mxu0
      %v2415 = vadd.f32 %v2302, %v2414
      %v2416 = vpop.f32.mrb[0].mxu0
      %v2417 = vadd.f32 %v2304, %v2416
      %v2418 = vpop.f32.mrb[0].mxu0
      %v2419 = vadd.f32 %v2306, %v2418
      %2420 = vmatprep.mubr.bf16.mxu0 0
      %2421 = vmatmul.mubr.bf16.gmra.mrb[0].mxu0 %v2019
      %v2422 = vpop.f32.mrb[0].mxu0
      %v2423 = vadd.f32 %v2310, %v2422
      %v2424 = vpop.f32.mrb[0].mxu0
      %v2425 = vadd.f32 %v2312, %v2424
      %v2426 = vpop.f32.mrb[0].mxu0
      %v2427 = vadd.f32 %v2314, %v2426
      %v2428 = vpop.f32.mrb[0].mxu0
      %v2429 = vadd.f32 %v2316, %v2428
      %2430 = vmatprep.mubr.bf16.mxu0 0
      %2431 = vmatmul.mubr.bf16.gmra.mrb[0].mxu0 %v2022
      %v2432 = vpop.f32.mrb[0].mxu0
      %v2433 = vadd.f32 %v2320, %v2432
      %v2434 = vpop.f32.mrb[0].mxu0
      %v2435 = vadd.f32 %v2322, %v2434
      %v2436 = vpop.f32.mrb[0].mxu0
      %v2437 = vadd.f32 %v2324, %v2436
      %v2438 = vpop.f32.mrb[0].mxu0
      %v2439 = vadd.f32 %v2326, %v2438
      %2440 = vmatprep.mubr.bf16.mxu0 0
      %2441 = vmatmul.mubr.bf16.gmra.mrb[0].mxu0 %v2025
      %v2442 = vpop.f32.mrb[0].mxu0
      %v2443 = vadd.f32 %v2330, %v2442
      %v2444 = vpop.f32.mrb[0].mxu0
      %v2445 = vadd.f32 %v2332, %v2444
      %v2446 = vpop.f32.mrb[0].mxu0
      %v2447 = vadd.f32 %v2334, %v2446
      %v2448 = vpop.f32.mrb[0].mxu0
      %v2449 = vadd.f32 %v2336, %v2448
      %2450 = vmatprep.mubr.bf16.mxu0 0
      %2451 = vmatmul.mubr.bf16.gmra.mrb[0].mxu0 %v2028
      %v2452 = vpop.f32.mrb[0].mxu0
      %v2453 = vadd.f32 %v2340, %v2452
      %v2454 = vpop.f32.mrb[0].mxu0
      %v2455 = vadd.f32 %v2342, %v2454
      %v2456 = vpop.f32.mrb[0].mxu0
      %v2457 = vadd.f32 %v2344, %v2456
      %v2458 = vpop.f32.mrb[0].mxu0
      %v2459 = vadd.f32 %v2346, %v2458
      %2460 = vmatprep.mubr.bf16.mxu0 0
      %2461 = vmatmul.mubr.bf16.gmra.mrb[0].mxu0 %v2031
      %v2462 = vpop.f32.mrb[0].mxu0
      %v2463 = vadd.f32 %v2350, %v2462
      %v2464 = vpop.f32.mrb[0].mxu0
      %v2465 = vadd.f32 %v2352, %v2464
      %v2466 = vpop.f32.mrb[0].mxu0
      %v2467 = vadd.f32 %v2354, %v2466
      %v2468 = vpop.f32.mrb[0].mxu0
      %v2469 = vadd.f32 %v2356, %v2468
      %2470 = vmatprep.mubr.bf16.mxu0 0
      %2471 = vmatmul.mubr.bf16.gmra.mrb[0].mxu0 %v2034
      %v2472 = vpop.f32.mrb[0].mxu0
      %v2473 = vadd.f32 %v2360, %v2472
      %v2474 = vpop.f32.mrb[0].mxu0
      %v2475 = vadd.f32 %v2362, %v2474
      %v2476 = vpop.f32.mrb[0].mxu0
      %v2477 = vadd.f32 %v2364, %v2476
      %v2478 = vpop.f32.mrb[0].mxu0
      %v2479 = vadd.f32 %v2366, %v2478
      %2480 = vmatprep.mubr.bf16.mxu0 0
      %2481 = vmatmul.mubr.bf16.gmra.mrb[0].mxu0 %v2037
      %v2482 = vpop.f32.mrb[0].mxu0
      %v2483 = vadd.f32 %v2370, %v2482
      %v2484 = vpop.f32.mrb[0].mxu0
      %v2485 = vadd.f32 %v2372, %v2484
      %v2486 = vpop.f32.mrb[0].mxu0
      %v2487 = vadd.f32 %v2374, %v2486
      %v2488 = vpop.f32.mrb[0].mxu0
      %v2489 = vadd.f32 %v2376, %v2488
      %2490 = vdwg.mxu0
      %2491 = vmatprep.subr.bf16.mxu0 %v1625
      %2492 = vmatpush1.bf16.msra.mxu0 %v1624
      %2493 = vmatprep.subr.bf16.mxu0 %v1629
      %2494 = vmatpush1.bf16.msra.mxu0 %v1628
      %2495 = vmatprep.subr.bf16.mxu0 %v1633
      %2496 = vmatpush1.bf16.msra.mxu0 %v1632
      %2497 = vmatprep.subr.bf16.mxu0 %v1637
      %2498 = vmatpush1.bf16.msra.mxu0 %v1636
      %2499 = vmatprep.subr.bf16.mxu0 %v1641
      %2500 = vmatpush1.bf16.msra.mxu0 %v1640
      %2501 = vmatprep.subr.bf16.mxu0 %v1645
      %2502 = vmatpush1.bf16.msra.mxu0 %v1644
      %2503 = vmatprep.subr.bf16.mxu0 %v1649
      %2504 = vmatpush1.bf16.msra.mxu0 %v1648
      %2505 = vmatprep.subr.bf16.mxu0 %v1653
      %2506 = vmatpush1.bf16.msra.mxu0 %v1652
      %2507 = vmatprep.subr.bf16.mxu0 %v1657
      %2508 = vmatpush1.bf16.msra.mxu0 %v1656
      %2509 = vmatprep.subr.bf16.mxu0 %v1661
      %2510 = vmatpush1.bf16.msra.mxu0 %v1660
      %2511 = vmatprep.subr.bf16.mxu0 %v1665
      %2512 = vmatpush1.bf16.msra.mxu0 %v1664
      %2513 = vmatprep.subr.bf16.mxu0 %v1669
      %2514 = vmatpush1.bf16.msra.mxu0 %v1668
      %2515 = vmatprep.subr.bf16.mxu0 %v1673
      %2516 = vmatpush1.bf16.msra.mxu0 %v1672
      %2517 = vmatprep.subr.bf16.mxu0 %v1677
      %2518 = vmatpush1.bf16.msra.mxu0 %v1676
      %2519 = vmatprep.subr.bf16.mxu0 %v1681
      %2520 = vmatpush1.bf16.msra.mxu0 %v1680
      %2521 = vmatprep.subr.bf16.mxu0 %v1685
      %2522 = vmatpush1.bf16.msra.mxu0 %v1684
      %2523 = vmatprep.mubr.bf16.mxu0 %v931
      %2524 = vmatmul.mubr.bf16.gmra.mrb[0].mxu0 %v930
      %v2525 = vpop.f32.mrb[0].mxu0
      %v2526 = vadd.f32 %v745, %v2525
      %v2527 = vpop.f32.mrb[0].mxu0
      %v2528 = vadd.f32 %v749, %v2527
      %v2529 = vpop.f32.mrb[0].mxu0
      %v2530 = vadd.f32 %v745, %v2529
      %v2531 = vpop.f32.mrb[0].mxu0
      %v2532 = vadd.f32 %v749, %v2531
      %2533 = vmatprep.mubr.bf16.mxu0 %v938
      %2534 = vmatmul.mubr.bf16.gmra.mrb[0].mxu0 %v937
      %v2535 = vpop.f32.mrb[0].mxu0
      %v2536 = vadd.f32 %v745, %v2535
      %v2537 = vpop.f32.mrb[0].mxu0
      %v2538 = vadd.f32 %v749, %v2537
      %v2539 = vpop.f32.mrb[0].mxu0
      %v2540 = vadd.f32 %v745, %v2539
      %v2541 = vpop.f32.mrb[0].mxu0
      %v2542 = vadd.f32 %v749, %v2541
      %2543 = vmatprep.mubr.bf16.mxu0 %v945
      %2544 = vmatmul.mubr.bf16.gmra.mrb[0].mxu0 %v944
      %v2545 = vpop.f32.mrb[0].mxu0
      %v2546 = vadd.f32 %v745, %v2545
      %v2547 = vpop.f32.mrb[0].mxu0
      %v2548 = vadd.f32 %v749, %v2547
      %v2549 = vpop.f32.mrb[0].mxu0
      %v2550 = vadd.f32 %v745, %v2549
      %v2551 = vpop.f32.mrb[0].mxu0
      %v2552 = vadd.f32 %v749, %v2551
      %2553 = vmatprep.mubr.bf16.mxu0 %v952
      %2554 = vmatmul.mubr.bf16.gmra.mrb[0].mxu0 %v951
      %v2555 = vpop.f32.mrb[0].mxu0
      %v2556 = vadd.f32 %v745, %v2555
      %v2557 = vpop.f32.mrb[0].mxu0
      %v2558 = vadd.f32 %v749, %v2557
      %v2559 = vpop.f32.mrb[0].mxu0
      %v2560 = vadd.f32 %v745, %v2559
      %v2561 = vpop.f32.mrb[0].mxu0
      %v2562 = vadd.f32 %v749, %v2561
      %2563 = vmatprep.mubr.bf16.mxu0 %v959
      %2564 = vmatmul.mubr.bf16.gmra.mrb[0].mxu0 %v958
      %v2565 = vpop.f32.mrb[0].mxu0
      %v2566 = vadd.f32 %v745, %v2565
      %v2567 = vpop.f32.mrb[0].mxu0
      %v2568 = vadd.f32 %v749, %v2567
      %v2569 = vpop.f32.mrb[0].mxu0
      %v2570 = vadd.f32 %v745, %v2569
      %v2571 = vpop.f32.mrb[0].mxu0
      %v2572 = vadd.f32 %v749, %v2571
      %2573 = vmatprep.mubr.bf16.mxu0 %v966
      %2574 = vmatmul.mubr.bf16.gmra.mrb[0].mxu0 %v965
      %v2575 = vpop.f32.mrb[0].mxu0
      %v2576 = vadd.f32 %v745, %v2575
      %v2577 = vpop.f32.mrb[0].mxu0
      %v2578 = vadd.f32 %v749, %v2577
      %v2579 = vpop.f32.mrb[0].mxu0
      %v2580 = vadd.f32 %v745, %v2579
      %v2581 = vpop.f32.mrb[0].mxu0
      %v2582 = vadd.f32 %v749, %v2581
      %2583 = vmatprep.mubr.bf16.mxu0 %v973
      %2584 = vmatmul.mubr.bf16.gmra.mrb[0].mxu0 %v972
      %v2585 = vpop.f32.mrb[0].mxu0
      %v2586 = vadd.f32 %v745, %v2585
      %v2587 = vpop.f32.mrb[0].mxu0
      %v2588 = vadd.f32 %v749, %v2587
      %v2589 = vpop.f32.mrb[0].mxu0
      %v2590 = vadd.f32 %v745, %v2589
      %v2591 = vpop.f32.mrb[0].mxu0
      %v2592 = vadd.f32 %v749, %v2591
      %2593 = vmatprep.mubr.bf16.mxu0 %v980
      %2594 = vmatmul.mubr.bf16.gmra.mrb[0].mxu0 %v979
      %v2595 = vpop.f32.mrb[0].mxu0
      %v2596 = vadd.f32 %v745, %v2595
      %v2597 = vpop.f32.mrb[0].mxu0
      %v2598 = vadd.f32 %v749, %v2597
      %v2599 = vpop.f32.mrb[0].mxu0
      %v2600 = vadd.f32 %v745, %v2599
      %v2601 = vpop.f32.mrb[0].mxu0
      %v2602 = vadd.f32 %v749, %v2601
      %2603 = vdwg.mxu0
      %2604 = vmatprep.subr.bf16.mxu0 %v1689
      %2605 = vmatpush1.bf16.msra.mxu0 %v1688
      %2606 = vmatprep.subr.bf16.mxu0 %v1693
      %2607 = vmatpush1.bf16.msra.mxu0 %v1692
      %2608 = vmatprep.subr.bf16.mxu0 %v1697
      %2609 = vmatpush1.bf16.msra.mxu0 %v1696
      %2610 = vmatprep.subr.bf16.mxu0 %v1701
      %2611 = vmatpush1.bf16.msra.mxu0 %v1700
      %2612 = vmatprep.subr.bf16.mxu0 %v1705
      %2613 = vmatpush1.bf16.msra.mxu0 %v1704
      %2614 = vmatprep.subr.bf16.mxu0 %v1709
      %2615 = vmatpush1.bf16.msra.mxu0 %v1708
      %2616 = vmatprep.subr.bf16.mxu0 %v1713
      %2617 = vmatpush1.bf16.msra.mxu0 %v1712
      %2618 = vmatprep.subr.bf16.mxu0 %v1717
      %2619 = vmatpush1.bf16.msra.mxu0 %v1716
      %2620 = vmatprep.subr.bf16.mxu0 %v1721
      %2621 = vmatpush1.bf16.msra.mxu0 %v1720
      %2622 = vmatprep.subr.bf16.mxu0 %v1725
      %2623 = vmatpush1.bf16.msra.mxu0 %v1724
      %2624 = vmatprep.subr.bf16.mxu0 %v1729
      %2625 = vmatpush1.bf16.msra.mxu0 %v1728
      %2626 = vmatprep.subr.bf16.mxu0 %v1733
      %2627 = vmatpush1.bf16.msra.mxu0 %v1732
      %2628 = vmatprep.subr.bf16.mxu0 %v1737
      %2629 = vmatpush1.bf16.msra.mxu0 %v1736
      %2630 = vmatprep.subr.bf16.mxu0 %v1741
      %2631 = vmatpush1.bf16.msra.mxu0 %v1740
      %2632 = vmatprep.subr.bf16.mxu0 %v1745
      %2633 = vmatpush1.bf16.msra.mxu0 %v1744
      %2634 = vmatprep.subr.bf16.mxu0 %v1749
      %2635 = vmatpush1.bf16.msra.mxu0 %v1748
      %2636 = vmatprep.mubr.bf16.mxu0 %v933
      %2637 = vmatmul.mubr.bf16.gmra.mrb[0].mxu0 %v932
      %v2638 = vpop.f32.mrb[0].mxu0
      %v2639 = vadd.f32 %v2526, %v2638
      %v2640 = vpop.f32.mrb[0].mxu0
      %v2641 = vadd.f32 %v2528, %v2640
      %v2642 = vpop.f32.mrb[0].mxu0
      %v2643 = vadd.f32 %v2530, %v2642
      %v2644 = vpop.f32.mrb[0].mxu0
      %v2645 = vadd.f32 %v2532, %v2644
      %2646 = vmatprep.mubr.bf16.mxu0 %v940
      %2647 = vmatmul.mubr.bf16.gmra.mrb[0].mxu0 %v939
      %v2648 = vpop.f32.mrb[0].mxu0
      %v2649 = vadd.f32 %v2536, %v2648
      %v2650 = vpop.f32.mrb[0].mxu0
      %v2651 = vadd.f32 %v2538, %v2650
      %v2652 = vpop.f32.mrb[0].mxu0
      %v2653 = vadd.f32 %v2540, %v2652
      %v2654 = vpop.f32.mrb[0].mxu0
      %v2655 = vadd.f32 %v2542, %v2654
      %2656 = vmatprep.mubr.bf16.mxu0 %v947
      %2657 = vmatmul.mubr.bf16.gmra.mrb[0].mxu0 %v946
      %v2658 = vpop.f32.mrb[0].mxu0
      %v2659 = vadd.f32 %v2546, %v2658
      %v2660 = vpop.f32.mrb[0].mxu0
      %v2661 = vadd.f32 %v2548, %v2660
      %v2662 = vpop.f32.mrb[0].mxu0
      %v2663 = vadd.f32 %v2550, %v2662
      %v2664 = vpop.f32.mrb[0].mxu0
      %v2665 = vadd.f32 %v2552, %v2664
      %2666 = vmatprep.mubr.bf16.mxu0 %v954
      %2667 = vmatmul.mubr.bf16.gmra.mrb[0].mxu0 %v953
      %v2668 = vpop.f32.mrb[0].mxu0
      %v2669 = vadd.f32 %v2556, %v2668
      %v2670 = vpop.f32.mrb[0].mxu0
      %v2671 = vadd.f32 %v2558, %v2670
      %v2672 = vpop.f32.mrb[0].mxu0
      %v2673 = vadd.f32 %v2560, %v2672
      %v2674 = vpop.f32.mrb[0].mxu0
      %v2675 = vadd.f32 %v2562, %v2674
      %2676 = vmatprep.mubr.bf16.mxu0 %v961
      %2677 = vmatmul.mubr.bf16.gmra.mrb[0].mxu0 %v960
      %v2678 = vpop.f32.mrb[0].mxu0
      %v2679 = vadd.f32 %v2566, %v2678
      %v2680 = vpop.f32.mrb[0].mxu0
      %v2681 = vadd.f32 %v2568, %v2680
      %v2682 = vpop.f32.mrb[0].mxu0
      %v2683 = vadd.f32 %v2570, %v2682
      %v2684 = vpop.f32.mrb[0].mxu0
      %v2685 = vadd.f32 %v2572, %v2684
      %2686 = vmatprep.mubr.bf16.mxu0 %v968
      %2687 = vmatmul.mubr.bf16.gmra.mrb[0].mxu0 %v967
      %v2688 = vpop.f32.mrb[0].mxu0
      %v2689 = vadd.f32 %v2576, %v2688
      %v2690 = vpop.f32.mrb[0].mxu0
      %v2691 = vadd.f32 %v2578, %v2690
      %v2692 = vpop.f32.mrb[0].mxu0
      %v2693 = vadd.f32 %v2580, %v2692
      %v2694 = vpop.f32.mrb[0].mxu0
      %v2695 = vadd.f32 %v2582, %v2694
      %2696 = vmatprep.mubr.bf16.mxu0 %v975
      %2697 = vmatmul.mubr.bf16.gmra.mrb[0].mxu0 %v974
      %v2698 = vpop.f32.mrb[0].mxu0
      %v2699 = vadd.f32 %v2586, %v2698
      %v2700 = vpop.f32.mrb[0].mxu0
      %v2701 = vadd.f32 %v2588, %v2700
      %v2702 = vpop.f32.mrb[0].mxu0
      %v2703 = vadd.f32 %v2590, %v2702
      %v2704 = vpop.f32.mrb[0].mxu0
      %v2705 = vadd.f32 %v2592, %v2704
      %2706 = vmatprep.mubr.bf16.mxu0 %v982
      %2707 = vmatmul.mubr.bf16.gmra.mrb[0].mxu0 %v981
      %v2708 = vpop.f32.mrb[0].mxu0
      %v2709 = vadd.f32 %v2596, %v2708
      %v2710 = vpop.f32.mrb[0].mxu0
      %v2711 = vadd.f32 %v2598, %v2710
      %v2712 = vpop.f32.mrb[0].mxu0
      %v2713 = vadd.f32 %v2600, %v2712
      %v2714 = vpop.f32.mrb[0].mxu0
      %v2715 = vadd.f32 %v2602, %v2714
      %2716 = vdwg.mxu0
      %2717 = vmatprep.subr.bf16.mxu0 %v1753
      %2718 = vmatpush1.bf16.msra.mxu0 %v1752
      %2719 = vmatprep.subr.bf16.mxu0 %v1757
      %2720 = vmatpush1.bf16.msra.mxu0 %v1756
      %2721 = vmatprep.subr.bf16.mxu0 %v1761
      %2722 = vmatpush1.bf16.msra.mxu0 %v1760
      %2723 = vmatprep.subr.bf16.mxu0 %v1765
      %2724 = vmatpush1.bf16.msra.mxu0 %v1764
      %2725 = vmatprep.subr.bf16.mxu0 %v1769
      %2726 = vmatpush1.bf16.msra.mxu0 %v1768
      %2727 = vmatprep.subr.bf16.mxu0 %v1773
      %2728 = vmatpush1.bf16.msra.mxu0 %v1772
      %2729 = vmatprep.subr.bf16.mxu0 %v1777
      %2730 = vmatpush1.bf16.msra.mxu0 %v1776
      %2731 = vmatprep.subr.bf16.mxu0 %v1781
      %2732 = vmatpush1.bf16.msra.mxu0 %v1780
      %2733 = vmatprep.subr.bf16.mxu0 %v1785
      %2734 = vmatpush1.bf16.msra.mxu0 %v1784
      %2735 = vmatprep.subr.bf16.mxu0 %v1789
      %2736 = vmatpush1.bf16.msra.mxu0 %v1788
      %2737 = vmatprep.subr.bf16.mxu0 %v1793
      %2738 = vmatpush1.bf16.msra.mxu0 %v1792
      %2739 = vmatprep.subr.bf16.mxu0 %v1797
      %2740 = vmatpush1.bf16.msra.mxu0 %v1796
      %2741 = vmatprep.subr.bf16.mxu0 %v1801
      %2742 = vmatpush1.bf16.msra.mxu0 %v1800
      %2743 = vmatprep.subr.bf16.mxu0 %v1805
      %2744 = vmatpush1.bf16.msra.mxu0 %v1804
      %2745 = vmatprep.subr.bf16.mxu0 %v1809
      %2746 = vmatpush1.bf16.msra.mxu0 %v1808
      %2747 = vmatprep.subr.bf16.mxu0 %v1813
      %2748 = vmatpush1.bf16.msra.mxu0 %v1812
      %2749 = vmatprep.mubr.bf16.mxu0 %v935
      %2750 = vmatmul.mubr.bf16.gmra.mrb[0].mxu0 %v934
      %v2751 = vpop.f32.mrb[0].mxu0
      %v2752 = vadd.f32 %v2639, %v2751
      %v2753 = vpop.f32.mrb[0].mxu0
      %v2754 = vadd.f32 %v2641, %v2753
      %v2755 = vpop.f32.mrb[0].mxu0
      %v2756 = vadd.f32 %v2643, %v2755
      %v2757 = vpop.f32.mrb[0].mxu0
      %v2758 = vadd.f32 %v2645, %v2757
      %2759 = vmatprep.mubr.bf16.mxu0 %v942
      %2760 = vmatmul.mubr.bf16.gmra.mrb[0].mxu0 %v941
      %v2761 = vpop.f32.mrb[0].mxu0
      %v2762 = vadd.f32 %v2649, %v2761
      %v2763 = vpop.f32.mrb[0].mxu0
      %v2764 = vadd.f32 %v2651, %v2763
      %v2765 = vpop.f32.mrb[0].mxu0
      %v2766 = vadd.f32 %v2653, %v2765
      %v2767 = vpop.f32.mrb[0].mxu0
      %v2768 = vadd.f32 %v2655, %v2767
      %2769 = vmatprep.mubr.bf16.mxu0 %v949
      %2770 = vmatmul.mubr.bf16.gmra.mrb[0].mxu0 %v948
      %v2771 = vpop.f32.mrb[0].mxu0
      %v2772 = vadd.f32 %v2659, %v2771
      %v2773 = vpop.f32.mrb[0].mxu0
      %v2774 = vadd.f32 %v2661, %v2773
      %v2775 = vpop.f32.mrb[0].mxu0
      %v2776 = vadd.f32 %v2663, %v2775
      %v2777 = vpop.f32.mrb[0].mxu0
      %v2778 = vadd.f32 %v2665, %v2777
      %2779 = vmatprep.mubr.bf16.mxu0 %v956
      %2780 = vmatmul.mubr.bf16.gmra.mrb[0].mxu0 %v955
      %v2781 = vpop.f32.mrb[0].mxu0
      %v2782 = vadd.f32 %v2669, %v2781
      %v2783 = vpop.f32.mrb[0].mxu0
      %v2784 = vadd.f32 %v2671, %v2783
      %v2785 = vpop.f32.mrb[0].mxu0
      %v2786 = vadd.f32 %v2673, %v2785
      %v2787 = vpop.f32.mrb[0].mxu0
      %v2788 = vadd.f32 %v2675, %v2787
      %2789 = vmatprep.mubr.bf16.mxu0 %v963
      %2790 = vmatmul.mubr.bf16.gmra.mrb[0].mxu0 %v962
      %v2791 = vpop.f32.mrb[0].mxu0
      %v2792 = vadd.f32 %v2679, %v2791
      %v2793 = vpop.f32.mrb[0].mxu0
      %v2794 = vadd.f32 %v2681, %v2793
      %v2795 = vpop.f32.mrb[0].mxu0
      %v2796 = vadd.f32 %v2683, %v2795
      %v2797 = vpop.f32.mrb[0].mxu0
      %v2798 = vadd.f32 %v2685, %v2797
      %2799 = vmatprep.mubr.bf16.mxu0 %v970
      %2800 = vmatmul.mubr.bf16.gmra.mrb[0].mxu0 %v969
      %v2801 = vpop.f32.mrb[0].mxu0
      %v2802 = vadd.f32 %v2689, %v2801
      %v2803 = vpop.f32.mrb[0].mxu0
      %v2804 = vadd.f32 %v2691, %v2803
      %v2805 = vpop.f32.mrb[0].mxu0
      %v2806 = vadd.f32 %v2693, %v2805
      %v2807 = vpop.f32.mrb[0].mxu0
      %v2808 = vadd.f32 %v2695, %v2807
      %2809 = vmatprep.mubr.bf16.mxu0 %v977
      %2810 = vmatmul.mubr.bf16.gmra.mrb[0].mxu0 %v976
      %v2811 = vpop.f32.mrb[0].mxu0
      %v2812 = vadd.f32 %v2699, %v2811
      %v2813 = vpop.f32.mrb[0].mxu0
      %v2814 = vadd.f32 %v2701, %v2813
      %v2815 = vpop.f32.mrb[0].mxu0
      %v2816 = vadd.f32 %v2703, %v2815
      %v2817 = vpop.f32.mrb[0].mxu0
      %v2818 = vadd.f32 %v2705, %v2817
      %2819 = vmatprep.mubr.bf16.mxu0 %v984
      %2820 = vmatmul.mubr.bf16.gmra.mrb[0].mxu0 %v983
      %v2821 = vpop.f32.mrb[0].mxu0
      %v2822 = vadd.f32 %v2709, %v2821
      %v2823 = vpop.f32.mrb[0].mxu0
      %v2824 = vadd.f32 %v2711, %v2823
      %v2825 = vpop.f32.mrb[0].mxu0
      %v2826 = vadd.f32 %v2713, %v2825
      %v2827 = vpop.f32.mrb[0].mxu0
      %v2828 = vadd.f32 %v2715, %v2827
      %2829 = vdwg.mxu0
      %2830 = vmatprep.subr.bf16.mxu0 %v1817
      %2831 = vmatpush1.bf16.msra.mxu0 %v1816
      %2832 = vmatprep.subr.bf16.mxu0 0
      %2833 = vmatpush1.bf16.msra.mxu0 0
      %2834 = vmatprep.subr.bf16.mxu0 0
      %2835 = vmatpush1.bf16.msra.mxu0 0
      %2836 = vmatprep.subr.bf16.mxu0 0
      %2837 = vmatpush1.bf16.msra.mxu0 0
      %2838 = vmatprep.subr.bf16.mxu0 0
      %2839 = vmatpush1.bf16.msra.mxu0 0
      %2840 = vmatprep.subr.bf16.mxu0 0
      %2841 = vmatpush1.bf16.msra.mxu0 0
      %2842 = vmatprep.subr.bf16.mxu0 0
      %2843 = vmatpush1.bf16.msra.mxu0 0
      %2844 = vmatprep.subr.bf16.mxu0 0
      %2845 = vmatpush1.bf16.msra.mxu0 0
      %2846 = vmatprep.subr.bf16.mxu0 0
      %2847 = vmatpush1.bf16.msra.mxu0 0
      %2848 = vmatprep.subr.bf16.mxu0 0
      %2849 = vmatpush1.bf16.msra.mxu0 0
      %2850 = vmatprep.subr.bf16.mxu0 0
      %2851 = vmatpush1.bf16.msra.mxu0 0
      %2852 = vmatprep.subr.bf16.mxu0 0
      %2853 = vmatpush1.bf16.msra.mxu0 0
      %2854 = vmatprep.subr.bf16.mxu0 0
      %2855 = vmatpush1.bf16.msra.mxu0 0
      %2856 = vmatprep.subr.bf16.mxu0 0
      %2857 = vmatpush1.bf16.msra.mxu0 0
      %2858 = vmatprep.subr.bf16.mxu0 0
      %2859 = vmatpush1.bf16.msra.mxu0 0
      %2860 = vmatprep.subr.bf16.mxu0 0
      %2861 = vmatpush1.bf16.msra.mxu0 0
      %2862 = vmatprep.mubr.bf16.mxu0 0
      %2863 = vmatmul.mubr.bf16.gmra.mrb[0].mxu0 %v2016
      %v2864 = vpop.f32.mrb[0].mxu0
      %v2865 = vadd.f32 %v2752, %v2864
      %v2866 = vpop.f32.mrb[0].mxu0
      %v2867 = vadd.f32 %v2754, %v2866
      %v2868 = vpop.f32.mrb[0].mxu0
      %v2869 = vadd.f32 %v2756, %v2868
      %v2870 = vpop.f32.mrb[0].mxu0
      %v2871 = vadd.f32 %v2758, %v2870
      %2872 = vmatprep.mubr.bf16.mxu0 0
      %2873 = vmatmul.mubr.bf16.gmra.mrb[0].mxu0 %v2019
      %v2874 = vpop.f32.mrb[0].mxu0
      %v2875 = vadd.f32 %v2762, %v2874
      %v2876 = vpop.f32.mrb[0].mxu0
      %v2877 = vadd.f32 %v2764, %v2876
      %v2878 = vpop.f32.mrb[0].mxu0
      %v2879 = vadd.f32 %v2766, %v2878
      %v2880 = vpop.f32.mrb[0].mxu0
      %v2881 = vadd.f32 %v2768, %v2880
      %2882 = vmatprep.mubr.bf16.mxu0 0
      %2883 = vmatmul.mubr.bf16.gmra.mrb[0].mxu0 %v2022
      %v2884 = vpop.f32.mrb[0].mxu0
      %v2885 = vadd.f32 %v2772, %v2884
      %v2886 = vpop.f32.mrb[0].mxu0
      %v2887 = vadd.f32 %v2774, %v2886
      %v2888 = vpop.f32.mrb[0].mxu0
      %v2889 = vadd.f32 %v2776, %v2888
      %v2890 = vpop.f32.mrb[0].mxu0
      %v2891 = vadd.f32 %v2778, %v2890
      %2892 = vmatprep.mubr.bf16.mxu0 0
      %2893 = vmatmul.mubr.bf16.gmra.mrb[0].mxu0 %v2025
      %v2894 = vpop.f32.mrb[0].mxu0
      %v2895 = vadd.f32 %v2782, %v2894
      %v2896 = vpop.f32.mrb[0].mxu0
      %v2897 = vadd.f32 %v2784, %v2896
      %v2898 = vpop.f32.mrb[0].mxu0
      %v2899 = vadd.f32 %v2786, %v2898
      %v2900 = vpop.f32.mrb[0].mxu0
      %v2901 = vadd.f32 %v2788, %v2900
      %2902 = vmatprep.mubr.bf16.mxu0 0
      %2903 = vmatmul.mubr.bf16.gmra.mrb[0].mxu0 %v2028
      %v2904 = vpop.f32.mrb[0].mxu0
      %v2905 = vadd.f32 %v2792, %v2904
      %v2906 = vpop.f32.mrb[0].mxu0
      %v2907 = vadd.f32 %v2794, %v2906
      %v2908 = vpop.f32.mrb[0].mxu0
      %v2909 = vadd.f32 %v2796, %v2908
      %v2910 = vpop.f32.mrb[0].mxu0
      %v2911 = vadd.f32 %v2798, %v2910
      %2912 = vmatprep.mubr.bf16.mxu0 0
      %2913 = vmatmul.mubr.bf16.gmra.mrb[0].mxu0 %v2031
      %v2914 = vpop.f32.mrb[0].mxu0
      %v2915 = vadd.f32 %v2802, %v2914
      %v2916 = vpop.f32.mrb[0].mxu0
      %v2917 = vadd.f32 %v2804, %v2916
      %v2918 = vpop.f32.mrb[0].mxu0
      %v2919 = vadd.f32 %v2806, %v2918
      %v2920 = vpop.f32.mrb[0].mxu0
      %v2921 = vadd.f32 %v2808, %v2920
      %2922 = vmatprep.mubr.bf16.mxu0 0
      %2923 = vmatmul.mubr.bf16.gmra.mrb[0].mxu0 %v2034
      %v2924 = vpop.f32.mrb[0].mxu0
      %v2925 = vadd.f32 %v2812, %v2924
      %v2926 = vpop.f32.mrb[0].mxu0
      %v2927 = vadd.f32 %v2814, %v2926
      %v2928 = vpop.f32.mrb[0].mxu0
      %v2929 = vadd.f32 %v2816, %v2928
      %v2930 = vpop.f32.mrb[0].mxu0
      %v2931 = vadd.f32 %v2818, %v2930
      %2932 = vmatprep.mubr.bf16.mxu0 0
      %2933 = vmatmul.mubr.bf16.gmra.mrb[0].mxu0 %v2037
      %v2934 = vpop.f32.mrb[0].mxu0
      %v2935 = vadd.f32 %v2822, %v2934
      %v2936 = vpop.f32.mrb[0].mxu0
      %v2937 = vadd.f32 %v2824, %v2936
      %v2938 = vpop.f32.mrb[0].mxu0
      %v2939 = vadd.f32 %v2826, %v2938
      %v2940 = vpop.f32.mrb[0].mxu0
      %v2941 = vadd.f32 %v2828, %v2940
      %2942 = vdwg.mxu0
      %v2943 = vmax.f32 %v2413, 0.0
      %v2944 = vmax.f32 %v2415, 0.0
      %v2945 = vmax.f32 %v2865, 0.0
      %v2946 = vmax.f32 %v2867, 0.0
      %v2947 = vmax.f32 %v2417, 0.0
      %v2948 = vmax.f32 %v2419, 0.0
      %v2949 = vmax.f32 %v2869, 0.0
      %v2950 = vmax.f32 %v2871, 0.0
      %v2951 = vmax.f32 %v2423, 0.0
      %v2952 = vmax.f32 %v2425, 0.0
      %v2953 = vmax.f32 %v2875, 0.0
      %v2954 = vmax.f32 %v2877, 0.0
      %v2955 = vmax.f32 %v2427, 0.0
      %v2956 = vmax.f32 %v2429, 0.0
      %v2957 = vmax.f32 %v2879, 0.0
      %v2958 = vmax.f32 %v2881, 0.0
      %v2959 = vmax.f32 %v2433, 0.0
      %v2960 = vmax.f32 %v2435, 0.0
      %v2961 = vmax.f32 %v2885, 0.0
      %v2962 = vmax.f32 %v2887, 0.0
      %v2963 = vmax.f32 %v2437, 0.0
      %v2964 = vmax.f32 %v2439, 0.0
      %v2965 = vmax.f32 %v2889, 0.0
      %v2966 = vmax.f32 %v2891, 0.0
      %v2967 = vmax.f32 %v2443, 0.0
      %v2968 = vmax.f32 %v2445, 0.0
      %v2969 = vmax.f32 %v2895, 0.0
      %v2970 = vmax.f32 %v2897, 0.0
      %v2971 = vmax.f32 %v2447, 0.0
      %v2972 = vmax.f32 %v2449, 0.0
      %v2973 = vmax.f32 %v2899, 0.0
      %v2974 = vmax.f32 %v2901, 0.0
      %v2975 = vmax.f32 %v2453, 0.0
      %v2976 = vmax.f32 %v2455, 0.0
      %v2977 = vmax.f32 %v2905, 0.0
      %v2978 = vmax.f32 %v2907, 0.0
      %v2979 = vmax.f32 %v2457, 0.0
      %v2980 = vmax.f32 %v2459, 0.0
      %v2981 = vmax.f32 %v2909, 0.0
      %v2982 = vmax.f32 %v2911, 0.0
      %v2983 = vmax.f32 %v2463, 0.0
      %v2984 = vmax.f32 %v2465, 0.0
      %v2985 = vmax.f32 %v2915, 0.0
      %v2986 = vmax.f32 %v2917, 0.0
      %v2987 = vmax.f32 %v2467, 0.0
      %v2988 = vmax.f32 %v2469, 0.0
      %v2989 = vmax.f32 %v2919, 0.0
      %v2990 = vmax.f32 %v2921, 0.0
      %v2991 = vmax.f32 %v2473, 0.0
      %v2992 = vmax.f32 %v2475, 0.0
      %v2993 = vmax.f32 %v2925, 0.0
      %v2994 = vmax.f32 %v2927, 0.0
      %v2995 = vmax.f32 %v2477, 0.0
      %v2996 = vmax.f32 %v2479, 0.0
      %v2997 = vmax.f32 %v2929, 0.0
      %v2998 = vmax.f32 %v2931, 0.0
      %v2999 = vmax.f32 %v2483, 0.0
      %v3000 = vmax.f32 %v2485, 0.0
      %v3001 = vmax.f32 %v2935, 0.0
      %v3002 = vmax.f32 %v2937, 0.0
      %v3003 = vmax.f32 %v2487, 0.0
      %v3004 = vmax.f32 %v2489, 0.0
      %v3005 = vmax.f32 %v2939, 0.0
      %v3006 = vmax.f32 %v2941, 0.0
      %v3007 = vpack.c.bf16 %v2947, %v2943
      %v3008 = vpack.c.bf16 %v2948, %v2944
      %v3009 = vpack.c.bf16 %v2949, %v2945
      %v3010 = vpack.c.bf16 %v2950, %v2946
      %v3011 = vpack.c.bf16 %v2955, %v2951
      %v3012 = vpack.c.bf16 %v2956, %v2952
      %v3013 = vpack.c.bf16 %v2957, %v2953
      %v3014 = vpack.c.bf16 %v2958, %v2954
      %v3015 = vpack.c.bf16 %v2963, %v2959
      %v3016 = vpack.c.bf16 %v2964, %v2960
      %v3017 = vpack.c.bf16 %v2965, %v2961
      %v3018 = vpack.c.bf16 %v2966, %v2962
      %v3019 = vpack.c.bf16 %v2971, %v2967
      %v3020 = vpack.c.bf16 %v2972, %v2968
      %v3021 = vpack.c.bf16 %v2973, %v2969
      %v3022 = vpack.c.bf16 %v2974, %v2970
      %v3023 = vpack.c.bf16 %v2979, %v2975
      %v3024 = vpack.c.bf16 %v2980, %v2976
      %v3025 = vpack.c.bf16 %v2981, %v2977
      %v3026 = vpack.c.bf16 %v2982, %v2978
      %v3027 = vpack.c.bf16 %v2987, %v2983
      %v3028 = vpack.c.bf16 %v2988, %v2984
      %v3029 = vpack.c.bf16 %v2989, %v2985
      %v3030 = vpack.c.bf16 %v2990, %v2986
      %v3031 = vpack.c.bf16 %v2995, %v2991
      %v3032 = vpack.c.bf16 %v2996, %v2992
      %v3033 = vpack.c.bf16 %v2997, %v2993
      %v3034 = vpack.c.bf16 %v2998, %v2994
      %v3035 = vpack.c.bf16 %v3003, %v2999
      %v3036 = vpack.c.bf16 %v3004, %v3000
      %v3037 = vpack.c.bf16 %v3005, %v3001
      %v3038 = vpack.c.bf16 %v3006, %v3002
      %v3039 = vld [vmem:[%s4] sm:$0xff]
      %v3040 = vld [vmem:[%s4 + $0x8] sm:$0xff]
      %v3041 = vld [vmem:[%s4 + $0x10] sm:$0xff]
      %v3042 = vld [vmem:[%s4 + $0x18] sm:$0xff]
      %v3043 = vld [vmem:[%s4 + $0x20] sm:$0xff]
      %v3044 = vld [vmem:[%s4 + $0x28] sm:$0xff]
      %v3045 = vld [vmem:[%s4 + $0x30] sm:$0xff]
      %v3046 = vld [vmem:[%s4 + $0x38] sm:$0xff]
      %v3047 = vld [vmem:[%s4 + $0x40] sm:$0xff]
      %v3048 = vld [vmem:[%s4 + $0x48] sm:$0xff]
      %v3049 = vld [vmem:[%s4 + $0x50] sm:$0xff]
      %v3050 = vld [vmem:[%s4 + $0x58] sm:$0xff]
      %v3051 = vld [vmem:[%s4 + $0x60] sm:$0xff]
      %v3052 = vld [vmem:[%s4 + $0x68] sm:$0xff]
      %v3053 = vld [vmem:[%s4 + $0x70] sm:$0xff]
      %v3054 = vld [vmem:[%s4 + $0x78] sm:$0xff]
      %v3055 = vld [vmem:[%s4 + $0x80] sm:$0xff]
      %v3056 = vld [vmem:[%s4 + $0x88] sm:$0xff]
      %v3057 = vld [vmem:[%s4 + $0x90] sm:$0xff]
      %v3058 = vld [vmem:[%s4 + $0x98] sm:$0xff]
      %v3059 = vld [vmem:[%s4 + $0xa0] sm:$0xff]
      %v3060 = vld [vmem:[%s4 + $0xa8] sm:$0xff]
      %v3061 = vld [vmem:[%s4 + $0xb0] sm:$0xff]
      %v3062 = vld [vmem:[%s4 + $0xb8] sm:$0xff]
      %v3063 = vld [vmem:[%s4 + $0xc0] sm:$0xff]
      %v3064 = vld [vmem:[%s4 + $0xc8] sm:$0xff]
      %v3065 = vld [vmem:[%s4 + $0xd0] sm:$0xff]
      %v3066 = vld [vmem:[%s4 + $0xd8] sm:$0xff]
      %v3067 = vld [vmem:[%s4 + $0xe0] sm:$0xff]
      %v3068 = vld [vmem:[%s4 + $0xe8] sm:$0xff]
      %v3069 = vld [vmem:[%s4 + $0xf0] sm:$0xff]
      %v3070 = vld [vmem:[%s4 + $0xf8] sm:$0xff]
      %v3071 = vld [vmem:[%s4 + $0x100] sm:$0xff]
      %v3072 = vld [vmem:[%s4 + $0x108] sm:$0xff]
      %v3073 = vld [vmem:[%s4 + $0x110] sm:$0xff]
      %v3074 = vld [vmem:[%s4 + $0x118] sm:$0xff]
      %v3075 = vld [vmem:[%s4 + $0x120] sm:$0xff]
      %v3076 = vld [vmem:[%s4 + $0x128] sm:$0xff]
      %v3077 = vld [vmem:[%s4 + $0x130] sm:$0xff]
      %v3078 = vld [vmem:[%s4 + $0x138] sm:$0xff]
      %v3079 = vld [vmem:[%s4 + $0x140] sm:$0xff]
      %v3080 = vld [vmem:[%s4 + $0x148] sm:$0xff]
      %v3081 = vld [vmem:[%s4 + $0x150] sm:$0xff]
      %v3082 = vld [vmem:[%s4 + $0x158] sm:$0xff]
      %v3083 = vld [vmem:[%s4 + $0x160] sm:$0xff]
      %v3084 = vld [vmem:[%s4 + $0x168] sm:$0xff]
      %v3085 = vld [vmem:[%s4 + $0x170] sm:$0xff]
      %v3086 = vld [vmem:[%s4 + $0x178] sm:$0xff]
      %v3087 = vld [vmem:[%s4 + $0x180] sm:$0xff]
      %v3088 = vld [vmem:[%s4 + $0x188] sm:$0xff]
      %v3089 = vld [vmem:[%s4 + $0x190] sm:$0xff]
      %v3090 = vld [vmem:[%s4 + $0x198] sm:$0xff]
      %v3091 = vld [vmem:[%s4 + $0x1a0] sm:$0xff]
      %v3092 = vld [vmem:[%s4 + $0x1a8] sm:$0xff]
      %v3093 = vld [vmem:[%s4 + $0x1b0] sm:$0xff]
      %v3094 = vld [vmem:[%s4 + $0x1b8] sm:$0xff]
      %v3095 = vld [vmem:[%s4 + $0x1c0] sm:$0xff]
      %v3096 = vld [vmem:[%s4 + $0x1c8] sm:$0xff]
      %v3097 = vld [vmem:[%s4 + $0x1d0] sm:$0xff]
      %v3098 = vld [vmem:[%s4 + $0x1d8] sm:$0xff]
      %v3099 = vld [vmem:[%s4 + $0x1e0] sm:$0xff]
      %v3100 = vld [vmem:[%s4 + $0x1e8] sm:$0xff]
      %v3101 = vld [vmem:[%s4 + $0x1f0] sm:$0xff]
      %v3102 = vld [vmem:[%s4 + $0x1f8] sm:$0xff]
      %v3103 = vld [vmem:[%s5] sm:$0x3]
      %v3105 = vlaneseq
      %v3106 = vshrl.u32 %v3105, 7
      %v3107 = vsub.s32 0, %v3106
      %v3108 = vrot.slane %v3103, %v3107
      %v3109 = vlaneseq
      %v3110 = vshrl.u32 %v3109, 7
      %v3111 = vsub.s32 1, %v3110
      %v3112 = vrot.slane %v3103, %v3111
      %v3179 = vunpack.c.l.b16 %v3039
      %v3180 = vunpack.c.h.b16 %v3039
      %v3181 = vunpack.c.l.b16 %v3040
      %v3182 = vunpack.c.h.b16 %v3040
      %v3183 = vunpack.c.l.b16 %v3041
      %v3184 = vunpack.c.h.b16 %v3041
      %v3185 = vunpack.c.l.b16 %v3042
      %v3186 = vunpack.c.h.b16 %v3042
      %v3187 = vunpack.c.l.b16 %v3043
      %v3188 = vunpack.c.h.b16 %v3043
      %v3189 = vunpack.c.l.b16 %v3044
      %v3190 = vunpack.c.h.b16 %v3044
      %v3191 = vunpack.c.l.b16 %v3045
      %v3192 = vunpack.c.h.b16 %v3045
      %v3193 = vunpack.c.l.b16 %v3046
      %v3194 = vunpack.c.h.b16 %v3046
      %v3195 = vunpack.c.l.b16 %v3047
      %v3196 = vunpack.c.h.b16 %v3047
      %v3197 = vunpack.c.l.b16 %v3048
      %v3198 = vunpack.c.h.b16 %v3048
      %v3199 = vunpack.c.l.b16 %v3049
      %v3200 = vunpack.c.h.b16 %v3049
      %v3201 = vunpack.c.l.b16 %v3050
      %v3202 = vunpack.c.h.b16 %v3050
      %v3203 = vunpack.c.l.b16 %v3051
      %v3204 = vunpack.c.h.b16 %v3051
      %v3205 = vunpack.c.l.b16 %v3052
      %v3206 = vunpack.c.h.b16 %v3052
      %v3207 = vunpack.c.l.b16 %v3053
      %v3208 = vunpack.c.h.b16 %v3053
      %v3209 = vunpack.c.l.b16 %v3054
      %v3210 = vunpack.c.h.b16 %v3054
      %v3211 = vunpack.c.l.b16 %v3055
      %v3212 = vunpack.c.h.b16 %v3055
      %v3213 = vunpack.c.l.b16 %v3056
      %v3214 = vunpack.c.h.b16 %v3056
      %v3215 = vunpack.c.l.b16 %v3057
      %v3216 = vunpack.c.h.b16 %v3057
      %v3217 = vunpack.c.l.b16 %v3058
      %v3218 = vunpack.c.h.b16 %v3058
      %v3219 = vunpack.c.l.b16 %v3059
      %v3220 = vunpack.c.h.b16 %v3059
      %v3221 = vunpack.c.l.b16 %v3060
      %v3222 = vunpack.c.h.b16 %v3060
      %v3223 = vunpack.c.l.b16 %v3061
      %v3224 = vunpack.c.h.b16 %v3061
      %v3225 = vunpack.c.l.b16 %v3062
      %v3226 = vunpack.c.h.b16 %v3062
      %v3227 = vunpack.c.l.b16 %v3063
      %v3228 = vunpack.c.h.b16 %v3063
      %v3229 = vunpack.c.l.b16 %v3064
      %v3230 = vunpack.c.h.b16 %v3064
      %v3231 = vunpack.c.l.b16 %v3065
      %v3232 = vunpack.c.h.b16 %v3065
      %v3233 = vunpack.c.l.b16 %v3066
      %v3234 = vunpack.c.h.b16 %v3066
      %v3235 = vunpack.c.l.b16 %v3067
      %v3236 = vunpack.c.h.b16 %v3067
      %v3237 = vunpack.c.l.b16 %v3068
      %v3238 = vunpack.c.h.b16 %v3068
      %v3239 = vunpack.c.l.b16 %v3069
      %v3240 = vunpack.c.h.b16 %v3069
      %v3241 = vunpack.c.l.b16 %v3070
      %v3242 = vunpack.c.h.b16 %v3070
      %v3243 = vunpack.c.l.b16 %v3071
      %v3244 = vunpack.c.h.b16 %v3071
      %v3245 = vunpack.c.l.b16 %v3072
      %v3246 = vunpack.c.h.b16 %v3072
      %v3247 = vunpack.c.l.b16 %v3073
      %v3248 = vunpack.c.h.b16 %v3073
      %v3249 = vunpack.c.l.b16 %v3074
      %v3250 = vunpack.c.h.b16 %v3074
      %v3251 = vunpack.c.l.b16 %v3075
      %v3252 = vunpack.c.h.b16 %v3075
      %v3253 = vunpack.c.l.b16 %v3076
      %v3254 = vunpack.c.h.b16 %v3076
      %v3255 = vunpack.c.l.b16 %v3077
      %v3256 = vunpack.c.h.b16 %v3077
      %v3257 = vunpack.c.l.b16 %v3078
      %v3258 = vunpack.c.h.b16 %v3078
      %v3259 = vunpack.c.l.b16 %v3079
      %v3260 = vunpack.c.h.b16 %v3079
      %v3261 = vunpack.c.l.b16 %v3080
      %v3262 = vunpack.c.h.b16 %v3080
      %v3263 = vunpack.c.l.b16 %v3081
      %v3264 = vunpack.c.h.b16 %v3081
      %v3265 = vunpack.c.l.b16 %v3082
      %v3266 = vunpack.c.h.b16 %v3082
      %v3267 = vunpack.c.l.b16 %v3083
      %v3268 = vunpack.c.h.b16 %v3083
      %v3269 = vunpack.c.l.b16 %v3084
      %v3270 = vunpack.c.h.b16 %v3084
      %v3271 = vunpack.c.l.b16 %v3085
      %v3272 = vunpack.c.h.b16 %v3085
      %v3273 = vunpack.c.l.b16 %v3086
      %v3274 = vunpack.c.h.b16 %v3086
      %v3275 = vunpack.c.l.b16 %v3087
      %v3276 = vunpack.c.h.b16 %v3087
      %v3277 = vunpack.c.l.b16 %v3088
      %v3278 = vunpack.c.h.b16 %v3088
      %v3279 = vunpack.c.l.b16 %v3089
      %v3280 = vunpack.c.h.b16 %v3089
      %v3281 = vunpack.c.l.b16 %v3090
      %v3282 = vunpack.c.h.b16 %v3090
      %v3283 = vunpack.c.l.b16 %v3091
      %v3284 = vunpack.c.h.b16 %v3091
      %v3285 = vunpack.c.l.b16 %v3092
      %v3286 = vunpack.c.h.b16 %v3092
      %v3287 = vunpack.c.l.b16 %v3093
      %v3288 = vunpack.c.h.b16 %v3093
      %v3289 = vunpack.c.l.b16 %v3094
      %v3290 = vunpack.c.h.b16 %v3094
      %v3291 = vunpack.c.l.b16 %v3095
      %v3292 = vunpack.c.h.b16 %v3095
      %v3293 = vunpack.c.l.b16 %v3096
      %v3294 = vunpack.c.h.b16 %v3096
      %v3295 = vunpack.c.l.b16 %v3097
      %v3296 = vunpack.c.h.b16 %v3097
      %v3297 = vunpack.c.l.b16 %v3098
      %v3298 = vunpack.c.h.b16 %v3098
      %v3299 = vunpack.c.l.b16 %v3099
      %v3300 = vunpack.c.h.b16 %v3099
      %v3301 = vunpack.c.l.b16 %v3100
      %v3302 = vunpack.c.h.b16 %v3100
      %v3303 = vunpack.c.l.b16 %v3101
      %v3304 = vunpack.c.h.b16 %v3101
      %v3305 = vunpack.c.l.b16 %v3102
      %v3306 = vunpack.c.h.b16 %v3102
      %v3307 = vpack.c.b16 %v3181, %v3179
      %v3308 = vpack.c.b16 %v3182, %v3180
      %v3309 = vpack.c.b16 %v3185, %v3183
      %v3310 = vpack.c.b16 %v3186, %v3184
      %v3311 = vpack.c.b16 %v3189, %v3187
      %v3312 = vpack.c.b16 %v3190, %v3188
      %v3313 = vpack.c.b16 %v3193, %v3191
      %v3314 = vpack.c.b16 %v3194, %v3192
      %v3315 = vpack.c.b16 %v3197, %v3195
      %v3316 = vpack.c.b16 %v3198, %v3196
      %v3317 = vpack.c.b16 %v3201, %v3199
      %v3318 = vpack.c.b16 %v3202, %v3200
      %v3319 = vpack.c.b16 %v3205, %v3203
      %v3320 = vpack.c.b16 %v3206, %v3204
      %v3321 = vpack.c.b16 %v3209, %v3207
      %v3322 = vpack.c.b16 %v3210, %v3208
      %v3323 = vpack.c.b16 %v3213, %v3211
      %v3324 = vpack.c.b16 %v3214, %v3212
      %v3325 = vpack.c.b16 %v3217, %v3215
      %v3326 = vpack.c.b16 %v3218, %v3216
      %v3327 = vpack.c.b16 %v3221, %v3219
      %v3328 = vpack.c.b16 %v3222, %v3220
      %v3329 = vpack.c.b16 %v3225, %v3223
      %v3330 = vpack.c.b16 %v3226, %v3224
      %v3331 = vpack.c.b16 %v3229, %v3227
      %v3332 = vpack.c.b16 %v3230, %v3228
      %v3333 = vpack.c.b16 %v3233, %v3231
      %v3334 = vpack.c.b16 %v3234, %v3232
      %v3335 = vpack.c.b16 %v3237, %v3235
      %v3336 = vpack.c.b16 %v3238, %v3236
      %v3337 = vpack.c.b16 %v3241, %v3239
      %v3338 = vpack.c.b16 %v3242, %v3240
      %v3339 = vpack.c.b16 %v3245, %v3243
      %v3340 = vpack.c.b16 %v3246, %v3244
      %v3341 = vpack.c.b16 %v3249, %v3247
      %v3342 = vpack.c.b16 %v3250, %v3248
      %v3343 = vpack.c.b16 %v3253, %v3251
      %v3344 = vpack.c.b16 %v3254, %v3252
      %v3345 = vpack.c.b16 %v3257, %v3255
      %v3346 = vpack.c.b16 %v3258, %v3256
      %v3347 = vpack.c.b16 %v3261, %v3259
      %v3348 = vpack.c.b16 %v3262, %v3260
      %v3349 = vpack.c.b16 %v3265, %v3263
      %v3350 = vpack.c.b16 %v3266, %v3264
      %v3351 = vpack.c.b16 %v3269, %v3267
      %v3352 = vpack.c.b16 %v3270, %v3268
      %v3353 = vpack.c.b16 %v3273, %v3271
      %v3354 = vpack.c.b16 %v3274, %v3272
      %v3355 = vpack.c.b16 %v3277, %v3275
      %v3356 = vpack.c.b16 %v3278, %v3276
      %v3357 = vpack.c.b16 %v3281, %v3279
      %v3358 = vpack.c.b16 %v3282, %v3280
      %v3359 = vpack.c.b16 %v3285, %v3283
      %v3360 = vpack.c.b16 %v3286, %v3284
      %v3361 = vpack.c.b16 %v3289, %v3287
      %v3362 = vpack.c.b16 %v3290, %v3288
      %v3363 = vpack.c.b16 %v3293, %v3291
      %v3364 = vpack.c.b16 %v3294, %v3292
      %v3365 = vpack.c.b16 %v3297, %v3295
      %v3366 = vpack.c.b16 %v3298, %v3296
      %v3367 = vpack.c.b16 %v3301, %v3299
      %v3368 = vpack.c.b16 %v3302, %v3300
      %v3369 = vpack.c.b16 %v3305, %v3303
      %v3370 = vpack.c.b16 %v3306, %v3304
      %3435 = vmatprep.subr.bf16.mxu0 %v3308
      %3436 = vmatpush1.bf16.msra.mxu0 %v3307
      %3437 = vmatprep.subr.bf16.mxu0 %v3310
      %3438 = vmatpush1.bf16.msra.mxu0 %v3309
      %3439 = vmatprep.subr.bf16.mxu0 %v3312
      %3440 = vmatpush1.bf16.msra.mxu0 %v3311
      %3441 = vmatprep.subr.bf16.mxu0 %v3314
      %3442 = vmatpush1.bf16.msra.mxu0 %v3313
      %3443 = vmatprep.subr.bf16.mxu0 %v3316
      %3444 = vmatpush1.bf16.msra.mxu0 %v3315
      %3445 = vmatprep.subr.bf16.mxu0 %v3318
      %3446 = vmatpush1.bf16.msra.mxu0 %v3317
      %3447 = vmatprep.subr.bf16.mxu0 %v3320
      %3448 = vmatpush1.bf16.msra.mxu0 %v3319
      %3449 = vmatprep.subr.bf16.mxu0 %v3322
      %3450 = vmatpush1.bf16.msra.mxu0 %v3321
      %3451 = vmatprep.subr.bf16.mxu0 %v3324
      %3452 = vmatpush1.bf16.msra.mxu0 %v3323
      %3453 = vmatprep.subr.bf16.mxu0 %v3326
      %3454 = vmatpush1.bf16.msra.mxu0 %v3325
      %3455 = vmatprep.subr.bf16.mxu0 %v3328
      %3456 = vmatpush1.bf16.msra.mxu0 %v3327
      %3457 = vmatprep.subr.bf16.mxu0 %v3330
      %3458 = vmatpush1.bf16.msra.mxu0 %v3329
      %3459 = vmatprep.subr.bf16.mxu0 %v3332
      %3460 = vmatpush1.bf16.msra.mxu0 %v3331
      %3461 = vmatprep.subr.bf16.mxu0 %v3334
      %3462 = vmatpush1.bf16.msra.mxu0 %v3333
      %3463 = vmatprep.subr.bf16.mxu0 %v3336
      %3464 = vmatpush1.bf16.msra.mxu0 %v3335
      %3465 = vmatprep.subr.bf16.mxu0 %v3338
      %3466 = vmatpush1.bf16.msra.mxu0 %v3337
      %3467 = vmatprep.mubr.bf16.mxu0 %v3008
      %3468 = vmatmul.mubr.bf16.gmra.mrb[0].mxu0 %v3007
      %v3469 = vpop.f32.mrb[0].mxu0
      %v3470 = vadd.f32 %v3108, %v3469
      %v3471 = vpop.f32.mrb[0].mxu0
      %v3472 = vadd.f32 %v3112, %v3471
      %v3473 = vpop.f32.mrb[0].mxu0
      %v3474 = vadd.f32 %v3108, %v3473
      %v3475 = vpop.f32.mrb[0].mxu0
      %v3476 = vadd.f32 %v3112, %v3475
      %3477 = vmatprep.mubr.bf16.mxu0 %v3012
      %3478 = vmatmul.mubr.bf16.gmra.mrb[0].mxu0 %v3011
      %v3479 = vpop.f32.mrb[0].mxu0
      %v3480 = vadd.f32 %v3108, %v3479
      %v3481 = vpop.f32.mrb[0].mxu0
      %v3482 = vadd.f32 %v3112, %v3481
      %v3483 = vpop.f32.mrb[0].mxu0
      %v3484 = vadd.f32 %v3108, %v3483
      %v3485 = vpop.f32.mrb[0].mxu0
      %v3486 = vadd.f32 %v3112, %v3485
      %3487 = vmatprep.mubr.bf16.mxu0 %v3016
      %3488 = vmatmul.mubr.bf16.gmra.mrb[0].mxu0 %v3015
      %v3489 = vpop.f32.mrb[0].mxu0
      %v3490 = vadd.f32 %v3108, %v3489
      %v3491 = vpop.f32.mrb[0].mxu0
      %v3492 = vadd.f32 %v3112, %v3491
      %v3493 = vpop.f32.mrb[0].mxu0
      %v3494 = vadd.f32 %v3108, %v3493
      %v3495 = vpop.f32.mrb[0].mxu0
      %v3496 = vadd.f32 %v3112, %v3495
      %3497 = vmatprep.mubr.bf16.mxu0 %v3020
      %3498 = vmatmul.mubr.bf16.gmra.mrb[0].mxu0 %v3019
      %v3499 = vpop.f32.mrb[0].mxu0
      %v3500 = vadd.f32 %v3108, %v3499
      %v3501 = vpop.f32.mrb[0].mxu0
      %v3502 = vadd.f32 %v3112, %v3501
      %v3503 = vpop.f32.mrb[0].mxu0
      %v3504 = vadd.f32 %v3108, %v3503
      %v3505 = vpop.f32.mrb[0].mxu0
      %v3506 = vadd.f32 %v3112, %v3505
      %3507 = vmatprep.mubr.bf16.mxu0 %v3024
      %3508 = vmatmul.mubr.bf16.gmra.mrb[0].mxu0 %v3023
      %v3509 = vpop.f32.mrb[0].mxu0
      %v3510 = vadd.f32 %v3108, %v3509
      %v3511 = vpop.f32.mrb[0].mxu0
      %v3512 = vadd.f32 %v3112, %v3511
      %v3513 = vpop.f32.mrb[0].mxu0
      %v3514 = vadd.f32 %v3108, %v3513
      %v3515 = vpop.f32.mrb[0].mxu0
      %v3516 = vadd.f32 %v3112, %v3515
      %3517 = vmatprep.mubr.bf16.mxu0 %v3028
      %3518 = vmatmul.mubr.bf16.gmra.mrb[0].mxu0 %v3027
      %v3519 = vpop.f32.mrb[0].mxu0
      %v3520 = vadd.f32 %v3108, %v3519
      %v3521 = vpop.f32.mrb[0].mxu0
      %v3522 = vadd.f32 %v3112, %v3521
      %v3523 = vpop.f32.mrb[0].mxu0
      %v3524 = vadd.f32 %v3108, %v3523
      %v3525 = vpop.f32.mrb[0].mxu0
      %v3526 = vadd.f32 %v3112, %v3525
      %3527 = vmatprep.mubr.bf16.mxu0 %v3032
      %3528 = vmatmul.mubr.bf16.gmra.mrb[0].mxu0 %v3031
      %v3529 = vpop.f32.mrb[0].mxu0
      %v3530 = vadd.f32 %v3108, %v3529
      %v3531 = vpop.f32.mrb[0].mxu0
      %v3532 = vadd.f32 %v3112, %v3531
      %v3533 = vpop.f32.mrb[0].mxu0
      %v3534 = vadd.f32 %v3108, %v3533
      %v3535 = vpop.f32.mrb[0].mxu0
      %v3536 = vadd.f32 %v3112, %v3535
      %3537 = vmatprep.mubr.bf16.mxu0 %v3036
      %3538 = vmatmul.mubr.bf16.gmra.mrb[0].mxu0 %v3035
      %v3539 = vpop.f32.mrb[0].mxu0
      %v3540 = vadd.f32 %v3108, %v3539
      %v3541 = vpop.f32.mrb[0].mxu0
      %v3542 = vadd.f32 %v3112, %v3541
      %v3543 = vpop.f32.mrb[0].mxu0
      %v3544 = vadd.f32 %v3108, %v3543
      %v3545 = vpop.f32.mrb[0].mxu0
      %v3546 = vadd.f32 %v3112, %v3545
      %3547 = vdwg.mxu0
      %3548 = vmatprep.subr.bf16.mxu0 %v3340
      %3549 = vmatpush1.bf16.msra.mxu0 %v3339
      %3550 = vmatprep.subr.bf16.mxu0 %v3342
      %3551 = vmatpush1.bf16.msra.mxu0 %v3341
      %3552 = vmatprep.subr.bf16.mxu0 %v3344
      %3553 = vmatpush1.bf16.msra.mxu0 %v3343
      %3554 = vmatprep.subr.bf16.mxu0 %v3346
      %3555 = vmatpush1.bf16.msra.mxu0 %v3345
      %3556 = vmatprep.subr.bf16.mxu0 %v3348
      %3557 = vmatpush1.bf16.msra.mxu0 %v3347
      %3558 = vmatprep.subr.bf16.mxu0 %v3350
      %3559 = vmatpush1.bf16.msra.mxu0 %v3349
      %3560 = vmatprep.subr.bf16.mxu0 %v3352
      %3561 = vmatpush1.bf16.msra.mxu0 %v3351
      %3562 = vmatprep.subr.bf16.mxu0 %v3354
      %3563 = vmatpush1.bf16.msra.mxu0 %v3353
      %3564 = vmatprep.subr.bf16.mxu0 %v3356
      %3565 = vmatpush1.bf16.msra.mxu0 %v3355
      %3566 = vmatprep.subr.bf16.mxu0 %v3358
      %3567 = vmatpush1.bf16.msra.mxu0 %v3357
      %3568 = vmatprep.subr.bf16.mxu0 %v3360
      %3569 = vmatpush1.bf16.msra.mxu0 %v3359
      %3570 = vmatprep.subr.bf16.mxu0 %v3362
      %3571 = vmatpush1.bf16.msra.mxu0 %v3361
      %3572 = vmatprep.subr.bf16.mxu0 %v3364
      %3573 = vmatpush1.bf16.msra.mxu0 %v3363
      %3574 = vmatprep.subr.bf16.mxu0 %v3366
      %3575 = vmatpush1.bf16.msra.mxu0 %v3365
      %3576 = vmatprep.subr.bf16.mxu0 %v3368
      %3577 = vmatpush1.bf16.msra.mxu0 %v3367
      %3578 = vmatprep.subr.bf16.mxu0 %v3370
      %3579 = vmatpush1.bf16.msra.mxu0 %v3369
      %3580 = vmatprep.mubr.bf16.mxu0 %v3010
      %3581 = vmatmul.mubr.bf16.gmra.mrb[0].mxu0 %v3009
      %v3582 = vpop.f32.mrb[0].mxu0
      %v3583 = vadd.f32 %v3470, %v3582
      %v3584 = vpop.f32.mrb[0].mxu0
      %v3585 = vadd.f32 %v3472, %v3584
      %v3586 = vpop.f32.mrb[0].mxu0
      %v3587 = vadd.f32 %v3474, %v3586
      %v3588 = vpop.f32.mrb[0].mxu0
      %v3589 = vadd.f32 %v3476, %v3588
      %3590 = vmatprep.mubr.bf16.mxu0 %v3014
      %3591 = vmatmul.mubr.bf16.gmra.mrb[0].mxu0 %v3013
      %v3592 = vpop.f32.mrb[0].mxu0
      %v3593 = vadd.f32 %v3480, %v3592
      %v3594 = vpop.f32.mrb[0].mxu0
      %v3595 = vadd.f32 %v3482, %v3594
      %v3596 = vpop.f32.mrb[0].mxu0
      %v3597 = vadd.f32 %v3484, %v3596
      %v3598 = vpop.f32.mrb[0].mxu0
      %v3599 = vadd.f32 %v3486, %v3598
      %3600 = vmatprep.mubr.bf16.mxu0 %v3018
      %3601 = vmatmul.mubr.bf16.gmra.mrb[0].mxu0 %v3017
      %v3602 = vpop.f32.mrb[0].mxu0
      %v3603 = vadd.f32 %v3490, %v3602
      %v3604 = vpop.f32.mrb[0].mxu0
      %v3605 = vadd.f32 %v3492, %v3604
      %v3606 = vpop.f32.mrb[0].mxu0
      %v3607 = vadd.f32 %v3494, %v3606
      %v3608 = vpop.f32.mrb[0].mxu0
      %v3609 = vadd.f32 %v3496, %v3608
      %3610 = vmatprep.mubr.bf16.mxu0 %v3022
      %3611 = vmatmul.mubr.bf16.gmra.mrb[0].mxu0 %v3021
      %v3612 = vpop.f32.mrb[0].mxu0
      %v3613 = vadd.f32 %v3500, %v3612
      %v3614 = vpop.f32.mrb[0].mxu0
      %v3615 = vadd.f32 %v3502, %v3614
      %v3616 = vpop.f32.mrb[0].mxu0
      %v3617 = vadd.f32 %v3504, %v3616
      %v3618 = vpop.f32.mrb[0].mxu0
      %v3619 = vadd.f32 %v3506, %v3618
      %3620 = vmatprep.mubr.bf16.mxu0 %v3026
      %3621 = vmatmul.mubr.bf16.gmra.mrb[0].mxu0 %v3025
      %v3622 = vpop.f32.mrb[0].mxu0
      %v3623 = vadd.f32 %v3510, %v3622
      %v3624 = vpop.f32.mrb[0].mxu0
      %v3625 = vadd.f32 %v3512, %v3624
      %v3626 = vpop.f32.mrb[0].mxu0
      %v3627 = vadd.f32 %v3514, %v3626
      %v3628 = vpop.f32.mrb[0].mxu0
      %v3629 = vadd.f32 %v3516, %v3628
      %3630 = vmatprep.mubr.bf16.mxu0 %v3030
      %3631 = vmatmul.mubr.bf16.gmra.mrb[0].mxu0 %v3029
      %v3632 = vpop.f32.mrb[0].mxu0
      %v3633 = vadd.f32 %v3520, %v3632
      %v3634 = vpop.f32.mrb[0].mxu0
      %v3635 = vadd.f32 %v3522, %v3634
      %v3636 = vpop.f32.mrb[0].mxu0
      %v3637 = vadd.f32 %v3524, %v3636
      %v3638 = vpop.f32.mrb[0].mxu0
      %v3639 = vadd.f32 %v3526, %v3638
      %3640 = vmatprep.mubr.bf16.mxu0 %v3034
      %3641 = vmatmul.mubr.bf16.gmra.mrb[0].mxu0 %v3033
      %v3642 = vpop.f32.mrb[0].mxu0
      %v3643 = vadd.f32 %v3530, %v3642
      %v3644 = vpop.f32.mrb[0].mxu0
      %v3645 = vadd.f32 %v3532, %v3644
      %v3646 = vpop.f32.mrb[0].mxu0
      %v3647 = vadd.f32 %v3534, %v3646
      %v3648 = vpop.f32.mrb[0].mxu0
      %v3649 = vadd.f32 %v3536, %v3648
      %3650 = vmatprep.mubr.bf16.mxu0 %v3038
      %3651 = vmatmul.mubr.bf16.gmra.mrb[0].mxu0 %v3037
      %v3652 = vpop.f32.mrb[0].mxu0
      %v3653 = vadd.f32 %v3540, %v3652
      %v3654 = vpop.f32.mrb[0].mxu0
      %v3655 = vadd.f32 %v3542, %v3654
      %v3656 = vpop.f32.mrb[0].mxu0
      %v3657 = vadd.f32 %v3544, %v3656
      %v3658 = vpop.f32.mrb[0].mxu0
      %v3659 = vadd.f32 %v3546, %v3658
      %3660 = vdwg.mxu0
      %v3661 = vmul.f32 %v3585, 0.5
      %v3662 = vmul.f32 %v3589, 0.5
      %v3663 = vmul.f32 %v3595, 0.5
      %v3664 = vmul.f32 %v3599, 0.5
      %v3665 = vmul.f32 %v3605, 0.5
      %v3666 = vmul.f32 %v3609, 0.5
      %v3667 = vmul.f32 %v3615, 0.5
      %v3668 = vmul.f32 %v3619, 0.5
      %v3669 = vmul.f32 %v3625, 0.5
      %v3670 = vmul.f32 %v3629, 0.5
      %v3671 = vmul.f32 %v3635, 0.5
      %v3672 = vmul.f32 %v3639, 0.5
      %v3673 = vmul.f32 %v3645, 0.5
      %v3674 = vmul.f32 %v3649, 0.5
      %v3675 = vmul.f32 %v3655, 0.5
      %v3676 = vmul.f32 %v3659, 0.5
      %v3677 = vmul.f32 %v3661, 1.442695
      %v3678 = vpow.pop %v3677
      %v3679 = vmul.f32 %v3662, 1.442695
      %v3680 = vpow.pop %v3679
      %v3681 = vmul.f32 %v3663, 1.442695
      %v3682 = vpow.pop %v3681
      %v3683 = vmul.f32 %v3664, 1.442695
      %v3684 = vpow.pop %v3683
      %v3685 = vmul.f32 %v3665, 1.442695
      %v3686 = vpow.pop %v3685
      %v3687 = vmul.f32 %v3666, 1.442695
      %v3688 = vpow.pop %v3687
      %v3689 = vmul.f32 %v3667, 1.442695
      %v3690 = vpow.pop %v3689
      %v3691 = vmul.f32 %v3668, 1.442695
      %v3692 = vpow.pop %v3691
      %v3693 = vmul.f32 %v3669, 1.442695
      %v3694 = vpow.pop %v3693
      %v3695 = vmul.f32 %v3670, 1.442695
      %v3696 = vpow.pop %v3695
      %v3697 = vmul.f32 %v3671, 1.442695
      %v3698 = vpow.pop %v3697
      %v3699 = vmul.f32 %v3672, 1.442695
      %v3700 = vpow.pop %v3699
      %v3701 = vmul.f32 %v3673, 1.442695
      %v3702 = vpow.pop %v3701
      %v3703 = vmul.f32 %v3674, 1.442695
      %v3704 = vpow.pop %v3703
      %v3705 = vmul.f32 %v3675, 1.442695
      %v3706 = vpow.pop %v3705
      %v3707 = vmul.f32 %v3676, 1.442695
      %v3708 = vpow.pop %v3707
      %v3709 = vld [vmem:[%s450] sm:$0xf]
      %v3710 = vld [vmem:[%s450 + $0x4] sm:$0xf]
      %v3711 = vld [vmem:[%s450 + $0x8] sm:$0xf]
      %v3712 = vld [vmem:[%s450 + $0xc] sm:$0xf]
      %v3713 = vld [vmem:[%s450 + $0x10] sm:$0xf]
      %v3714 = vld [vmem:[%s450 + $0x14] sm:$0xf]
      %v3715 = vld [vmem:[%s450 + $0x18] sm:$0xf]
      %v3716 = vld [vmem:[%s450 + $0x1c] sm:$0xf]
      %v3717 = vld [vmem:[%s450 + $0x20] sm:$0xf]
      %v3718 = vld [vmem:[%s450 + $0x24] sm:$0xf]
      %v3719 = vld [vmem:[%s450 + $0x28] sm:$0xf]
      %v3720 = vld [vmem:[%s450 + $0x2c] sm:$0xf]
      %v3721 = vld [vmem:[%s450 + $0x30] sm:$0xf]
      %v3722 = vld [vmem:[%s450 + $0x34] sm:$0xf]
      %v3723 = vld [vmem:[%s450 + $0x38] sm:$0xf]
      %v3724 = vld [vmem:[%s450 + $0x3c] sm:$0xf]
      %v3725 = vunpack.c.l.bf16 %v3709
      %v3726 = vunpack.c.l.bf16 %v3710
      %v3727 = vunpack.c.l.bf16 %v3711
      %v3728 = vunpack.c.l.bf16 %v3712
      %v3729 = vunpack.c.l.bf16 %v3713
      %v3730 = vunpack.c.l.bf16 %v3714
      %v3731 = vunpack.c.l.bf16 %v3715
      %v3732 = vunpack.c.l.bf16 %v3716
      %v3733 = vunpack.c.l.bf16 %v3717
      %v3734 = vunpack.c.l.bf16 %v3718
      %v3735 = vunpack.c.l.bf16 %v3719
      %v3736 = vunpack.c.l.bf16 %v3720
      %v3737 = vunpack.c.l.bf16 %v3721
      %v3738 = vunpack.c.l.bf16 %v3722
      %v3739 = vunpack.c.l.bf16 %v3723
      %v3740 = vunpack.c.l.bf16 %v3724
      %v3741 = vmul.f32 %v3725, %v3678
      %v3742 = vmul.f32 %v3726, %v3680
      %v3743 = vmul.f32 %v3727, %v3682
      %v3744 = vmul.f32 %v3728, %v3684
      %v3745 = vmul.f32 %v3729, %v3686
      %v3746 = vmul.f32 %v3730, %v3688
      %v3747 = vmul.f32 %v3731, %v3690
      %v3748 = vmul.f32 %v3732, %v3692
      %v3749 = vmul.f32 %v3733, %v3694
      %v3750 = vmul.f32 %v3734, %v3696
      %v3751 = vmul.f32 %v3735, %v3698
      %v3752 = vmul.f32 %v3736, %v3700
      %v3753 = vmul.f32 %v3737, %v3702
      %v3754 = vmul.f32 %v3738, %v3704
      %v3755 = vmul.f32 %v3739, %v3706
      %v3756 = vmul.f32 %v3740, %v3708
      %v3757 = vadd.f32 %v3741, %v3583
      %v3758 = vadd.f32 %v3742, %v3587
      %v3759 = vadd.f32 %v3743, %v3593
      %v3760 = vadd.f32 %v3744, %v3597
      %v3761 = vadd.f32 %v3745, %v3603
      %v3762 = vadd.f32 %v3746, %v3607
      %v3763 = vadd.f32 %v3747, %v3613
      %v3764 = vadd.f32 %v3748, %v3617
      %v3765 = vadd.f32 %v3749, %v3623
      %v3766 = vadd.f32 %v3750, %v3627
      %v3767 = vadd.f32 %v3751, %v3633
      %v3768 = vadd.f32 %v3752, %v3637
      %v3769 = vadd.f32 %v3753, %v3643
      %v3770 = vadd.f32 %v3754, %v3647
      %v3771 = vadd.f32 %v3755, %v3653
      %v3772 = vadd.f32 %v3756, %v3657
      %v3773 = vpack.c.bf16 %v3758, %v3757
      %v3774 = vpack.c.bf16 %v3760, %v3759
      %v3775 = vpack.c.bf16 %v3762, %v3761
      %v3776 = vpack.c.bf16 %v3764, %v3763
      %v3777 = vpack.c.bf16 %v3766, %v3765
      %v3778 = vpack.c.bf16 %v3768, %v3767
      %v3779 = vpack.c.bf16 %v3770, %v3769
      %v3780 = vpack.c.bf16 %v3772, %v3771
      %v3781 = vld [vmem:[%s6] sm:$0xff]
      %v3782 = vld [vmem:[%s6 + $0x8] sm:$0xff]
      %v3783 = vld [vmem:[%s6 + $0x10] sm:$0xff]
      %v3784 = vld [vmem:[%s6 + $0x18] sm:$0xff]
      %v3785 = vld [vmem:[%s6 + $0x20] sm:$0xff]
      %v3786 = vld [vmem:[%s6 + $0x28] sm:$0xff]
      %v3787 = vld [vmem:[%s6 + $0x30] sm:$0xff]
      %v3788 = vld [vmem:[%s6 + $0x38] sm:$0xff]
      %v3789 = vld [vmem:[%s6 + $0x40] sm:$0xff]
      %v3790 = vld [vmem:[%s6 + $0x48] sm:$0xff]
      %v3791 = vld [vmem:[%s6 + $0x50] sm:$0xff]
      %v3792 = vld [vmem:[%s6 + $0x58] sm:$0xff]
      %v3793 = vld [vmem:[%s6 + $0x60] sm:$0xff]
      %v3794 = vld [vmem:[%s6 + $0x68] sm:$0xff]
      %v3795 = vld [vmem:[%s6 + $0x70] sm:$0xff]
      %v3796 = vld [vmem:[%s6 + $0x78] sm:$0xff]
      %v3797 = vld [vmem:[%s6 + $0x80] sm:$0xff]
      %v3798 = vld [vmem:[%s6 + $0x88] sm:$0xff]
      %v3799 = vld [vmem:[%s6 + $0x90] sm:$0xff]
      %v3800 = vld [vmem:[%s6 + $0x98] sm:$0xff]
      %v3801 = vld [vmem:[%s6 + $0xa0] sm:$0xff]
      %v3802 = vld [vmem:[%s6 + $0xa8] sm:$0xff]
      %v3803 = vld [vmem:[%s6 + $0xb0] sm:$0xff]
      %v3804 = vld [vmem:[%s6 + $0xb8] sm:$0xff]
      %v3805 = vld [vmem:[%s6 + $0xc0] sm:$0xff]
      %v3806 = vld [vmem:[%s6 + $0xc8] sm:$0xff]
      %v3807 = vld [vmem:[%s6 + $0xd0] sm:$0xff]
      %v3808 = vld [vmem:[%s6 + $0xd8] sm:$0xff]
      %v3809 = vld [vmem:[%s6 + $0xe0] sm:$0xff]
      %v3810 = vld [vmem:[%s6 + $0xe8] sm:$0xff]
      %v3811 = vld [vmem:[%s6 + $0xf0] sm:$0xff]
      %v3812 = vld [vmem:[%s6 + $0xf8] sm:$0xff]
      %v3813 = vld [vmem:[%s7] sm:$0xf]
      %v3815 = vlaneseq
      %v3816 = vshrl.u32 %v3815, 7
      %v3817 = vsub.s32 0, %v3816
      %v3818 = vrot.slane %v3813, %v3817
      %v3819 = vlaneseq
      %v3820 = vshrl.u32 %v3819, 7
      %v3821 = vsub.s32 1, %v3820
      %v3822 = vrot.slane %v3813, %v3821
      %v3823 = vlaneseq
      %v3824 = vshrl.u32 %v3823, 7
      %v3825 = vsub.s32 2, %v3824
      %v3826 = vrot.slane %v3813, %v3825
      %v3827 = vlaneseq
      %v3828 = vshrl.u32 %v3827, 7
      %v3829 = vsub.s32 3, %v3828
      %v3830 = vrot.slane %v3813, %v3829
      %v3867 = vunpack.c.l.b16 %v3781
      %v3868 = vunpack.c.h.b16 %v3781
      %v3869 = vunpack.c.l.b16 %v3782
      %v3870 = vunpack.c.h.b16 %v3782
      %v3871 = vunpack.c.l.b16 %v3783
      %v3872 = vunpack.c.h.b16 %v3783
      %v3873 = vunpack.c.l.b16 %v3784
      %v3874 = vunpack.c.h.b16 %v3784
      %v3875 = vunpack.c.l.b16 %v3785
      %v3876 = vunpack.c.h.b16 %v3785
      %v3877 = vunpack.c.l.b16 %v3786
      %v3878 = vunpack.c.h.b16 %v3786
      %v3879 = vunpack.c.l.b16 %v3787
      %v3880 = vunpack.c.h.b16 %v3787
      %v3881 = vunpack.c.l.b16 %v3788
      %v3882 = vunpack.c.h.b16 %v3788
      %v3883 = vunpack.c.l.b16 %v3789
      %v3884 = vunpack.c.h.b16 %v3789
      %v3885 = vunpack.c.l.b16 %v3790
      %v3886 = vunpack.c.h.b16 %v3790
      %v3887 = vunpack.c.l.b16 %v3791
      %v3888 = vunpack.c.h.b16 %v3791
      %v3889 = vunpack.c.l.b16 %v3792
      %v3890 = vunpack.c.h.b16 %v3792
      %v3891 = vunpack.c.l.b16 %v3793
      %v3892 = vunpack.c.h.b16 %v3793
      %v3893 = vunpack.c.l.b16 %v3794
      %v3894 = vunpack.c.h.b16 %v3794
      %v3895 = vunpack.c.l.b16 %v3795
      %v3896 = vunpack.c.h.b16 %v3795
      %v3897 = vunpack.c.l.b16 %v3796
      %v3898 = vunpack.c.h.b16 %v3796
      %v3899 = vunpack.c.l.b16 %v3797
      %v3900 = vunpack.c.h.b16 %v3797
      %v3901 = vunpack.c.l.b16 %v3798
      %v3902 = vunpack.c.h.b16 %v3798
      %v3903 = vunpack.c.l.b16 %v3799
      %v3904 = vunpack.c.h.b16 %v3799
      %v3905 = vunpack.c.l.b16 %v3800
      %v3906 = vunpack.c.h.b16 %v3800
      %v3907 = vunpack.c.l.b16 %v3801
      %v3908 = vunpack.c.h.b16 %v3801
      %v3909 = vunpack.c.l.b16 %v3802
      %v3910 = vunpack.c.h.b16 %v3802
      %v3911 = vunpack.c.l.b16 %v3803
      %v3912 = vunpack.c.h.b16 %v3803
      %v3913 = vunpack.c.l.b16 %v3804
      %v3914 = vunpack.c.h.b16 %v3804
      %v3915 = vunpack.c.l.b16 %v3805
      %v3916 = vunpack.c.h.b16 %v3805
      %v3917 = vunpack.c.l.b16 %v3806
      %v3918 = vunpack.c.h.b16 %v3806
      %v3919 = vunpack.c.l.b16 %v3807
      %v3920 = vunpack.c.h.b16 %v3807
      %v3921 = vunpack.c.l.b16 %v3808
      %v3922 = vunpack.c.h.b16 %v3808
      %v3923 = vunpack.c.l.b16 %v3809
      %v3924 = vunpack.c.h.b16 %v3809
      %v3925 = vunpack.c.l.b16 %v3810
      %v3926 = vunpack.c.h.b16 %v3810
      %v3927 = vunpack.c.l.b16 %v3811
      %v3928 = vunpack.c.h.b16 %v3811
      %v3929 = vunpack.c.l.b16 %v3812
      %v3930 = vunpack.c.h.b16 %v3812
      %v3931 = vpack.c.b16 %v3871, %v3867
      %v3932 = vpack.c.b16 %v3872, %v3868
      %v3933 = vpack.c.b16 %v3873, %v3869
      %v3934 = vpack.c.b16 %v3874, %v3870
      %v3935 = vpack.c.b16 %v3879, %v3875
      %v3936 = vpack.c.b16 %v3880, %v3876
      %v3937 = vpack.c.b16 %v3881, %v3877
      %v3938 = vpack.c.b16 %v3882, %v3878
      %v3939 = vpack.c.b16 %v3887, %v3883
      %v3940 = vpack.c.b16 %v3888, %v3884
      %v3941 = vpack.c.b16 %v3889, %v3885
      %v3942 = vpack.c.b16 %v3890, %v3886
      %v3943 = vpack.c.b16 %v3895, %v3891
      %v3944 = vpack.c.b16 %v3896, %v3892
      %v3945 = vpack.c.b16 %v3897, %v3893
      %v3946 = vpack.c.b16 %v3898, %v3894
      %v3947 = vpack.c.b16 %v3903, %v3899
      %v3948 = vpack.c.b16 %v3904, %v3900
      %v3949 = vpack.c.b16 %v3905, %v3901
      %v3950 = vpack.c.b16 %v3906, %v3902
      %v3951 = vpack.c.b16 %v3911, %v3907
      %v3952 = vpack.c.b16 %v3912, %v3908
      %v3953 = vpack.c.b16 %v3913, %v3909
      %v3954 = vpack.c.b16 %v3914, %v3910
      %v3955 = vpack.c.b16 %v3919, %v3915
      %v3956 = vpack.c.b16 %v3920, %v3916
      %v3957 = vpack.c.b16 %v3921, %v3917
      %v3958 = vpack.c.b16 %v3922, %v3918
      %v3959 = vpack.c.b16 %v3927, %v3923
      %v3960 = vpack.c.b16 %v3928, %v3924
      %v3961 = vpack.c.b16 %v3929, %v3925
      %v3962 = vpack.c.b16 %v3930, %v3926
      %3995 = vmatprep.subr.bf16.mxu0 %v3932
      %3996 = vmatpush1.bf16.msra.mxu0 %v3931
      %3997 = vmatprep.subr.bf16.mxu0 %v3936
      %3998 = vmatpush1.bf16.msra.mxu0 %v3935
      %3999 = vmatprep.subr.bf16.mxu0 %v3940
      %4000 = vmatpush1.bf16.msra.mxu0 %v3939
      %4001 = vmatprep.subr.bf16.mxu0 %v3944
      %4002 = vmatpush1.bf16.msra.mxu0 %v3943
      %4003 = vmatprep.subr.bf16.mxu0 %v3948
      %4004 = vmatpush1.bf16.msra.mxu0 %v3947
      %4005 = vmatprep.subr.bf16.mxu0 %v3952
      %4006 = vmatpush1.bf16.msra.mxu0 %v3951
      %4007 = vmatprep.subr.bf16.mxu0 %v3956
      %4008 = vmatpush1.bf16.msra.mxu0 %v3955
      %4009 = vmatprep.subr.bf16.mxu0 %v3960
      %4010 = vmatpush1.bf16.msra.mxu0 %v3959
      %4011 = vmatprep.subr.bf16.mxu0 0
      %4012 = vmatpush1.bf16.msra.mxu0 0
      %4013 = vmatprep.subr.bf16.mxu0 0
      %4014 = vmatpush1.bf16.msra.mxu0 0
      %4015 = vmatprep.subr.bf16.mxu0 0
      %4016 = vmatpush1.bf16.msra.mxu0 0
      %4017 = vmatprep.subr.bf16.mxu0 0
      %4018 = vmatpush1.bf16.msra.mxu0 0
      %4019 = vmatprep.subr.bf16.mxu0 0
      %4020 = vmatpush1.bf16.msra.mxu0 0
      %4021 = vmatprep.subr.bf16.mxu0 0
      %4022 = vmatpush1.bf16.msra.mxu0 0
      %4023 = vmatprep.subr.bf16.mxu0 0
      %4024 = vmatpush1.bf16.msra.mxu0 0
      %4025 = vmatprep.subr.bf16.mxu0 0
      %4026 = vmatpush1.bf16.msra.mxu0 0
      %4027 = vmatprep.mubr.bf16.mxu0 0
      %4028 = vmatmul.mubr.bf16.gmra.mrb[0].mxu0 %v3773
      %v4029 = vpop.f32.mrb[0].mxu0
      %v4030 = vadd.f32 %v3818, %v4029
      %v4031 = vpop.f32.mrb[0].mxu0
      %v4032 = vadd.f32 %v3822, %v4031
      %v4033 = vpop.f32.mrb[0].mxu0
      %v4034 = vadd.f32 %v3818, %v4033
      %v4035 = vpop.f32.mrb[0].mxu0
      %v4036 = vadd.f32 %v3822, %v4035
      %4037 = vmatprep.mubr.bf16.mxu0 0
      %4038 = vmatmul.mubr.bf16.gmra.mrb[0].mxu0 %v3774
      %v4039 = vpop.f32.mrb[0].mxu0
      %v4040 = vadd.f32 %v3818, %v4039
      %v4041 = vpop.f32.mrb[0].mxu0
      %v4042 = vadd.f32 %v3822, %v4041
      %v4043 = vpop.f32.mrb[0].mxu0
      %v4044 = vadd.f32 %v3818, %v4043
      %v4045 = vpop.f32.mrb[0].mxu0
      %v4046 = vadd.f32 %v3822, %v4045
      %4047 = vmatprep.mubr.bf16.mxu0 0
      %4048 = vmatmul.mubr.bf16.gmra.mrb[0].mxu0 %v3775
      %v4049 = vpop.f32.mrb[0].mxu0
      %v4050 = vadd.f32 %v3818, %v4049
      %v4051 = vpop.f32.mrb[0].mxu0
      %v4052 = vadd.f32 %v3822, %v4051
      %v4053 = vpop.f32.mrb[0].mxu0
      %v4054 = vadd.f32 %v3818, %v4053
      %v4055 = vpop.f32.mrb[0].mxu0
      %v4056 = vadd.f32 %v3822, %v4055
      %4057 = vmatprep.mubr.bf16.mxu0 0
      %4058 = vmatmul.mubr.bf16.gmra.mrb[0].mxu0 %v3776
      %v4059 = vpop.f32.mrb[0].mxu0
      %v4060 = vadd.f32 %v3818, %v4059
      %v4061 = vpop.f32.mrb[0].mxu0
      %v4062 = vadd.f32 %v3822, %v4061
      %v4063 = vpop.f32.mrb[0].mxu0
      %v4064 = vadd.f32 %v3818, %v4063
      %v4065 = vpop.f32.mrb[0].mxu0
      %v4066 = vadd.f32 %v3822, %v4065
      %4067 = vmatprep.mubr.bf16.mxu0 0
      %4068 = vmatmul.mubr.bf16.gmra.mrb[0].mxu0 %v3777
      %v4069 = vpop.f32.mrb[0].mxu0
      %v4070 = vadd.f32 %v3818, %v4069
      %v4071 = vpop.f32.mrb[0].mxu0
      %v4072 = vadd.f32 %v3822, %v4071
      %v4073 = vpop.f32.mrb[0].mxu0
      %v4074 = vadd.f32 %v3818, %v4073
      %v4075 = vpop.f32.mrb[0].mxu0
      %v4076 = vadd.f32 %v3822, %v4075
      %4077 = vmatprep.mubr.bf16.mxu0 0
      %4078 = vmatmul.mubr.bf16.gmra.mrb[0].mxu0 %v3778
      %v4079 = vpop.f32.mrb[0].mxu0
      %v4080 = vadd.f32 %v3818, %v4079
      %v4081 = vpop.f32.mrb[0].mxu0
      %v4082 = vadd.f32 %v3822, %v4081
      %v4083 = vpop.f32.mrb[0].mxu0
      %v4084 = vadd.f32 %v3818, %v4083
      %v4085 = vpop.f32.mrb[0].mxu0
      %v4086 = vadd.f32 %v3822, %v4085
      %4087 = vmatprep.mubr.bf16.mxu0 0
      %4088 = vmatmul.mubr.bf16.gmra.mrb[0].mxu0 %v3779
      %v4089 = vpop.f32.mrb[0].mxu0
      %v4090 = vadd.f32 %v3818, %v4089
      %v4091 = vpop.f32.mrb[0].mxu0
      %v4092 = vadd.f32 %v3822, %v4091
      %v4093 = vpop.f32.mrb[0].mxu0
      %v4094 = vadd.f32 %v3818, %v4093
      %v4095 = vpop.f32.mrb[0].mxu0
      %v4096 = vadd.f32 %v3822, %v4095
      %4097 = vmatprep.mubr.bf16.mxu0 0
      %4098 = vmatmul.mubr.bf16.gmra.mrb[0].mxu0 %v3780
      %v4099 = vpop.f32.mrb[0].mxu0
      %v4100 = vadd.f32 %v3818, %v4099
      %v4101 = vpop.f32.mrb[0].mxu0
      %v4102 = vadd.f32 %v3822, %v4101
      %v4103 = vpop.f32.mrb[0].mxu0
      %v4104 = vadd.f32 %v3818, %v4103
      %v4105 = vpop.f32.mrb[0].mxu0
      %v4106 = vadd.f32 %v3822, %v4105
      %4107 = vdwg.mxu0
      %4108 = vmatprep.subr.bf16.mxu0 %v3934
      %4109 = vmatpush1.bf16.msra.mxu0 %v3933
      %4110 = vmatprep.subr.bf16.mxu0 %v3938
      %4111 = vmatpush1.bf16.msra.mxu0 %v3937
      %4112 = vmatprep.subr.bf16.mxu0 %v3942
      %4113 = vmatpush1.bf16.msra.mxu0 %v3941
      %4114 = vmatprep.subr.bf16.mxu0 %v3946
      %4115 = vmatpush1.bf16.msra.mxu0 %v3945
      %4116 = vmatprep.subr.bf16.mxu0 %v3950
      %4117 = vmatpush1.bf16.msra.mxu0 %v3949
      %4118 = vmatprep.subr.bf16.mxu0 %v3954
      %4119 = vmatpush1.bf16.msra.mxu0 %v3953
      %4120 = vmatprep.subr.bf16.mxu0 %v3958
      %4121 = vmatpush1.bf16.msra.mxu0 %v3957
      %4122 = vmatprep.subr.bf16.mxu0 %v3962
      %4123 = vmatpush1.bf16.msra.mxu0 %v3961
      %4124 = vmatprep.subr.bf16.mxu0 0
      %4125 = vmatpush1.bf16.msra.mxu0 0
      %4126 = vmatprep.subr.bf16.mxu0 0
      %4127 = vmatpush1.bf16.msra.mxu0 0
      %4128 = vmatprep.subr.bf16.mxu0 0
      %4129 = vmatpush1.bf16.msra.mxu0 0
      %4130 = vmatprep.subr.bf16.mxu0 0
      %4131 = vmatpush1.bf16.msra.mxu0 0
      %4132 = vmatprep.subr.bf16.mxu0 0
      %4133 = vmatpush1.bf16.msra.mxu0 0
      %4134 = vmatprep.subr.bf16.mxu0 0
      %4135 = vmatpush1.bf16.msra.mxu0 0
      %4136 = vmatprep.subr.bf16.mxu0 0
      %4137 = vmatpush1.bf16.msra.mxu0 0
      %4138 = vmatprep.subr.bf16.mxu0 0
      %4139 = vmatpush1.bf16.msra.mxu0 0
      %4140 = vmatprep.mubr.bf16.mxu0 0
      %4141 = vmatmul.mubr.bf16.gmra.mrb[0].mxu0 %v3773
      %v4142 = vpop.f32.mrb[0].mxu0
      %v4143 = vadd.f32 %v3826, %v4142
      %v4144 = vpop.f32.mrb[0].mxu0
      %v4145 = vadd.f32 %v3830, %v4144
      %v4146 = vpop.f32.mrb[0].mxu0
      %v4147 = vadd.f32 %v3826, %v4146
      %v4148 = vpop.f32.mrb[0].mxu0
      %v4149 = vadd.f32 %v3830, %v4148
      %4150 = vmatprep.mubr.bf16.mxu0 0
      %4151 = vmatmul.mubr.bf16.gmra.mrb[0].mxu0 %v3774
      %v4152 = vpop.f32.mrb[0].mxu0
      %v4153 = vadd.f32 %v3826, %v4152
      %v4154 = vpop.f32.mrb[0].mxu0
      %v4155 = vadd.f32 %v3830, %v4154
      %v4156 = vpop.f32.mrb[0].mxu0
      %v4157 = vadd.f32 %v3826, %v4156
      %v4158 = vpop.f32.mrb[0].mxu0
      %v4159 = vadd.f32 %v3830, %v4158
      %4160 = vmatprep.mubr.bf16.mxu0 0
      %4161 = vmatmul.mubr.bf16.gmra.mrb[0].mxu0 %v3775
      %v4162 = vpop.f32.mrb[0].mxu0
      %v4163 = vadd.f32 %v3826, %v4162
      %v4164 = vpop.f32.mrb[0].mxu0
      %v4165 = vadd.f32 %v3830, %v4164
      %v4166 = vpop.f32.mrb[0].mxu0
      %v4167 = vadd.f32 %v3826, %v4166
      %v4168 = vpop.f32.mrb[0].mxu0
      %v4169 = vadd.f32 %v3830, %v4168
      %4170 = vmatprep.mubr.bf16.mxu0 0
      %4171 = vmatmul.mubr.bf16.gmra.mrb[0].mxu0 %v3776
      %v4172 = vpop.f32.mrb[0].mxu0
      %v4173 = vadd.f32 %v3826, %v4172
      %v4174 = vpop.f32.mrb[0].mxu0
      %v4175 = vadd.f32 %v3830, %v4174
      %v4176 = vpop.f32.mrb[0].mxu0
      %v4177 = vadd.f32 %v3826, %v4176
      %v4178 = vpop.f32.mrb[0].mxu0
      %v4179 = vadd.f32 %v3830, %v4178
      %4180 = vmatprep.mubr.bf16.mxu0 0
      %4181 = vmatmul.mubr.bf16.gmra.mrb[0].mxu0 %v3777
      %v4182 = vpop.f32.mrb[0].mxu0
      %v4183 = vadd.f32 %v3826, %v4182
      %v4184 = vpop.f32.mrb[0].mxu0
      %v4185 = vadd.f32 %v3830, %v4184
      %v4186 = vpop.f32.mrb[0].mxu0
      %v4187 = vadd.f32 %v3826, %v4186
      %v4188 = vpop.f32.mrb[0].mxu0
      %v4189 = vadd.f32 %v3830, %v4188
      %4190 = vmatprep.mubr.bf16.mxu0 0
      %4191 = vmatmul.mubr.bf16.gmra.mrb[0].mxu0 %v3778
      %v4192 = vpop.f32.mrb[0].mxu0
      %v4193 = vadd.f32 %v3826, %v4192
      %v4194 = vpop.f32.mrb[0].mxu0
      %v4195 = vadd.f32 %v3830, %v4194
      %v4196 = vpop.f32.mrb[0].mxu0
      %v4197 = vadd.f32 %v3826, %v4196
      %v4198 = vpop.f32.mrb[0].mxu0
      %v4199 = vadd.f32 %v3830, %v4198
      %4200 = vmatprep.mubr.bf16.mxu0 0
      %4201 = vmatmul.mubr.bf16.gmra.mrb[0].mxu0 %v3779
      %v4202 = vpop.f32.mrb[0].mxu0
      %v4203 = vadd.f32 %v3826, %v4202
      %v4204 = vpop.f32.mrb[0].mxu0
      %v4205 = vadd.f32 %v3830, %v4204
      %v4206 = vpop.f32.mrb[0].mxu0
      %v4207 = vadd.f32 %v3826, %v4206
      %v4208 = vpop.f32.mrb[0].mxu0
      %v4209 = vadd.f32 %v3830, %v4208
      %4210 = vmatprep.mubr.bf16.mxu0 0
      %4211 = vmatmul.mubr.bf16.gmra.mrb[0].mxu0 %v3780
      %v4212 = vpop.f32.mrb[0].mxu0
      %v4213 = vadd.f32 %v3826, %v4212
      %v4214 = vpop.f32.mrb[0].mxu0
      %v4215 = vadd.f32 %v3830, %v4214
      %v4216 = vpop.f32.mrb[0].mxu0
      %v4217 = vadd.f32 %v3826, %v4216
      %v4218 = vpop.f32.mrb[0].mxu0
      %v4219 = vadd.f32 %v3830, %v4218
      %4220 = vdwg.mxu0
      %v4221 = vmax.f32 %v4030, 0.0
      %v4222 = vmax.f32 %v4032, 0.0
      %v4223 = vmax.f32 %v4143, 0.0
      %v4224 = vmax.f32 %v4145, 0.0
      %v4225 = vmax.f32 %v4034, 0.0
      %v4226 = vmax.f32 %v4036, 0.0
      %v4227 = vmax.f32 %v4147, 0.0
      %v4228 = vmax.f32 %v4149, 0.0
      %v4229 = vmax.f32 %v4040, 0.0
      %v4230 = vmax.f32 %v4042, 0.0
      %v4231 = vmax.f32 %v4153, 0.0
      %v4232 = vmax.f32 %v4155, 0.0
      %v4233 = vmax.f32 %v4044, 0.0
      %v4234 = vmax.f32 %v4046, 0.0
      %v4235 = vmax.f32 %v4157, 0.0
      %v4236 = vmax.f32 %v4159, 0.0
      %v4237 = vmax.f32 %v4050, 0.0
      %v4238 = vmax.f32 %v4052, 0.0
      %v4239 = vmax.f32 %v4163, 0.0
      %v4240 = vmax.f32 %v4165, 0.0
      %v4241 = vmax.f32 %v4054, 0.0
      %v4242 = vmax.f32 %v4056, 0.0
      %v4243 = vmax.f32 %v4167, 0.0
      %v4244 = vmax.f32 %v4169, 0.0
      %v4245 = vmax.f32 %v4060, 0.0
      %v4246 = vmax.f32 %v4062, 0.0
      %v4247 = vmax.f32 %v4173, 0.0
      %v4248 = vmax.f32 %v4175, 0.0
      %v4249 = vmax.f32 %v4064, 0.0
      %v4250 = vmax.f32 %v4066, 0.0
      %v4251 = vmax.f32 %v4177, 0.0
      %v4252 = vmax.f32 %v4179, 0.0
      %v4253 = vmax.f32 %v4070, 0.0
      %v4254 = vmax.f32 %v4072, 0.0
      %v4255 = vmax.f32 %v4183, 0.0
      %v4256 = vmax.f32 %v4185, 0.0
      %v4257 = vmax.f32 %v4074, 0.0
      %v4258 = vmax.f32 %v4076, 0.0
      %v4259 = vmax.f32 %v4187, 0.0
      %v4260 = vmax.f32 %v4189, 0.0
      %v4261 = vmax.f32 %v4080, 0.0
      %v4262 = vmax.f32 %v4082, 0.0
      %v4263 = vmax.f32 %v4193, 0.0
      %v4264 = vmax.f32 %v4195, 0.0
      %v4265 = vmax.f32 %v4084, 0.0
      %v4266 = vmax.f32 %v4086, 0.0
      %v4267 = vmax.f32 %v4197, 0.0
      %v4268 = vmax.f32 %v4199, 0.0
      %v4269 = vmax.f32 %v4090, 0.0
      %v4270 = vmax.f32 %v4092, 0.0
      %v4271 = vmax.f32 %v4203, 0.0
      %v4272 = vmax.f32 %v4205, 0.0
      %v4273 = vmax.f32 %v4094, 0.0
      %v4274 = vmax.f32 %v4096, 0.0
      %v4275 = vmax.f32 %v4207, 0.0
      %v4276 = vmax.f32 %v4209, 0.0
      %v4277 = vmax.f32 %v4100, 0.0
      %v4278 = vmax.f32 %v4102, 0.0
      %v4279 = vmax.f32 %v4213, 0.0
      %v4280 = vmax.f32 %v4215, 0.0
      %v4281 = vmax.f32 %v4104, 0.0
      %v4282 = vmax.f32 %v4106, 0.0
      %v4283 = vmax.f32 %v4217, 0.0
      %v4284 = vmax.f32 %v4219, 0.0
      %v4285 = vpack.c.bf16 %v4225, %v4221
      %v4286 = vpack.c.bf16 %v4226, %v4222
      %v4287 = vpack.c.bf16 %v4227, %v4223
      %v4288 = vpack.c.bf16 %v4228, %v4224
      %v4289 = vpack.c.bf16 %v4233, %v4229
      %v4290 = vpack.c.bf16 %v4234, %v4230
      %v4291 = vpack.c.bf16 %v4235, %v4231
      %v4292 = vpack.c.bf16 %v4236, %v4232
      %v4293 = vpack.c.bf16 %v4241, %v4237
      %v4294 = vpack.c.bf16 %v4242, %v4238
      %v4295 = vpack.c.bf16 %v4243, %v4239
      %v4296 = vpack.c.bf16 %v4244, %v4240
      %v4297 = vpack.c.bf16 %v4249, %v4245
      %v4298 = vpack.c.bf16 %v4250, %v4246
      %v4299 = vpack.c.bf16 %v4251, %v4247
      %v4300 = vpack.c.bf16 %v4252, %v4248
      %v4301 = vpack.c.bf16 %v4257, %v4253
      %v4302 = vpack.c.bf16 %v4258, %v4254
      %v4303 = vpack.c.bf16 %v4259, %v4255
      %v4304 = vpack.c.bf16 %v4260, %v4256
      %v4305 = vpack.c.bf16 %v4265, %v4261
      %v4306 = vpack.c.bf16 %v4266, %v4262
      %v4307 = vpack.c.bf16 %v4267, %v4263
      %v4308 = vpack.c.bf16 %v4268, %v4264
      %v4309 = vpack.c.bf16 %v4273, %v4269
      %v4310 = vpack.c.bf16 %v4274, %v4270
      %v4311 = vpack.c.bf16 %v4275, %v4271
      %v4312 = vpack.c.bf16 %v4276, %v4272
      %v4313 = vpack.c.bf16 %v4281, %v4277
      %v4314 = vpack.c.bf16 %v4282, %v4278
      %v4315 = vpack.c.bf16 %v4283, %v4279
      %v4316 = vpack.c.bf16 %v4284, %v4280
      %v4317 = vld [vmem:[%s8] sm:$0xff]
      %v4318 = vld [vmem:[%s8 + $0x8] sm:$0xff]
      %v4319 = vld [vmem:[%s8 + $0x10] sm:$0xff]
      %v4320 = vld [vmem:[%s8 + $0x18] sm:$0xf]
      %v4321 = vld [vmem:[%s8 + $0x1c] sm:$0xff]
      %v4322 = vld [vmem:[%s8 + $0x24] sm:$0xff]
      %v4323 = vld [vmem:[%s8 + $0x2c] sm:$0xff]
      %v4324 = vld [vmem:[%s8 + $0x34] sm:$0xf]
      %v4325 = vld [vmem:[%s8 + $0x38] sm:$0xff]
      %v4326 = vld [vmem:[%s8 + $0x40] sm:$0xff]
      %v4327 = vld [vmem:[%s8 + $0x48] sm:$0xff]
      %v4328 = vld [vmem:[%s8 + $0x50] sm:$0xf]
      %v4329 = vld [vmem:[%s8 + $0x54] sm:$0xff]
      %v4330 = vld [vmem:[%s8 + $0x5c] sm:$0xff]
      %v4331 = vld [vmem:[%s8 + $0x64] sm:$0xff]
      %v4332 = vld [vmem:[%s8 + $0x6c] sm:$0xf]
      %v4333 = vld [vmem:[%s8 + $0x70] sm:$0xff]
      %v4334 = vld [vmem:[%s8 + $0x78] sm:$0xff]
      %v4335 = vld [vmem:[%s8 + $0x80] sm:$0xff]
      %v4336 = vld [vmem:[%s8 + $0x88] sm:$0xf]
      %v4337 = vld [vmem:[%s8 + $0x8c] sm:$0xff]
      %v4338 = vld [vmem:[%s8 + $0x94] sm:$0xff]
      %v4339 = vld [vmem:[%s8 + $0x9c] sm:$0xff]
      %v4340 = vld [vmem:[%s8 + $0xa4] sm:$0xf]
      %v4341 = vld [vmem:[%s8 + $0xa8] sm:$0xff]
      %v4342 = vld [vmem:[%s8 + $0xb0] sm:$0xff]
      %v4343 = vld [vmem:[%s8 + $0xb8] sm:$0xff]
      %v4344 = vld [vmem:[%s8 + $0xc0] sm:$0xf]
      %v4345 = vld [vmem:[%s8 + $0xc4] sm:$0xff]
      %v4346 = vld [vmem:[%s8 + $0xcc] sm:$0xff]
      %v4347 = vld [vmem:[%s8 + $0xd4] sm:$0xff]
      %v4348 = vld [vmem:[%s8 + $0xdc] sm:$0xf]
      %v4349 = vld [vmem:[%s8 + $0xe0] sm:$0xff]
      %v4350 = vld [vmem:[%s8 + $0xe8] sm:$0xff]
      %v4351 = vld [vmem:[%s8 + $0xf0] sm:$0xff]
      %v4352 = vld [vmem:[%s8 + $0xf8] sm:$0xf]
      %v4353 = vld [vmem:[%s8 + $0xfc] sm:$0xff]
      %v4354 = vld [vmem:[%s8 + $0x104] sm:$0xff]
      %v4355 = vld [vmem:[%s8 + $0x10c] sm:$0xff]
      %v4356 = vld [vmem:[%s8 + $0x114] sm:$0xf]
      %v4357 = vld [vmem:[%s8 + $0x118] sm:$0xff]
      %v4358 = vld [vmem:[%s8 + $0x120] sm:$0xff]
      %v4359 = vld [vmem:[%s8 + $0x128] sm:$0xff]
      %v4360 = vld [vmem:[%s8 + $0x130] sm:$0xf]
      %v4361 = vld [vmem:[%s8 + $0x134] sm:$0xff]
      %v4362 = vld [vmem:[%s8 + $0x13c] sm:$0xff]
      %v4363 = vld [vmem:[%s8 + $0x144] sm:$0xff]
      %v4364 = vld [vmem:[%s8 + $0x14c] sm:$0xf]
      %v4365 = vld [vmem:[%s8 + $0x150] sm:$0xff]
      %v4366 = vld [vmem:[%s8 + $0x158] sm:$0xff]
      %v4367 = vld [vmem:[%s8 + $0x160] sm:$0xff]
      %v4368 = vld [vmem:[%s8 + $0x168] sm:$0xf]
      %v4369 = vld [vmem:[%s8 + $0x16c] sm:$0xff]
      %v4370 = vld [vmem:[%s8 + $0x174] sm:$0xff]
      %v4371 = vld [vmem:[%s8 + $0x17c] sm:$0xff]
      %v4372 = vld [vmem:[%s8 + $0x184] sm:$0xf]
      %v4373 = vld [vmem:[%s8 + $0x188] sm:$0xff]
      %v4374 = vld [vmem:[%s8 + $0x190] sm:$0xff]
      %v4375 = vld [vmem:[%s8 + $0x198] sm:$0xff]
      %v4376 = vld [vmem:[%s8 + $0x1a0] sm:$0xf]
      %v4377 = vld [vmem:[%s8 + $0x1a4] sm:$0xff]
      %v4378 = vld [vmem:[%s8 + $0x1ac] sm:$0xff]
      %v4379 = vld [vmem:[%s8 + $0x1b4] sm:$0xff]
      %v4380 = vld [vmem:[%s8 + $0x1bc] sm:$0xf]
      %v4381 = vld [vmem:[%s8 + $0x1c0] sm:$0xff]
      %v4382 = vld [vmem:[%s8 + $0x1c8] sm:$0xff]
      %v4383 = vld [vmem:[%s8 + $0x1d0] sm:$0xff]
      %v4384 = vld [vmem:[%s8 + $0x1d8] sm:$0xf]
      %v4385 = vld [vmem:[%s8 + $0x1dc] sm:$0xff]
      %v4386 = vld [vmem:[%s8 + $0x1e4] sm:$0xff]
      %v4387 = vld [vmem:[%s8 + $0x1ec] sm:$0xff]
      %v4388 = vld [vmem:[%s8 + $0x1f4] sm:$0xf]
      %v4389 = vld [vmem:[%s8 + $0x1f8] sm:$0xff]
      %v4390 = vld [vmem:[%s8 + $0x200] sm:$0xff]
      %v4391 = vld [vmem:[%s8 + $0x208] sm:$0xff]
      %v4392 = vld [vmem:[%s8 + $0x210] sm:$0xf]
      %v4393 = vld [vmem:[%s8 + $0x214] sm:$0xff]
      %v4394 = vld [vmem:[%s8 + $0x21c] sm:$0xff]
      %v4395 = vld [vmem:[%s8 + $0x224] sm:$0xff]
      %v4396 = vld [vmem:[%s8 + $0x22c] sm:$0xf]
      %v4397 = vld [vmem:[%s8 + $0x230] sm:$0xff]
      %v4398 = vld [vmem:[%s8 + $0x238] sm:$0xff]
      %v4399 = vld [vmem:[%s8 + $0x240] sm:$0xff]
      %v4400 = vld [vmem:[%s8 + $0x248] sm:$0xf]
      %v4401 = vld [vmem:[%s8 + $0x24c] sm:$0xff]
      %v4402 = vld [vmem:[%s8 + $0x254] sm:$0xff]
      %v4403 = vld [vmem:[%s8 + $0x25c] sm:$0xff]
      %v4404 = vld [vmem:[%s8 + $0x264] sm:$0xf]
      %v4405 = vld [vmem:[%s8 + $0x268] sm:$0xff]
      %v4406 = vld [vmem:[%s8 + $0x270] sm:$0xff]
      %v4407 = vld [vmem:[%s8 + $0x278] sm:$0xff]
      %v4408 = vld [vmem:[%s8 + $0x280] sm:$0xf]
      %v4409 = vld [vmem:[%s8 + $0x284] sm:$0xff]
      %v4410 = vld [vmem:[%s8 + $0x28c] sm:$0xff]
      %v4411 = vld [vmem:[%s8 + $0x294] sm:$0xff]
      %v4412 = vld [vmem:[%s8 + $0x29c] sm:$0xf]
      %v4413 = vld [vmem:[%s8 + $0x2a0] sm:$0xff]
      %v4414 = vld [vmem:[%s8 + $0x2a8] sm:$0xff]
      %v4415 = vld [vmem:[%s8 + $0x2b0] sm:$0xff]
      %v4416 = vld [vmem:[%s8 + $0x2b8] sm:$0xf]
      %v4417 = vld [vmem:[%s8 + $0x2bc] sm:$0xff]
      %v4418 = vld [vmem:[%s8 + $0x2c4] sm:$0xff]
      %v4419 = vld [vmem:[%s8 + $0x2cc] sm:$0xff]
      %v4420 = vld [vmem:[%s8 + $0x2d4] sm:$0xf]
      %v4421 = vld [vmem:[%s8 + $0x2d8] sm:$0xff]
      %v4422 = vld [vmem:[%s8 + $0x2e0] sm:$0xff]
      %v4423 = vld [vmem:[%s8 + $0x2e8] sm:$0xff]
      %v4424 = vld [vmem:[%s8 + $0x2f0] sm:$0xf]
      %v4425 = vld [vmem:[%s8 + $0x2f4] sm:$0xff]
      %v4426 = vld [vmem:[%s8 + $0x2fc] sm:$0xff]
      %v4427 = vld [vmem:[%s8 + $0x304] sm:$0xff]
      %v4428 = vld [vmem:[%s8 + $0x30c] sm:$0xf]
      %v4429 = vld [vmem:[%s8 + $0x310] sm:$0xff]
      %v4430 = vld [vmem:[%s8 + $0x318] sm:$0xff]
      %v4431 = vld [vmem:[%s8 + $0x320] sm:$0xff]
      %v4432 = vld [vmem:[%s8 + $0x328] sm:$0xf]
      %v4433 = vld [vmem:[%s8 + $0x32c] sm:$0xff]
      %v4434 = vld [vmem:[%s8 + $0x334] sm:$0xff]
      %v4435 = vld [vmem:[%s8 + $0x33c] sm:$0xff]
      %v4436 = vld [vmem:[%s8 + $0x344] sm:$0xf]
      %v4437 = vld [vmem:[%s8 + $0x348] sm:$0xff]
      %v4438 = vld [vmem:[%s8 + $0x350] sm:$0xff]
      %v4439 = vld [vmem:[%s8 + $0x358] sm:$0xff]
      %v4440 = vld [vmem:[%s8 + $0x360] sm:$0xf]
      %v4441 = vld [vmem:[%s8 + $0x364] sm:$0xff]
      %v4442 = vld [vmem:[%s8 + $0x36c] sm:$0xff]
      %v4443 = vld [vmem:[%s8 + $0x374] sm:$0xff]
      %v4444 = vld [vmem:[%s8 + $0x37c] sm:$0xf]
      %v4445 = vld [vmem:[%s8 + $0x380] sm:$0xff]
      %v4446 = vld [vmem:[%s8 + $0x388] sm:$0xff]
      %v4447 = vld [vmem:[%s8 + $0x390] sm:$0xff]
      %v4448 = vld [vmem:[%s8 + $0x398] sm:$0xf]
      %v4449 = vld [vmem:[%s8 + $0x39c] sm:$0xff]
      %v4450 = vld [vmem:[%s8 + $0x3a4] sm:$0xff]
      %v4451 = vld [vmem:[%s8 + $0x3ac] sm:$0xff]
      %v4452 = vld [vmem:[%s8 + $0x3b4] sm:$0xf]
      %v4453 = vld [vmem:[%s8 + $0x3b8] sm:$0xff]
      %v4454 = vld [vmem:[%s8 + $0x3c0] sm:$0xff]
      %v4455 = vld [vmem:[%s8 + $0x3c8] sm:$0xff]
      %v4456 = vld [vmem:[%s8 + $0x3d0] sm:$0xf]
      %v4457 = vld [vmem:[%s8 + $0x3d4] sm:$0xff]
      %v4458 = vld [vmem:[%s8 + $0x3dc] sm:$0xff]
      %v4459 = vld [vmem:[%s8 + $0x3e4] sm:$0xff]
      %v4460 = vld [vmem:[%s8 + $0x3ec] sm:$0xf]
      %v4461 = vld [vmem:[%s8 + $0x3f0] sm:$0xff]
      %v4462 = vld [vmem:[%s8 + $0x3f8] sm:$0xff]
      %v4463 = vld [vmem:[%s8 + $0x400] sm:$0xff]
      %v4464 = vld [vmem:[%s8 + $0x408] sm:$0xf]
      %v4465 = vld [vmem:[%s8 + $0x40c] sm:$0xff]
      %v4466 = vld [vmem:[%s8 + $0x414] sm:$0xff]
      %v4467 = vld [vmem:[%s8 + $0x41c] sm:$0xff]
      %v4468 = vld [vmem:[%s8 + $0x424] sm:$0xf]
      %v4469 = vld [vmem:[%s8 + $0x428] sm:$0xff]
      %v4470 = vld [vmem:[%s8 + $0x430] sm:$0xff]
      %v4471 = vld [vmem:[%s8 + $0x438] sm:$0xff]
      %v4472 = vld [vmem:[%s8 + $0x440] sm:$0xf]
      %v4473 = vld [vmem:[%s8 + $0x444] sm:$0xff]
      %v4474 = vld [vmem:[%s8 + $0x44c] sm:$0xff]
      %v4475 = vld [vmem:[%s8 + $0x454] sm:$0xff]
      %v4476 = vld [vmem:[%s8 + $0x45c] sm:$0xf]
      %v4477 = vld [vmem:[%s8 + $0x460] sm:$0xff]
      %v4478 = vld [vmem:[%s8 + $0x468] sm:$0xff]
      %v4479 = vld [vmem:[%s8 + $0x470] sm:$0xff]
      %v4480 = vld [vmem:[%s8 + $0x478] sm:$0xf]
      %v4481 = vld [vmem:[%s8 + $0x47c] sm:$0xff]
      %v4482 = vld [vmem:[%s8 + $0x484] sm:$0xff]
      %v4483 = vld [vmem:[%s8 + $0x48c] sm:$0xff]
      %v4484 = vld [vmem:[%s8 + $0x494] sm:$0xf]
      %v4485 = vld [vmem:[%s8 + $0x498] sm:$0xff]
      %v4486 = vld [vmem:[%s8 + $0x4a0] sm:$0xff]
      %v4487 = vld [vmem:[%s8 + $0x4a8] sm:$0xff]
      %v4488 = vld [vmem:[%s8 + $0x4b0] sm:$0xf]
      %v4489 = vld [vmem:[%s8 + $0x4b4] sm:$0xff]
      %v4490 = vld [vmem:[%s8 + $0x4bc] sm:$0xff]
      %v4491 = vld [vmem:[%s8 + $0x4c4] sm:$0xff]
      %v4492 = vld [vmem:[%s8 + $0x4cc] sm:$0xf]
      %v4493 = vld [vmem:[%s8 + $0x4d0] sm:$0xff]
      %v4494 = vld [vmem:[%s8 + $0x4d8] sm:$0xff]
      %v4495 = vld [vmem:[%s8 + $0x4e0] sm:$0xff]
      %v4496 = vld [vmem:[%s8 + $0x4e8] sm:$0xf]
      %v4497 = vld [vmem:[%s8 + $0x4ec] sm:$0xff]
      %v4498 = vld [vmem:[%s8 + $0x4f4] sm:$0xff]
      %v4499 = vld [vmem:[%s8 + $0x4fc] sm:$0xff]
      %v4500 = vld [vmem:[%s8 + $0x504] sm:$0xf]
      %v4501 = vld [vmem:[%s8 + $0x508] sm:$0xff]
      %v4502 = vld [vmem:[%s8 + $0x510] sm:$0xff]
      %v4503 = vld [vmem:[%s8 + $0x518] sm:$0xff]
      %v4504 = vld [vmem:[%s8 + $0x520] sm:$0xf]
      %v4505 = vld [vmem:[%s8 + $0x524] sm:$0xff]
      %v4506 = vld [vmem:[%s8 + $0x52c] sm:$0xff]
      %v4507 = vld [vmem:[%s8 + $0x534] sm:$0xff]
      %v4508 = vld [vmem:[%s8 + $0x53c] sm:$0xf]
      %v4509 = vld [vmem:[%s8 + $0x540] sm:$0xff]
      %v4510 = vld [vmem:[%s8 + $0x548] sm:$0xff]
      %v4511 = vld [vmem:[%s8 + $0x550] sm:$0xff]
      %v4512 = vld [vmem:[%s8 + $0x558] sm:$0xf]
      %v4513 = vld [vmem:[%s8 + $0x55c] sm:$0xff]
      %v4514 = vld [vmem:[%s8 + $0x564] sm:$0xff]
      %v4515 = vld [vmem:[%s8 + $0x56c] sm:$0xff]
      %v4516 = vld [vmem:[%s8 + $0x574] sm:$0xf]
      %v4517 = vld [vmem:[%s8 + $0x578] sm:$0xff]
      %v4518 = vld [vmem:[%s8 + $0x580] sm:$0xff]
      %v4519 = vld [vmem:[%s8 + $0x588] sm:$0xff]
      %v4520 = vld [vmem:[%s8 + $0x590] sm:$0xf]
      %v4521 = vld [vmem:[%s8 + $0x594] sm:$0xff]
      %v4522 = vld [vmem:[%s8 + $0x59c] sm:$0xff]
      %v4523 = vld [vmem:[%s8 + $0x5a4] sm:$0xff]
      %v4524 = vld [vmem:[%s8 + $0x5ac] sm:$0xf]
      %v4525 = vld [vmem:[%s8 + $0x5b0] sm:$0xff]
      %v4526 = vld [vmem:[%s8 + $0x5b8] sm:$0xff]
      %v4527 = vld [vmem:[%s8 + $0x5c0] sm:$0xff]
      %v4528 = vld [vmem:[%s8 + $0x5c8] sm:$0xf]
      %v4529 = vld [vmem:[%s8 + $0x5cc] sm:$0xff]
      %v4530 = vld [vmem:[%s8 + $0x5d4] sm:$0xff]
      %v4531 = vld [vmem:[%s8 + $0x5dc] sm:$0xff]
      %v4532 = vld [vmem:[%s8 + $0x5e4] sm:$0xf]
      %v4533 = vld [vmem:[%s8 + $0x5e8] sm:$0xff]
      %v4534 = vld [vmem:[%s8 + $0x5f0] sm:$0xff]
      %v4535 = vld [vmem:[%s8 + $0x5f8] sm:$0xff]
      %v4536 = vld [vmem:[%s8 + $0x600] sm:$0xf]
      %v4537 = vld [vmem:[%s8 + $0x604] sm:$0xff]
      %v4538 = vld [vmem:[%s8 + $0x60c] sm:$0xff]
      %v4539 = vld [vmem:[%s8 + $0x614] sm:$0xff]
      %v4540 = vld [vmem:[%s8 + $0x61c] sm:$0xf]
      %v4541 = vld [vmem:[%s8 + $0x620] sm:$0xff]
      %v4542 = vld [vmem:[%s8 + $0x628] sm:$0xff]
      %v4543 = vld [vmem:[%s8 + $0x630] sm:$0xff]
      %v4544 = vld [vmem:[%s8 + $0x638] sm:$0xf]
      %v4545 = vld [vmem:[%s8 + $0x63c] sm:$0xff]
      %v4546 = vld [vmem:[%s8 + $0x644] sm:$0xff]
      %v4547 = vld [vmem:[%s8 + $0x64c] sm:$0xff]
      %v4548 = vld [vmem:[%s8 + $0x654] sm:$0xf]
      %v4549 = vld [vmem:[%s8 + $0x658] sm:$0xff]
      %v4550 = vld [vmem:[%s8 + $0x660] sm:$0xff]
      %v4551 = vld [vmem:[%s8 + $0x668] sm:$0xff]
      %v4552 = vld [vmem:[%s8 + $0x670] sm:$0xf]
      %v4553 = vld [vmem:[%s8 + $0x674] sm:$0xff]
      %v4554 = vld [vmem:[%s8 + $0x67c] sm:$0xff]
      %v4555 = vld [vmem:[%s8 + $0x684] sm:$0xff]
      %v4556 = vld [vmem:[%s8 + $0x68c] sm:$0xf]
      %v4557 = vld [vmem:[%s8 + $0x690] sm:$0xff]
      %v4558 = vld [vmem:[%s8 + $0x698] sm:$0xff]
      %v4559 = vld [vmem:[%s8 + $0x6a0] sm:$0xff]
      %v4560 = vld [vmem:[%s8 + $0x6a8] sm:$0xf]
      %v4561 = vld [vmem:[%s8 + $0x6ac] sm:$0xff]
      %v4562 = vld [vmem:[%s8 + $0x6b4] sm:$0xff]
      %v4563 = vld [vmem:[%s8 + $0x6bc] sm:$0xff]
      %v4564 = vld [vmem:[%s8 + $0x6c4] sm:$0xf]
      %v4565 = vld [vmem:[%s8 + $0x6c8] sm:$0xff]
      %v4566 = vld [vmem:[%s8 + $0x6d0] sm:$0xff]
      %v4567 = vld [vmem:[%s8 + $0x6d8] sm:$0xff]
      %v4568 = vld [vmem:[%s8 + $0x6e0] sm:$0xf]
      %v4569 = vld [vmem:[%s8 + $0x6e4] sm:$0xff]
      %v4570 = vld [vmem:[%s8 + $0x6ec] sm:$0xff]
      %v4571 = vld [vmem:[%s8 + $0x6f4] sm:$0xff]
      %v4572 = vld [vmem:[%s8 + $0x6fc] sm:$0xf]
      %v4573 = vld [vmem:[%s9] sm:$0x7f]
      %v4575 = vlaneseq
      %v4576 = vshrl.u32 %v4575, 7
      %v4577 = vsub.s32 0, %v4576
      %v4578 = vrot.slane %v4573, %v4577
      %v4579 = vlaneseq
      %v4580 = vshrl.u32 %v4579, 7
      %v4581 = vsub.s32 1, %v4580
      %v4582 = vrot.slane %v4573, %v4581
      %v4583 = vlaneseq
      %v4584 = vshrl.u32 %v4583, 7
      %v4585 = vsub.s32 2, %v4584
      %v4586 = vrot.slane %v4573, %v4585
      %v4587 = vlaneseq
      %v4588 = vshrl.u32 %v4587, 7
      %v4589 = vsub.s32 3, %v4588
      %v4590 = vrot.slane %v4573, %v4589
      %v4591 = vlaneseq
      %v4592 = vshrl.u32 %v4591, 7
      %v4593 = vsub.s32 4, %v4592
      %v4594 = vrot.slane %v4573, %v4593
      %v4595 = vlaneseq
      %v4596 = vshrl.u32 %v4595, 7
      %v4597 = vsub.s32 5, %v4596
      %v4598 = vrot.slane %v4573, %v4597
      %v4599 = vlaneseq
      %v4600 = vshrl.u32 %v4599, 7
      %v4601 = vsub.s32 6, %v4600
      %v4602 = vrot.slane %v4573, %v4601
      %v4866 = vunpack.c.l.b16 %v4317
      %v4867 = vunpack.c.h.b16 %v4317
      %v4868 = vunpack.c.l.b16 %v4318
      %v4869 = vunpack.c.h.b16 %v4318
      %v4870 = vunpack.c.l.b16 %v4319
      %v4871 = vunpack.c.h.b16 %v4319
      %v4872 = vunpack.c.l.b16 %v4320
      %v4873 = vunpack.c.l.b16 %v4321
      %v4874 = vunpack.c.h.b16 %v4321
      %v4875 = vunpack.c.l.b16 %v4322
      %v4876 = vunpack.c.h.b16 %v4322
      %v4877 = vunpack.c.l.b16 %v4323
      %v4878 = vunpack.c.h.b16 %v4323
      %v4879 = vunpack.c.l.b16 %v4324
      %v4880 = vunpack.c.l.b16 %v4325
      %v4881 = vunpack.c.h.b16 %v4325
      %v4882 = vunpack.c.l.b16 %v4326
      %v4883 = vunpack.c.h.b16 %v4326
      %v4884 = vunpack.c.l.b16 %v4327
      %v4885 = vunpack.c.h.b16 %v4327
      %v4886 = vunpack.c.l.b16 %v4328
      %v4887 = vunpack.c.l.b16 %v4329
      %v4888 = vunpack.c.h.b16 %v4329
      %v4889 = vunpack.c.l.b16 %v4330
      %v4890 = vunpack.c.h.b16 %v4330
      %v4891 = vunpack.c.l.b16 %v4331
      %v4892 = vunpack.c.h.b16 %v4331
      %v4893 = vunpack.c.l.b16 %v4332
      %v4894 = vunpack.c.l.b16 %v4333
      %v4895 = vunpack.c.h.b16 %v4333
      %v4896 = vunpack.c.l.b16 %v4334
      %v4897 = vunpack.c.h.b16 %v4334
      %v4898 = vunpack.c.l.b16 %v4335
      %v4899 = vunpack.c.h.b16 %v4335
      %v4900 = vunpack.c.l.b16 %v4336
      %v4901 = vunpack.c.l.b16 %v4337
      %v4902 = vunpack.c.h.b16 %v4337
      %v4903 = vunpack.c.l.b16 %v4338
      %v4904 = vunpack.c.h.b16 %v4338
      %v4905 = vunpack.c.l.b16 %v4339
      %v4906 = vunpack.c.h.b16 %v4339
      %v4907 = vunpack.c.l.b16 %v4340
      %v4908 = vunpack.c.l.b16 %v4341
      %v4909 = vunpack.c.h.b16 %v4341
      %v4910 = vunpack.c.l.b16 %v4342
      %v4911 = vunpack.c.h.b16 %v4342
      %v4912 = vunpack.c.l.b16 %v4343
      %v4913 = vunpack.c.h.b16 %v4343
      %v4914 = vunpack.c.l.b16 %v4344
      %v4915 = vunpack.c.l.b16 %v4345
      %v4916 = vunpack.c.h.b16 %v4345
      %v4917 = vunpack.c.l.b16 %v4346
      %v4918 = vunpack.c.h.b16 %v4346
      %v4919 = vunpack.c.l.b16 %v4347
      %v4920 = vunpack.c.h.b16 %v4347
      %v4921 = vunpack.c.l.b16 %v4348
      %v4922 = vunpack.c.l.b16 %v4349
      %v4923 = vunpack.c.h.b16 %v4349
      %v4924 = vunpack.c.l.b16 %v4350
      %v4925 = vunpack.c.h.b16 %v4350
      %v4926 = vunpack.c.l.b16 %v4351
      %v4927 = vunpack.c.h.b16 %v4351
      %v4928 = vunpack.c.l.b16 %v4352
      %v4929 = vunpack.c.l.b16 %v4353
      %v4930 = vunpack.c.h.b16 %v4353
      %v4931 = vunpack.c.l.b16 %v4354
      %v4932 = vunpack.c.h.b16 %v4354
      %v4933 = vunpack.c.l.b16 %v4355
      %v4934 = vunpack.c.h.b16 %v4355
      %v4935 = vunpack.c.l.b16 %v4356
      %v4936 = vunpack.c.l.b16 %v4357
      %v4937 = vunpack.c.h.b16 %v4357
      %v4938 = vunpack.c.l.b16 %v4358
      %v4939 = vunpack.c.h.b16 %v4358
      %v4940 = vunpack.c.l.b16 %v4359
      %v4941 = vunpack.c.h.b16 %v4359
      %v4942 = vunpack.c.l.b16 %v4360
      %v4943 = vunpack.c.l.b16 %v4361
      %v4944 = vunpack.c.h.b16 %v4361
      %v4945 = vunpack.c.l.b16 %v4362
      %v4946 = vunpack.c.h.b16 %v4362
      %v4947 = vunpack.c.l.b16 %v4363
      %v4948 = vunpack.c.h.b16 %v4363
      %v4949 = vunpack.c.l.b16 %v4364
      %v4950 = vunpack.c.l.b16 %v4365
      %v4951 = vunpack.c.h.b16 %v4365
      %v4952 = vunpack.c.l.b16 %v4366
      %v4953 = vunpack.c.h.b16 %v4366
      %v4954 = vunpack.c.l.b16 %v4367
      %v4955 = vunpack.c.h.b16 %v4367
      %v4956 = vunpack.c.l.b16 %v4368
      %v4957 = vunpack.c.l.b16 %v4369
      %v4958 = vunpack.c.h.b16 %v4369
      %v4959 = vunpack.c.l.b16 %v4370
      %v4960 = vunpack.c.h.b16 %v4370
      %v4961 = vunpack.c.l.b16 %v4371
      %v4962 = vunpack.c.h.b16 %v4371
      %v4963 = vunpack.c.l.b16 %v4372
      %v4964 = vunpack.c.l.b16 %v4373
      %v4965 = vunpack.c.h.b16 %v4373
      %v4966 = vunpack.c.l.b16 %v4374
      %v4967 = vunpack.c.h.b16 %v4374
      %v4968 = vunpack.c.l.b16 %v4375
      %v4969 = vunpack.c.h.b16 %v4375
      %v4970 = vunpack.c.l.b16 %v4376
      %v4971 = vunpack.c.l.b16 %v4377
      %v4972 = vunpack.c.h.b16 %v4377
      %v4973 = vunpack.c.l.b16 %v4378
      %v4974 = vunpack.c.h.b16 %v4378
      %v4975 = vunpack.c.l.b16 %v4379
      %v4976 = vunpack.c.h.b16 %v4379
      %v4977 = vunpack.c.l.b16 %v4380
      %v4978 = vunpack.c.l.b16 %v4381
      %v4979 = vunpack.c.h.b16 %v4381
      %v4980 = vunpack.c.l.b16 %v4382
      %v4981 = vunpack.c.h.b16 %v4382
      %v4982 = vunpack.c.l.b16 %v4383
      %v4983 = vunpack.c.h.b16 %v4383
      %v4984 = vunpack.c.l.b16 %v4384
      %v4985 = vunpack.c.l.b16 %v4385
      %v4986 = vunpack.c.h.b16 %v4385
      %v4987 = vunpack.c.l.b16 %v4386
      %v4988 = vunpack.c.h.b16 %v4386
      %v4989 = vunpack.c.l.b16 %v4387
      %v4990 = vunpack.c.h.b16 %v4387
      %v4991 = vunpack.c.l.b16 %v4388
      %v4992 = vunpack.c.l.b16 %v4389
      %v4993 = vunpack.c.h.b16 %v4389
      %v4994 = vunpack.c.l.b16 %v4390
      %v4995 = vunpack.c.h.b16 %v4390
      %v4996 = vunpack.c.l.b16 %v4391
      %v4997 = vunpack.c.h.b16 %v4391
      %v4998 = vunpack.c.l.b16 %v4392
      %v4999 = vunpack.c.l.b16 %v4393
      %v5000 = vunpack.c.h.b16 %v4393
      %v5001 = vunpack.c.l.b16 %v4394
      %v5002 = vunpack.c.h.b16 %v4394
      %v5003 = vunpack.c.l.b16 %v4395
      %v5004 = vunpack.c.h.b16 %v4395
      %v5005 = vunpack.c.l.b16 %v4396
      %v5006 = vunpack.c.l.b16 %v4397
      %v5007 = vunpack.c.h.b16 %v4397
      %v5008 = vunpack.c.l.b16 %v4398
      %v5009 = vunpack.c.h.b16 %v4398
      %v5010 = vunpack.c.l.b16 %v4399
      %v5011 = vunpack.c.h.b16 %v4399
      %v5012 = vunpack.c.l.b16 %v4400
      %v5013 = vunpack.c.l.b16 %v4401
      %v5014 = vunpack.c.h.b16 %v4401
      %v5015 = vunpack.c.l.b16 %v4402
      %v5016 = vunpack.c.h.b16 %v4402
      %v5017 = vunpack.c.l.b16 %v4403
      %v5018 = vunpack.c.h.b16 %v4403
      %v5019 = vunpack.c.l.b16 %v4404
      %v5020 = vunpack.c.l.b16 %v4405
      %v5021 = vunpack.c.h.b16 %v4405
      %v5022 = vunpack.c.l.b16 %v4406
      %v5023 = vunpack.c.h.b16 %v4406
      %v5024 = vunpack.c.l.b16 %v4407
      %v5025 = vunpack.c.h.b16 %v4407
      %v5026 = vunpack.c.l.b16 %v4408
      %v5027 = vunpack.c.l.b16 %v4409
      %v5028 = vunpack.c.h.b16 %v4409
      %v5029 = vunpack.c.l.b16 %v4410
      %v5030 = vunpack.c.h.b16 %v4410
      %v5031 = vunpack.c.l.b16 %v4411
      %v5032 = vunpack.c.h.b16 %v4411
      %v5033 = vunpack.c.l.b16 %v4412
      %v5034 = vunpack.c.l.b16 %v4413
      %v5035 = vunpack.c.h.b16 %v4413
      %v5036 = vunpack.c.l.b16 %v4414
      %v5037 = vunpack.c.h.b16 %v4414
      %v5038 = vunpack.c.l.b16 %v4415
      %v5039 = vunpack.c.h.b16 %v4415
      %v5040 = vunpack.c.l.b16 %v4416
      %v5041 = vunpack.c.l.b16 %v4417
      %v5042 = vunpack.c.h.b16 %v4417
      %v5043 = vunpack.c.l.b16 %v4418
      %v5044 = vunpack.c.h.b16 %v4418
      %v5045 = vunpack.c.l.b16 %v4419
      %v5046 = vunpack.c.h.b16 %v4419
      %v5047 = vunpack.c.l.b16 %v4420
      %v5048 = vunpack.c.l.b16 %v4421
      %v5049 = vunpack.c.h.b16 %v4421
      %v5050 = vunpack.c.l.b16 %v4422
      %v5051 = vunpack.c.h.b16 %v4422
      %v5052 = vunpack.c.l.b16 %v4423
      %v5053 = vunpack.c.h.b16 %v4423
      %v5054 = vunpack.c.l.b16 %v4424
      %v5055 = vunpack.c.l.b16 %v4425
      %v5056 = vunpack.c.h.b16 %v4425
      %v5057 = vunpack.c.l.b16 %v4426
      %v5058 = vunpack.c.h.b16 %v4426
      %v5059 = vunpack.c.l.b16 %v4427
      %v5060 = vunpack.c.h.b16 %v4427
      %v5061 = vunpack.c.l.b16 %v4428
      %v5062 = vunpack.c.l.b16 %v4429
      %v5063 = vunpack.c.h.b16 %v4429
      %v5064 = vunpack.c.l.b16 %v4430
      %v5065 = vunpack.c.h.b16 %v4430
      %v5066 = vunpack.c.l.b16 %v4431
      %v5067 = vunpack.c.h.b16 %v4431
      %v5068 = vunpack.c.l.b16 %v4432
      %v5069 = vunpack.c.l.b16 %v4433
      %v5070 = vunpack.c.h.b16 %v4433
      %v5071 = vunpack.c.l.b16 %v4434
      %v5072 = vunpack.c.h.b16 %v4434
      %v5073 = vunpack.c.l.b16 %v4435
      %v5074 = vunpack.c.h.b16 %v4435
      %v5075 = vunpack.c.l.b16 %v4436
      %v5076 = vunpack.c.l.b16 %v4437
      %v5077 = vunpack.c.h.b16 %v4437
      %v5078 = vunpack.c.l.b16 %v4438
      %v5079 = vunpack.c.h.b16 %v4438
      %v5080 = vunpack.c.l.b16 %v4439
      %v5081 = vunpack.c.h.b16 %v4439
      %v5082 = vunpack.c.l.b16 %v4440
      %v5083 = vunpack.c.l.b16 %v4441
      %v5084 = vunpack.c.h.b16 %v4441
      %v5085 = vunpack.c.l.b16 %v4442
      %v5086 = vunpack.c.h.b16 %v4442
      %v5087 = vunpack.c.l.b16 %v4443
      %v5088 = vunpack.c.h.b16 %v4443
      %v5089 = vunpack.c.l.b16 %v4444
      %v5090 = vunpack.c.l.b16 %v4445
      %v5091 = vunpack.c.h.b16 %v4445
      %v5092 = vunpack.c.l.b16 %v4446
      %v5093 = vunpack.c.h.b16 %v4446
      %v5094 = vunpack.c.l.b16 %v4447
      %v5095 = vunpack.c.h.b16 %v4447
      %v5096 = vunpack.c.l.b16 %v4448
      %v5097 = vunpack.c.l.b16 %v4449
      %v5098 = vunpack.c.h.b16 %v4449
      %v5099 = vunpack.c.l.b16 %v4450
      %v5100 = vunpack.c.h.b16 %v4450
      %v5101 = vunpack.c.l.b16 %v4451
      %v5102 = vunpack.c.h.b16 %v4451
      %v5103 = vunpack.c.l.b16 %v4452
      %v5104 = vunpack.c.l.b16 %v4453
      %v5105 = vunpack.c.h.b16 %v4453
      %v5106 = vunpack.c.l.b16 %v4454
      %v5107 = vunpack.c.h.b16 %v4454
      %v5108 = vunpack.c.l.b16 %v4455
      %v5109 = vunpack.c.h.b16 %v4455
      %v5110 = vunpack.c.l.b16 %v4456
      %v5111 = vunpack.c.l.b16 %v4457
      %v5112 = vunpack.c.h.b16 %v4457
      %v5113 = vunpack.c.l.b16 %v4458
      %v5114 = vunpack.c.h.b16 %v4458
      %v5115 = vunpack.c.l.b16 %v4459
      %v5116 = vunpack.c.h.b16 %v4459
      %v5117 = vunpack.c.l.b16 %v4460
      %v5118 = vunpack.c.l.b16 %v4461
      %v5119 = vunpack.c.h.b16 %v4461
      %v5120 = vunpack.c.l.b16 %v4462
      %v5121 = vunpack.c.h.b16 %v4462
      %v5122 = vunpack.c.l.b16 %v4463
      %v5123 = vunpack.c.h.b16 %v4463
      %v5124 = vunpack.c.l.b16 %v4464
      %v5125 = vunpack.c.l.b16 %v4465
      %v5126 = vunpack.c.h.b16 %v4465
      %v5127 = vunpack.c.l.b16 %v4466
      %v5128 = vunpack.c.h.b16 %v4466
      %v5129 = vunpack.c.l.b16 %v4467
      %v5130 = vunpack.c.h.b16 %v4467
      %v5131 = vunpack.c.l.b16 %v4468
      %v5132 = vunpack.c.l.b16 %v4469
      %v5133 = vunpack.c.h.b16 %v4469
      %v5134 = vunpack.c.l.b16 %v4470
      %v5135 = vunpack.c.h.b16 %v4470
      %v5136 = vunpack.c.l.b16 %v4471
      %v5137 = vunpack.c.h.b16 %v4471
      %v5138 = vunpack.c.l.b16 %v4472
      %v5139 = vunpack.c.l.b16 %v4473
      %v5140 = vunpack.c.h.b16 %v4473
      %v5141 = vunpack.c.l.b16 %v4474
      %v5142 = vunpack.c.h.b16 %v4474
      %v5143 = vunpack.c.l.b16 %v4475
      %v5144 = vunpack.c.h.b16 %v4475
      %v5145 = vunpack.c.l.b16 %v4476
      %v5146 = vunpack.c.l.b16 %v4477
      %v5147 = vunpack.c.h.b16 %v4477
      %v5148 = vunpack.c.l.b16 %v4478
      %v5149 = vunpack.c.h.b16 %v4478
      %v5150 = vunpack.c.l.b16 %v4479
      %v5151 = vunpack.c.h.b16 %v4479
      %v5152 = vunpack.c.l.b16 %v4480
      %v5153 = vunpack.c.l.b16 %v4481
      %v5154 = vunpack.c.h.b16 %v4481
      %v5155 = vunpack.c.l.b16 %v4482
      %v5156 = vunpack.c.h.b16 %v4482
      %v5157 = vunpack.c.l.b16 %v4483
      %v5158 = vunpack.c.h.b16 %v4483
      %v5159 = vunpack.c.l.b16 %v4484
      %v5160 = vunpack.c.l.b16 %v4485
      %v5161 = vunpack.c.h.b16 %v4485
      %v5162 = vunpack.c.l.b16 %v4486
      %v5163 = vunpack.c.h.b16 %v4486
      %v5164 = vunpack.c.l.b16 %v4487
      %v5165 = vunpack.c.h.b16 %v4487
      %v5166 = vunpack.c.l.b16 %v4488
      %v5167 = vunpack.c.l.b16 %v4489
      %v5168 = vunpack.c.h.b16 %v4489
      %v5169 = vunpack.c.l.b16 %v4490
      %v5170 = vunpack.c.h.b16 %v4490
      %v5171 = vunpack.c.l.b16 %v4491
      %v5172 = vunpack.c.h.b16 %v4491
      %v5173 = vunpack.c.l.b16 %v4492
      %v5174 = vunpack.c.l.b16 %v4493
      %v5175 = vunpack.c.h.b16 %v4493
      %v5176 = vunpack.c.l.b16 %v4494
      %v5177 = vunpack.c.h.b16 %v4494
      %v5178 = vunpack.c.l.b16 %v4495
      %v5179 = vunpack.c.h.b16 %v4495
      %v5180 = vunpack.c.l.b16 %v4496
      %v5181 = vunpack.c.l.b16 %v4497
      %v5182 = vunpack.c.h.b16 %v4497
      %v5183 = vunpack.c.l.b16 %v4498
      %v5184 = vunpack.c.h.b16 %v4498
      %v5185 = vunpack.c.l.b16 %v4499
      %v5186 = vunpack.c.h.b16 %v4499
      %v5187 = vunpack.c.l.b16 %v4500
      %v5188 = vunpack.c.l.b16 %v4501
      %v5189 = vunpack.c.h.b16 %v4501
      %v5190 = vunpack.c.l.b16 %v4502
      %v5191 = vunpack.c.h.b16 %v4502
      %v5192 = vunpack.c.l.b16 %v4503
      %v5193 = vunpack.c.h.b16 %v4503
      %v5194 = vunpack.c.l.b16 %v4504
      %v5195 = vunpack.c.l.b16 %v4505
      %v5196 = vunpack.c.h.b16 %v4505
      %v5197 = vunpack.c.l.b16 %v4506
      %v5198 = vunpack.c.h.b16 %v4506
      %v5199 = vunpack.c.l.b16 %v4507
      %v5200 = vunpack.c.h.b16 %v4507
      %v5201 = vunpack.c.l.b16 %v4508
      %v5202 = vunpack.c.l.b16 %v4509
      %v5203 = vunpack.c.h.b16 %v4509
      %v5204 = vunpack.c.l.b16 %v4510
      %v5205 = vunpack.c.h.b16 %v4510
      %v5206 = vunpack.c.l.b16 %v4511
      %v5207 = vunpack.c.h.b16 %v4511
      %v5208 = vunpack.c.l.b16 %v4512
      %v5209 = vunpack.c.l.b16 %v4513
      %v5210 = vunpack.c.h.b16 %v4513
      %v5211 = vunpack.c.l.b16 %v4514
      %v5212 = vunpack.c.h.b16 %v4514
      %v5213 = vunpack.c.l.b16 %v4515
      %v5214 = vunpack.c.h.b16 %v4515
      %v5215 = vunpack.c.l.b16 %v4516
      %v5216 = vunpack.c.l.b16 %v4517
      %v5217 = vunpack.c.h.b16 %v4517
      %v5218 = vunpack.c.l.b16 %v4518
      %v5219 = vunpack.c.h.b16 %v4518
      %v5220 = vunpack.c.l.b16 %v4519
      %v5221 = vunpack.c.h.b16 %v4519
      %v5222 = vunpack.c.l.b16 %v4520
      %v5223 = vunpack.c.l.b16 %v4521
      %v5224 = vunpack.c.h.b16 %v4521
      %v5225 = vunpack.c.l.b16 %v4522
      %v5226 = vunpack.c.h.b16 %v4522
      %v5227 = vunpack.c.l.b16 %v4523
      %v5228 = vunpack.c.h.b16 %v4523
      %v5229 = vunpack.c.l.b16 %v4524
      %v5230 = vunpack.c.l.b16 %v4525
      %v5231 = vunpack.c.h.b16 %v4525
      %v5232 = vunpack.c.l.b16 %v4526
      %v5233 = vunpack.c.h.b16 %v4526
      %v5234 = vunpack.c.l.b16 %v4527
      %v5235 = vunpack.c.h.b16 %v4527
      %v5236 = vunpack.c.l.b16 %v4528
      %v5237 = vunpack.c.l.b16 %v4529
      %v5238 = vunpack.c.h.b16 %v4529
      %v5239 = vunpack.c.l.b16 %v4530
      %v5240 = vunpack.c.h.b16 %v4530
      %v5241 = vunpack.c.l.b16 %v4531
      %v5242 = vunpack.c.h.b16 %v4531
      %v5243 = vunpack.c.l.b16 %v4532
      %v5244 = vunpack.c.l.b16 %v4533
      %v5245 = vunpack.c.h.b16 %v4533
      %v5246 = vunpack.c.l.b16 %v4534
      %v5247 = vunpack.c.h.b16 %v4534
      %v5248 = vunpack.c.l.b16 %v4535
      %v5249 = vunpack.c.h.b16 %v4535
      %v5250 = vunpack.c.l.b16 %v4536
      %v5251 = vunpack.c.l.b16 %v4537
      %v5252 = vunpack.c.h.b16 %v4537
      %v5253 = vunpack.c.l.b16 %v4538
      %v5254 = vunpack.c.h.b16 %v4538
      %v5255 = vunpack.c.l.b16 %v4539
      %v5256 = vunpack.c.h.b16 %v4539
      %v5257 = vunpack.c.l.b16 %v4540
      %v5258 = vunpack.c.l.b16 %v4541
      %v5259 = vunpack.c.h.b16 %v4541
      %v5260 = vunpack.c.l.b16 %v4542
      %v5261 = vunpack.c.h.b16 %v4542
      %v5262 = vunpack.c.l.b16 %v4543
      %v5263 = vunpack.c.h.b16 %v4543
      %v5264 = vunpack.c.l.b16 %v4544
      %v5265 = vunpack.c.l.b16 %v4545
      %v5266 = vunpack.c.h.b16 %v4545
      %v5267 = vunpack.c.l.b16 %v4546
      %v5268 = vunpack.c.h.b16 %v4546
      %v5269 = vunpack.c.l.b16 %v4547
      %v5270 = vunpack.c.h.b16 %v4547
      %v5271 = vunpack.c.l.b16 %v4548
      %v5272 = vunpack.c.l.b16 %v4549
      %v5273 = vunpack.c.h.b16 %v4549
      %v5274 = vunpack.c.l.b16 %v4550
      %v5275 = vunpack.c.h.b16 %v4550
      %v5276 = vunpack.c.l.b16 %v4551
      %v5277 = vunpack.c.h.b16 %v4551
      %v5278 = vunpack.c.l.b16 %v4552
      %v5279 = vunpack.c.l.b16 %v4553
      %v5280 = vunpack.c.h.b16 %v4553
      %v5281 = vunpack.c.l.b16 %v4554
      %v5282 = vunpack.c.h.b16 %v4554
      %v5283 = vunpack.c.l.b16 %v4555
      %v5284 = vunpack.c.h.b16 %v4555
      %v5285 = vunpack.c.l.b16 %v4556
      %v5286 = vunpack.c.l.b16 %v4557
      %v5287 = vunpack.c.h.b16 %v4557
      %v5288 = vunpack.c.l.b16 %v4558
      %v5289 = vunpack.c.h.b16 %v4558
      %v5290 = vunpack.c.l.b16 %v4559
      %v5291 = vunpack.c.h.b16 %v4559
      %v5292 = vunpack.c.l.b16 %v4560
      %v5293 = vunpack.c.l.b16 %v4561
      %v5294 = vunpack.c.h.b16 %v4561
      %v5295 = vunpack.c.l.b16 %v4562
      %v5296 = vunpack.c.h.b16 %v4562
      %v5297 = vunpack.c.l.b16 %v4563
      %v5298 = vunpack.c.h.b16 %v4563
      %v5299 = vunpack.c.l.b16 %v4564
      %v5300 = vunpack.c.l.b16 %v4565
      %v5301 = vunpack.c.h.b16 %v4565
      %v5302 = vunpack.c.l.b16 %v4566
      %v5303 = vunpack.c.h.b16 %v4566
      %v5304 = vunpack.c.l.b16 %v4567
      %v5305 = vunpack.c.h.b16 %v4567
      %v5306 = vunpack.c.l.b16 %v4568
      %v5307 = vunpack.c.l.b16 %v4569
      %v5308 = vunpack.c.h.b16 %v4569
      %v5309 = vunpack.c.l.b16 %v4570
      %v5310 = vunpack.c.h.b16 %v4570
      %v5311 = vunpack.c.l.b16 %v4571
      %v5312 = vunpack.c.h.b16 %v4571
      %v5313 = vunpack.c.l.b16 %v4572
      %v5314 = vpack.c.b16 %v4873, %v4866
      %v5315 = vpack.c.b16 %v4874, %v4867
      %v5316 = vpack.c.b16 %v4875, %v4868
      %v5317 = vpack.c.b16 %v4876, %v4869
      %v5318 = vpack.c.b16 %v4877, %v4870
      %v5319 = vpack.c.b16 %v4878, %v4871
      %v5320 = vpack.c.b16 %v4879, %v4872
      %v5321 = vpack.c.b16 %v4887, %v4880
      %v5322 = vpack.c.b16 %v4888, %v4881
      %v5323 = vpack.c.b16 %v4889, %v4882
      %v5324 = vpack.c.b16 %v4890, %v4883
      %v5325 = vpack.c.b16 %v4891, %v4884
      %v5326 = vpack.c.b16 %v4892, %v4885
      %v5327 = vpack.c.b16 %v4893, %v4886
      %v5328 = vpack.c.b16 %v4901, %v4894
      %v5329 = vpack.c.b16 %v4902, %v4895
      %v5330 = vpack.c.b16 %v4903, %v4896
      %v5331 = vpack.c.b16 %v4904, %v4897
      %v5332 = vpack.c.b16 %v4905, %v4898
      %v5333 = vpack.c.b16 %v4906, %v4899
      %v5334 = vpack.c.b16 %v4907, %v4900
      %v5335 = vpack.c.b16 %v4915, %v4908
      %v5336 = vpack.c.b16 %v4916, %v4909
      %v5337 = vpack.c.b16 %v4917, %v4910
      %v5338 = vpack.c.b16 %v4918, %v4911
      %v5339 = vpack.c.b16 %v4919, %v4912
      %v5340 = vpack.c.b16 %v4920, %v4913
      %v5341 = vpack.c.b16 %v4921, %v4914
      %v5342 = vpack.c.b16 %v4929, %v4922
      %v5343 = vpack.c.b16 %v4930, %v4923
      %v5344 = vpack.c.b16 %v4931, %v4924
      %v5345 = vpack.c.b16 %v4932, %v4925
      %v5346 = vpack.c.b16 %v4933, %v4926
      %v5347 = vpack.c.b16 %v4934, %v4927
      %v5348 = vpack.c.b16 %v4935, %v4928
      %v5349 = vpack.c.b16 %v4943, %v4936
      %v5350 = vpack.c.b16 %v4944, %v4937
      %v5351 = vpack.c.b16 %v4945, %v4938
      %v5352 = vpack.c.b16 %v4946, %v4939
      %v5353 = vpack.c.b16 %v4947, %v4940
      %v5354 = vpack.c.b16 %v4948, %v4941
      %v5355 = vpack.c.b16 %v4949, %v4942
      %v5356 = vpack.c.b16 %v4957, %v4950
      %v5357 = vpack.c.b16 %v4958, %v4951
      %v5358 = vpack.c.b16 %v4959, %v4952
      %v5359 = vpack.c.b16 %v4960, %v4953
      %v5360 = vpack.c.b16 %v4961, %v4954
      %v5361 = vpack.c.b16 %v4962, %v4955
      %v5362 = vpack.c.b16 %v4963, %v4956
      %v5363 = vpack.c.b16 %v4971, %v4964
      %v5364 = vpack.c.b16 %v4972, %v4965
      %v5365 = vpack.c.b16 %v4973, %v4966
      %v5366 = vpack.c.b16 %v4974, %v4967
      %v5367 = vpack.c.b16 %v4975, %v4968
      %v5368 = vpack.c.b16 %v4976, %v4969
      %v5369 = vpack.c.b16 %v4977, %v4970
      %v5370 = vpack.c.b16 %v4985, %v4978
      %v5371 = vpack.c.b16 %v4986, %v4979
      %v5372 = vpack.c.b16 %v4987, %v4980
      %v5373 = vpack.c.b16 %v4988, %v4981
      %v5374 = vpack.c.b16 %v4989, %v4982
      %v5375 = vpack.c.b16 %v4990, %v4983
      %v5376 = vpack.c.b16 %v4991, %v4984
      %v5377 = vpack.c.b16 %v4999, %v4992
      %v5378 = vpack.c.b16 %v5000, %v4993
      %v5379 = vpack.c.b16 %v5001, %v4994
      %v5380 = vpack.c.b16 %v5002, %v4995
      %v5381 = vpack.c.b16 %v5003, %v4996
      %v5382 = vpack.c.b16 %v5004, %v4997
      %v5383 = vpack.c.b16 %v5005, %v4998
      %v5384 = vpack.c.b16 %v5013, %v5006
      %v5385 = vpack.c.b16 %v5014, %v5007
      %v5386 = vpack.c.b16 %v5015, %v5008
      %v5387 = vpack.c.b16 %v5016, %v5009
      %v5388 = vpack.c.b16 %v5017, %v5010
      %v5389 = vpack.c.b16 %v5018, %v5011
      %v5390 = vpack.c.b16 %v5019, %v5012
      %v5391 = vpack.c.b16 %v5027, %v5020
      %v5392 = vpack.c.b16 %v5028, %v5021
      %v5393 = vpack.c.b16 %v5029, %v5022
      %v5394 = vpack.c.b16 %v5030, %v5023
      %v5395 = vpack.c.b16 %v5031, %v5024
      %v5396 = vpack.c.b16 %v5032, %v5025
      %v5397 = vpack.c.b16 %v5033, %v5026
      %v5398 = vpack.c.b16 %v5041, %v5034
      %v5399 = vpack.c.b16 %v5042, %v5035
      %v5400 = vpack.c.b16 %v5043, %v5036
      %v5401 = vpack.c.b16 %v5044, %v5037
      %v5402 = vpack.c.b16 %v5045, %v5038
      %v5403 = vpack.c.b16 %v5046, %v5039
      %v5404 = vpack.c.b16 %v5047, %v5040
      %v5405 = vpack.c.b16 %v5055, %v5048
      %v5406 = vpack.c.b16 %v5056, %v5049
      %v5407 = vpack.c.b16 %v5057, %v5050
      %v5408 = vpack.c.b16 %v5058, %v5051
      %v5409 = vpack.c.b16 %v5059, %v5052
      %v5410 = vpack.c.b16 %v5060, %v5053
      %v5411 = vpack.c.b16 %v5061, %v5054
      %v5412 = vpack.c.b16 %v5069, %v5062
      %v5413 = vpack.c.b16 %v5070, %v5063
      %v5414 = vpack.c.b16 %v5071, %v5064
      %v5415 = vpack.c.b16 %v5072, %v5065
      %v5416 = vpack.c.b16 %v5073, %v5066
      %v5417 = vpack.c.b16 %v5074, %v5067
      %v5418 = vpack.c.b16 %v5075, %v5068
      %v5419 = vpack.c.b16 %v5083, %v5076
      %v5420 = vpack.c.b16 %v5084, %v5077
      %v5421 = vpack.c.b16 %v5085, %v5078
      %v5422 = vpack.c.b16 %v5086, %v5079
      %v5423 = vpack.c.b16 %v5087, %v5080
      %v5424 = vpack.c.b16 %v5088, %v5081
      %v5425 = vpack.c.b16 %v5089, %v5082
      %v5426 = vpack.c.b16 %v5097, %v5090
      %v5427 = vpack.c.b16 %v5098, %v5091
      %v5428 = vpack.c.b16 %v5099, %v5092
      %v5429 = vpack.c.b16 %v5100, %v5093
      %v5430 = vpack.c.b16 %v5101, %v5094
      %v5431 = vpack.c.b16 %v5102, %v5095
      %v5432 = vpack.c.b16 %v5103, %v5096
      %v5433 = vpack.c.b16 %v5111, %v5104
      %v5434 = vpack.c.b16 %v5112, %v5105
      %v5435 = vpack.c.b16 %v5113, %v5106
      %v5436 = vpack.c.b16 %v5114, %v5107
      %v5437 = vpack.c.b16 %v5115, %v5108
      %v5438 = vpack.c.b16 %v5116, %v5109
      %v5439 = vpack.c.b16 %v5117, %v5110
      %v5440 = vpack.c.b16 %v5125, %v5118
      %v5441 = vpack.c.b16 %v5126, %v5119
      %v5442 = vpack.c.b16 %v5127, %v5120
      %v5443 = vpack.c.b16 %v5128, %v5121
      %v5444 = vpack.c.b16 %v5129, %v5122
      %v5445 = vpack.c.b16 %v5130, %v5123
      %v5446 = vpack.c.b16 %v5131, %v5124
      %v5447 = vpack.c.b16 %v5139, %v5132
      %v5448 = vpack.c.b16 %v5140, %v5133
      %v5449 = vpack.c.b16 %v5141, %v5134
      %v5450 = vpack.c.b16 %v5142, %v5135
      %v5451 = vpack.c.b16 %v5143, %v5136
      %v5452 = vpack.c.b16 %v5144, %v5137
      %v5453 = vpack.c.b16 %v5145, %v5138
      %v5454 = vpack.c.b16 %v5153, %v5146
      %v5455 = vpack.c.b16 %v5154, %v5147
      %v5456 = vpack.c.b16 %v5155, %v5148
      %v5457 = vpack.c.b16 %v5156, %v5149
      %v5458 = vpack.c.b16 %v5157, %v5150
      %v5459 = vpack.c.b16 %v5158, %v5151
      %v5460 = vpack.c.b16 %v5159, %v5152
      %v5461 = vpack.c.b16 %v5167, %v5160
      %v5462 = vpack.c.b16 %v5168, %v5161
      %v5463 = vpack.c.b16 %v5169, %v5162
      %v5464 = vpack.c.b16 %v5170, %v5163
      %v5465 = vpack.c.b16 %v5171, %v5164
      %v5466 = vpack.c.b16 %v5172, %v5165
      %v5467 = vpack.c.b16 %v5173, %v5166
      %v5468 = vpack.c.b16 %v5181, %v5174
      %v5469 = vpack.c.b16 %v5182, %v5175
      %v5470 = vpack.c.b16 %v5183, %v5176
      %v5471 = vpack.c.b16 %v5184, %v5177
      %v5472 = vpack.c.b16 %v5185, %v5178
      %v5473 = vpack.c.b16 %v5186, %v5179
      %v5474 = vpack.c.b16 %v5187, %v5180
      %v5475 = vpack.c.b16 %v5195, %v5188
      %v5476 = vpack.c.b16 %v5196, %v5189
      %v5477 = vpack.c.b16 %v5197, %v5190
      %v5478 = vpack.c.b16 %v5198, %v5191
      %v5479 = vpack.c.b16 %v5199, %v5192
      %v5480 = vpack.c.b16 %v5200, %v5193
      %v5481 = vpack.c.b16 %v5201, %v5194
      %v5482 = vpack.c.b16 %v5209, %v5202
      %v5483 = vpack.c.b16 %v5210, %v5203
      %v5484 = vpack.c.b16 %v5211, %v5204
      %v5485 = vpack.c.b16 %v5212, %v5205
      %v5486 = vpack.c.b16 %v5213, %v5206
      %v5487 = vpack.c.b16 %v5214, %v5207
      %v5488 = vpack.c.b16 %v5215, %v5208
      %v5489 = vpack.c.b16 %v5223, %v5216
      %v5490 = vpack.c.b16 %v5224, %v5217
      %v5491 = vpack.c.b16 %v5225, %v5218
      %v5492 = vpack.c.b16 %v5226, %v5219
      %v5493 = vpack.c.b16 %v5227, %v5220
      %v5494 = vpack.c.b16 %v5228, %v5221
      %v5495 = vpack.c.b16 %v5229, %v5222
      %v5496 = vpack.c.b16 %v5237, %v5230
      %v5497 = vpack.c.b16 %v5238, %v5231
      %v5498 = vpack.c.b16 %v5239, %v5232
      %v5499 = vpack.c.b16 %v5240, %v5233
      %v5500 = vpack.c.b16 %v5241, %v5234
      %v5501 = vpack.c.b16 %v5242, %v5235
      %v5502 = vpack.c.b16 %v5243, %v5236
      %v5503 = vpack.c.b16 %v5251, %v5244
      %v5504 = vpack.c.b16 %v5252, %v5245
      %v5505 = vpack.c.b16 %v5253, %v5246
      %v5506 = vpack.c.b16 %v5254, %v5247
      %v5507 = vpack.c.b16 %v5255, %v5248
      %v5508 = vpack.c.b16 %v5256, %v5249
      %v5509 = vpack.c.b16 %v5257, %v5250
      %v5510 = vpack.c.b16 %v5265, %v5258
      %v5511 = vpack.c.b16 %v5266, %v5259
      %v5512 = vpack.c.b16 %v5267, %v5260
      %v5513 = vpack.c.b16 %v5268, %v5261
      %v5514 = vpack.c.b16 %v5269, %v5262
      %v5515 = vpack.c.b16 %v5270, %v5263
      %v5516 = vpack.c.b16 %v5271, %v5264
      %v5517 = vpack.c.b16 %v5279, %v5272
      %v5518 = vpack.c.b16 %v5280, %v5273
      %v5519 = vpack.c.b16 %v5281, %v5274
      %v5520 = vpack.c.b16 %v5282, %v5275
      %v5521 = vpack.c.b16 %v5283, %v5276
      %v5522 = vpack.c.b16 %v5284, %v5277
      %v5523 = vpack.c.b16 %v5285, %v5278
      %v5524 = vpack.c.b16 %v5293, %v5286
      %v5525 = vpack.c.b16 %v5294, %v5287
      %v5526 = vpack.c.b16 %v5295, %v5288
      %v5527 = vpack.c.b16 %v5296, %v5289
      %v5528 = vpack.c.b16 %v5297, %v5290
      %v5529 = vpack.c.b16 %v5298, %v5291
      %v5530 = vpack.c.b16 %v5299, %v5292
      %v5531 = vpack.c.b16 %v5307, %v5300
      %v5532 = vpack.c.b16 %v5308, %v5301
      %v5533 = vpack.c.b16 %v5309, %v5302
      %v5534 = vpack.c.b16 %v5310, %v5303
      %v5535 = vpack.c.b16 %v5311, %v5304
      %v5536 = vpack.c.b16 %v5312, %v5305
      %v5537 = vpack.c.b16 %v5313, %v5306
      %5762 = vmatprep.subr.bf16.mxu0 %v5315
      %5763 = vmatpush1.bf16.msra.mxu0 %v5314
      %5764 = vmatprep.subr.bf16.mxu0 %v5322
      %5765 = vmatpush1.bf16.msra.mxu0 %v5321
      %5766 = vmatprep.subr.bf16.mxu0 %v5329
      %5767 = vmatpush1.bf16.msra.mxu0 %v5328
      %5768 = vmatprep.subr.bf16.mxu0 %v5336
      %5769 = vmatpush1.bf16.msra.mxu0 %v5335
      %5770 = vmatprep.subr.bf16.mxu0 %v5343
      %5771 = vmatpush1.bf16.msra.mxu0 %v5342
      %5772 = vmatprep.subr.bf16.mxu0 %v5350
      %5773 = vmatpush1.bf16.msra.mxu0 %v5349
      %5774 = vmatprep.subr.bf16.mxu0 %v5357
      %5775 = vmatpush1.bf16.msra.mxu0 %v5356
      %5776 = vmatprep.subr.bf16.mxu0 %v5364
      %5777 = vmatpush1.bf16.msra.mxu0 %v5363
      %5778 = vmatprep.subr.bf16.mxu0 %v5371
      %5779 = vmatpush1.bf16.msra.mxu0 %v5370
      %5780 = vmatprep.subr.bf16.mxu0 %v5378
      %5781 = vmatpush1.bf16.msra.mxu0 %v5377
      %5782 = vmatprep.subr.bf16.mxu0 %v5385
      %5783 = vmatpush1.bf16.msra.mxu0 %v5384
      %5784 = vmatprep.subr.bf16.mxu0 %v5392
      %5785 = vmatpush1.bf16.msra.mxu0 %v5391
      %5786 = vmatprep.subr.bf16.mxu0 %v5399
      %5787 = vmatpush1.bf16.msra.mxu0 %v5398
      %5788 = vmatprep.subr.bf16.mxu0 %v5406
      %5789 = vmatpush1.bf16.msra.mxu0 %v5405
      %5790 = vmatprep.subr.bf16.mxu0 %v5413
      %5791 = vmatpush1.bf16.msra.mxu0 %v5412
      %5792 = vmatprep.subr.bf16.mxu0 %v5420
      %5793 = vmatpush1.bf16.msra.mxu0 %v5419
      %5794 = vmatprep.mubr.bf16.mxu0 %v4286
      %5795 = vmatmul.mubr.bf16.gmra.mrb[0].mxu0 %v4285
      %v5796 = vpop.f32.mrb[0].mxu0
      %v5797 = vadd.f32 %v4578, %v5796
      %v5798 = vpop.f32.mrb[0].mxu0
      %v5799 = vadd.f32 %v4582, %v5798
      %v5800 = vpop.f32.mrb[0].mxu0
      %v5801 = vadd.f32 %v4578, %v5800
      %v5802 = vpop.f32.mrb[0].mxu0
      %v5803 = vadd.f32 %v4582, %v5802
      %5804 = vmatprep.mubr.bf16.mxu0 %v4290
      %5805 = vmatmul.mubr.bf16.gmra.mrb[0].mxu0 %v4289
      %v5806 = vpop.f32.mrb[0].mxu0
      %v5807 = vadd.f32 %v4578, %v5806
      %v5808 = vpop.f32.mrb[0].mxu0
      %v5809 = vadd.f32 %v4582, %v5808
      %v5810 = vpop.f32.mrb[0].mxu0
      %v5811 = vadd.f32 %v4578, %v5810
      %v5812 = vpop.f32.mrb[0].mxu0
      %v5813 = vadd.f32 %v4582, %v5812
      %5814 = vmatprep.mubr.bf16.mxu0 %v4294
      %5815 = vmatmul.mubr.bf16.gmra.mrb[0].mxu0 %v4293
      %v5816 = vpop.f32.mrb[0].mxu0
      %v5817 = vadd.f32 %v4578, %v5816
      %v5818 = vpop.f32.mrb[0].mxu0
      %v5819 = vadd.f32 %v4582, %v5818
      %v5820 = vpop.f32.mrb[0].mxu0
      %v5821 = vadd.f32 %v4578, %v5820
      %v5822 = vpop.f32.mrb[0].mxu0
      %v5823 = vadd.f32 %v4582, %v5822
      %5824 = vmatprep.mubr.bf16.mxu0 %v4298
      %5825 = vmatmul.mubr.bf16.gmra.mrb[0].mxu0 %v4297
      %v5826 = vpop.f32.mrb[0].mxu0
      %v5827 = vadd.f32 %v4578, %v5826
      %v5828 = vpop.f32.mrb[0].mxu0
      %v5829 = vadd.f32 %v4582, %v5828
      %v5830 = vpop.f32.mrb[0].mxu0
      %v5831 = vadd.f32 %v4578, %v5830
      %v5832 = vpop.f32.mrb[0].mxu0
      %v5833 = vadd.f32 %v4582, %v5832
      %5834 = vmatprep.mubr.bf16.mxu0 %v4302
      %5835 = vmatmul.mubr.bf16.gmra.mrb[0].mxu0 %v4301
      %v5836 = vpop.f32.mrb[0].mxu0
      %v5837 = vadd.f32 %v4578, %v5836
      %v5838 = vpop.f32.mrb[0].mxu0
      %v5839 = vadd.f32 %v4582, %v5838
      %v5840 = vpop.f32.mrb[0].mxu0
      %v5841 = vadd.f32 %v4578, %v5840
      %v5842 = vpop.f32.mrb[0].mxu0
      %v5843 = vadd.f32 %v4582, %v5842
      %5844 = vmatprep.mubr.bf16.mxu0 %v4306
      %5845 = vmatmul.mubr.bf16.gmra.mrb[0].mxu0 %v4305
      %v5846 = vpop.f32.mrb[0].mxu0
      %v5847 = vadd.f32 %v4578, %v5846
      %v5848 = vpop.f32.mrb[0].mxu0
      %v5849 = vadd.f32 %v4582, %v5848
      %v5850 = vpop.f32.mrb[0].mxu0
      %v5851 = vadd.f32 %v4578, %v5850
      %v5852 = vpop.f32.mrb[0].mxu0
      %v5853 = vadd.f32 %v4582, %v5852
      %5854 = vmatprep.mubr.bf16.mxu0 %v4310
      %5855 = vmatmul.mubr.bf16.gmra.mrb[0].mxu0 %v4309
      %v5856 = vpop.f32.mrb[0].mxu0
      %v5857 = vadd.f32 %v4578, %v5856
      %v5858 = vpop.f32.mrb[0].mxu0
      %v5859 = vadd.f32 %v4582, %v5858
      %v5860 = vpop.f32.mrb[0].mxu0
      %v5861 = vadd.f32 %v4578, %v5860
      %v5862 = vpop.f32.mrb[0].mxu0
      %v5863 = vadd.f32 %v4582, %v5862
      %5864 = vmatprep.mubr.bf16.mxu0 %v4314
      %5865 = vmatmul.mubr.bf16.gmra.mrb[0].mxu0 %v4313
      %v5866 = vpop.f32.mrb[0].mxu0
      %v5867 = vadd.f32 %v4578, %v5866
      %v5868 = vpop.f32.mrb[0].mxu0
      %v5869 = vadd.f32 %v4582, %v5868
      %v5870 = vpop.f32.mrb[0].mxu0
      %v5871 = vadd.f32 %v4578, %v5870
      %v5872 = vpop.f32.mrb[0].mxu0
      %v5873 = vadd.f32 %v4582, %v5872
      %5874 = vdwg.mxu0
      %5875 = vmatprep.subr.bf16.mxu0 %v5427
      %5876 = vmatpush1.bf16.msra.mxu0 %v5426
      %5877 = vmatprep.subr.bf16.mxu0 %v5434
      %5878 = vmatpush1.bf16.msra.mxu0 %v5433
      %5879 = vmatprep.subr.bf16.mxu0 %v5441
      %5880 = vmatpush1.bf16.msra.mxu0 %v5440
      %5881 = vmatprep.subr.bf16.mxu0 %v5448
      %5882 = vmatpush1.bf16.msra.mxu0 %v5447
      %5883 = vmatprep.subr.bf16.mxu0 %v5455
      %5884 = vmatpush1.bf16.msra.mxu0 %v5454
      %5885 = vmatprep.subr.bf16.mxu0 %v5462
      %5886 = vmatpush1.bf16.msra.mxu0 %v5461
      %5887 = vmatprep.subr.bf16.mxu0 %v5469
      %5888 = vmatpush1.bf16.msra.mxu0 %v5468
      %5889 = vmatprep.subr.bf16.mxu0 %v5476
      %5890 = vmatpush1.bf16.msra.mxu0 %v5475
      %5891 = vmatprep.subr.bf16.mxu0 %v5483
      %5892 = vmatpush1.bf16.msra.mxu0 %v5482
      %5893 = vmatprep.subr.bf16.mxu0 %v5490
      %5894 = vmatpush1.bf16.msra.mxu0 %v5489
      %5895 = vmatprep.subr.bf16.mxu0 %v5497
      %5896 = vmatpush1.bf16.msra.mxu0 %v5496
      %5897 = vmatprep.subr.bf16.mxu0 %v5504
      %5898 = vmatpush1.bf16.msra.mxu0 %v5503
      %5899 = vmatprep.subr.bf16.mxu0 %v5511
      %5900 = vmatpush1.bf16.msra.mxu0 %v5510
      %5901 = vmatprep.subr.bf16.mxu0 %v5518
      %5902 = vmatpush1.bf16.msra.mxu0 %v5517
      %5903 = vmatprep.subr.bf16.mxu0 %v5525
      %5904 = vmatpush1.bf16.msra.mxu0 %v5524
      %5905 = vmatprep.subr.bf16.mxu0 %v5532
      %5906 = vmatpush1.bf16.msra.mxu0 %v5531
      %5907 = vmatprep.mubr.bf16.mxu0 %v4288
      %5908 = vmatmul.mubr.bf16.gmra.mrb[0].mxu0 %v4287
      %v5909 = vpop.f32.mrb[0].mxu0
      %v5910 = vadd.f32 %v5797, %v5909
      %v5911 = vpop.f32.mrb[0].mxu0
      %v5912 = vadd.f32 %v5799, %v5911
      %v5913 = vpop.f32.mrb[0].mxu0
      %v5914 = vadd.f32 %v5801, %v5913
      %v5915 = vpop.f32.mrb[0].mxu0
      %v5916 = vadd.f32 %v5803, %v5915
      %5917 = vmatprep.mubr.bf16.mxu0 %v4292
      %5918 = vmatmul.mubr.bf16.gmra.mrb[0].mxu0 %v4291
      %v5919 = vpop.f32.mrb[0].mxu0
      %v5920 = vadd.f32 %v5807, %v5919
      %v5921 = vpop.f32.mrb[0].mxu0
      %v5922 = vadd.f32 %v5809, %v5921
      %v5923 = vpop.f32.mrb[0].mxu0
      %v5924 = vadd.f32 %v5811, %v5923
      %v5925 = vpop.f32.mrb[0].mxu0
      %v5926 = vadd.f32 %v5813, %v5925
      %5927 = vmatprep.mubr.bf16.mxu0 %v4296
      %5928 = vmatmul.mubr.bf16.gmra.mrb[0].mxu0 %v4295
      %v5929 = vpop.f32.mrb[0].mxu0
      %v5930 = vadd.f32 %v5817, %v5929
      %v5931 = vpop.f32.mrb[0].mxu0
      %v5932 = vadd.f32 %v5819, %v5931
      %v5933 = vpop.f32.mrb[0].mxu0
      %v5934 = vadd.f32 %v5821, %v5933
      %v5935 = vpop.f32.mrb[0].mxu0
      %v5936 = vadd.f32 %v5823, %v5935
      %5937 = vmatprep.mubr.bf16.mxu0 %v4300
      %5938 = vmatmul.mubr.bf16.gmra.mrb[0].mxu0 %v4299
      %v5939 = vpop.f32.mrb[0].mxu0
      %v5940 = vadd.f32 %v5827, %v5939
      %v5941 = vpop.f32.mrb[0].mxu0
      %v5942 = vadd.f32 %v5829, %v5941
      %v5943 = vpop.f32.mrb[0].mxu0
      %v5944 = vadd.f32 %v5831, %v5943
      %v5945 = vpop.f32.mrb[0].mxu0
      %v5946 = vadd.f32 %v5833, %v5945
      %5947 = vmatprep.mubr.bf16.mxu0 %v4304
      %5948 = vmatmul.mubr.bf16.gmra.mrb[0].mxu0 %v4303
      %v5949 = vpop.f32.mrb[0].mxu0
      %v5950 = vadd.f32 %v5837, %v5949
      %v5951 = vpop.f32.mrb[0].mxu0
      %v5952 = vadd.f32 %v5839, %v5951
      %v5953 = vpop.f32.mrb[0].mxu0
      %v5954 = vadd.f32 %v5841, %v5953
      %v5955 = vpop.f32.mrb[0].mxu0
      %v5956 = vadd.f32 %v5843, %v5955
      %5957 = vmatprep.mubr.bf16.mxu0 %v4308
      %5958 = vmatmul.mubr.bf16.gmra.mrb[0].mxu0 %v4307
      %v5959 = vpop.f32.mrb[0].mxu0
      %v5960 = vadd.f32 %v5847, %v5959
      %v5961 = vpop.f32.mrb[0].mxu0
      %v5962 = vadd.f32 %v5849, %v5961
      %v5963 = vpop.f32.mrb[0].mxu0
      %v5964 = vadd.f32 %v5851, %v5963
      %v5965 = vpop.f32.mrb[0].mxu0
      %v5966 = vadd.f32 %v5853, %v5965
      %5967 = vmatprep.mubr.bf16.mxu0 %v4312
      %5968 = vmatmul.mubr.bf16.gmra.mrb[0].mxu0 %v4311
      %v5969 = vpop.f32.mrb[0].mxu0
      %v5970 = vadd.f32 %v5857, %v5969
      %v5971 = vpop.f32.mrb[0].mxu0
      %v5972 = vadd.f32 %v5859, %v5971
      %v5973 = vpop.f32.mrb[0].mxu0
      %v5974 = vadd.f32 %v5861, %v5973
      %v5975 = vpop.f32.mrb[0].mxu0
      %v5976 = vadd.f32 %v5863, %v5975
      %5977 = vmatprep.mubr.bf16.mxu0 %v4316
      %5978 = vmatmul.mubr.bf16.gmra.mrb[0].mxu0 %v4315
      %v5979 = vpop.f32.mrb[0].mxu0
      %v5980 = vadd.f32 %v5867, %v5979
      %v5981 = vpop.f32.mrb[0].mxu0
      %v5982 = vadd.f32 %v5869, %v5981
      %v5983 = vpop.f32.mrb[0].mxu0
      %v5984 = vadd.f32 %v5871, %v5983
      %v5985 = vpop.f32.mrb[0].mxu0
      %v5986 = vadd.f32 %v5873, %v5985
      %5987 = vdwg.mxu0
      %5988 = vmatprep.subr.bf16.mxu0 %v5317
      %5989 = vmatpush1.bf16.msra.mxu0 %v5316
      %5990 = vmatprep.subr.bf16.mxu0 %v5324
      %5991 = vmatpush1.bf16.msra.mxu0 %v5323
      %5992 = vmatprep.subr.bf16.mxu0 %v5331
      %5993 = vmatpush1.bf16.msra.mxu0 %v5330
      %5994 = vmatprep.subr.bf16.mxu0 %v5338
      %5995 = vmatpush1.bf16.msra.mxu0 %v5337
      %5996 = vmatprep.subr.bf16.mxu0 %v5345
      %5997 = vmatpush1.bf16.msra.mxu0 %v5344
      %5998 = vmatprep.subr.bf16.mxu0 %v5352
      %5999 = vmatpush1.bf16.msra.mxu0 %v5351
      %6000 = vmatprep.subr.bf16.mxu0 %v5359
      %6001 = vmatpush1.bf16.msra.mxu0 %v5358
      %6002 = vmatprep.subr.bf16.mxu0 %v5366
      %6003 = vmatpush1.bf16.msra.mxu0 %v5365
      %6004 = vmatprep.subr.bf16.mxu0 %v5373
      %6005 = vmatpush1.bf16.msra.mxu0 %v5372
      %6006 = vmatprep.subr.bf16.mxu0 %v5380
      %6007 = vmatpush1.bf16.msra.mxu0 %v5379
      %6008 = vmatprep.subr.bf16.mxu0 %v5387
      %6009 = vmatpush1.bf16.msra.mxu0 %v5386
      %6010 = vmatprep.subr.bf16.mxu0 %v5394
      %6011 = vmatpush1.bf16.msra.mxu0 %v5393
      %6012 = vmatprep.subr.bf16.mxu0 %v5401
      %6013 = vmatpush1.bf16.msra.mxu0 %v5400
      %6014 = vmatprep.subr.bf16.mxu0 %v5408
      %6015 = vmatpush1.bf16.msra.mxu0 %v5407
      %6016 = vmatprep.subr.bf16.mxu0 %v5415
      %6017 = vmatpush1.bf16.msra.mxu0 %v5414
      %6018 = vmatprep.subr.bf16.mxu0 %v5422
      %6019 = vmatpush1.bf16.msra.mxu0 %v5421
      %6020 = vmatprep.mubr.bf16.mxu0 %v4286
      %6021 = vmatmul.mubr.bf16.gmra.mrb[0].mxu0 %v4285
      %v6022 = vpop.f32.mrb[0].mxu0
      %v6023 = vadd.f32 %v4586, %v6022
      %v6024 = vpop.f32.mrb[0].mxu0
      %v6025 = vadd.f32 %v4590, %v6024
      %v6026 = vpop.f32.mrb[0].mxu0
      %v6027 = vadd.f32 %v4586, %v6026
      %v6028 = vpop.f32.mrb[0].mxu0
      %v6029 = vadd.f32 %v4590, %v6028
      %6030 = vmatprep.mubr.bf16.mxu0 %v4290
      %6031 = vmatmul.mubr.bf16.gmra.mrb[0].mxu0 %v4289
      %v6032 = vpop.f32.mrb[0].mxu0
      %v6033 = vadd.f32 %v4586, %v6032
      %v6034 = vpop.f32.mrb[0].mxu0
      %v6035 = vadd.f32 %v4590, %v6034
      %v6036 = vpop.f32.mrb[0].mxu0
      %v6037 = vadd.f32 %v4586, %v6036
      %v6038 = vpop.f32.mrb[0].mxu0
      %v6039 = vadd.f32 %v4590, %v6038
      %6040 = vmatprep.mubr.bf16.mxu0 %v4294
      %6041 = vmatmul.mubr.bf16.gmra.mrb[0].mxu0 %v4293
      %v6042 = vpop.f32.mrb[0].mxu0
      %v6043 = vadd.f32 %v4586, %v6042
      %v6044 = vpop.f32.mrb[0].mxu0
      %v6045 = vadd.f32 %v4590, %v6044
      %v6046 = vpop.f32.mrb[0].mxu0
      %v6047 = vadd.f32 %v4586, %v6046
      %v6048 = vpop.f32.mrb[0].mxu0
      %v6049 = vadd.f32 %v4590, %v6048
      %6050 = vmatprep.mubr.bf16.mxu0 %v4298
      %6051 = vmatmul.mubr.bf16.gmra.mrb[0].mxu0 %v4297
      %v6052 = vpop.f32.mrb[0].mxu0
      %v6053 = vadd.f32 %v4586, %v6052
      %v6054 = vpop.f32.mrb[0].mxu0
      %v6055 = vadd.f32 %v4590, %v6054
      %v6056 = vpop.f32.mrb[0].mxu0
      %v6057 = vadd.f32 %v4586, %v6056
      %v6058 = vpop.f32.mrb[0].mxu0
      %v6059 = vadd.f32 %v4590, %v6058
      %6060 = vmatprep.mubr.bf16.mxu0 %v4302
      %6061 = vmatmul.mubr.bf16.gmra.mrb[0].mxu0 %v4301
      %v6062 = vpop.f32.mrb[0].mxu0
      %v6063 = vadd.f32 %v4586, %v6062
      %v6064 = vpop.f32.mrb[0].mxu0
      %v6065 = vadd.f32 %v4590, %v6064
      %v6066 = vpop.f32.mrb[0].mxu0
      %v6067 = vadd.f32 %v4586, %v6066
      %v6068 = vpop.f32.mrb[0].mxu0
      %v6069 = vadd.f32 %v4590, %v6068
      %6070 = vmatprep.mubr.bf16.mxu0 %v4306
      %6071 = vmatmul.mubr.bf16.gmra.mrb[0].mxu0 %v4305
      %v6072 = vpop.f32.mrb[0].mxu0
      %v6073 = vadd.f32 %v4586, %v6072
      %v6074 = vpop.f32.mrb[0].mxu0
      %v6075 = vadd.f32 %v4590, %v6074
      %v6076 = vpop.f32.mrb[0].mxu0
      %v6077 = vadd.f32 %v4586, %v6076
      %v6078 = vpop.f32.mrb[0].mxu0
      %v6079 = vadd.f32 %v4590, %v6078
      %6080 = vmatprep.mubr.bf16.mxu0 %v4310
      %6081 = vmatmul.mubr.bf16.gmra.mrb[0].mxu0 %v4309
      %v6082 = vpop.f32.mrb[0].mxu0
      %v6083 = vadd.f32 %v4586, %v6082
      %v6084 = vpop.f32.mrb[0].mxu0
      %v6085 = vadd.f32 %v4590, %v6084
      %v6086 = vpop.f32.mrb[0].mxu0
      %v6087 = vadd.f32 %v4586, %v6086
      %v6088 = vpop.f32.mrb[0].mxu0
      %v6089 = vadd.f32 %v4590, %v6088
      %6090 = vmatprep.mubr.bf16.mxu0 %v4314
      %6091 = vmatmul.mubr.bf16.gmra.mrb[0].mxu0 %v4313
      %v6092 = vpop.f32.mrb[0].mxu0
      %v6093 = vadd.f32 %v4586, %v6092
      %v6094 = vpop.f32.mrb[0].mxu0
      %v6095 = vadd.f32 %v4590, %v6094
      %v6096 = vpop.f32.mrb[0].mxu0
      %v6097 = vadd.f32 %v4586, %v6096
      %v6098 = vpop.f32.mrb[0].mxu0
      %v6099 = vadd.f32 %v4590, %v6098
      %6100 = vdwg.mxu0
      %6101 = vmatprep.subr.bf16.mxu0 %v5429
      %6102 = vmatpush1.bf16.msra.mxu0 %v5428
      %6103 = vmatprep.subr.bf16.mxu0 %v5436
      %6104 = vmatpush1.bf16.msra.mxu0 %v5435
      %6105 = vmatprep.subr.bf16.mxu0 %v5443
      %6106 = vmatpush1.bf16.msra.mxu0 %v5442
      %6107 = vmatprep.subr.bf16.mxu0 %v5450
      %6108 = vmatpush1.bf16.msra.mxu0 %v5449
      %6109 = vmatprep.subr.bf16.mxu0 %v5457
      %6110 = vmatpush1.bf16.msra.mxu0 %v5456
      %6111 = vmatprep.subr.bf16.mxu0 %v5464
      %6112 = vmatpush1.bf16.msra.mxu0 %v5463
      %6113 = vmatprep.subr.bf16.mxu0 %v5471
      %6114 = vmatpush1.bf16.msra.mxu0 %v5470
      %6115 = vmatprep.subr.bf16.mxu0 %v5478
      %6116 = vmatpush1.bf16.msra.mxu0 %v5477
      %6117 = vmatprep.subr.bf16.mxu0 %v5485
      %6118 = vmatpush1.bf16.msra.mxu0 %v5484
      %6119 = vmatprep.subr.bf16.mxu0 %v5492
      %6120 = vmatpush1.bf16.msra.mxu0 %v5491
      %6121 = vmatprep.subr.bf16.mxu0 %v5499
      %6122 = vmatpush1.bf16.msra.mxu0 %v5498
      %6123 = vmatprep.subr.bf16.mxu0 %v5506
      %6124 = vmatpush1.bf16.msra.mxu0 %v5505
      %6125 = vmatprep.subr.bf16.mxu0 %v5513
      %6126 = vmatpush1.bf16.msra.mxu0 %v5512
      %6127 = vmatprep.subr.bf16.mxu0 %v5520
      %6128 = vmatpush1.bf16.msra.mxu0 %v5519
      %6129 = vmatprep.subr.bf16.mxu0 %v5527
      %6130 = vmatpush1.bf16.msra.mxu0 %v5526
      %6131 = vmatprep.subr.bf16.mxu0 %v5534
      %6132 = vmatpush1.bf16.msra.mxu0 %v5533
      %6133 = vmatprep.mubr.bf16.mxu0 %v4288
      %6134 = vmatmul.mubr.bf16.gmra.mrb[0].mxu0 %v4287
      %v6135 = vpop.f32.mrb[0].mxu0
      %v6136 = vadd.f32 %v6023, %v6135
      %v6137 = vpop.f32.mrb[0].mxu0
      %v6138 = vadd.f32 %v6025, %v6137
      %v6139 = vpop.f32.mrb[0].mxu0
      %v6140 = vadd.f32 %v6027, %v6139
      %v6141 = vpop.f32.mrb[0].mxu0
      %v6142 = vadd.f32 %v6029, %v6141
      %6143 = vmatprep.mubr.bf16.mxu0 %v4292
      %6144 = vmatmul.mubr.bf16.gmra.mrb[0].mxu0 %v4291
      %v6145 = vpop.f32.mrb[0].mxu0
      %v6146 = vadd.f32 %v6033, %v6145
      %v6147 = vpop.f32.mrb[0].mxu0
      %v6148 = vadd.f32 %v6035, %v6147
      %v6149 = vpop.f32.mrb[0].mxu0
      %v6150 = vadd.f32 %v6037, %v6149
      %v6151 = vpop.f32.mrb[0].mxu0
      %v6152 = vadd.f32 %v6039, %v6151
      %6153 = vmatprep.mubr.bf16.mxu0 %v4296
      %6154 = vmatmul.mubr.bf16.gmra.mrb[0].mxu0 %v4295
      %v6155 = vpop.f32.mrb[0].mxu0
      %v6156 = vadd.f32 %v6043, %v6155
      %v6157 = vpop.f32.mrb[0].mxu0
      %v6158 = vadd.f32 %v6045, %v6157
      %v6159 = vpop.f32.mrb[0].mxu0
      %v6160 = vadd.f32 %v6047, %v6159
      %v6161 = vpop.f32.mrb[0].mxu0
      %v6162 = vadd.f32 %v6049, %v6161
      %6163 = vmatprep.mubr.bf16.mxu0 %v4300
      %6164 = vmatmul.mubr.bf16.gmra.mrb[0].mxu0 %v4299
      %v6165 = vpop.f32.mrb[0].mxu0
      %v6166 = vadd.f32 %v6053, %v6165
      %v6167 = vpop.f32.mrb[0].mxu0
      %v6168 = vadd.f32 %v6055, %v6167
      %v6169 = vpop.f32.mrb[0].mxu0
      %v6170 = vadd.f32 %v6057, %v6169
      %v6171 = vpop.f32.mrb[0].mxu0
      %v6172 = vadd.f32 %v6059, %v6171
      %6173 = vmatprep.mubr.bf16.mxu0 %v4304
      %6174 = vmatmul.mubr.bf16.gmra.mrb[0].mxu0 %v4303
      %v6175 = vpop.f32.mrb[0].mxu0
      %v6176 = vadd.f32 %v6063, %v6175
      %v6177 = vpop.f32.mrb[0].mxu0
      %v6178 = vadd.f32 %v6065, %v6177
      %v6179 = vpop.f32.mrb[0].mxu0
      %v6180 = vadd.f32 %v6067, %v6179
      %v6181 = vpop.f32.mrb[0].mxu0
      %v6182 = vadd.f32 %v6069, %v6181
      %6183 = vmatprep.mubr.bf16.mxu0 %v4308
      %6184 = vmatmul.mubr.bf16.gmra.mrb[0].mxu0 %v4307
      %v6185 = vpop.f32.mrb[0].mxu0
      %v6186 = vadd.f32 %v6073, %v6185
      %v6187 = vpop.f32.mrb[0].mxu0
      %v6188 = vadd.f32 %v6075, %v6187
      %v6189 = vpop.f32.mrb[0].mxu0
      %v6190 = vadd.f32 %v6077, %v6189
      %v6191 = vpop.f32.mrb[0].mxu0
      %v6192 = vadd.f32 %v6079, %v6191
      %6193 = vmatprep.mubr.bf16.mxu0 %v4312
      %6194 = vmatmul.mubr.bf16.gmra.mrb[0].mxu0 %v4311
      %v6195 = vpop.f32.mrb[0].mxu0
      %v6196 = vadd.f32 %v6083, %v6195
      %v6197 = vpop.f32.mrb[0].mxu0
      %v6198 = vadd.f32 %v6085, %v6197
      %v6199 = vpop.f32.mrb[0].mxu0
      %v6200 = vadd.f32 %v6087, %v6199
      %v6201 = vpop.f32.mrb[0].mxu0
      %v6202 = vadd.f32 %v6089, %v6201
      %6203 = vmatprep.mubr.bf16.mxu0 %v4316
      %6204 = vmatmul.mubr.bf16.gmra.mrb[0].mxu0 %v4315
      %v6205 = vpop.f32.mrb[0].mxu0
      %v6206 = vadd.f32 %v6093, %v6205
      %v6207 = vpop.f32.mrb[0].mxu0
      %v6208 = vadd.f32 %v6095, %v6207
      %v6209 = vpop.f32.mrb[0].mxu0
      %v6210 = vadd.f32 %v6097, %v6209
      %v6211 = vpop.f32.mrb[0].mxu0
      %v6212 = vadd.f32 %v6099, %v6211
      %6213 = vdwg.mxu0
      %6214 = vmatprep.subr.bf16.mxu0 %v5319
      %6215 = vmatpush1.bf16.msra.mxu0 %v5318
      %6216 = vmatprep.subr.bf16.mxu0 %v5326
      %6217 = vmatpush1.bf16.msra.mxu0 %v5325
      %6218 = vmatprep.subr.bf16.mxu0 %v5333
      %6219 = vmatpush1.bf16.msra.mxu0 %v5332
      %6220 = vmatprep.subr.bf16.mxu0 %v5340
      %6221 = vmatpush1.bf16.msra.mxu0 %v5339
      %6222 = vmatprep.subr.bf16.mxu0 %v5347
      %6223 = vmatpush1.bf16.msra.mxu0 %v5346
      %6224 = vmatprep.subr.bf16.mxu0 %v5354
      %6225 = vmatpush1.bf16.msra.mxu0 %v5353
      %6226 = vmatprep.subr.bf16.mxu0 %v5361
      %6227 = vmatpush1.bf16.msra.mxu0 %v5360
      %6228 = vmatprep.subr.bf16.mxu0 %v5368
      %6229 = vmatpush1.bf16.msra.mxu0 %v5367
      %6230 = vmatprep.subr.bf16.mxu0 %v5375
      %6231 = vmatpush1.bf16.msra.mxu0 %v5374
      %6232 = vmatprep.subr.bf16.mxu0 %v5382
      %6233 = vmatpush1.bf16.msra.mxu0 %v5381
      %6234 = vmatprep.subr.bf16.mxu0 %v5389
      %6235 = vmatpush1.bf16.msra.mxu0 %v5388
      %6236 = vmatprep.subr.bf16.mxu0 %v5396
      %6237 = vmatpush1.bf16.msra.mxu0 %v5395
      %6238 = vmatprep.subr.bf16.mxu0 %v5403
      %6239 = vmatpush1.bf16.msra.mxu0 %v5402
      %6240 = vmatprep.subr.bf16.mxu0 %v5410
      %6241 = vmatpush1.bf16.msra.mxu0 %v5409
      %6242 = vmatprep.subr.bf16.mxu0 %v5417
      %6243 = vmatpush1.bf16.msra.mxu0 %v5416
      %6244 = vmatprep.subr.bf16.mxu0 %v5424
      %6245 = vmatpush1.bf16.msra.mxu0 %v5423
      %6246 = vmatprep.mubr.bf16.mxu0 %v4286
      %6247 = vmatmul.mubr.bf16.gmra.mrb[0].mxu0 %v4285
      %v6248 = vpop.f32.mrb[0].mxu0
      %v6249 = vadd.f32 %v4594, %v6248
      %v6250 = vpop.f32.mrb[0].mxu0
      %v6251 = vadd.f32 %v4598, %v6250
      %v6252 = vpop.f32.mrb[0].mxu0
      %v6253 = vadd.f32 %v4594, %v6252
      %v6254 = vpop.f32.mrb[0].mxu0
      %v6255 = vadd.f32 %v4598, %v6254
      %6256 = vmatprep.mubr.bf16.mxu0 %v4290
      %6257 = vmatmul.mubr.bf16.gmra.mrb[0].mxu0 %v4289
      %v6258 = vpop.f32.mrb[0].mxu0
      %v6259 = vadd.f32 %v4594, %v6258
      %v6260 = vpop.f32.mrb[0].mxu0
      %v6261 = vadd.f32 %v4598, %v6260
      %v6262 = vpop.f32.mrb[0].mxu0
      %v6263 = vadd.f32 %v4594, %v6262
      %v6264 = vpop.f32.mrb[0].mxu0
      %v6265 = vadd.f32 %v4598, %v6264
      %6266 = vmatprep.mubr.bf16.mxu0 %v4294
      %6267 = vmatmul.mubr.bf16.gmra.mrb[0].mxu0 %v4293
      %v6268 = vpop.f32.mrb[0].mxu0
      %v6269 = vadd.f32 %v4594, %v6268
      %v6270 = vpop.f32.mrb[0].mxu0
      %v6271 = vadd.f32 %v4598, %v6270
      %v6272 = vpop.f32.mrb[0].mxu0
      %v6273 = vadd.f32 %v4594, %v6272
      %v6274 = vpop.f32.mrb[0].mxu0
      %v6275 = vadd.f32 %v4598, %v6274
      %6276 = vmatprep.mubr.bf16.mxu0 %v4298
      %6277 = vmatmul.mubr.bf16.gmra.mrb[0].mxu0 %v4297
      %v6278 = vpop.f32.mrb[0].mxu0
      %v6279 = vadd.f32 %v4594, %v6278
      %v6280 = vpop.f32.mrb[0].mxu0
      %v6281 = vadd.f32 %v4598, %v6280
      %v6282 = vpop.f32.mrb[0].mxu0
      %v6283 = vadd.f32 %v4594, %v6282
      %v6284 = vpop.f32.mrb[0].mxu0
      %v6285 = vadd.f32 %v4598, %v6284
      %6286 = vmatprep.mubr.bf16.mxu0 %v4302
      %6287 = vmatmul.mubr.bf16.gmra.mrb[0].mxu0 %v4301
      %v6288 = vpop.f32.mrb[0].mxu0
      %v6289 = vadd.f32 %v4594, %v6288
      %v6290 = vpop.f32.mrb[0].mxu0
      %v6291 = vadd.f32 %v4598, %v6290
      %v6292 = vpop.f32.mrb[0].mxu0
      %v6293 = vadd.f32 %v4594, %v6292
      %v6294 = vpop.f32.mrb[0].mxu0
      %v6295 = vadd.f32 %v4598, %v6294
      %6296 = vmatprep.mubr.bf16.mxu0 %v4306
      %6297 = vmatmul.mubr.bf16.gmra.mrb[0].mxu0 %v4305
      %v6298 = vpop.f32.mrb[0].mxu0
      %v6299 = vadd.f32 %v4594, %v6298
      %v6300 = vpop.f32.mrb[0].mxu0
      %v6301 = vadd.f32 %v4598, %v6300
      %v6302 = vpop.f32.mrb[0].mxu0
      %v6303 = vadd.f32 %v4594, %v6302
      %v6304 = vpop.f32.mrb[0].mxu0
      %v6305 = vadd.f32 %v4598, %v6304
      %6306 = vmatprep.mubr.bf16.mxu0 %v4310
      %6307 = vmatmul.mubr.bf16.gmra.mrb[0].mxu0 %v4309
      %v6308 = vpop.f32.mrb[0].mxu0
      %v6309 = vadd.f32 %v4594, %v6308
      %v6310 = vpop.f32.mrb[0].mxu0
      %v6311 = vadd.f32 %v4598, %v6310
      %v6312 = vpop.f32.mrb[0].mxu0
      %v6313 = vadd.f32 %v4594, %v6312
      %v6314 = vpop.f32.mrb[0].mxu0
      %v6315 = vadd.f32 %v4598, %v6314
      %6316 = vmatprep.mubr.bf16.mxu0 %v4314
      %6317 = vmatmul.mubr.bf16.gmra.mrb[0].mxu0 %v4313
      %v6318 = vpop.f32.mrb[0].mxu0
      %v6319 = vadd.f32 %v4594, %v6318
      %v6320 = vpop.f32.mrb[0].mxu0
      %v6321 = vadd.f32 %v4598, %v6320
      %v6322 = vpop.f32.mrb[0].mxu0
      %v6323 = vadd.f32 %v4594, %v6322
      %v6324 = vpop.f32.mrb[0].mxu0
      %v6325 = vadd.f32 %v4598, %v6324
      %6326 = vdwg.mxu0
      %6327 = vmatprep.subr.bf16.mxu0 %v5431
      %6328 = vmatpush1.bf16.msra.mxu0 %v5430
      %6329 = vmatprep.subr.bf16.mxu0 %v5438
      %6330 = vmatpush1.bf16.msra.mxu0 %v5437
      %6331 = vmatprep.subr.bf16.mxu0 %v5445
      %6332 = vmatpush1.bf16.msra.mxu0 %v5444
      %6333 = vmatprep.subr.bf16.mxu0 %v5452
      %6334 = vmatpush1.bf16.msra.mxu0 %v5451
      %6335 = vmatprep.subr.bf16.mxu0 %v5459
      %6336 = vmatpush1.bf16.msra.mxu0 %v5458
      %6337 = vmatprep.subr.bf16.mxu0 %v5466
      %6338 = vmatpush1.bf16.msra.mxu0 %v5465
      %6339 = vmatprep.subr.bf16.mxu0 %v5473
      %6340 = vmatpush1.bf16.msra.mxu0 %v5472
      %6341 = vmatprep.subr.bf16.mxu0 %v5480
      %6342 = vmatpush1.bf16.msra.mxu0 %v5479
      %6343 = vmatprep.subr.bf16.mxu0 %v5487
      %6344 = vmatpush1.bf16.msra.mxu0 %v5486
      %6345 = vmatprep.subr.bf16.mxu0 %v5494
      %6346 = vmatpush1.bf16.msra.mxu0 %v5493
      %6347 = vmatprep.subr.bf16.mxu0 %v5501
      %6348 = vmatpush1.bf16.msra.mxu0 %v5500
      %6349 = vmatprep.subr.bf16.mxu0 %v5508
      %6350 = vmatpush1.bf16.msra.mxu0 %v5507
      %6351 = vmatprep.subr.bf16.mxu0 %v5515
      %6352 = vmatpush1.bf16.msra.mxu0 %v5514
      %6353 = vmatprep.subr.bf16.mxu0 %v5522
      %6354 = vmatpush1.bf16.msra.mxu0 %v5521
      %6355 = vmatprep.subr.bf16.mxu0 %v5529
      %6356 = vmatpush1.bf16.msra.mxu0 %v5528
      %6357 = vmatprep.subr.bf16.mxu0 %v5536
      %6358 = vmatpush1.bf16.msra.mxu0 %v5535
      %6359 = vmatprep.mubr.bf16.mxu0 %v4288
      %6360 = vmatmul.mubr.bf16.gmra.mrb[0].mxu0 %v4287
      %v6361 = vpop.f32.mrb[0].mxu0
      %v6362 = vadd.f32 %v6249, %v6361
      %v6363 = vpop.f32.mrb[0].mxu0
      %v6364 = vadd.f32 %v6251, %v6363
      %v6365 = vpop.f32.mrb[0].mxu0
      %v6366 = vadd.f32 %v6253, %v6365
      %v6367 = vpop.f32.mrb[0].mxu0
      %v6368 = vadd.f32 %v6255, %v6367
      %6369 = vmatprep.mubr.bf16.mxu0 %v4292
      %6370 = vmatmul.mubr.bf16.gmra.mrb[0].mxu0 %v4291
      %v6371 = vpop.f32.mrb[0].mxu0
      %v6372 = vadd.f32 %v6259, %v6371
      %v6373 = vpop.f32.mrb[0].mxu0
      %v6374 = vadd.f32 %v6261, %v6373
      %v6375 = vpop.f32.mrb[0].mxu0
      %v6376 = vadd.f32 %v6263, %v6375
      %v6377 = vpop.f32.mrb[0].mxu0
      %v6378 = vadd.f32 %v6265, %v6377
      %6379 = vmatprep.mubr.bf16.mxu0 %v4296
      %6380 = vmatmul.mubr.bf16.gmra.mrb[0].mxu0 %v4295
      %v6381 = vpop.f32.mrb[0].mxu0
      %v6382 = vadd.f32 %v6269, %v6381
      %v6383 = vpop.f32.mrb[0].mxu0
      %v6384 = vadd.f32 %v6271, %v6383
      %v6385 = vpop.f32.mrb[0].mxu0
      %v6386 = vadd.f32 %v6273, %v6385
      %v6387 = vpop.f32.mrb[0].mxu0
      %v6388 = vadd.f32 %v6275, %v6387
      %6389 = vmatprep.mubr.bf16.mxu0 %v4300
      %6390 = vmatmul.mubr.bf16.gmra.mrb[0].mxu0 %v4299
      %v6391 = vpop.f32.mrb[0].mxu0
      %v6392 = vadd.f32 %v6279, %v6391
      %v6393 = vpop.f32.mrb[0].mxu0
      %v6394 = vadd.f32 %v6281, %v6393
      %v6395 = vpop.f32.mrb[0].mxu0
      %v6396 = vadd.f32 %v6283, %v6395
      %v6397 = vpop.f32.mrb[0].mxu0
      %v6398 = vadd.f32 %v6285, %v6397
      %6399 = vmatprep.mubr.bf16.mxu0 %v4304
      %6400 = vmatmul.mubr.bf16.gmra.mrb[0].mxu0 %v4303
      %v6401 = vpop.f32.mrb[0].mxu0
      %v6402 = vadd.f32 %v6289, %v6401
      %v6403 = vpop.f32.mrb[0].mxu0
      %v6404 = vadd.f32 %v6291, %v6403
      %v6405 = vpop.f32.mrb[0].mxu0
      %v6406 = vadd.f32 %v6293, %v6405
      %v6407 = vpop.f32.mrb[0].mxu0
      %v6408 = vadd.f32 %v6295, %v6407
      %6409 = vmatprep.mubr.bf16.mxu0 %v4308
      %6410 = vmatmul.mubr.bf16.gmra.mrb[0].mxu0 %v4307
      %v6411 = vpop.f32.mrb[0].mxu0
      %v6412 = vadd.f32 %v6299, %v6411
      %v6413 = vpop.f32.mrb[0].mxu0
      %v6414 = vadd.f32 %v6301, %v6413
      %v6415 = vpop.f32.mrb[0].mxu0
      %v6416 = vadd.f32 %v6303, %v6415
      %v6417 = vpop.f32.mrb[0].mxu0
      %v6418 = vadd.f32 %v6305, %v6417
      %6419 = vmatprep.mubr.bf16.mxu0 %v4312
      %6420 = vmatmul.mubr.bf16.gmra.mrb[0].mxu0 %v4311
      %v6421 = vpop.f32.mrb[0].mxu0
      %v6422 = vadd.f32 %v6309, %v6421
      %v6423 = vpop.f32.mrb[0].mxu0
      %v6424 = vadd.f32 %v6311, %v6423
      %v6425 = vpop.f32.mrb[0].mxu0
      %v6426 = vadd.f32 %v6313, %v6425
      %v6427 = vpop.f32.mrb[0].mxu0
      %v6428 = vadd.f32 %v6315, %v6427
      %6429 = vmatprep.mubr.bf16.mxu0 %v4316
      %6430 = vmatmul.mubr.bf16.gmra.mrb[0].mxu0 %v4315
      %v6431 = vpop.f32.mrb[0].mxu0
      %v6432 = vadd.f32 %v6319, %v6431
      %v6433 = vpop.f32.mrb[0].mxu0
      %v6434 = vadd.f32 %v6321, %v6433
      %v6435 = vpop.f32.mrb[0].mxu0
      %v6436 = vadd.f32 %v6323, %v6435
      %v6437 = vpop.f32.mrb[0].mxu0
      %v6438 = vadd.f32 %v6325, %v6437
      %6439 = vdwg.mxu0
      %6440 = vmatprep.subr.bf16.mxu0 0
      %6441 = vmatpush1.bf16.msra.mxu0 %v5320
      %6442 = vmatprep.subr.bf16.mxu0 0
      %6443 = vmatpush1.bf16.msra.mxu0 %v5327
      %6444 = vmatprep.subr.bf16.mxu0 0
      %6445 = vmatpush1.bf16.msra.mxu0 %v5334
      %6446 = vmatprep.subr.bf16.mxu0 0
      %6447 = vmatpush1.bf16.msra.mxu0 %v5341
      %6448 = vmatprep.subr.bf16.mxu0 0
      %6449 = vmatpush1.bf16.msra.mxu0 %v5348
      %6450 = vmatprep.subr.bf16.mxu0 0
      %6451 = vmatpush1.bf16.msra.mxu0 %v5355
      %6452 = vmatprep.subr.bf16.mxu0 0
      %6453 = vmatpush1.bf16.msra.mxu0 %v5362
      %6454 = vmatprep.subr.bf16.mxu0 0
      %6455 = vmatpush1.bf16.msra.mxu0 %v5369
      %6456 = vmatprep.subr.bf16.mxu0 0
      %6457 = vmatpush1.bf16.msra.mxu0 %v5376
      %6458 = vmatprep.subr.bf16.mxu0 0
      %6459 = vmatpush1.bf16.msra.mxu0 %v5383
      %6460 = vmatprep.subr.bf16.mxu0 0
      %6461 = vmatpush1.bf16.msra.mxu0 %v5390
      %6462 = vmatprep.subr.bf16.mxu0 0
      %6463 = vmatpush1.bf16.msra.mxu0 %v5397
      %6464 = vmatprep.subr.bf16.mxu0 0
      %6465 = vmatpush1.bf16.msra.mxu0 %v5404
      %6466 = vmatprep.subr.bf16.mxu0 0
      %6467 = vmatpush1.bf16.msra.mxu0 %v5411
      %6468 = vmatprep.subr.bf16.mxu0 0
      %6469 = vmatpush1.bf16.msra.mxu0 %v5418
      %6470 = vmatprep.subr.bf16.mxu0 0
      %6471 = vmatpush1.bf16.msra.mxu0 %v5425
      %6472 = vmatprep.mubr.bf16.mxu0 %v4286
      %6473 = vmatmul.mubr.bf16.gmra.mrb[0].mxu0 %v4285
      %v6474 = vpop.f32.mrb[0].mxu0
      %v6475 = vadd.f32 %v4602, %v6474
      %v6476 = vpop.f32.mrb[0].mxu0
      %v6477 = vpop.f32.mrb[0].mxu0
      %v6478 = vadd.f32 %v4602, %v6477
      %v6479 = vpop.f32.mrb[0].mxu0
      %6480 = vmatprep.mubr.bf16.mxu0 %v4290
      %6481 = vmatmul.mubr.bf16.gmra.mrb[0].mxu0 %v4289
      %v6482 = vpop.f32.mrb[0].mxu0
      %v6483 = vadd.f32 %v4602, %v6482
      %v6484 = vpop.f32.mrb[0].mxu0
      %v6485 = vpop.f32.mrb[0].mxu0
      %v6486 = vadd.f32 %v4602, %v6485
      %v6487 = vpop.f32.mrb[0].mxu0
      %6488 = vmatprep.mubr.bf16.mxu0 %v4294
      %6489 = vmatmul.mubr.bf16.gmra.mrb[0].mxu0 %v4293
      %v6490 = vpop.f32.mrb[0].mxu0
      %v6491 = vadd.f32 %v4602, %v6490
      %v6492 = vpop.f32.mrb[0].mxu0
      %v6493 = vpop.f32.mrb[0].mxu0
      %v6494 = vadd.f32 %v4602, %v6493
      %v6495 = vpop.f32.mrb[0].mxu0
      %6496 = vmatprep.mubr.bf16.mxu0 %v4298
      %6497 = vmatmul.mubr.bf16.gmra.mrb[0].mxu0 %v4297
      %v6498 = vpop.f32.mrb[0].mxu0
      %v6499 = vadd.f32 %v4602, %v6498
      %v6500 = vpop.f32.mrb[0].mxu0
      %v6501 = vpop.f32.mrb[0].mxu0
      %v6502 = vadd.f32 %v4602, %v6501
      %v6503 = vpop.f32.mrb[0].mxu0
      %6504 = vmatprep.mubr.bf16.mxu0 %v4302
      %6505 = vmatmul.mubr.bf16.gmra.mrb[0].mxu0 %v4301
      %v6506 = vpop.f32.mrb[0].mxu0
      %v6507 = vadd.f32 %v4602, %v6506
      %v6508 = vpop.f32.mrb[0].mxu0
      %v6509 = vpop.f32.mrb[0].mxu0
      %v6510 = vadd.f32 %v4602, %v6509
      %v6511 = vpop.f32.mrb[0].mxu0
      %6512 = vmatprep.mubr.bf16.mxu0 %v4306
      %6513 = vmatmul.mubr.bf16.gmra.mrb[0].mxu0 %v4305
      %v6514 = vpop.f32.mrb[0].mxu0
      %v6515 = vadd.f32 %v4602, %v6514
      %v6516 = vpop.f32.mrb[0].mxu0
      %v6517 = vpop.f32.mrb[0].mxu0
      %v6518 = vadd.f32 %v4602, %v6517
      %v6519 = vpop.f32.mrb[0].mxu0
      %6520 = vmatprep.mubr.bf16.mxu0 %v4310
      %6521 = vmatmul.mubr.bf16.gmra.mrb[0].mxu0 %v4309
      %v6522 = vpop.f32.mrb[0].mxu0
      %v6523 = vadd.f32 %v4602, %v6522
      %v6524 = vpop.f32.mrb[0].mxu0
      %v6525 = vpop.f32.mrb[0].mxu0
      %v6526 = vadd.f32 %v4602, %v6525
      %v6527 = vpop.f32.mrb[0].mxu0
      %6528 = vmatprep.mubr.bf16.mxu0 %v4314
      %6529 = vmatmul.mubr.bf16.gmra.mrb[0].mxu0 %v4313
      %v6530 = vpop.f32.mrb[0].mxu0
      %v6531 = vadd.f32 %v4602, %v6530
      %v6532 = vpop.f32.mrb[0].mxu0
      %v6533 = vpop.f32.mrb[0].mxu0
      %v6534 = vadd.f32 %v4602, %v6533
      %v6535 = vpop.f32.mrb[0].mxu0
      %6536 = vdwg.mxu0
      %6537 = vmatprep.subr.bf16.mxu0 0
      %6538 = vmatpush1.bf16.msra.mxu0 %v5432
      %6539 = vmatprep.subr.bf16.mxu0 0
      %6540 = vmatpush1.bf16.msra.mxu0 %v5439
      %6541 = vmatprep.subr.bf16.mxu0 0
      %6542 = vmatpush1.bf16.msra.mxu0 %v5446
      %6543 = vmatprep.subr.bf16.mxu0 0
      %6544 = vmatpush1.bf16.msra.mxu0 %v5453
      %6545 = vmatprep.subr.bf16.mxu0 0
      %6546 = vmatpush1.bf16.msra.mxu0 %v5460
      %6547 = vmatprep.subr.bf16.mxu0 0
      %6548 = vmatpush1.bf16.msra.mxu0 %v5467
      %6549 = vmatprep.subr.bf16.mxu0 0
      %6550 = vmatpush1.bf16.msra.mxu0 %v5474
      %6551 = vmatprep.subr.bf16.mxu0 0
      %6552 = vmatpush1.bf16.msra.mxu0 %v5481
      %6553 = vmatprep.subr.bf16.mxu0 0
      %6554 = vmatpush1.bf16.msra.mxu0 %v5488
      %6555 = vmatprep.subr.bf16.mxu0 0
      %6556 = vmatpush1.bf16.msra.mxu0 %v5495
      %6557 = vmatprep.subr.bf16.mxu0 0
      %6558 = vmatpush1.bf16.msra.mxu0 %v5502
      %6559 = vmatprep.subr.bf16.mxu0 0
      %6560 = vmatpush1.bf16.msra.mxu0 %v5509
      %6561 = vmatprep.subr.bf16.mxu0 0
      %6562 = vmatpush1.bf16.msra.mxu0 %v5516
      %6563 = vmatprep.subr.bf16.mxu0 0
      %6564 = vmatpush1.bf16.msra.mxu0 %v5523
      %6565 = vmatprep.subr.bf16.mxu0 0
      %6566 = vmatpush1.bf16.msra.mxu0 %v5530
      %6567 = vmatprep.subr.bf16.mxu0 0
      %6568 = vmatpush1.bf16.msra.mxu0 %v5537
      %6569 = vmatprep.mubr.bf16.mxu0 %v4288
      %6570 = vmatmul.mubr.bf16.gmra.mrb[0].mxu0 %v4287
      %v6571 = vpop.f32.mrb[0].mxu0
      %v6572 = vadd.f32 %v6475, %v6571
      %v6573 = vpop.f32.mrb[0].mxu0
      %v6574 = vpop.f32.mrb[0].mxu0
      %v6575 = vadd.f32 %v6478, %v6574
      %v6576 = vpop.f32.mrb[0].mxu0
      %6577 = vmatprep.mubr.bf16.mxu0 %v4292
      %6578 = vmatmul.mubr.bf16.gmra.mrb[0].mxu0 %v4291
      %v6579 = vpop.f32.mrb[0].mxu0
      %v6580 = vadd.f32 %v6483, %v6579
      %v6581 = vpop.f32.mrb[0].mxu0
      %v6582 = vpop.f32.mrb[0].mxu0
      %v6583 = vadd.f32 %v6486, %v6582
      %v6584 = vpop.f32.mrb[0].mxu0
      %6585 = vmatprep.mubr.bf16.mxu0 %v4296
      %6586 = vmatmul.mubr.bf16.gmra.mrb[0].mxu0 %v4295
      %v6587 = vpop.f32.mrb[0].mxu0
      %v6588 = vadd.f32 %v6491, %v6587
      %v6589 = vpop.f32.mrb[0].mxu0
      %v6590 = vpop.f32.mrb[0].mxu0
      %v6591 = vadd.f32 %v6494, %v6590
      %v6592 = vpop.f32.mrb[0].mxu0
      %6593 = vmatprep.mubr.bf16.mxu0 %v4300
      %6594 = vmatmul.mubr.bf16.gmra.mrb[0].mxu0 %v4299
      %v6595 = vpop.f32.mrb[0].mxu0
      %v6596 = vadd.f32 %v6499, %v6595
      %v6597 = vpop.f32.mrb[0].mxu0
      %v6598 = vpop.f32.mrb[0].mxu0
      %v6599 = vadd.f32 %v6502, %v6598
      %v6600 = vpop.f32.mrb[0].mxu0
      %6601 = vmatprep.mubr.bf16.mxu0 %v4304
      %6602 = vmatmul.mubr.bf16.gmra.mrb[0].mxu0 %v4303
      %v6603 = vpop.f32.mrb[0].mxu0
      %v6604 = vadd.f32 %v6507, %v6603
      %v6605 = vpop.f32.mrb[0].mxu0
      %v6606 = vpop.f32.mrb[0].mxu0
      %v6607 = vadd.f32 %v6510, %v6606
      %v6608 = vpop.f32.mrb[0].mxu0
      %6609 = vmatprep.mubr.bf16.mxu0 %v4308
      %6610 = vmatmul.mubr.bf16.gmra.mrb[0].mxu0 %v4307
      %v6611 = vpop.f32.mrb[0].mxu0
      %v6612 = vadd.f32 %v6515, %v6611
      %v6613 = vpop.f32.mrb[0].mxu0
      %v6614 = vpop.f32.mrb[0].mxu0
      %v6615 = vadd.f32 %v6518, %v6614
      %v6616 = vpop.f32.mrb[0].mxu0
      %6617 = vmatprep.mubr.bf16.mxu0 %v4312
      %6618 = vmatmul.mubr.bf16.gmra.mrb[0].mxu0 %v4311
      %v6619 = vpop.f32.mrb[0].mxu0
      %v6620 = vadd.f32 %v6523, %v6619
      %v6621 = vpop.f32.mrb[0].mxu0
      %v6622 = vpop.f32.mrb[0].mxu0
      %v6623 = vadd.f32 %v6526, %v6622
      %v6624 = vpop.f32.mrb[0].mxu0
      %6625 = vmatprep.mubr.bf16.mxu0 %v4316
      %6626 = vmatmul.mubr.bf16.gmra.mrb[0].mxu0 %v4315
      %v6627 = vpop.f32.mrb[0].mxu0
      %v6628 = vadd.f32 %v6531, %v6627
      %v6629 = vpop.f32.mrb[0].mxu0
      %v6630 = vpop.f32.mrb[0].mxu0
      %v6631 = vadd.f32 %v6534, %v6630
      %v6632 = vpop.f32.mrb[0].mxu0
      %6633 = vdwg.mxu0
      %v6634 = vxor.u32 %v5910, 2147483648
      %v6635 = vxor.u32 %v5912, 2147483648
      %v6636 = vxor.u32 %v6136, 2147483648
      %v6637 = vxor.u32 %v6138, 2147483648
      %v6638 = vxor.u32 %v6362, 2147483648
      %v6639 = vxor.u32 %v6364, 2147483648
      %v6640 = vxor.u32 %v6572, 2147483648
      %v6641 = vxor.u32 %v5914, 2147483648
      %v6642 = vxor.u32 %v5916, 2147483648
      %v6643 = vxor.u32 %v6140, 2147483648
      %v6644 = vxor.u32 %v6142, 2147483648
      %v6645 = vxor.u32 %v6366, 2147483648
      %v6646 = vxor.u32 %v6368, 2147483648
      %v6647 = vxor.u32 %v6575, 2147483648
      %v6648 = vxor.u32 %v5920, 2147483648
      %v6649 = vxor.u32 %v5922, 2147483648
      %v6650 = vxor.u32 %v6146, 2147483648
      %v6651 = vxor.u32 %v6148, 2147483648
      %v6652 = vxor.u32 %v6372, 2147483648
      %v6653 = vxor.u32 %v6374, 2147483648
      %v6654 = vxor.u32 %v6580, 2147483648
      %v6655 = vxor.u32 %v5924, 2147483648
      %v6656 = vxor.u32 %v5926, 2147483648
      %v6657 = vxor.u32 %v6150, 2147483648
      %v6658 = vxor.u32 %v6152, 2147483648
      %v6659 = vxor.u32 %v6376, 2147483648
      %v6660 = vxor.u32 %v6378, 2147483648
      %v6661 = vxor.u32 %v6583, 2147483648
      %v6662 = vxor.u32 %v5930, 2147483648
      %v6663 = vxor.u32 %v5932, 2147483648
      %v6664 = vxor.u32 %v6156, 2147483648
      %v6665 = vxor.u32 %v6158, 2147483648
      %v6666 = vxor.u32 %v6382, 2147483648
      %v6667 = vxor.u32 %v6384, 2147483648
      %v6668 = vxor.u32 %v6588, 2147483648
      %v6669 = vxor.u32 %v5934, 2147483648
      %v6670 = vxor.u32 %v5936, 2147483648
      %v6671 = vxor.u32 %v6160, 2147483648
      %v6672 = vxor.u32 %v6162, 2147483648
      %v6673 = vxor.u32 %v6386, 2147483648
      %v6674 = vxor.u32 %v6388, 2147483648
      %v6675 = vxor.u32 %v6591, 2147483648
      %v6676 = vxor.u32 %v5940, 2147483648
      %v6677 = vxor.u32 %v5942, 2147483648
      %v6678 = vxor.u32 %v6166, 2147483648
      %v6679 = vxor.u32 %v6168, 2147483648
      %v6680 = vxor.u32 %v6392, 2147483648
      %v6681 = vxor.u32 %v6394, 2147483648
      %v6682 = vxor.u32 %v6596, 2147483648
      %v6683 = vxor.u32 %v5944, 2147483648
      %v6684 = vxor.u32 %v5946, 2147483648
      %v6685 = vxor.u32 %v6170, 2147483648
      %v6686 = vxor.u32 %v6172, 2147483648
      %v6687 = vxor.u32 %v6396, 2147483648
      %v6688 = vxor.u32 %v6398, 2147483648
      %v6689 = vxor.u32 %v6599, 2147483648
      %v6690 = vxor.u32 %v5950, 2147483648
      %v6691 = vxor.u32 %v5952, 2147483648
      %v6692 = vxor.u32 %v6176, 2147483648
      %v6693 = vxor.u32 %v6178, 2147483648
      %v6694 = vxor.u32 %v6402, 2147483648
      %v6695 = vxor.u32 %v6404, 2147483648
      %v6696 = vxor.u32 %v6604, 2147483648
      %v6697 = vxor.u32 %v5954, 2147483648
      %v6698 = vxor.u32 %v5956, 2147483648
      %v6699 = vxor.u32 %v6180, 2147483648
      %v6700 = vxor.u32 %v6182, 2147483648
      %v6701 = vxor.u32 %v6406, 2147483648
      %v6702 = vxor.u32 %v6408, 2147483648
      %v6703 = vxor.u32 %v6607, 2147483648
      %v6704 = vxor.u32 %v5960, 2147483648
      %v6705 = vxor.u32 %v5962, 2147483648
      %v6706 = vxor.u32 %v6186, 2147483648
      %v6707 = vxor.u32 %v6188, 2147483648
      %v6708 = vxor.u32 %v6412, 2147483648
      %v6709 = vxor.u32 %v6414, 2147483648
      %v6710 = vxor.u32 %v6612, 2147483648
      %v6711 = vxor.u32 %v5964, 2147483648
      %v6712 = vxor.u32 %v5966, 2147483648
      %v6713 = vxor.u32 %v6190, 2147483648
      %v6714 = vxor.u32 %v6192, 2147483648
      %v6715 = vxor.u32 %v6416, 2147483648
      %v6716 = vxor.u32 %v6418, 2147483648
      %v6717 = vxor.u32 %v6615, 2147483648
      %v6718 = vxor.u32 %v5970, 2147483648
      %v6719 = vxor.u32 %v5972, 2147483648
      %v6720 = vxor.u32 %v6196, 2147483648
      %v6721 = vxor.u32 %v6198, 2147483648
      %v6722 = vxor.u32 %v6422, 2147483648
      %v6723 = vxor.u32 %v6424, 2147483648
      %v6724 = vxor.u32 %v6620, 2147483648
      %v6725 = vxor.u32 %v5974, 2147483648
      %v6726 = vxor.u32 %v5976, 2147483648
      %v6727 = vxor.u32 %v6200, 2147483648
      %v6728 = vxor.u32 %v6202, 2147483648
      %v6729 = vxor.u32 %v6426, 2147483648
      %v6730 = vxor.u32 %v6428, 2147483648
      %v6731 = vxor.u32 %v6623, 2147483648
      %v6732 = vxor.u32 %v5980, 2147483648
      %v6733 = vxor.u32 %v5982, 2147483648
      %v6734 = vxor.u32 %v6206, 2147483648
      %v6735 = vxor.u32 %v6208, 2147483648
      %v6736 = vxor.u32 %v6432, 2147483648
      %v6737 = vxor.u32 %v6434, 2147483648
      %v6738 = vxor.u32 %v6628, 2147483648
      %v6739 = vxor.u32 %v5984, 2147483648
      %v6740 = vxor.u32 %v5986, 2147483648
      %v6741 = vxor.u32 %v6210, 2147483648
      %v6742 = vxor.u32 %v6212, 2147483648
      %v6743 = vxor.u32 %v6436, 2147483648
      %v6744 = vxor.u32 %v6438, 2147483648
      %v6745 = vxor.u32 %v6631, 2147483648
      %v6746 = vmul.f32 %v6634, 1.442695
      %v6747 = vpow.pop %v6746
      %v6748 = vmul.f32 %v6635, 1.442695
      %v6749 = vpow.pop %v6748
      %v6750 = vmul.f32 %v6636, 1.442695
      %v6751 = vpow.pop %v6750
      %v6752 = vmul.f32 %v6637, 1.442695
      %v6753 = vpow.pop %v6752
      %v6754 = vmul.f32 %v6638, 1.442695
      %v6755 = vpow.pop %v6754
      %v6756 = vmul.f32 %v6639, 1.442695
      %v6757 = vpow.pop %v6756
      %v6758 = vmul.f32 %v6640, 1.442695
      %v6759 = vpow.pop %v6758
      %v6760 = vmul.f32 %v6641, 1.442695
      %v6761 = vpow.pop %v6760
      %v6762 = vmul.f32 %v6642, 1.442695
      %v6763 = vpow.pop %v6762
      %v6764 = vmul.f32 %v6643, 1.442695
      %v6765 = vpow.pop %v6764
      %v6766 = vmul.f32 %v6644, 1.442695
      %v6767 = vpow.pop %v6766
      %v6768 = vmul.f32 %v6645, 1.442695
      %v6769 = vpow.pop %v6768
      %v6770 = vmul.f32 %v6646, 1.442695
      %v6771 = vpow.pop %v6770
      %v6772 = vmul.f32 %v6647, 1.442695
      %v6773 = vpow.pop %v6772
      %v6774 = vmul.f32 %v6648, 1.442695
      %v6775 = vpow.pop %v6774
      %v6776 = vmul.f32 %v6649, 1.442695
      %v6777 = vpow.pop %v6776
      %v6778 = vmul.f32 %v6650, 1.442695
      %v6779 = vpow.pop %v6778
      %v6780 = vmul.f32 %v6651, 1.442695
      %v6781 = vpow.pop %v6780
      %v6782 = vmul.f32 %v6652, 1.442695
      %v6783 = vpow.pop %v6782
      %v6784 = vmul.f32 %v6653, 1.442695
      %v6785 = vpow.pop %v6784
      %v6786 = vmul.f32 %v6654, 1.442695
      %v6787 = vpow.pop %v6786
      %v6788 = vmul.f32 %v6655, 1.442695
      %v6789 = vpow.pop %v6788
      %v6790 = vmul.f32 %v6656, 1.442695
      %v6791 = vpow.pop %v6790
      %v6792 = vmul.f32 %v6657, 1.442695
      %v6793 = vpow.pop %v6792
      %v6794 = vmul.f32 %v6658, 1.442695
      %v6795 = vpow.pop %v6794
      %v6796 = vmul.f32 %v6659, 1.442695
      %v6797 = vpow.pop %v6796
      %v6798 = vmul.f32 %v6660, 1.442695
      %v6799 = vpow.pop %v6798
      %v6800 = vmul.f32 %v6661, 1.442695
      %v6801 = vpow.pop %v6800
      %v6802 = vmul.f32 %v6662, 1.442695
      %v6803 = vpow.pop %v6802
      %v6804 = vmul.f32 %v6663, 1.442695
      %v6805 = vpow.pop %v6804
      %v6806 = vmul.f32 %v6664, 1.442695
      %v6807 = vpow.pop %v6806
      %v6808 = vmul.f32 %v6665, 1.442695
      %v6809 = vpow.pop %v6808
      %v6810 = vmul.f32 %v6666, 1.442695
      %v6811 = vpow.pop %v6810
      %v6812 = vmul.f32 %v6667, 1.442695
      %v6813 = vpow.pop %v6812
      %v6814 = vmul.f32 %v6668, 1.442695
      %v6815 = vpow.pop %v6814
      %v6816 = vmul.f32 %v6669, 1.442695
      %v6817 = vpow.pop %v6816
      %v6818 = vmul.f32 %v6670, 1.442695
      %v6819 = vpow.pop %v6818
      %v6820 = vmul.f32 %v6671, 1.442695
      %v6821 = vpow.pop %v6820
      %v6822 = vmul.f32 %v6672, 1.442695
      %v6823 = vpow.pop %v6822
      %v6824 = vmul.f32 %v6673, 1.442695
      %v6825 = vpow.pop %v6824
      %v6826 = vmul.f32 %v6674, 1.442695
      %v6827 = vpow.pop %v6826
      %v6828 = vmul.f32 %v6675, 1.442695
      %v6829 = vpow.pop %v6828
      %v6830 = vmul.f32 %v6676, 1.442695
      %v6831 = vpow.pop %v6830
      %v6832 = vmul.f32 %v6677, 1.442695
      %v6833 = vpow.pop %v6832
      %v6834 = vmul.f32 %v6678, 1.442695
      %v6835 = vpow.pop %v6834
      %v6836 = vmul.f32 %v6679, 1.442695
      %v6837 = vpow.pop %v6836
      %v6838 = vmul.f32 %v6680, 1.442695
      %v6839 = vpow.pop %v6838
      %v6840 = vmul.f32 %v6681, 1.442695
      %v6841 = vpow.pop %v6840
      %v6842 = vmul.f32 %v6682, 1.442695
      %v6843 = vpow.pop %v6842
      %v6844 = vmul.f32 %v6683, 1.442695
      %v6845 = vpow.pop %v6844
      %v6846 = vmul.f32 %v6684, 1.442695
      %v6847 = vpow.pop %v6846
      %v6848 = vmul.f32 %v6685, 1.442695
      %v6849 = vpow.pop %v6848
      %v6850 = vmul.f32 %v6686, 1.442695
      %v6851 = vpow.pop %v6850
      %v6852 = vmul.f32 %v6687, 1.442695
      %v6853 = vpow.pop %v6852
      %v6854 = vmul.f32 %v6688, 1.442695
      %v6855 = vpow.pop %v6854
      %v6856 = vmul.f32 %v6689, 1.442695
      %v6857 = vpow.pop %v6856
      %v6858 = vmul.f32 %v6690, 1.442695
      %v6859 = vpow.pop %v6858
      %v6860 = vmul.f32 %v6691, 1.442695
      %v6861 = vpow.pop %v6860
      %v6862 = vmul.f32 %v6692, 1.442695
      %v6863 = vpow.pop %v6862
      %v6864 = vmul.f32 %v6693, 1.442695
      %v6865 = vpow.pop %v6864
      %v6866 = vmul.f32 %v6694, 1.442695
      %v6867 = vpow.pop %v6866
      %v6868 = vmul.f32 %v6695, 1.442695
      %v6869 = vpow.pop %v6868
      %v6870 = vmul.f32 %v6696, 1.442695
      %v6871 = vpow.pop %v6870
      %v6872 = vmul.f32 %v6697, 1.442695
      %v6873 = vpow.pop %v6872
      %v6874 = vmul.f32 %v6698, 1.442695
      %v6875 = vpow.pop %v6874
      %v6876 = vmul.f32 %v6699, 1.442695
      %v6877 = vpow.pop %v6876
      %v6878 = vmul.f32 %v6700, 1.442695
      %v6879 = vpow.pop %v6878
      %v6880 = vmul.f32 %v6701, 1.442695
      %v6881 = vpow.pop %v6880
      %v6882 = vmul.f32 %v6702, 1.442695
      %v6883 = vpow.pop %v6882
      %v6884 = vmul.f32 %v6703, 1.442695
      %v6885 = vpow.pop %v6884
      %v6886 = vmul.f32 %v6704, 1.442695
      %v6887 = vpow.pop %v6886
      %v6888 = vmul.f32 %v6705, 1.442695
      %v6889 = vpow.pop %v6888
      %v6890 = vmul.f32 %v6706, 1.442695
      %v6891 = vpow.pop %v6890
      %v6892 = vmul.f32 %v6707, 1.442695
      %v6893 = vpow.pop %v6892
      %v6894 = vmul.f32 %v6708, 1.442695
      %v6895 = vpow.pop %v6894
      %v6896 = vmul.f32 %v6709, 1.442695
      %v6897 = vpow.pop %v6896
      %v6898 = vmul.f32 %v6710, 1.442695
      %v6899 = vpow.pop %v6898
      %v6900 = vmul.f32 %v6711, 1.442695
      %v6901 = vpow.pop %v6900
      %v6902 = vmul.f32 %v6712, 1.442695
      %v6903 = vpow.pop %v6902
      %v6904 = vmul.f32 %v6713, 1.442695
      %v6905 = vpow.pop %v6904
      %v6906 = vmul.f32 %v6714, 1.442695
      %v6907 = vpow.pop %v6906
      %v6908 = vmul.f32 %v6715, 1.442695
      %v6909 = vpow.pop %v6908
      %v6910 = vmul.f32 %v6716, 1.442695
      %v6911 = vpow.pop %v6910
      %v6912 = vmul.f32 %v6717, 1.442695
      %v6913 = vpow.pop %v6912
      %v6914 = vmul.f32 %v6718, 1.442695
      %v6915 = vpow.pop %v6914
      %v6916 = vmul.f32 %v6719, 1.442695
      %v6917 = vpow.pop %v6916
      %v6918 = vmul.f32 %v6720, 1.442695
      %v6919 = vpow.pop %v6918
      %v6920 = vmul.f32 %v6721, 1.442695
      %v6921 = vpow.pop %v6920
      %v6922 = vmul.f32 %v6722, 1.442695
      %v6923 = vpow.pop %v6922
      %v6924 = vmul.f32 %v6723, 1.442695
      %v6925 = vpow.pop %v6924
      %v6926 = vmul.f32 %v6724, 1.442695
      %v6927 = vpow.pop %v6926
      %v6928 = vmul.f32 %v6725, 1.442695
      %v6929 = vpow.pop %v6928
      %v6930 = vmul.f32 %v6726, 1.442695
      %v6931 = vpow.pop %v6930
      %v6932 = vmul.f32 %v6727, 1.442695
      %v6933 = vpow.pop %v6932
      %v6934 = vmul.f32 %v6728, 1.442695
      %v6935 = vpow.pop %v6934
      %v6936 = vmul.f32 %v6729, 1.442695
      %v6937 = vpow.pop %v6936
      %v6938 = vmul.f32 %v6730, 1.442695
      %v6939 = vpow.pop %v6938
      %v6940 = vmul.f32 %v6731, 1.442695
      %v6941 = vpow.pop %v6940
      %v6942 = vmul.f32 %v6732, 1.442695
      %v6943 = vpow.pop %v6942
      %v6944 = vmul.f32 %v6733, 1.442695
      %v6945 = vpow.pop %v6944
      %v6946 = vmul.f32 %v6734, 1.442695
      %v6947 = vpow.pop %v6946
      %v6948 = vmul.f32 %v6735, 1.442695
      %v6949 = vpow.pop %v6948
      %v6950 = vmul.f32 %v6736, 1.442695
      %v6951 = vpow.pop %v6950
      %v6952 = vmul.f32 %v6737, 1.442695
      %v6953 = vpow.pop %v6952
      %v6954 = vmul.f32 %v6738, 1.442695
      %v6955 = vpow.pop %v6954
      %v6956 = vmul.f32 %v6739, 1.442695
      %v6957 = vpow.pop %v6956
      %v6958 = vmul.f32 %v6740, 1.442695
      %v6959 = vpow.pop %v6958
      %v6960 = vmul.f32 %v6741, 1.442695
      %v6961 = vpow.pop %v6960
      %v6962 = vmul.f32 %v6742, 1.442695
      %v6963 = vpow.pop %v6962
      %v6964 = vmul.f32 %v6743, 1.442695
      %v6965 = vpow.pop %v6964
      %v6966 = vmul.f32 %v6744, 1.442695
      %v6967 = vpow.pop %v6966
      %v6968 = vmul.f32 %v6745, 1.442695
      %v6969 = vpow.pop %v6968
      %v6970 = vadd.f32 %v6747, 1.0
      %v6971 = vadd.f32 %v6749, 1.0
      %v6972 = vadd.f32 %v6751, 1.0
      %v6973 = vadd.f32 %v6753, 1.0
      %v6974 = vadd.f32 %v6755, 1.0
      %v6975 = vadd.f32 %v6757, 1.0
      %v6976 = vadd.f32 %v6759, 1.0
      %v6977 = vadd.f32 %v6761, 1.0
      %v6978 = vadd.f32 %v6763, 1.0
      %v6979 = vadd.f32 %v6765, 1.0
      %v6980 = vadd.f32 %v6767, 1.0
      %v6981 = vadd.f32 %v6769, 1.0
      %v6982 = vadd.f32 %v6771, 1.0
      %v6983 = vadd.f32 %v6773, 1.0
      %v6984 = vadd.f32 %v6775, 1.0
      %v6985 = vadd.f32 %v6777, 1.0
      %v6986 = vadd.f32 %v6779, 1.0
      %v6987 = vadd.f32 %v6781, 1.0
      %v6988 = vadd.f32 %v6783, 1.0
      %v6989 = vadd.f32 %v6785, 1.0
      %v6990 = vadd.f32 %v6787, 1.0
      %v6991 = vadd.f32 %v6789, 1.0
      %v6992 = vadd.f32 %v6791, 1.0
      %v6993 = vadd.f32 %v6793, 1.0
      %v6994 = vadd.f32 %v6795, 1.0
      %v6995 = vadd.f32 %v6797, 1.0
      %v6996 = vadd.f32 %v6799, 1.0
      %v6997 = vadd.f32 %v6801, 1.0
      %v6998 = vadd.f32 %v6803, 1.0
      %v6999 = vadd.f32 %v6805, 1.0
      %v7000 = vadd.f32 %v6807, 1.0
      %v7001 = vadd.f32 %v6809, 1.0
      %v7002 = vadd.f32 %v6811, 1.0
      %v7003 = vadd.f32 %v6813, 1.0
      %v7004 = vadd.f32 %v6815, 1.0
      %v7005 = vadd.f32 %v6817, 1.0
      %v7006 = vadd.f32 %v6819, 1.0
      %v7007 = vadd.f32 %v6821, 1.0
      %v7008 = vadd.f32 %v6823, 1.0
      %v7009 = vadd.f32 %v6825, 1.0
      %v7010 = vadd.f32 %v6827, 1.0
      %v7011 = vadd.f32 %v6829, 1.0
      %v7012 = vadd.f32 %v6831, 1.0
      %v7013 = vadd.f32 %v6833, 1.0
      %v7014 = vadd.f32 %v6835, 1.0
      %v7015 = vadd.f32 %v6837, 1.0
      %v7016 = vadd.f32 %v6839, 1.0
      %v7017 = vadd.f32 %v6841, 1.0
      %v7018 = vadd.f32 %v6843, 1.0
      %v7019 = vadd.f32 %v6845, 1.0
      %v7020 = vadd.f32 %v6847, 1.0
      %v7021 = vadd.f32 %v6849, 1.0
      %v7022 = vadd.f32 %v6851, 1.0
      %v7023 = vadd.f32 %v6853, 1.0
      %v7024 = vadd.f32 %v6855, 1.0
      %v7025 = vadd.f32 %v6857, 1.0
      %v7026 = vadd.f32 %v6859, 1.0
      %v7027 = vadd.f32 %v6861, 1.0
      %v7028 = vadd.f32 %v6863, 1.0
      %v7029 = vadd.f32 %v6865, 1.0
      %v7030 = vadd.f32 %v6867, 1.0
      %v7031 = vadd.f32 %v6869, 1.0
      %v7032 = vadd.f32 %v6871, 1.0
      %v7033 = vadd.f32 %v6873, 1.0
      %v7034 = vadd.f32 %v6875, 1.0
      %v7035 = vadd.f32 %v6877, 1.0
      %v7036 = vadd.f32 %v6879, 1.0
      %v7037 = vadd.f32 %v6881, 1.0
      %v7038 = vadd.f32 %v6883, 1.0
      %v7039 = vadd.f32 %v6885, 1.0
      %v7040 = vadd.f32 %v6887, 1.0
      %v7041 = vadd.f32 %v6889, 1.0
      %v7042 = vadd.f32 %v6891, 1.0
      %v7043 = vadd.f32 %v6893, 1.0
      %v7044 = vadd.f32 %v6895, 1.0
      %v7045 = vadd.f32 %v6897, 1.0
      %v7046 = vadd.f32 %v6899, 1.0
      %v7047 = vadd.f32 %v6901, 1.0
      %v7048 = vadd.f32 %v6903, 1.0
      %v7049 = vadd.f32 %v6905, 1.0
      %v7050 = vadd.f32 %v6907, 1.0
      %v7051 = vadd.f32 %v6909, 1.0
      %v7052 = vadd.f32 %v6911, 1.0
      %v7053 = vadd.f32 %v6913, 1.0
      %v7054 = vadd.f32 %v6915, 1.0
      %v7055 = vadd.f32 %v6917, 1.0
      %v7056 = vadd.f32 %v6919, 1.0
      %v7057 = vadd.f32 %v6921, 1.0
      %v7058 = vadd.f32 %v6923, 1.0
      %v7059 = vadd.f32 %v6925, 1.0
      %v7060 = vadd.f32 %v6927, 1.0
      %v7061 = vadd.f32 %v6929, 1.0
      %v7062 = vadd.f32 %v6931, 1.0
      %v7063 = vadd.f32 %v6933, 1.0
      %v7064 = vadd.f32 %v6935, 1.0
      %v7065 = vadd.f32 %v6937, 1.0
      %v7066 = vadd.f32 %v6939, 1.0
      %v7067 = vadd.f32 %v6941, 1.0
      %v7068 = vadd.f32 %v6943, 1.0
      %v7069 = vadd.f32 %v6945, 1.0
      %v7070 = vadd.f32 %v6947, 1.0
      %v7071 = vadd.f32 %v6949, 1.0
      %v7072 = vadd.f32 %v6951, 1.0
      %v7073 = vadd.f32 %v6953, 1.0
      %v7074 = vadd.f32 %v6955, 1.0
      %v7075 = vadd.f32 %v6957, 1.0
      %v7076 = vadd.f32 %v6959, 1.0
      %v7077 = vadd.f32 %v6961, 1.0
      %v7078 = vadd.f32 %v6963, 1.0
      %v7079 = vadd.f32 %v6965, 1.0
      %v7080 = vadd.f32 %v6967, 1.0
      %v7081 = vadd.f32 %v6969, 1.0
      %v7082 = vrcp.pop %v6970
      %v7083 = vmul.f32 1.0, %v7082
      %v7084 = vrcp.pop %v6971
      %v7085 = vmul.f32 1.0, %v7084
      %v7086 = vrcp.pop %v6972
      %v7087 = vmul.f32 1.0, %v7086
      %v7088 = vrcp.pop %v6973
      %v7089 = vmul.f32 1.0, %v7088
      %v7090 = vrcp.pop %v6974
      %v7091 = vmul.f32 1.0, %v7090
      %v7092 = vrcp.pop %v6975
      %v7093 = vmul.f32 1.0, %v7092
      %v7094 = vrcp.pop %v6976
      %v7095 = vmul.f32 1.0, %v7094
      %v7096 = vrcp.pop %v6977
      %v7097 = vmul.f32 1.0, %v7096
      %v7098 = vrcp.pop %v6978
      %v7099 = vmul.f32 1.0, %v7098
      %v7100 = vrcp.pop %v6979
      %v7101 = vmul.f32 1.0, %v7100
      %v7102 = vrcp.pop %v6980
      %v7103 = vmul.f32 1.0, %v7102
      %v7104 = vrcp.pop %v6981
      %v7105 = vmul.f32 1.0, %v7104
      %v7106 = vrcp.pop %v6982
      %v7107 = vmul.f32 1.0, %v7106
      %v7108 = vrcp.pop %v6983
      %v7109 = vmul.f32 1.0, %v7108
      %v7110 = vrcp.pop %v6984
      %v7111 = vmul.f32 1.0, %v7110
      %v7112 = vrcp.pop %v6985
      %v7113 = vmul.f32 1.0, %v7112
      %v7114 = vrcp.pop %v6986
      %v7115 = vmul.f32 1.0, %v7114
      %v7116 = vrcp.pop %v6987
      %v7117 = vmul.f32 1.0, %v7116
      %v7118 = vrcp.pop %v6988
      %v7119 = vmul.f32 1.0, %v7118
      %v7120 = vrcp.pop %v6989
      %v7121 = vmul.f32 1.0, %v7120
      %v7122 = vrcp.pop %v6990
      %v7123 = vmul.f32 1.0, %v7122
      %v7124 = vrcp.pop %v6991
      %v7125 = vmul.f32 1.0, %v7124
      %v7126 = vrcp.pop %v6992
      %v7127 = vmul.f32 1.0, %v7126
      %v7128 = vrcp.pop %v6993
      %v7129 = vmul.f32 1.0, %v7128
      %v7130 = vrcp.pop %v6994
      %v7131 = vmul.f32 1.0, %v7130
      %v7132 = vrcp.pop %v6995
      %v7133 = vmul.f32 1.0, %v7132
      %v7134 = vrcp.pop %v6996
      %v7135 = vmul.f32 1.0, %v7134
      %v7136 = vrcp.pop %v6997
      %v7137 = vmul.f32 1.0, %v7136
      %v7138 = vrcp.pop %v6998
      %v7139 = vmul.f32 1.0, %v7138
      %v7140 = vrcp.pop %v6999
      %v7141 = vmul.f32 1.0, %v7140
      %v7142 = vrcp.pop %v7000
      %v7143 = vmul.f32 1.0, %v7142
      %v7144 = vrcp.pop %v7001
      %v7145 = vmul.f32 1.0, %v7144
      %v7146 = vrcp.pop %v7002
      %v7147 = vmul.f32 1.0, %v7146
      %v7148 = vrcp.pop %v7003
      %v7149 = vmul.f32 1.0, %v7148
      %v7150 = vrcp.pop %v7004
      %v7151 = vmul.f32 1.0, %v7150
      %v7152 = vrcp.pop %v7005
      %v7153 = vmul.f32 1.0, %v7152
      %v7154 = vrcp.pop %v7006
      %v7155 = vmul.f32 1.0, %v7154
      %v7156 = vrcp.pop %v7007
      %v7157 = vmul.f32 1.0, %v7156
      %v7158 = vrcp.pop %v7008
      %v7159 = vmul.f32 1.0, %v7158
      %v7160 = vrcp.pop %v7009
      %v7161 = vmul.f32 1.0, %v7160
      %v7162 = vrcp.pop %v7010
      %v7163 = vmul.f32 1.0, %v7162
      %v7164 = vrcp.pop %v7011
      %v7165 = vmul.f32 1.0, %v7164
      %v7166 = vrcp.pop %v7012
      %v7167 = vmul.f32 1.0, %v7166
      %v7168 = vrcp.pop %v7013
      %v7169 = vmul.f32 1.0, %v7168
      %v7170 = vrcp.pop %v7014
      %v7171 = vmul.f32 1.0, %v7170
      %v7172 = vrcp.pop %v7015
      %v7173 = vmul.f32 1.0, %v7172
      %v7174 = vrcp.pop %v7016
      %v7175 = vmul.f32 1.0, %v7174
      %v7176 = vrcp.pop %v7017
      %v7177 = vmul.f32 1.0, %v7176
      %v7178 = vrcp.pop %v7018
      %v7179 = vmul.f32 1.0, %v7178
      %v7180 = vrcp.pop %v7019
      %v7181 = vmul.f32 1.0, %v7180
      %v7182 = vrcp.pop %v7020
      %v7183 = vmul.f32 1.0, %v7182
      %v7184 = vrcp.pop %v7021
      %v7185 = vmul.f32 1.0, %v7184
      %v7186 = vrcp.pop %v7022
      %v7187 = vmul.f32 1.0, %v7186
      %v7188 = vrcp.pop %v7023
      %v7189 = vmul.f32 1.0, %v7188
      %v7190 = vrcp.pop %v7024
      %v7191 = vmul.f32 1.0, %v7190
      %v7192 = vrcp.pop %v7025
      %v7193 = vmul.f32 1.0, %v7192
      %v7194 = vrcp.pop %v7026
      %v7195 = vmul.f32 1.0, %v7194
      %v7196 = vrcp.pop %v7027
      %v7197 = vmul.f32 1.0, %v7196
      %v7198 = vrcp.pop %v7028
      %v7199 = vmul.f32 1.0, %v7198
      %v7200 = vrcp.pop %v7029
      %v7201 = vmul.f32 1.0, %v7200
      %v7202 = vrcp.pop %v7030
      %v7203 = vmul.f32 1.0, %v7202
      %v7204 = vrcp.pop %v7031
      %v7205 = vmul.f32 1.0, %v7204
      %v7206 = vrcp.pop %v7032
      %v7207 = vmul.f32 1.0, %v7206
      %v7208 = vrcp.pop %v7033
      %v7209 = vmul.f32 1.0, %v7208
      %v7210 = vrcp.pop %v7034
      %v7211 = vmul.f32 1.0, %v7210
      %v7212 = vrcp.pop %v7035
      %v7213 = vmul.f32 1.0, %v7212
      %v7214 = vrcp.pop %v7036
      %v7215 = vmul.f32 1.0, %v7214
      %v7216 = vrcp.pop %v7037
      %v7217 = vmul.f32 1.0, %v7216
      %v7218 = vrcp.pop %v7038
      %v7219 = vmul.f32 1.0, %v7218
      %v7220 = vrcp.pop %v7039
      %v7221 = vmul.f32 1.0, %v7220
      %v7222 = vrcp.pop %v7040
      %v7223 = vmul.f32 1.0, %v7222
      %v7224 = vrcp.pop %v7041
      %v7225 = vmul.f32 1.0, %v7224
      %v7226 = vrcp.pop %v7042
      %v7227 = vmul.f32 1.0, %v7226
      %v7228 = vrcp.pop %v7043
      %v7229 = vmul.f32 1.0, %v7228
      %v7230 = vrcp.pop %v7044
      %v7231 = vmul.f32 1.0, %v7230
      %v7232 = vrcp.pop %v7045
      %v7233 = vmul.f32 1.0, %v7232
      %v7234 = vrcp.pop %v7046
      %v7235 = vmul.f32 1.0, %v7234
      %v7236 = vrcp.pop %v7047
      %v7237 = vmul.f32 1.0, %v7236
      %v7238 = vrcp.pop %v7048
      %v7239 = vmul.f32 1.0, %v7238
      %v7240 = vrcp.pop %v7049
      %v7241 = vmul.f32 1.0, %v7240
      %v7242 = vrcp.pop %v7050
      %v7243 = vmul.f32 1.0, %v7242
      %v7244 = vrcp.pop %v7051
      %v7245 = vmul.f32 1.0, %v7244
      %v7246 = vrcp.pop %v7052
      %v7247 = vmul.f32 1.0, %v7246
      %v7248 = vrcp.pop %v7053
      %v7249 = vmul.f32 1.0, %v7248
      %v7250 = vrcp.pop %v7054
      %v7251 = vmul.f32 1.0, %v7250
      %v7252 = vrcp.pop %v7055
      %v7253 = vmul.f32 1.0, %v7252
      %v7254 = vrcp.pop %v7056
      %v7255 = vmul.f32 1.0, %v7254
      %v7256 = vrcp.pop %v7057
      %v7257 = vmul.f32 1.0, %v7256
      %v7258 = vrcp.pop %v7058
      %v7259 = vmul.f32 1.0, %v7258
      %v7260 = vrcp.pop %v7059
      %v7261 = vmul.f32 1.0, %v7260
      %v7262 = vrcp.pop %v7060
      %v7263 = vmul.f32 1.0, %v7262
      %v7264 = vrcp.pop %v7061
      %v7265 = vmul.f32 1.0, %v7264
      %v7266 = vrcp.pop %v7062
      %v7267 = vmul.f32 1.0, %v7266
      %v7268 = vrcp.pop %v7063
      %v7269 = vmul.f32 1.0, %v7268
      %v7270 = vrcp.pop %v7064
      %v7271 = vmul.f32 1.0, %v7270
      %v7272 = vrcp.pop %v7065
      %v7273 = vmul.f32 1.0, %v7272
      %v7274 = vrcp.pop %v7066
      %v7275 = vmul.f32 1.0, %v7274
      %v7276 = vrcp.pop %v7067
      %v7277 = vmul.f32 1.0, %v7276
      %v7278 = vrcp.pop %v7068
      %v7279 = vmul.f32 1.0, %v7278
      %v7280 = vrcp.pop %v7069
      %v7281 = vmul.f32 1.0, %v7280
      %v7282 = vrcp.pop %v7070
      %v7283 = vmul.f32 1.0, %v7282
      %v7284 = vrcp.pop %v7071
      %v7285 = vmul.f32 1.0, %v7284
      %v7286 = vrcp.pop %v7072
      %v7287 = vmul.f32 1.0, %v7286
      %v7288 = vrcp.pop %v7073
      %v7289 = vmul.f32 1.0, %v7288
      %v7290 = vrcp.pop %v7074
      %v7291 = vmul.f32 1.0, %v7290
      %v7292 = vrcp.pop %v7075
      %v7293 = vmul.f32 1.0, %v7292
      %v7294 = vrcp.pop %v7076
      %v7295 = vmul.f32 1.0, %v7294
      %v7296 = vrcp.pop %v7077
      %v7297 = vmul.f32 1.0, %v7296
      %v7298 = vrcp.pop %v7078
      %v7299 = vmul.f32 1.0, %v7298
      %v7300 = vrcp.pop %v7079
      %v7301 = vmul.f32 1.0, %v7300
      %v7302 = vrcp.pop %v7080
      %v7303 = vmul.f32 1.0, %v7302
      %v7304 = vrcp.pop %v7081
      %v7305 = vmul.f32 1.0, %v7304
      %v7306 = vpack.c.bf16 %v7097, %v7083
      %v7307 = vpack.c.bf16 %v7099, %v7085
      %v7308 = vpack.c.bf16 %v7101, %v7087
      %v7309 = vpack.c.bf16 %v7103, %v7089
      %v7310 = vpack.c.bf16 %v7105, %v7091
      %v7311 = vpack.c.bf16 %v7107, %v7093
      %v7312 = vpack.c.bf16 %v7109, %v7095
      %v7313 = vpack.c.bf16 %v7125, %v7111
      %v7314 = vpack.c.bf16 %v7127, %v7113
      %v7315 = vpack.c.bf16 %v7129, %v7115
      %v7316 = vpack.c.bf16 %v7131, %v7117
      %v7317 = vpack.c.bf16 %v7133, %v7119
      %v7318 = vpack.c.bf16 %v7135, %v7121
      %v7319 = vpack.c.bf16 %v7137, %v7123
      %v7320 = vpack.c.bf16 %v7153, %v7139
      %v7321 = vpack.c.bf16 %v7155, %v7141
      %v7322 = vpack.c.bf16 %v7157, %v7143
      %v7323 = vpack.c.bf16 %v7159, %v7145
      %v7324 = vpack.c.bf16 %v7161, %v7147
      %v7325 = vpack.c.bf16 %v7163, %v7149
      %v7326 = vpack.c.bf16 %v7165, %v7151
      %v7327 = vpack.c.bf16 %v7181, %v7167
      %v7328 = vpack.c.bf16 %v7183, %v7169
      %v7329 = vpack.c.bf16 %v7185, %v7171
      %v7330 = vpack.c.bf16 %v7187, %v7173
      %v7331 = vpack.c.bf16 %v7189, %v7175
      %v7332 = vpack.c.bf16 %v7191, %v7177
      %v7333 = vpack.c.bf16 %v7193, %v7179
      %v7334 = vpack.c.bf16 %v7209, %v7195
      %v7335 = vpack.c.bf16 %v7211, %v7197
      %v7336 = vpack.c.bf16 %v7213, %v7199
      %v7337 = vpack.c.bf16 %v7215, %v7201
      %v7338 = vpack.c.bf16 %v7217, %v7203
      %v7339 = vpack.c.bf16 %v7219, %v7205
      %v7340 = vpack.c.bf16 %v7221, %v7207
      %v7341 = vpack.c.bf16 %v7237, %v7223
      %v7342 = vpack.c.bf16 %v7239, %v7225
      %v7343 = vpack.c.bf16 %v7241, %v7227
      %v7344 = vpack.c.bf16 %v7243, %v7229
      %v7345 = vpack.c.bf16 %v7245, %v7231
      %v7346 = vpack.c.bf16 %v7247, %v7233
      %v7347 = vpack.c.bf16 %v7249, %v7235
      %v7348 = vpack.c.bf16 %v7265, %v7251
      %v7349 = vpack.c.bf16 %v7267, %v7253
      %v7350 = vpack.c.bf16 %v7269, %v7255
      %v7351 = vpack.c.bf16 %v7271, %v7257
      %v7352 = vpack.c.bf16 %v7273, %v7259
      %v7353 = vpack.c.bf16 %v7275, %v7261
      %v7354 = vpack.c.bf16 %v7277, %v7263
      %v7355 = vpack.c.bf16 %v7293, %v7279
      %v7356 = vpack.c.bf16 %v7295, %v7281
      %v7357 = vpack.c.bf16 %v7297, %v7283
      %v7358 = vpack.c.bf16 %v7299, %v7285
      %v7359 = vpack.c.bf16 %v7301, %v7287
      %v7360 = vpack.c.bf16 %v7303, %v7289
      %v7361 = vpack.c.bf16 %v7305, %v7291
      %v7418 = vunpack.c.l.b16 %v7306
      %v7419 = vunpack.c.l.b16 %v7307
      %v7420 = vunpack.c.l.b16 %v7308
      %v7421 = vunpack.c.l.b16 %v7309
      %v7422 = vunpack.c.l.b16 %v7310
      %v7423 = vunpack.c.l.b16 %v7311
      %v7424 = vunpack.c.l.b16 %v7312
      %v7425 = vunpack.c.h.b16 %v7306
      %v7426 = vunpack.c.h.b16 %v7307
      %v7427 = vunpack.c.h.b16 %v7308
      %v7428 = vunpack.c.h.b16 %v7309
      %v7429 = vunpack.c.h.b16 %v7310
      %v7430 = vunpack.c.h.b16 %v7311
      %v7431 = vunpack.c.h.b16 %v7312
      %v7432 = vunpack.c.l.b16 %v7313
      %v7433 = vunpack.c.l.b16 %v7314
      %v7434 = vunpack.c.l.b16 %v7315
      %v7435 = vunpack.c.l.b16 %v7316
      %v7436 = vunpack.c.l.b16 %v7317
      %v7437 = vunpack.c.l.b16 %v7318
      %v7438 = vunpack.c.l.b16 %v7319
      %v7439 = vunpack.c.h.b16 %v7313
      %v7440 = vunpack.c.h.b16 %v7314
      %v7441 = vunpack.c.h.b16 %v7315
      %v7442 = vunpack.c.h.b16 %v7316
      %v7443 = vunpack.c.h.b16 %v7317
      %v7444 = vunpack.c.h.b16 %v7318
      %v7445 = vunpack.c.h.b16 %v7319
      %v7446 = vunpack.c.l.b16 %v7320
      %v7447 = vunpack.c.l.b16 %v7321
      %v7448 = vunpack.c.l.b16 %v7322
      %v7449 = vunpack.c.l.b16 %v7323
      %v7450 = vunpack.c.l.b16 %v7324
      %v7451 = vunpack.c.l.b16 %v7325
      %v7452 = vunpack.c.l.b16 %v7326
      %v7453 = vunpack.c.h.b16 %v7320
      %v7454 = vunpack.c.h.b16 %v7321
      %v7455 = vunpack.c.h.b16 %v7322
      %v7456 = vunpack.c.h.b16 %v7323
      %v7457 = vunpack.c.h.b16 %v7324
      %v7458 = vunpack.c.h.b16 %v7325
      %v7459 = vunpack.c.h.b16 %v7326
      %v7460 = vunpack.c.l.b16 %v7327
      %v7461 = vunpack.c.l.b16 %v7328
      %v7462 = vunpack.c.l.b16 %v7329
      %v7463 = vunpack.c.l.b16 %v7330
      %v7464 = vunpack.c.l.b16 %v7331
      %v7465 = vunpack.c.l.b16 %v7332
      %v7466 = vunpack.c.l.b16 %v7333
      %v7467 = vunpack.c.h.b16 %v7327
      %v7468 = vunpack.c.h.b16 %v7328
      %v7469 = vunpack.c.h.b16 %v7329
      %v7470 = vunpack.c.h.b16 %v7330
      %v7471 = vunpack.c.h.b16 %v7331
      %v7472 = vunpack.c.h.b16 %v7332
      %v7473 = vunpack.c.h.b16 %v7333
      %v7474 = vunpack.c.l.b16 %v7334
      %v7475 = vunpack.c.l.b16 %v7335
      %v7476 = vunpack.c.l.b16 %v7336
      %v7477 = vunpack.c.l.b16 %v7337
      %v7478 = vunpack.c.l.b16 %v7338
      %v7479 = vunpack.c.l.b16 %v7339
      %v7480 = vunpack.c.l.b16 %v7340
      %v7481 = vunpack.c.h.b16 %v7334
      %v7482 = vunpack.c.h.b16 %v7335
      %v7483 = vunpack.c.h.b16 %v7336
      %v7484 = vunpack.c.h.b16 %v7337
      %v7485 = vunpack.c.h.b16 %v7338
      %v7486 = vunpack.c.h.b16 %v7339
      %v7487 = vunpack.c.h.b16 %v7340
      %v7488 = vunpack.c.l.b16 %v7341
      %v7489 = vunpack.c.l.b16 %v7342
      %v7490 = vunpack.c.l.b16 %v7343
      %v7491 = vunpack.c.l.b16 %v7344
      %v7492 = vunpack.c.l.b16 %v7345
      %v7493 = vunpack.c.l.b16 %v7346
      %v7494 = vunpack.c.l.b16 %v7347
      %v7495 = vunpack.c.h.b16 %v7341
      %v7496 = vunpack.c.h.b16 %v7342
      %v7497 = vunpack.c.h.b16 %v7343
      %v7498 = vunpack.c.h.b16 %v7344
      %v7499 = vunpack.c.h.b16 %v7345
      %v7500 = vunpack.c.h.b16 %v7346
      %v7501 = vunpack.c.h.b16 %v7347
      %v7502 = vunpack.c.l.b16 %v7348
      %v7503 = vunpack.c.l.b16 %v7349
      %v7504 = vunpack.c.l.b16 %v7350
      %v7505 = vunpack.c.l.b16 %v7351
      %v7506 = vunpack.c.l.b16 %v7352
      %v7507 = vunpack.c.l.b16 %v7353
      %v7508 = vunpack.c.l.b16 %v7354
      %v7509 = vunpack.c.h.b16 %v7348
      %v7510 = vunpack.c.h.b16 %v7349
      %v7511 = vunpack.c.h.b16 %v7350
      %v7512 = vunpack.c.h.b16 %v7351
      %v7513 = vunpack.c.h.b16 %v7352
      %v7514 = vunpack.c.h.b16 %v7353
      %v7515 = vunpack.c.h.b16 %v7354
      %v7516 = vunpack.c.l.b16 %v7355
      %v7517 = vunpack.c.l.b16 %v7356
      %v7518 = vunpack.c.l.b16 %v7357
      %v7519 = vunpack.c.l.b16 %v7358
      %v7520 = vunpack.c.l.b16 %v7359
      %v7521 = vunpack.c.l.b16 %v7360
      %v7522 = vunpack.c.l.b16 %v7361
      %v7523 = vunpack.c.h.b16 %v7355
      %v7524 = vunpack.c.h.b16 %v7356
      %v7525 = vunpack.c.h.b16 %v7357
      %v7526 = vunpack.c.h.b16 %v7358
      %v7527 = vunpack.c.h.b16 %v7359
      %v7528 = vunpack.c.h.b16 %v7360
      %v7529 = vunpack.c.h.b16 %v7361
      %v7530 = vpack.c.b16 %v7419, %v7418
      %v7531 = vpack.c.b16 %v7421, %v7420
      %v7532 = vpack.c.b16 %v7423, %v7422
      %v7533 = vpack.c.b16 %v7424, %v7424
      %v7534 = vpack.c.b16 %v7426, %v7425
      %v7535 = vpack.c.b16 %v7428, %v7427
      %v7536 = vpack.c.b16 %v7430, %v7429
      %v7537 = vpack.c.b16 %v7431, %v7431
      %v7538 = vpack.c.b16 %v7433, %v7432
      %v7539 = vpack.c.b16 %v7435, %v7434
      %v7540 = vpack.c.b16 %v7437, %v7436
      %v7541 = vpack.c.b16 %v7438, %v7438
      %v7542 = vpack.c.b16 %v7440, %v7439
      %v7543 = vpack.c.b16 %v7442, %v7441
      %v7544 = vpack.c.b16 %v7444, %v7443
      %v7545 = vpack.c.b16 %v7445, %v7445
      %v7546 = vpack.c.b16 %v7447, %v7446
      %v7547 = vpack.c.b16 %v7449, %v7448
      %v7548 = vpack.c.b16 %v7451, %v7450
      %v7549 = vpack.c.b16 %v7452, %v7452
      %v7550 = vpack.c.b16 %v7454, %v7453
      %v7551 = vpack.c.b16 %v7456, %v7455
      %v7552 = vpack.c.b16 %v7458, %v7457
      %v7553 = vpack.c.b16 %v7459, %v7459
      %v7554 = vpack.c.b16 %v7461, %v7460
      %v7555 = vpack.c.b16 %v7463, %v7462
      %v7556 = vpack.c.b16 %v7465, %v7464
      %v7557 = vpack.c.b16 %v7466, %v7466
      %v7558 = vpack.c.b16 %v7468, %v7467
      %v7559 = vpack.c.b16 %v7470, %v7469
      %v7560 = vpack.c.b16 %v7472, %v7471
      %v7561 = vpack.c.b16 %v7473, %v7473
      %v7562 = vpack.c.b16 %v7475, %v7474
      %v7563 = vpack.c.b16 %v7477, %v7476
      %v7564 = vpack.c.b16 %v7479, %v7478
      %v7565 = vpack.c.b16 %v7480, %v7480
      %v7566 = vpack.c.b16 %v7482, %v7481
      %v7567 = vpack.c.b16 %v7484, %v7483
      %v7568 = vpack.c.b16 %v7486, %v7485
      %v7569 = vpack.c.b16 %v7487, %v7487
      %v7570 = vpack.c.b16 %v7489, %v7488
      %v7571 = vpack.c.b16 %v7491, %v7490
      %v7572 = vpack.c.b16 %v7493, %v7492
      %v7573 = vpack.c.b16 %v7494, %v7494
      %v7574 = vpack.c.b16 %v7496, %v7495
      %v7575 = vpack.c.b16 %v7498, %v7497
      %v7576 = vpack.c.b16 %v7500, %v7499
      %v7577 = vpack.c.b16 %v7501, %v7501
      %v7578 = vpack.c.b16 %v7503, %v7502
      %v7579 = vpack.c.b16 %v7505, %v7504
      %v7580 = vpack.c.b16 %v7507, %v7506
      %v7581 = vpack.c.b16 %v7508, %v7508
      %v7582 = vpack.c.b16 %v7510, %v7509
      %v7583 = vpack.c.b16 %v7512, %v7511
      %v7584 = vpack.c.b16 %v7514, %v7513
      %v7585 = vpack.c.b16 %v7515, %v7515
      %v7586 = vpack.c.b16 %v7517, %v7516
      %v7587 = vpack.c.b16 %v7519, %v7518
      %v7588 = vpack.c.b16 %v7521, %v7520
      %v7589 = vpack.c.b16 %v7522, %v7522
      %v7590 = vpack.c.b16 %v7524, %v7523
      %v7591 = vpack.c.b16 %v7526, %v7525
      %v7592 = vpack.c.b16 %v7528, %v7527
      %v7593 = vpack.c.b16 %v7529, %v7529
      %7658 = vst [vmem:[%s457] sm:$0xff] %v7530
      %7659 = vst [vmem:[%s457 + $0x8] sm:$0xff] %v7531
      %7660 = vst [vmem:[%s457 + $0x10] sm:$0xff] %v7532
      %vm7661 = vcmask 125952
      %7662 = vst.msk [vmem:[%s457 + $0x18] sm:$0xf] %vm7661, %v7533
      %7663 = vst [vmem:[%s457 + $0x1c] sm:$0xff] %v7534
      %7664 = vst [vmem:[%s457 + $0x24] sm:$0xff] %v7535
      %7665 = vst [vmem:[%s457 + $0x2c] sm:$0xff] %v7536
      %7666 = vst.msk [vmem:[%s457 + $0x34] sm:$0xf] %vm7661, %v7537
      %7667 = vst [vmem:[%s457 + $0x38] sm:$0xff] %v7538
      %7668 = vst [vmem:[%s457 + $0x40] sm:$0xff] %v7539
      %7669 = vst [vmem:[%s457 + $0x48] sm:$0xff] %v7540
      %7670 = vst.msk [vmem:[%s457 + $0x50] sm:$0xf] %vm7661, %v7541
      %7671 = vst [vmem:[%s457 + $0x54] sm:$0xff] %v7542
      %7672 = vst [vmem:[%s457 + $0x5c] sm:$0xff] %v7543
      %7673 = vst [vmem:[%s457 + $0x64] sm:$0xff] %v7544
      %7674 = vst.msk [vmem:[%s457 + $0x6c] sm:$0xf] %vm7661, %v7545
      %7675 = vst [vmem:[%s457 + $0x70] sm:$0xff] %v7546
      %7676 = vst [vmem:[%s457 + $0x78] sm:$0xff] %v7547
      %7677 = vst [vmem:[%s457 + $0x80] sm:$0xff] %v7548
      %7678 = vst.msk [vmem:[%s457 + $0x88] sm:$0xf] %vm7661, %v7549
      %7679 = vst [vmem:[%s457 + $0x8c] sm:$0xff] %v7550
      %7680 = vst [vmem:[%s457 + $0x94] sm:$0xff] %v7551
      %7681 = vst [vmem:[%s457 + $0x9c] sm:$0xff] %v7552
      %7682 = vst.msk [vmem:[%s457 + $0xa4] sm:$0xf] %vm7661, %v7553
      %7683 = vst [vmem:[%s457 + $0xa8] sm:$0xff] %v7554
      %7684 = vst [vmem:[%s457 + $0xb0] sm:$0xff] %v7555
      %7685 = vst [vmem:[%s457 + $0xb8] sm:$0xff] %v7556
      %7686 = vst.msk [vmem:[%s457 + $0xc0] sm:$0xf] %vm7661, %v7557
      %7687 = vst [vmem:[%s457 + $0xc4] sm:$0xff] %v7558
      %7688 = vst [vmem:[%s457 + $0xcc] sm:$0xff] %v7559
      %7689 = vst [vmem:[%s457 + $0xd4] sm:$0xff] %v7560
      %7690 = vst.msk [vmem:[%s457 + $0xdc] sm:$0xf] %vm7661, %v7561
      %7691 = vst [vmem:[%s457 + $0xe0] sm:$0xff] %v7562
      %7692 = vst [vmem:[%s457 + $0xe8] sm:$0xff] %v7563
      %7693 = vst [vmem:[%s457 + $0xf0] sm:$0xff] %v7564
      %7694 = vst.msk [vmem:[%s457 + $0xf8] sm:$0xf] %vm7661, %v7565
      %7695 = vst [vmem:[%s457 + $0xfc] sm:$0xff] %v7566
      %7696 = vst [vmem:[%s457 + $0x104] sm:$0xff] %v7567
      %7697 = vst [vmem:[%s457 + $0x10c] sm:$0xff] %v7568
      %7698 = vst.msk [vmem:[%s457 + $0x114] sm:$0xf] %vm7661, %v7569
      %7699 = vst [vmem:[%s457 + $0x118] sm:$0xff] %v7570
      %7700 = vst [vmem:[%s457 + $0x120] sm:$0xff] %v7571
      %7701 = vst [vmem:[%s457 + $0x128] sm:$0xff] %v7572
      %7702 = vst.msk [vmem:[%s457 + $0x130] sm:$0xf] %vm7661, %v7573
      %7703 = vst [vmem:[%s457 + $0x134] sm:$0xff] %v7574
      %7704 = vst [vmem:[%s457 + $0x13c] sm:$0xff] %v7575
      %7705 = vst [vmem:[%s457 + $0x144] sm:$0xff] %v7576
      %7706 = vst.msk [vmem:[%s457 + $0x14c] sm:$0xf] %vm7661, %v7577
      %7707 = vst [vmem:[%s457 + $0x150] sm:$0xff] %v7578
      %7708 = vst [vmem:[%s457 + $0x158] sm:$0xff] %v7579
      %7709 = vst [vmem:[%s457 + $0x160] sm:$0xff] %v7580
      %7710 = vst.msk [vmem:[%s457 + $0x168] sm:$0xf] %vm7661, %v7581
      %7711 = vst [vmem:[%s457 + $0x16c] sm:$0xff] %v7582
      %7712 = vst [vmem:[%s457 + $0x174] sm:$0xff] %v7583
      %7713 = vst [vmem:[%s457 + $0x17c] sm:$0xff] %v7584
      %7714 = vst.msk [vmem:[%s457 + $0x184] sm:$0xf] %vm7661, %v7585
      %7715 = vst [vmem:[%s457 + $0x188] sm:$0xff] %v7586
      %7716 = vst [vmem:[%s457 + $0x190] sm:$0xff] %v7587
      %7717 = vst [vmem:[%s457 + $0x198] sm:$0xff] %v7588
      %7718 = vst.msk [vmem:[%s457 + $0x1a0] sm:$0xf] %vm7661, %v7589
      %7719 = vst [vmem:[%s457 + $0x1a4] sm:$0xff] %v7590
      %7720 = vst [vmem:[%s457 + $0x1ac] sm:$0xff] %v7591
      %7721 = vst [vmem:[%s457 + $0x1b4] sm:$0xff] %v7592
      %7722 = vst.msk [vmem:[%s457 + $0x1bc] sm:$0xf] %vm7661, %v7593
      %7723 = vst [vmem:[%s463] sm:$0xff] %v3583
      %7724 = vst [vmem:[%s463 + $0x8] sm:$0xff] %v3587
      %7725 = vst [vmem:[%s463 + $0x10] sm:$0xff] %v3593
      %7726 = vst [vmem:[%s463 + $0x18] sm:$0xff] %v3597
      %7727 = vst [vmem:[%s463 + $0x20] sm:$0xff] %v3603
      %7728 = vst [vmem:[%s463 + $0x28] sm:$0xff] %v3607
      %7729 = vst [vmem:[%s463 + $0x30] sm:$0xff] %v3613
      %7730 = vst [vmem:[%s463 + $0x38] sm:$0xff] %v3617
      %7731 = vst [vmem:[%s463 + $0x40] sm:$0xff] %v3623
      %7732 = vst [vmem:[%s463 + $0x48] sm:$0xff] %v3627
      %7733 = vst [vmem:[%s463 + $0x50] sm:$0xff] %v3633
      %7734 = vst [vmem:[%s463 + $0x58] sm:$0xff] %v3637
      %7735 = vst [vmem:[%s463 + $0x60] sm:$0xff] %v3643
      %7736 = vst [vmem:[%s463 + $0x68] sm:$0xff] %v3647
      %7737 = vst [vmem:[%s463 + $0x70] sm:$0xff] %v3653
      %7738 = vst [vmem:[%s463 + $0x78] sm:$0xff] %v3657
      %7739 = vst [vmem:[%s469] sm:$0xff] %v3585
      %7740 = vst [vmem:[%s469 + $0x8] sm:$0xff] %v3589
      %7741 = vst [vmem:[%s469 + $0x10] sm:$0xff] %v3595
      %7742 = vst [vmem:[%s469 + $0x18] sm:$0xff] %v3599
      %7743 = vst [vmem:[%s469 + $0x20] sm:$0xff] %v3605
      %7744 = vst [vmem:[%s469 + $0x28] sm:$0xff] %v3609
      %7745 = vst [vmem:[%s469 + $0x30] sm:$0xff] %v3615
      %7746 = vst [vmem:[%s469 + $0x38] sm:$0xff] %v3619
      %7747 = vst [vmem:[%s469 + $0x40] sm:$0xff] %v3625
      %7748 = vst [vmem:[%s469 + $0x48] sm:$0xff] %v3629
      %7749 = vst [vmem:[%s469 + $0x50] sm:$0xff] %v3635
      %7750 = vst [vmem:[%s469 + $0x58] sm:$0xff] %v3639
      %7751 = vst [vmem:[%s469 + $0x60] sm:$0xff] %v3645
      %7752 = vst [vmem:[%s469 + $0x68] sm:$0xff] %v3649
      %7753 = vst [vmem:[%s469 + $0x70] sm:$0xff] %v3655
      %7754 = vst [vmem:[%s469 + $0x78] sm:$0xff] %v3659
      %s7755 = smul.u32 16, %s24
      %p7756 = scmp.lt.s32.totalorder %s7755, 63
      %s7757 = scalar_select %p7756, %s7755, 63
      %s7758 = smul.addr %s7757, 7
      %s7759 = smul.addr %s7758, 4
      %s7760 = scalar_lea.vmem %s10, %s7759
      %s7761 = smul.u32 16, %s24
      %p7762 = scmp.lt.s32.totalorder %s7761, 63
      %s7763 = scalar_select %p7762, %s7761, 63
      %s7764 = smul.addr %s7763, 8
      %s7765 = scalar_lea.vmem %s11, %s7764
      %s7766 = smul.u32 16, %s24
      %p7767 = scmp.lt.s32.totalorder %s7766, 63
      %s7768 = scalar_select %p7767, %s7766, 63
      %s7769 = smul.addr %s7768, 8
      %s7770 = scalar_lea.vmem %s12, %s7769
      // Predicated region
      $region61: #{vae_forward.1} parent=59 // pred_check
        %p7771 = pneg %p262
      $region62: #{vae_forward.1} parent=59 // pred_check_branch
        %7773 = sbr.rel (%p7771) target = $region64
      $region63: #{vae_forward.1} parent=59 // pred_region
        %s7774 = smul.u32 16, %s24
      $region64: #{vae_forward.1} parent=59 // pred_fallthru
        _
      // Predicated region
      $region65: #{vae_forward.1} parent=59 // pred_check
        %p7775 = pneg %p288
      $region66: #{vae_forward.1} parent=59 // pred_check_branch
        %7777 = sbr.rel (%p7775) target = $region68
      $region67: #{vae_forward.1} parent=59 // pred_region
        %s7778 = smul.u32 16, %s24
      $region68: #{vae_forward.1} parent=59 // pred_fallthru
        _
      // Predicated region
      $region69: #{vae_forward.1} parent=59 // pred_check
        %p7779 = pneg %p314
      $region70: #{vae_forward.1} parent=59 // pred_check_branch
        %7781 = sbr.rel (%p7779) target = $region72
      $region71: #{vae_forward.1} parent=59 // pred_region
        %s7782 = smul.u32 16, %s24
      $region72: #{vae_forward.1} parent=59 // pred_fallthru
        _
    $region60: #{vae_forward.1} parent=5 // pred_fallthru
      _
    %p7783 = scmp.le.s32.totalorder 2, %s19
    // Predicated region
    $region73: #{vae_forward.1} parent=5 // pred_check
      %p7784 = pneg %p7783
    $region74: #{vae_forward.1} parent=5 // pred_check_branch
      %7786 = sbr.rel (%p7784) target = $region76
    $region75: #{vae_forward.1} parent=5 // pred_region
      %s7787 = ssub.s32 %s19, 2
      // Predicated region
      $region77: #{vae_forward.1} parent=75 // pred_check
        %p7788 = pneg %p268
      $region78: #{vae_forward.1} parent=75 // pred_check_branch
        %7790 = sbr.rel (%p7788) target = $region80
      $region79: #{vae_forward.1} parent=75 // pred_region
        %s7791 = smul.u32 16, %s25
        %p7792 = scmp.lt.s32.totalorder %s7791, 63
        %s7793 = scalar_select %p7792, %s7791, 63
        %s7794 = smul.addr %s7793, 7
        %s7795 = smul.addr %s7794, 4
        %s7796 = scalar_lea.vmem %s10, %s7795
      $region80: #{vae_forward.1} parent=75 // pred_fallthru
        _
      // Predicated region
      $region81: #{vae_forward.1} parent=75 // pred_check
        %p7797 = pneg %p294
      $region82: #{vae_forward.1} parent=75 // pred_check_branch
        %7799 = sbr.rel (%p7797) target = $region84
      $region83: #{vae_forward.1} parent=75 // pred_region
        %s7800 = smul.u32 16, %s25
        %p7801 = scmp.lt.s32.totalorder %s7800, 63
        %s7802 = scalar_select %p7801, %s7800, 63
        %s7803 = smul.addr %s7802, 8
        %s7804 = scalar_lea.vmem %s11, %s7803
      $region84: #{vae_forward.1} parent=75 // pred_fallthru
        _
      // Predicated region
      $region85: #{vae_forward.1} parent=75 // pred_check
        %p7805 = pneg %p320
      $region86: #{vae_forward.1} parent=75 // pred_check_branch
        %7807 = sbr.rel (%p7805) target = $region88
      $region87: #{vae_forward.1} parent=75 // pred_region
        %s7808 = smul.u32 16, %s25
        %p7809 = scmp.lt.s32.totalorder %s7808, 63
        %s7810 = scalar_select %p7809, %s7808, 63
        %s7811 = smul.addr %s7810, 8
        %s7812 = scalar_lea.vmem %s12, %s7811
      $region88: #{vae_forward.1} parent=75 // pred_fallthru
        _
    $region76: #{vae_forward.1} parent=5 // pred_fallthru
      _
  $region6: #{vae_forward.1} parent=0 // loop_footer
    %s23 = sadd.s32 1, %s19
  $region7: #{vae_forward.1} parent=0 // loop_footer_branch
    %18 = sbr.rel target = $region3
  $region8: #{vae_forward.1} parent=0 // loop_exit
    _

</llo_original>
